<compile_context>
chip_gen: v7x
topology: tpu7x:2x2x1
jax: 0.10.0
libtpu: 0.0.40
codegen_flags: <defaults>
</compile_context>

<pallas_src>
import jax
import jax.numpy as jnp
from jax import lax
from jax.experimental import pallas as pl
from jax.experimental.pallas import tpu as pltpu


# ----------------------------------------------------------------------------
# Fused kernel: conv1+BN+ReLU -> conv2+BN+ReLU -> 4x SA_Layer -> concat
# (block_b batch elements per grid step)
# ----------------------------------------------------------------------------
def stacked_attention_kernel(x_ref, w1_ref, sh1_ref, w2_ref, sh2_ref,
                             wqv_ref, bv_ref, wt_ref, bt_ref, o_ref):
    f32 = jnp.float32
    bf16 = jnp.bfloat16
    Bb, C, N = x_ref.shape
    C4 = C // 4

    # Unrolled loop over the batch elements of this grid step: independent
    # per-element pipelines the scheduler can interleave across EUP/VPU/MXU.
    for bb in range(Bb):
        x = x_ref[bb]                                               # (C, N) f32

        # conv1 (+ folded BN1 scale) + ReLU   -- w1 = scale1 * W1, bf16
        y = jnp.dot(w1_ref[...], x.astype(bf16), preferred_element_type=f32)
        x = jnp.maximum(y + sh1_ref[...], 0.0)

        # conv2 (+ folded BN2 scale) + ReLU
        y = jnp.dot(w2_ref[...], x.astype(bf16), preferred_element_type=f32)
        x = jnp.maximum(y + sh2_ref[...], 0.0)

        # 4 stacked SA layers; each layer's output goes straight into the
        # concatenated output slab at row offset layer*C.
        for layer in range(4):
            xb = x.astype(bf16)

            # Fused q/k + v projection: q_conv and k_conv share weights
            # (bias=False), so one (C/4 + C, C) matmul produces both.
            qv = jnp.dot(wqv_ref[layer], xb, preferred_element_type=f32)
            xq = qv[:C4]                                            # (C/4, N)
            xv = qv[C4:] + bv_ref[layer]                            # (C, N)

            # energy[n, m] = sum_c xq[c, n] * xq[c, m]  (q_conv == k_conv,
            # bias=False) -- contraction over dim 0 of both operands, no
            # explicit transpose of the (C/4, N) tile materialized.
            xqb = xq.astype(bf16)
            energy = lax.dot_general(
                xqb, xqb, dimension_numbers=(((0,), (0,)), ((), ())),
                preferred_element_type=f32)                         # (N, N)

            # Numerically-stable softmax over last dim (torch.Softmax(dim=-1)).
            rowmax = jnp.max(energy, axis=-1, keepdims=True)        # (N, 1)
            p = jnp.exp(energy - rowmax)                            # (N, N) f32
            rinv = pl.reciprocal(jnp.sum(p, axis=-1, keepdims=True),
                                 approx=True)                       # (N, 1)
            pn = p * rinv                                           # softmax rows
            # PyTorch: attention / (1e-9 + attention.sum(dim=1, keepdims=True))
            # Folded into a per-column scale applied after the PV matmul:
            #   x_v @ (pn / col) == (x_v @ pn) * (1 / col)
            # so the normalized (N, N) attention is never materialized.
            col = 1e-9 + jnp.sum(pn, axis=0, keepdims=True)         # (1, N)
            cinv = pl.reciprocal(col, approx=True)                  # (1, N)

            x_r = jnp.dot(xv.astype(bf16), pn.astype(bf16),
                          preferred_element_type=f32) * cinv        # (C, N)

            # trans_conv (+ folded after_norm) + ReLU + residual
            d = (x - x_r).astype(bf16)
            t = jnp.dot(wt_ref[layer], d,
                        preferred_element_type=f32) + bt_ref[layer]
            x = x + jnp.maximum(t, 0.0)

            o_ref[bb, layer * C:(layer + 1) * C, :] = x


def stacked_attention(x, params, *, block_b=None):
    B, C, N = x.shape
    C4 = C // 4
    w1, sh1, w2, sh2, wqv, bv, wt, bt = params

    if block_b is None:
        # Amortize per-grid-step overhead over several batch elements, but
        # keep at least 2 grid steps so both TensorCores get work on v7x.
        block_b = max(1, min(8, B // 2))
    Bp = ((B + block_b - 1) // block_b) * block_b
    xp = x if Bp == B else jnp.pad(x, ((0, Bp - B), (0, 0), (0, 0)))

    out = pl.pallas_call(
        stacked_attention_kernel,
        out_shape=jax.ShapeDtypeStruct((Bp, 4 * C, N), jnp.float32),
        grid_spec=pltpu.PrefetchScalarGridSpec(
            num_scalar_prefetch=0,
            grid=(Bp // block_b,),
            in_specs=[
                pl.BlockSpec((block_b, C, N), lambda b: (b, 0, 0)),   # x
                pl.BlockSpec((C, C), lambda b: (0, 0)),               # w1 (BN folded, bf16)
                pl.BlockSpec((C, 1), lambda b: (0, 0)),               # shift1
                pl.BlockSpec((C, C), lambda b: (0, 0)),               # w2 (BN folded, bf16)
                pl.BlockSpec((C, 1), lambda b: (0, 0)),               # shift2
                pl.BlockSpec((4, C4 + C, C), lambda b: (0, 0, 0)),    # [wq; wv] fused, bf16
                pl.BlockSpec((4, C, 1), lambda b: (0, 0, 0)),         # bv
                pl.BlockSpec((4, C, C), lambda b: (0, 0, 0)),         # wt (BN folded), bf16
                pl.BlockSpec((4, C, 1), lambda b: (0, 0, 0)),         # bt (BN folded)
            ],
            out_specs=pl.BlockSpec((block_b, 4 * C, N), lambda b: (b, 0, 0)),
        ),
        compiler_params=pltpu.CompilerParams(
            dimension_semantics=("parallel",),
            vmem_limit_bytes=48 * 1024 * 1024,
        ),
    )(xp, w1, sh1, w2, sh2, wqv, bv, wt, bt)
    return out if Bp == B else out[:B]


# ----------------------------------------------------------------------------
# Deterministic synthetic parameters (inference-mode BN folded into weights)
# ----------------------------------------------------------------------------
def _bn_scale_shift(key, c, eps=1e-5):
    k1, k2, k3, k4 = jax.random.split(key, 4)
    gamma = 1.0 + 0.1 * jax.random.normal(k1, (c,), jnp.float32)
    beta = 0.1 * jax.random.normal(k2, (c,), jnp.float32)
    running_mean = 0.1 * jax.random.normal(k3, (c,), jnp.float32)
    running_var = 1.0 + 0.1 * jax.random.uniform(k4, (c,), jnp.float32)
    scale = gamma / jnp.sqrt(running_var + eps)
    shift = beta - running_mean * scale
    return scale.reshape(c, 1), shift.reshape(c, 1)


def make_params(key, c):
    c4 = c // 4
    kc1, kc2, kb1, kb2, ksa = jax.random.split(key, 5)
    s = 0.05

    w1 = s * jax.random.normal(kc1, (c, c), jnp.float32)
    w2 = s * jax.random.normal(kc2, (c, c), jnp.float32)
    s1, sh1 = _bn_scale_shift(kb1, c)
    s2, sh2 = _bn_scale_shift(kb2, c)
    w1f = (s1 * w1).astype(jnp.bfloat16)           # fold BN1 scale into conv1
    w2f = (s2 * w2).astype(jnp.bfloat16)           # fold BN2 scale into conv2

    wqv_l, bv_l, wt_l, bt_l = [], [], [], []
    for k in jax.random.split(ksa, 4):
        k0, k1, k2, k3, k4, k5 = jax.random.split(k, 6)
        wq = s * jax.random.normal(k0, (c4, c), jnp.float32)   # q_conv == k_conv weight
        wv = s * jax.random.normal(k1, (c, c), jnp.float32)
        bv = s * jax.random.normal(k2, (c,), jnp.float32).reshape(c, 1)
        wt = s * jax.random.normal(k3, (c, c), jnp.float32)
        bt = s * jax.random.normal(k4, (c,), jnp.float32).reshape(c, 1)
        scale, shift = _bn_scale_shift(k5, c)
        # stack q/k weight on top of v weight -> one fused projection matmul
        wqv_l.append(jnp.concatenate([wq, wv], axis=0).astype(jnp.bfloat16))
        bv_l.append(bv)
        wt_l.append((scale * wt).astype(jnp.bfloat16))          # fold after_norm scale
        bt_l.append(scale * bt + shift)                         # fold after_norm shift

    return (w1f, sh1, w2f, sh2,
            jnp.stack(wqv_l), jnp.stack(bv_l),
            jnp.stack(wt_l), jnp.stack(bt_l))


if __name__ == "__main__":
    B, C, N = 4, 64, 128   # small shapes: batch=4, channels=64, points=128
    key = jax.random.PRNGKey(0)
    kx, kp = jax.random.split(key)

    x = jax.random.normal(kx, (B, C, N), jnp.float32)
    params = make_params(kp, C)

    out = stacked_attention(x, params)   # block_b auto -> 2, grid -> (2,)
    jax.block_until_ready(out)
    assert out.shape == (B, 4 * C, N)
    assert bool(jnp.isfinite(out).all())
    print("KERNEL_OK")
</pallas_src>

<mosaic_0001>
module attributes {stable_mosaic.version = 11 : i64} {
  func.func @stacked_attention_kernel(%arg0: i32, %arg1: memref<2x64x128xf32, #tpu.memory_space<vmem>>, %arg2: memref<64x64xbf16, #tpu.memory_space<vmem>>, %arg3: memref<64x1xf32, #tpu.memory_space<vmem>>, %arg4: memref<64x64xbf16, #tpu.memory_space<vmem>>, %arg5: memref<64x1xf32, #tpu.memory_space<vmem>>, %arg6: memref<4x80x64xbf16, #tpu.memory_space<vmem>>, %arg7: memref<4x64x1xf32, #tpu.memory_space<vmem>>, %arg8: memref<4x64x64xbf16, #tpu.memory_space<vmem>>, %arg9: memref<4x64x1xf32, #tpu.memory_space<vmem>>, %arg10: memref<2x256x128xf32, #tpu.memory_space<vmem>>) attributes {dimension_semantics = [#tpu.dimension_semantics<parallel>], iteration_bounds = array<i64: 2>, scalar_prefetch = 0 : i64, scratch_operands = 0 : i64, tpu.core_type = #tpu.core_type<tc>, window_params = [{transform_indices = @transform_0, window_bounds = array<i64: 2, 64, 128>}, {pipeline_mode = #tpu.pipeline_mode<synchronous>, transform_indices = @transform_1, window_bounds = array<i64: 64, 64>}, {pipeline_mode = #tpu.pipeline_mode<synchronous>, transform_indices = @transform_2, window_bounds = array<i64: 64, 1>}, {pipeline_mode = #tpu.pipeline_mode<synchronous>, transform_indices = @transform_3, window_bounds = array<i64: 64, 64>}, {pipeline_mode = #tpu.pipeline_mode<synchronous>, transform_indices = @transform_4, window_bounds = array<i64: 64, 1>}, {pipeline_mode = #tpu.pipeline_mode<synchronous>, transform_indices = @transform_5, window_bounds = array<i64: 4, 80, 64>}, {pipeline_mode = #tpu.pipeline_mode<synchronous>, transform_indices = @transform_6, window_bounds = array<i64: 4, 64, 1>}, {pipeline_mode = #tpu.pipeline_mode<synchronous>, transform_indices = @transform_7, window_bounds = array<i64: 4, 64, 64>}, {pipeline_mode = #tpu.pipeline_mode<synchronous>, transform_indices = @transform_8, window_bounds = array<i64: 4, 64, 1>}, {transform_indices = @transform_9, window_bounds = array<i64: 2, 256, 128>}]} {
    %c0 = arith.constant 0 : index
    %c0_0 = arith.constant 0 : index
    %c0_1 = arith.constant 0 : index
    %0 = vector.load %arg1[%c0, %c0_0, %c0_1] : memref<2x64x128xf32, #tpu.memory_space<vmem>>, vector<1x64x128xf32>
    %1 = vector.shape_cast %0 : vector<1x64x128xf32> to vector<64x128xf32>
    %c0_2 = arith.constant 0 : index
    %c0_3 = arith.constant 0 : index
    %2 = vector.load %arg2[%c0_2, %c0_3] : memref<64x64xbf16, #tpu.memory_space<vmem>>, vector<64x64xbf16>
    %3 = arith.truncf %1 : vector<64x128xf32> to vector<64x128xbf16>
    %cst = arith.constant dense<0.000000e+00> : vector<64x128xf32>
    %4 = tpu.matmul %2, %3, %cst {dimension_numbers = #tpu.dot_dimension_numbers<[1], [0], [0], [1], [0, 0, 1, 1], [], []>} : vector<64x64xbf16>, vector<64x128xbf16>, vector<64x128xf32> -> vector<64x128xf32>
    %c0_4 = arith.constant 0 : index
    %c0_5 = arith.constant 0 : index
    %5 = vector.load %arg3[%c0_4, %c0_5] : memref<64x1xf32, #tpu.memory_space<vmem>>, vector<64x1xf32>
    %6 = vector.broadcast %5 : vector<64x1xf32> to vector<64x128xf32>
    %7 = arith.addf %4, %6 : vector<64x128xf32>
    %cst_6 = arith.constant 0.000000e+00 : f32
    %8 = vector.broadcast %cst_6 : f32 to vector<64x128xf32>
    %9 = arith.maximumf %7, %8 : vector<64x128xf32>
    %c0_7 = arith.constant 0 : index
    %c0_8 = arith.constant 0 : index
    %10 = vector.load %arg4[%c0_7, %c0_8] : memref<64x64xbf16, #tpu.memory_space<vmem>>, vector<64x64xbf16>
    %11 = arith.truncf %9 : vector<64x128xf32> to vector<64x128xbf16>
    %cst_9 = arith.constant dense<0.000000e+00> : vector<64x128xf32>
    %12 = tpu.matmul %10, %11, %cst_9 {dimension_numbers = #tpu.dot_dimension_numbers<[1], [0], [0], [1], [0, 0, 1, 1], [], []>} : vector<64x64xbf16>, vector<64x128xbf16>, vector<64x128xf32> -> vector<64x128xf32>
    %c0_10 = arith.constant 0 : index
    %c0_11 = arith.constant 0 : index
    %13 = vector.load %arg5[%c0_10, %c0_11] : memref<64x1xf32, #tpu.memory_space<vmem>>, vector<64x1xf32>
    %14 = vector.broadcast %13 : vector<64x1xf32> to vector<64x128xf32>
    %15 = arith.addf %12, %14 : vector<64x128xf32>
    %cst_12 = arith.constant 0.000000e+00 : f32
    %16 = vector.broadcast %cst_12 : f32 to vector<64x128xf32>
    %17 = arith.maximumf %15, %16 : vector<64x128xf32>
    %18 = arith.truncf %17 : vector<64x128xf32> to vector<64x128xbf16>
    %c0_13 = arith.constant 0 : index
    %c0_14 = arith.constant 0 : index
    %c0_15 = arith.constant 0 : index
    %19 = vector.load %arg6[%c0_13, %c0_14, %c0_15] : memref<4x80x64xbf16, #tpu.memory_space<vmem>>, vector<1x80x64xbf16>
    %20 = vector.shape_cast %19 : vector<1x80x64xbf16> to vector<80x64xbf16>
    %cst_16 = arith.constant dense<0.000000e+00> : vector<80x128xf32>
    %21 = tpu.matmul %20, %18, %cst_16 {dimension_numbers = #tpu.dot_dimension_numbers<[1], [0], [0], [1], [0, 0, 1, 1], [], []>} : vector<80x64xbf16>, vector<64x128xbf16>, vector<80x128xf32> -> vector<80x128xf32>
    %22 = vector.extract_strided_slice %21 {offsets = [0, 0], sizes = [16, 128], strides = [1, 1]} : vector<80x128xf32> to vector<16x128xf32>
    %23 = vector.extract_strided_slice %21 {offsets = [16, 0], sizes = [64, 128], strides = [1, 1]} : vector<80x128xf32> to vector<64x128xf32>
    %c0_17 = arith.constant 0 : index
    %c0_18 = arith.constant 0 : index
    %c0_19 = arith.constant 0 : index
    %24 = vector.load %arg7[%c0_17, %c0_18, %c0_19] : memref<4x64x1xf32, #tpu.memory_space<vmem>>, vector<1x64x1xf32>
    %25 = vector.shape_cast %24 : vector<1x64x1xf32> to vector<64x1xf32>
    %26 = vector.broadcast %25 : vector<64x1xf32> to vector<64x128xf32>
    %27 = arith.addf %23, %26 : vector<64x128xf32>
    %28 = arith.truncf %22 : vector<16x128xf32> to vector<16x128xbf16>
    %cst_20 = arith.constant dense<0.000000e+00> : vector<128x128xf32>
    %29 = tpu.matmul %28, %28, %cst_20 {dimension_numbers = #tpu.dot_dimension_numbers<[0], [0], [1], [1], [0, 1, 1, 1], [], []>} : vector<16x128xbf16>, vector<16x128xbf16>, vector<128x128xf32> -> vector<128x128xf32>
    %cst_21 = arith.constant dense<0xFF800000> : vector<128xf32>
    %30 = vector.multi_reduction <maximumf>, %29, %cst_21 [1] : vector<128x128xf32> to vector<128xf32>
    %31 = vector.shape_cast %30 : vector<128xf32> to vector<128x1xf32>
    %32 = vector.broadcast %31 : vector<128x1xf32> to vector<128x128xf32>
    %33 = arith.subf %29, %32 : vector<128x128xf32>
    %34 = math.exp %33 : vector<128x128xf32>
    %cst_22 = arith.constant dense<0.000000e+00> : vector<128xf32>
    %35 = vector.multi_reduction <add>, %34, %cst_22 [1] : vector<128x128xf32> to vector<128xf32>
    %36 = vector.shape_cast %35 : vector<128xf32> to vector<128x1xf32>
    %37 = tpu.reciprocal %36 {approx = true} : vector<128x1xf32> -> vector<128x1xf32>
    %38 = vector.broadcast %37 : vector<128x1xf32> to vector<128x128xf32>
    %39 = arith.mulf %34, %38 : vector<128x128xf32>
    %cst_23 = arith.constant dense<0.000000e+00> : vector<128xf32>
    %40 = vector.multi_reduction <add>, %39, %cst_23 [0] : vector<128x128xf32> to vector<128xf32>
    %41 = vector.shape_cast %40 : vector<128xf32> to vector<1x128xf32>
    %cst_24 = arith.constant 9.99999971E-10 : f32
    %42 = vector.broadcast %cst_24 : f32 to vector<1x128xf32>
    %43 = arith.addf %42, %41 : vector<1x128xf32>
    %44 = tpu.reciprocal %43 {approx = true} : vector<1x128xf32> -> vector<1x128xf32>
    %45 = arith.truncf %27 : vector<64x128xf32> to vector<64x128xbf16>
    %46 = arith.truncf %39 : vector<128x128xf32> to vector<128x128xbf16>
    %cst_25 = arith.constant dense<0.000000e+00> : vector<64x128xf32>
    %47 = tpu.matmul %45, %46, %cst_25 {dimension_numbers = #tpu.dot_dimension_numbers<[1], [0], [0], [1], [0, 0, 1, 1], [], []>} : vector<64x128xbf16>, vector<128x128xbf16>, vector<64x128xf32> -> vector<64x128xf32>
    %48 = vector.broadcast %44 : vector<1x128xf32> to vector<64x128xf32>
    %49 = arith.mulf %47, %48 : vector<64x128xf32>
    %50 = arith.subf %17, %49 : vector<64x128xf32>
    %51 = arith.truncf %50 : vector<64x128xf32> to vector<64x128xbf16>
    %c0_26 = arith.constant 0 : index
    %c0_27 = arith.constant 0 : index
    %c0_28 = arith.constant 0 : index
    %52 = vector.load %arg8[%c0_26, %c0_27, %c0_28] : memref<4x64x64xbf16, #tpu.memory_space<vmem>>, vector<1x64x64xbf16>
    %53 = vector.shape_cast %52 : vector<1x64x64xbf16> to vector<64x64xbf16>
    %cst_29 = arith.constant dense<0.000000e+00> : vector<64x128xf32>
    %54 = tpu.matmul %53, %51, %cst_29 {dimension_numbers = #tpu.dot_dimension_numbers<[1], [0], [0], [1], [0, 0, 1, 1], [], []>} : vector<64x64xbf16>, vector<64x128xbf16>, vector<64x128xf32> -> vector<64x128xf32>
    %c0_30 = arith.constant 0 : index
    %c0_31 = arith.constant 0 : index
    %c0_32 = arith.constant 0 : index
    %55 = vector.load %arg9[%c0_30, %c0_31, %c0_32] : memref<4x64x1xf32, #tpu.memory_space<vmem>>, vector<1x64x1xf32>
    %56 = vector.shape_cast %55 : vector<1x64x1xf32> to vector<64x1xf32>
    %57 = vector.broadcast %56 : vector<64x1xf32> to vector<64x128xf32>
    %58 = arith.addf %54, %57 : vector<64x128xf32>
    %cst_33 = arith.constant 0.000000e+00 : f32
    %59 = vector.broadcast %cst_33 : f32 to vector<64x128xf32>
    %60 = arith.maximumf %58, %59 : vector<64x128xf32>
    %61 = arith.addf %17, %60 : vector<64x128xf32>
    %c0_34 = arith.constant 0 : index
    %c0_35 = arith.constant 0 : index
    %c0_36 = arith.constant 0 : index
    %62 = vector.load %arg10[%c0_34, %c0_35, %c0_36] : memref<2x256x128xf32, #tpu.memory_space<vmem>>, vector<1x64x128xf32>
    %63 = vector.shape_cast %62 : vector<1x64x128xf32> to vector<64x128xf32>
    %64 = vector.shape_cast %61 : vector<64x128xf32> to vector<1x64x128xf32>
    tpu.vector_store %arg10[%c0_34, %c0_35, %c0_36], %64 {strides = array<i32>} : memref<2x256x128xf32, #tpu.memory_space<vmem>>, vector<1x64x128xf32>,
    %65 = arith.truncf %61 : vector<64x128xf32> to vector<64x128xbf16>
    %c1 = arith.constant 1 : index
    %c0_37 = arith.constant 0 : index
    %c0_38 = arith.constant 0 : index
    %66 = vector.load %arg6[%c1, %c0_37, %c0_38] : memref<4x80x64xbf16, #tpu.memory_space<vmem>>, vector<1x80x64xbf16>
    %67 = vector.shape_cast %66 : vector<1x80x64xbf16> to vector<80x64xbf16>
    %cst_39 = arith.constant dense<0.000000e+00> : vector<80x128xf32>
    %68 = tpu.matmul %67, %65, %cst_39 {dimension_numbers = #tpu.dot_dimension_numbers<[1], [0], [0], [1], [0, 0, 1, 1], [], []>} : vector<80x64xbf16>, vector<64x128xbf16>, vector<80x128xf32> -> vector<80x128xf32>
    %69 = vector.extract_strided_slice %68 {offsets = [0, 0], sizes = [16, 128], strides = [1, 1]} : vector<80x128xf32> to vector<16x128xf32>
    %70 = vector.extract_strided_slice %68 {offsets = [16, 0], sizes = [64, 128], strides = [1, 1]} : vector<80x128xf32> to vector<64x128xf32>
    %c1_40 = arith.constant 1 : index
    %c0_41 = arith.constant 0 : index
    %c0_42 = arith.constant 0 : index
    %71 = vector.load %arg7[%c1_40, %c0_41, %c0_42] : memref<4x64x1xf32, #tpu.memory_space<vmem>>, vector<1x64x1xf32>
    %72 = vector.shape_cast %71 : vector<1x64x1xf32> to vector<64x1xf32>
    %73 = vector.broadcast %72 : vector<64x1xf32> to vector<64x128xf32>
    %74 = arith.addf %70, %73 : vector<64x128xf32>
    %75 = arith.truncf %69 : vector<16x128xf32> to vector<16x128xbf16>
    %cst_43 = arith.constant dense<0.000000e+00> : vector<128x128xf32>
    %76 = tpu.matmul %75, %75, %cst_43 {dimension_numbers = #tpu.dot_dimension_numbers<[0], [0], [1], [1], [0, 1, 1, 1], [], []>} : vector<16x128xbf16>, vector<16x128xbf16>, vector<128x128xf32> -> vector<128x128xf32>
    %cst_44 = arith.constant dense<0xFF800000> : vector<128xf32>
    %77 = vector.multi_reduction <maximumf>, %76, %cst_44 [1] : vector<128x128xf32> to vector<128xf32>
    %78 = vector.shape_cast %77 : vector<128xf32> to vector<128x1xf32>
    %79 = vector.broadcast %78 : vector<128x1xf32> to vector<128x128xf32>
    %80 = arith.subf %76, %79 : vector<128x128xf32>
    %81 = math.exp %80 : vector<128x128xf32>
    %cst_45 = arith.constant dense<0.000000e+00> : vector<128xf32>
    %82 = vector.multi_reduction <add>, %81, %cst_45 [1] : vector<128x128xf32> to vector<128xf32>
    %83 = vector.shape_cast %82 : vector<128xf32> to vector<128x1xf32>
    %84 = tpu.reciprocal %83 {approx = true} : vector<128x1xf32> -> vector<128x1xf32>
    %85 = vector.broadcast %84 : vector<128x1xf32> to vector<128x128xf32>
    %86 = arith.mulf %81, %85 : vector<128x128xf32>
    %cst_46 = arith.constant dense<0.000000e+00> : vector<128xf32>
    %87 = vector.multi_reduction <add>, %86, %cst_46 [0] : vector<128x128xf32> to vector<128xf32>
    %88 = vector.shape_cast %87 : vector<128xf32> to vector<1x128xf32>
    %cst_47 = arith.constant 9.99999971E-10 : f32
    %89 = vector.broadcast %cst_47 : f32 to vector<1x128xf32>
    %90 = arith.addf %89, %88 : vector<1x128xf32>
    %91 = tpu.reciprocal %90 {approx = true} : vector<1x128xf32> -> vector<1x128xf32>
    %92 = arith.truncf %74 : vector<64x128xf32> to vector<64x128xbf16>
    %93 = arith.truncf %86 : vector<128x128xf32> to vector<128x128xbf16>
    %cst_48 = arith.constant dense<0.000000e+00> : vector<64x128xf32>
    %94 = tpu.matmul %92, %93, %cst_48 {dimension_numbers = #tpu.dot_dimension_numbers<[1], [0], [0], [1], [0, 0, 1, 1], [], []>} : vector<64x128xbf16>, vector<128x128xbf16>, vector<64x128xf32> -> vector<64x128xf32>
    %95 = vector.broadcast %91 : vector<1x128xf32> to vector<64x128xf32>
    %96 = arith.mulf %94, %95 : vector<64x128xf32>
    %97 = arith.subf %61, %96 : vector<64x128xf32>
    %98 = arith.truncf %97 : vector<64x128xf32> to vector<64x128xbf16>
    %c1_49 = arith.constant 1 : index
    %c0_50 = arith.constant 0 : index
    %c0_51 = arith.constant 0 : index
    %99 = vector.load %arg8[%c1_49, %c0_50, %c0_51] : memref<4x64x64xbf16, #tpu.memory_space<vmem>>, vector<1x64x64xbf16>
    %100 = vector.shape_cast %99 : vector<1x64x64xbf16> to vector<64x64xbf16>
    %cst_52 = arith.constant dense<0.000000e+00> : vector<64x128xf32>
    %101 = tpu.matmul %100, %98, %cst_52 {dimension_numbers = #tpu.dot_dimension_numbers<[1], [0], [0], [1], [0, 0, 1, 1], [], []>} : vector<64x64xbf16>, vector<64x128xbf16>, vector<64x128xf32> -> vector<64x128xf32>
    %c1_53 = arith.constant 1 : index
    %c0_54 = arith.constant 0 : index
    %c0_55 = arith.constant 0 : index
    %102 = vector.load %arg9[%c1_53, %c0_54, %c0_55] : memref<4x64x1xf32, #tpu.memory_space<vmem>>, vector<1x64x1xf32>
    %103 = vector.shape_cast %102 : vector<1x64x1xf32> to vector<64x1xf32>
    %104 = vector.broadcast %103 : vector<64x1xf32> to vector<64x128xf32>
    %105 = arith.addf %101, %104 : vector<64x128xf32>
    %cst_56 = arith.constant 0.000000e+00 : f32
    %106 = vector.broadcast %cst_56 : f32 to vector<64x128xf32>
    %107 = arith.maximumf %105, %106 : vector<64x128xf32>
    %108 = arith.addf %61, %107 : vector<64x128xf32>
    %c0_57 = arith.constant 0 : index
    %c64 = arith.constant 64 : index
    %c0_58 = arith.constant 0 : index
    %109 = vector.load %arg10[%c0_57, %c64, %c0_58] : memref<2x256x128xf32, #tpu.memory_space<vmem>>, vector<1x64x128xf32>
    %110 = vector.shape_cast %109 : vector<1x64x128xf32> to vector<64x128xf32>
    %111 = vector.shape_cast %108 : vector<64x128xf32> to vector<1x64x128xf32>
    tpu.vector_store %arg10[%c0_57, %c64, %c0_58], %111 {strides = array<i32>} : memref<2x256x128xf32, #tpu.memory_space<vmem>>, vector<1x64x128xf32>,
    %112 = arith.truncf %108 : vector<64x128xf32> to vector<64x128xbf16>
    %c2 = arith.constant 2 : index
    %c0_59 = arith.constant 0 : index
    %c0_60 = arith.constant 0 : index
    %113 = vector.load %arg6[%c2, %c0_59, %c0_60] : memref<4x80x64xbf16, #tpu.memory_space<vmem>>, vector<1x80x64xbf16>
    %114 = vector.shape_cast %113 : vector<1x80x64xbf16> to vector<80x64xbf16>
    %cst_61 = arith.constant dense<0.000000e+00> : vector<80x128xf32>
    %115 = tpu.matmul %114, %112, %cst_61 {dimension_numbers = #tpu.dot_dimension_numbers<[1], [0], [0], [1], [0, 0, 1, 1], [], []>} : vector<80x64xbf16>, vector<64x128xbf16>, vector<80x128xf32> -> vector<80x128xf32>
    %116 = vector.extract_strided_slice %115 {offsets = [0, 0], sizes = [16, 128], strides = [1, 1]} : vector<80x128xf32> to vector<16x128xf32>
    %117 = vector.extract_strided_slice %115 {offsets = [16, 0], sizes = [64, 128], strides = [1, 1]} : vector<80x128xf32> to vector<64x128xf32>
    %c2_62 = arith.constant 2 : index
    %c0_63 = arith.constant 0 : index
    %c0_64 = arith.constant 0 : index
    %118 = vector.load %arg7[%c2_62, %c0_63, %c0_64] : memref<4x64x1xf32, #tpu.memory_space<vmem>>, vector<1x64x1xf32>
    %119 = vector.shape_cast %118 : vector<1x64x1xf32> to vector<64x1xf32>
    %120 = vector.broadcast %119 : vector<64x1xf32> to vector<64x128xf32>
    %121 = arith.addf %117, %120 : vector<64x128xf32>
    %122 = arith.truncf %116 : vector<16x128xf32> to vector<16x128xbf16>
    %cst_65 = arith.constant dense<0.000000e+00> : vector<128x128xf32>
    %123 = tpu.matmul %122, %122, %cst_65 {dimension_numbers = #tpu.dot_dimension_numbers<[0], [0], [1], [1], [0, 1, 1, 1], [], []>} : vector<16x128xbf16>, vector<16x128xbf16>, vector<128x128xf32> -> vector<128x128xf32>
    %cst_66 = arith.constant dense<0xFF800000> : vector<128xf32>
    %124 = vector.multi_reduction <maximumf>, %123, %cst_66 [1] : vector<128x128xf32> to vector<128xf32>
    %125 = vector.shape_cast %124 : vector<128xf32> to vector<128x1xf32>
    %126 = vector.broadcast %125 : vector<128x1xf32> to vector<128x128xf32>
    %127 = arith.subf %123, %126 : vector<128x128xf32>
    %128 = math.exp %127 : vector<128x128xf32>
    %cst_67 = arith.constant dense<0.000000e+00> : vector<128xf32>
    %129 = vector.multi_reduction <add>, %128, %cst_67 [1] : vector<128x128xf32> to vector<128xf32>
    %130 = vector.shape_cast %129 : vector<128xf32> to vector<128x1xf32>
    %131 = tpu.reciprocal %130 {approx = true} : vector<128x1xf32> -> vector<128x1xf32>
    %132 = vector.broadcast %131 : vector<128x1xf32> to vector<128x128xf32>
    %133 = arith.mulf %128, %132 : vector<128x128xf32>
    %cst_68 = arith.constant dense<0.000000e+00> : vector<128xf32>
    %134 = vector.multi_reduction <add>, %133, %cst_68 [0] : vector<128x128xf32> to vector<128xf32>
    %135 = vector.shape_cast %134 : vector<128xf32> to vector<1x128xf32>
    %cst_69 = arith.constant 9.99999971E-10 : f32
    %136 = vector.broadcast %cst_69 : f32 to vector<1x128xf32>
    %137 = arith.addf %136, %135 : vector<1x128xf32>
    %138 = tpu.reciprocal %137 {approx = true} : vector<1x128xf32> -> vector<1x128xf32>
    %139 = arith.truncf %121 : vector<64x128xf32> to vector<64x128xbf16>
    %140 = arith.truncf %133 : vector<128x128xf32> to vector<128x128xbf16>
    %cst_70 = arith.constant dense<0.000000e+00> : vector<64x128xf32>
    %141 = tpu.matmul %139, %140, %cst_70 {dimension_numbers = #tpu.dot_dimension_numbers<[1], [0], [0], [1], [0, 0, 1, 1], [], []>} : vector<64x128xbf16>, vector<128x128xbf16>, vector<64x128xf32> -> vector<64x128xf32>
    %142 = vector.broadcast %138 : vector<1x128xf32> to vector<64x128xf32>
    %143 = arith.mulf %141, %142 : vector<64x128xf32>
    %144 = arith.subf %108, %143 : vector<64x128xf32>
    %145 = arith.truncf %144 : vector<64x128xf32> to vector<64x128xbf16>
    %c2_71 = arith.constant 2 : index
    %c0_72 = arith.constant 0 : index
    %c0_73 = arith.constant 0 : index
    %146 = vector.load %arg8[%c2_71, %c0_72, %c0_73] : memref<4x64x64xbf16, #tpu.memory_space<vmem>>, vector<1x64x64xbf16>
    %147 = vector.shape_cast %146 : vector<1x64x64xbf16> to vector<64x64xbf16>
    %cst_74 = arith.constant dense<0.000000e+00> : vector<64x128xf32>
    %148 = tpu.matmul %147, %145, %cst_74 {dimension_numbers = #tpu.dot_dimension_numbers<[1], [0], [0], [1], [0, 0, 1, 1], [], []>} : vector<64x64xbf16>, vector<64x128xbf16>, vector<64x128xf32> -> vector<64x128xf32>
    %c2_75 = arith.constant 2 : index
    %c0_76 = arith.constant 0 : index
    %c0_77 = arith.constant 0 : index
    %149 = vector.load %arg9[%c2_75, %c0_76, %c0_77] : memref<4x64x1xf32, #tpu.memory_space<vmem>>, vector<1x64x1xf32>
    %150 = vector.shape_cast %149 : vector<1x64x1xf32> to vector<64x1xf32>
    %151 = vector.broadcast %150 : vector<64x1xf32> to vector<64x128xf32>
    %152 = arith.addf %148, %151 : vector<64x128xf32>
    %cst_78 = arith.constant 0.000000e+00 : f32
    %153 = vector.broadcast %cst_78 : f32 to vector<64x128xf32>
    %154 = arith.maximumf %152, %153 : vector<64x128xf32>
    %155 = arith.addf %108, %154 : vector<64x128xf32>
    %c0_79 = arith.constant 0 : index
    %c128 = arith.constant 128 : index
    %c0_80 = arith.constant 0 : index
    %156 = vector.load %arg10[%c0_79, %c128, %c0_80] : memref<2x256x128xf32, #tpu.memory_space<vmem>>, vector<1x64x128xf32>
    %157 = vector.shape_cast %156 : vector<1x64x128xf32> to vector<64x128xf32>
    %158 = vector.shape_cast %155 : vector<64x128xf32> to vector<1x64x128xf32>
    tpu.vector_store %arg10[%c0_79, %c128, %c0_80], %158 {strides = array<i32>} : memref<2x256x128xf32, #tpu.memory_space<vmem>>, vector<1x64x128xf32>,
    %159 = arith.truncf %155 : vector<64x128xf32> to vector<64x128xbf16>
    %c3 = arith.constant 3 : index
    %c0_81 = arith.constant 0 : index
    %c0_82 = arith.constant 0 : index
    %160 = vector.load %arg6[%c3, %c0_81, %c0_82] : memref<4x80x64xbf16, #tpu.memory_space<vmem>>, vector<1x80x64xbf16>
    %161 = vector.shape_cast %160 : vector<1x80x64xbf16> to vector<80x64xbf16>
    %cst_83 = arith.constant dense<0.000000e+00> : vector<80x128xf32>
    %162 = tpu.matmul %161, %159, %cst_83 {dimension_numbers = #tpu.dot_dimension_numbers<[1], [0], [0], [1], [0, 0, 1, 1], [], []>} : vector<80x64xbf16>, vector<64x128xbf16>, vector<80x128xf32> -> vector<80x128xf32>
    %163 = vector.extract_strided_slice %162 {offsets = [0, 0], sizes = [16, 128], strides = [1, 1]} : vector<80x128xf32> to vector<16x128xf32>
    %164 = vector.extract_strided_slice %162 {offsets = [16, 0], sizes = [64, 128], strides = [1, 1]} : vector<80x128xf32> to vector<64x128xf32>
    %c3_84 = arith.constant 3 : index
    %c0_85 = arith.constant 0 : index
    %c0_86 = arith.constant 0 : index
    %165 = vector.load %arg7[%c3_84, %c0_85, %c0_86] : memref<4x64x1xf32, #tpu.memory_space<vmem>>, vector<1x64x1xf32>
    %166 = vector.shape_cast %165 : vector<1x64x1xf32> to vector<64x1xf32>
    %167 = vector.broadcast %166 : vector<64x1xf32> to vector<64x128xf32>
    %168 = arith.addf %164, %167 : vector<64x128xf32>
    %169 = arith.truncf %163 : vector<16x128xf32> to vector<16x128xbf16>
    %cst_87 = arith.constant dense<0.000000e+00> : vector<128x128xf32>
    %170 = tpu.matmul %169, %169, %cst_87 {dimension_numbers = #tpu.dot_dimension_numbers<[0], [0], [1], [1], [0, 1, 1, 1], [], []>} : vector<16x128xbf16>, vector<16x128xbf16>, vector<128x128xf32> -> vector<128x128xf32>
    %cst_88 = arith.constant dense<0xFF800000> : vector<128xf32>
    %171 = vector.multi_reduction <maximumf>, %170, %cst_88 [1] : vector<128x128xf32> to vector<128xf32>
    %172 = vector.shape_cast %171 : vector<128xf32> to vector<128x1xf32>
    %173 = vector.broadcast %172 : vector<128x1xf32> to vector<128x128xf32>
    %174 = arith.subf %170, %173 : vector<128x128xf32>
    %175 = math.exp %174 : vector<128x128xf32>
    %cst_89 = arith.constant dense<0.000000e+00> : vector<128xf32>
    %176 = vector.multi_reduction <add>, %175, %cst_89 [1] : vector<128x128xf32> to vector<128xf32>
    %177 = vector.shape_cast %176 : vector<128xf32> to vector<128x1xf32>
    %178 = tpu.reciprocal %177 {approx = true} : vector<128x1xf32> -> vector<128x1xf32>
    %179 = vector.broadcast %178 : vector<128x1xf32> to vector<128x128xf32>
    %180 = arith.mulf %175, %179 : vector<128x128xf32>
    %cst_90 = arith.constant dense<0.000000e+00> : vector<128xf32>
    %181 = vector.multi_reduction <add>, %180, %cst_90 [0] : vector<128x128xf32> to vector<128xf32>
    %182 = vector.shape_cast %181 : vector<128xf32> to vector<1x128xf32>
    %cst_91 = arith.constant 9.99999971E-10 : f32
    %183 = vector.broadcast %cst_91 : f32 to vector<1x128xf32>
    %184 = arith.addf %183, %182 : vector<1x128xf32>
    %185 = tpu.reciprocal %184 {approx = true} : vector<1x128xf32> -> vector<1x128xf32>
    %186 = arith.truncf %168 : vector<64x128xf32> to vector<64x128xbf16>
    %187 = arith.truncf %180 : vector<128x128xf32> to vector<128x128xbf16>
    %cst_92 = arith.constant dense<0.000000e+00> : vector<64x128xf32>
    %188 = tpu.matmul %186, %187, %cst_92 {dimension_numbers = #tpu.dot_dimension_numbers<[1], [0], [0], [1], [0, 0, 1, 1], [], []>} : vector<64x128xbf16>, vector<128x128xbf16>, vector<64x128xf32> -> vector<64x128xf32>
    %189 = vector.broadcast %185 : vector<1x128xf32> to vector<64x128xf32>
    %190 = arith.mulf %188, %189 : vector<64x128xf32>
    %191 = arith.subf %155, %190 : vector<64x128xf32>
    %192 = arith.truncf %191 : vector<64x128xf32> to vector<64x128xbf16>
    %c3_93 = arith.constant 3 : index
    %c0_94 = arith.constant 0 : index
    %c0_95 = arith.constant 0 : index
    %193 = vector.load %arg8[%c3_93, %c0_94, %c0_95] : memref<4x64x64xbf16, #tpu.memory_space<vmem>>, vector<1x64x64xbf16>
    %194 = vector.shape_cast %193 : vector<1x64x64xbf16> to vector<64x64xbf16>
    %cst_96 = arith.constant dense<0.000000e+00> : vector<64x128xf32>
    %195 = tpu.matmul %194, %192, %cst_96 {dimension_numbers = #tpu.dot_dimension_numbers<[1], [0], [0], [1], [0, 0, 1, 1], [], []>} : vector<64x64xbf16>, vector<64x128xbf16>, vector<64x128xf32> -> vector<64x128xf32>
    %c3_97 = arith.constant 3 : index
    %c0_98 = arith.constant 0 : index
    %c0_99 = arith.constant 0 : index
    %196 = vector.load %arg9[%c3_97, %c0_98, %c0_99] : memref<4x64x1xf32, #tpu.memory_space<vmem>>, vector<1x64x1xf32>
    %197 = vector.shape_cast %196 : vector<1x64x1xf32> to vector<64x1xf32>
    %198 = vector.broadcast %197 : vector<64x1xf32> to vector<64x128xf32>
    %199 = arith.addf %195, %198 : vector<64x128xf32>
    %cst_100 = arith.constant 0.000000e+00 : f32
    %200 = vector.broadcast %cst_100 : f32 to vector<64x128xf32>
    %201 = arith.maximumf %199, %200 : vector<64x128xf32>
    %202 = arith.addf %155, %201 : vector<64x128xf32>
    %c0_101 = arith.constant 0 : index
    %c192 = arith.constant 192 : index
    %c0_102 = arith.constant 0 : index
    %203 = vector.load %arg10[%c0_101, %c192, %c0_102] : memref<2x256x128xf32, #tpu.memory_space<vmem>>, vector<1x64x128xf32>
    %204 = vector.shape_cast %203 : vector<1x64x128xf32> to vector<64x128xf32>
    %205 = vector.shape_cast %202 : vector<64x128xf32> to vector<1x64x128xf32>
    tpu.vector_store %arg10[%c0_101, %c192, %c0_102], %205 {strides = array<i32>} : memref<2x256x128xf32, #tpu.memory_space<vmem>>, vector<1x64x128xf32>,
    %c1_103 = arith.constant 1 : index
    %c0_104 = arith.constant 0 : index
    %c0_105 = arith.constant 0 : index
    %206 = vector.load %arg1[%c1_103, %c0_104, %c0_105] : memref<2x64x128xf32, #tpu.memory_space<vmem>>, vector<1x64x128xf32>
    %207 = vector.shape_cast %206 : vector<1x64x128xf32> to vector<64x128xf32>
    %c0_106 = arith.constant 0 : index
    %c0_107 = arith.constant 0 : index
    %208 = vector.load %arg2[%c0_106, %c0_107] : memref<64x64xbf16, #tpu.memory_space<vmem>>, vector<64x64xbf16>
    %209 = arith.truncf %207 : vector<64x128xf32> to vector<64x128xbf16>
    %cst_108 = arith.constant dense<0.000000e+00> : vector<64x128xf32>
    %210 = tpu.matmul %208, %209, %cst_108 {dimension_numbers = #tpu.dot_dimension_numbers<[1], [0], [0], [1], [0, 0, 1, 1], [], []>} : vector<64x64xbf16>, vector<64x128xbf16>, vector<64x128xf32> -> vector<64x128xf32>
    %c0_109 = arith.constant 0 : index
    %c0_110 = arith.constant 0 : index
    %211 = vector.load %arg3[%c0_109, %c0_110] : memref<64x1xf32, #tpu.memory_space<vmem>>, vector<64x1xf32>
    %212 = vector.broadcast %211 : vector<64x1xf32> to vector<64x128xf32>
    %213 = arith.addf %210, %212 : vector<64x128xf32>
    %cst_111 = arith.constant 0.000000e+00 : f32
    %214 = vector.broadcast %cst_111 : f32 to vector<64x128xf32>
    %215 = arith.maximumf %213, %214 : vector<64x128xf32>
    %c0_112 = arith.constant 0 : index
    %c0_113 = arith.constant 0 : index
    %216 = vector.load %arg4[%c0_112, %c0_113] : memref<64x64xbf16, #tpu.memory_space<vmem>>, vector<64x64xbf16>
    %217 = arith.truncf %215 : vector<64x128xf32> to vector<64x128xbf16>
    %cst_114 = arith.constant dense<0.000000e+00> : vector<64x128xf32>
    %218 = tpu.matmul %216, %217, %cst_114 {dimension_numbers = #tpu.dot_dimension_numbers<[1], [0], [0], [1], [0, 0, 1, 1], [], []>} : vector<64x64xbf16>, vector<64x128xbf16>, vector<64x128xf32> -> vector<64x128xf32>
    %c0_115 = arith.constant 0 : index
    %c0_116 = arith.constant 0 : index
    %219 = vector.load %arg5[%c0_115, %c0_116] : memref<64x1xf32, #tpu.memory_space<vmem>>, vector<64x1xf32>
    %220 = vector.broadcast %219 : vector<64x1xf32> to vector<64x128xf32>
    %221 = arith.addf %218, %220 : vector<64x128xf32>
    %cst_117 = arith.constant 0.000000e+00 : f32
    %222 = vector.broadcast %cst_117 : f32 to vector<64x128xf32>
    %223 = arith.maximumf %221, %222 : vector<64x128xf32>
    %224 = arith.truncf %223 : vector<64x128xf32> to vector<64x128xbf16>
    %c0_118 = arith.constant 0 : index
    %c0_119 = arith.constant 0 : index
    %c0_120 = arith.constant 0 : index
    %225 = vector.load %arg6[%c0_118, %c0_119, %c0_120] : memref<4x80x64xbf16, #tpu.memory_space<vmem>>, vector<1x80x64xbf16>
    %226 = vector.shape_cast %225 : vector<1x80x64xbf16> to vector<80x64xbf16>
    %cst_121 = arith.constant dense<0.000000e+00> : vector<80x128xf32>
    %227 = tpu.matmul %226, %224, %cst_121 {dimension_numbers = #tpu.dot_dimension_numbers<[1], [0], [0], [1], [0, 0, 1, 1], [], []>} : vector<80x64xbf16>, vector<64x128xbf16>, vector<80x128xf32> -> vector<80x128xf32>
    %228 = vector.extract_strided_slice %227 {offsets = [0, 0], sizes = [16, 128], strides = [1, 1]} : vector<80x128xf32> to vector<16x128xf32>
    %229 = vector.extract_strided_slice %227 {offsets = [16, 0], sizes = [64, 128], strides = [1, 1]} : vector<80x128xf32> to vector<64x128xf32>
    %c0_122 = arith.constant 0 : index
    %c0_123 = arith.constant 0 : index
    %c0_124 = arith.constant 0 : index
    %230 = vector.load %arg7[%c0_122, %c0_123, %c0_124] : memref<4x64x1xf32, #tpu.memory_space<vmem>>, vector<1x64x1xf32>
    %231 = vector.shape_cast %230 : vector<1x64x1xf32> to vector<64x1xf32>
    %232 = vector.broadcast %231 : vector<64x1xf32> to vector<64x128xf32>
    %233 = arith.addf %229, %232 : vector<64x128xf32>
    %234 = arith.truncf %228 : vector<16x128xf32> to vector<16x128xbf16>
    %cst_125 = arith.constant dense<0.000000e+00> : vector<128x128xf32>
    %235 = tpu.matmul %234, %234, %cst_125 {dimension_numbers = #tpu.dot_dimension_numbers<[0], [0], [1], [1], [0, 1, 1, 1], [], []>} : vector<16x128xbf16>, vector<16x128xbf16>, vector<128x128xf32> -> vector<128x128xf32>
    %cst_126 = arith.constant dense<0xFF800000> : vector<128xf32>
    %236 = vector.multi_reduction <maximumf>, %235, %cst_126 [1] : vector<128x128xf32> to vector<128xf32>
    %237 = vector.shape_cast %236 : vector<128xf32> to vector<128x1xf32>
    %238 = vector.broadcast %237 : vector<128x1xf32> to vector<128x128xf32>
    %239 = arith.subf %235, %238 : vector<128x128xf32>
    %240 = math.exp %239 : vector<128x128xf32>
    %cst_127 = arith.constant dense<0.000000e+00> : vector<128xf32>
    %241 = vector.multi_reduction <add>, %240, %cst_127 [1] : vector<128x128xf32> to vector<128xf32>
    %242 = vector.shape_cast %241 : vector<128xf32> to vector<128x1xf32>
    %243 = tpu.reciprocal %242 {approx = true} : vector<128x1xf32> -> vector<128x1xf32>
    %244 = vector.broadcast %243 : vector<128x1xf32> to vector<128x128xf32>
    %245 = arith.mulf %240, %244 : vector<128x128xf32>
    %cst_128 = arith.constant dense<0.000000e+00> : vector<128xf32>
    %246 = vector.multi_reduction <add>, %245, %cst_128 [0] : vector<128x128xf32> to vector<128xf32>
    %247 = vector.shape_cast %246 : vector<128xf32> to vector<1x128xf32>
    %cst_129 = arith.constant 9.99999971E-10 : f32
    %248 = vector.broadcast %cst_129 : f32 to vector<1x128xf32>
    %249 = arith.addf %248, %247 : vector<1x128xf32>
    %250 = tpu.reciprocal %249 {approx = true} : vector<1x128xf32> -> vector<1x128xf32>
    %251 = arith.truncf %233 : vector<64x128xf32> to vector<64x128xbf16>
    %252 = arith.truncf %245 : vector<128x128xf32> to vector<128x128xbf16>
    %cst_130 = arith.constant dense<0.000000e+00> : vector<64x128xf32>
    %253 = tpu.matmul %251, %252, %cst_130 {dimension_numbers = #tpu.dot_dimension_numbers<[1], [0], [0], [1], [0, 0, 1, 1], [], []>} : vector<64x128xbf16>, vector<128x128xbf16>, vector<64x128xf32> -> vector<64x128xf32>
    %254 = vector.broadcast %250 : vector<1x128xf32> to vector<64x128xf32>
    %255 = arith.mulf %253, %254 : vector<64x128xf32>
    %256 = arith.subf %223, %255 : vector<64x128xf32>
    %257 = arith.truncf %256 : vector<64x128xf32> to vector<64x128xbf16>
    %c0_131 = arith.constant 0 : index
    %c0_132 = arith.constant 0 : index
    %c0_133 = arith.constant 0 : index
    %258 = vector.load %arg8[%c0_131, %c0_132, %c0_133] : memref<4x64x64xbf16, #tpu.memory_space<vmem>>, vector<1x64x64xbf16>
    %259 = vector.shape_cast %258 : vector<1x64x64xbf16> to vector<64x64xbf16>
    %cst_134 = arith.constant dense<0.000000e+00> : vector<64x128xf32>
    %260 = tpu.matmul %259, %257, %cst_134 {dimension_numbers = #tpu.dot_dimension_numbers<[1], [0], [0], [1], [0, 0, 1, 1], [], []>} : vector<64x64xbf16>, vector<64x128xbf16>, vector<64x128xf32> -> vector<64x128xf32>
    %c0_135 = arith.constant 0 : index
    %c0_136 = arith.constant 0 : index
    %c0_137 = arith.constant 0 : index
    %261 = vector.load %arg9[%c0_135, %c0_136, %c0_137] : memref<4x64x1xf32, #tpu.memory_space<vmem>>, vector<1x64x1xf32>
    %262 = vector.shape_cast %261 : vector<1x64x1xf32> to vector<64x1xf32>
    %263 = vector.broadcast %262 : vector<64x1xf32> to vector<64x128xf32>
    %264 = arith.addf %260, %263 : vector<64x128xf32>
    %cst_138 = arith.constant 0.000000e+00 : f32
    %265 = vector.broadcast %cst_138 : f32 to vector<64x128xf32>
    %266 = arith.maximumf %264, %265 : vector<64x128xf32>
    %267 = arith.addf %223, %266 : vector<64x128xf32>
    %c1_139 = arith.constant 1 : index
    %c0_140 = arith.constant 0 : index
    %c0_141 = arith.constant 0 : index
    %268 = vector.load %arg10[%c1_139, %c0_140, %c0_141] : memref<2x256x128xf32, #tpu.memory_space<vmem>>, vector<1x64x128xf32>
    %269 = vector.shape_cast %268 : vector<1x64x128xf32> to vector<64x128xf32>
    %270 = vector.shape_cast %267 : vector<64x128xf32> to vector<1x64x128xf32>
    tpu.vector_store %arg10[%c1_139, %c0_140, %c0_141], %270 {strides = array<i32>} : memref<2x256x128xf32, #tpu.memory_space<vmem>>, vector<1x64x128xf32>,
    %271 = arith.truncf %267 : vector<64x128xf32> to vector<64x128xbf16>
    %c1_142 = arith.constant 1 : index
    %c0_143 = arith.constant 0 : index
    %c0_144 = arith.constant 0 : index
    %272 = vector.load %arg6[%c1_142, %c0_143, %c0_144] : memref<4x80x64xbf16, #tpu.memory_space<vmem>>, vector<1x80x64xbf16>
    %273 = vector.shape_cast %272 : vector<1x80x64xbf16> to vector<80x64xbf16>
    %cst_145 = arith.constant dense<0.000000e+00> : vector<80x128xf32>
    %274 = tpu.matmul %273, %271, %cst_145 {dimension_numbers = #tpu.dot_dimension_numbers<[1], [0], [0], [1], [0, 0, 1, 1], [], []>} : vector<80x64xbf16>, vector<64x128xbf16>, vector<80x128xf32> -> vector<80x128xf32>
    %275 = vector.extract_strided_slice %274 {offsets = [0, 0], sizes = [16, 128], strides = [1, 1]} : vector<80x128xf32> to vector<16x128xf32>
    %276 = vector.extract_strided_slice %274 {offsets = [16, 0], sizes = [64, 128], strides = [1, 1]} : vector<80x128xf32> to vector<64x128xf32>
    %c1_146 = arith.constant 1 : index
    %c0_147 = arith.constant 0 : index
    %c0_148 = arith.constant 0 : index
    %277 = vector.load %arg7[%c1_146, %c0_147, %c0_148] : memref<4x64x1xf32, #tpu.memory_space<vmem>>, vector<1x64x1xf32>
    %278 = vector.shape_cast %277 : vector<1x64x1xf32> to vector<64x1xf32>
    %279 = vector.broadcast %278 : vector<64x1xf32> to vector<64x128xf32>
    %280 = arith.addf %276, %279 : vector<64x128xf32>
    %281 = arith.truncf %275 : vector<16x128xf32> to vector<16x128xbf16>
    %cst_149 = arith.constant dense<0.000000e+00> : vector<128x128xf32>
    %282 = tpu.matmul %281, %281, %cst_149 {dimension_numbers = #tpu.dot_dimension_numbers<[0], [0], [1], [1], [0, 1, 1, 1], [], []>} : vector<16x128xbf16>, vector<16x128xbf16>, vector<128x128xf32> -> vector<128x128xf32>
    %cst_150 = arith.constant dense<0xFF800000> : vector<128xf32>
    %283 = vector.multi_reduction <maximumf>, %282, %cst_150 [1] : vector<128x128xf32> to vector<128xf32>
    %284 = vector.shape_cast %283 : vector<128xf32> to vector<128x1xf32>
    %285 = vector.broadcast %284 : vector<128x1xf32> to vector<128x128xf32>
    %286 = arith.subf %282, %285 : vector<128x128xf32>
    %287 = math.exp %286 : vector<128x128xf32>
    %cst_151 = arith.constant dense<0.000000e+00> : vector<128xf32>
    %288 = vector.multi_reduction <add>, %287, %cst_151 [1] : vector<128x128xf32> to vector<128xf32>
    %289 = vector.shape_cast %288 : vector<128xf32> to vector<128x1xf32>
    %290 = tpu.reciprocal %289 {approx = true} : vector<128x1xf32> -> vector<128x1xf32>
    %291 = vector.broadcast %290 : vector<128x1xf32> to vector<128x128xf32>
    %292 = arith.mulf %287, %291 : vector<128x128xf32>
    %cst_152 = arith.constant dense<0.000000e+00> : vector<128xf32>
    %293 = vector.multi_reduction <add>, %292, %cst_152 [0] : vector<128x128xf32> to vector<128xf32>
    %294 = vector.shape_cast %293 : vector<128xf32> to vector<1x128xf32>
    %cst_153 = arith.constant 9.99999971E-10 : f32
    %295 = vector.broadcast %cst_153 : f32 to vector<1x128xf32>
    %296 = arith.addf %295, %294 : vector<1x128xf32>
    %297 = tpu.reciprocal %296 {approx = true} : vector<1x128xf32> -> vector<1x128xf32>
    %298 = arith.truncf %280 : vector<64x128xf32> to vector<64x128xbf16>
    %299 = arith.truncf %292 : vector<128x128xf32> to vector<128x128xbf16>
    %cst_154 = arith.constant dense<0.000000e+00> : vector<64x128xf32>
    %300 = tpu.matmul %298, %299, %cst_154 {dimension_numbers = #tpu.dot_dimension_numbers<[1], [0], [0], [1], [0, 0, 1, 1], [], []>} : vector<64x128xbf16>, vector<128x128xbf16>, vector<64x128xf32> -> vector<64x128xf32>
    %301 = vector.broadcast %297 : vector<1x128xf32> to vector<64x128xf32>
    %302 = arith.mulf %300, %301 : vector<64x128xf32>
    %303 = arith.subf %267, %302 : vector<64x128xf32>
    %304 = arith.truncf %303 : vector<64x128xf32> to vector<64x128xbf16>
    %c1_155 = arith.constant 1 : index
    %c0_156 = arith.constant 0 : index
    %c0_157 = arith.constant 0 : index
    %305 = vector.load %arg8[%c1_155, %c0_156, %c0_157] : memref<4x64x64xbf16, #tpu.memory_space<vmem>>, vector<1x64x64xbf16>
    %306 = vector.shape_cast %305 : vector<1x64x64xbf16> to vector<64x64xbf16>
    %cst_158 = arith.constant dense<0.000000e+00> : vector<64x128xf32>
    %307 = tpu.matmul %306, %304, %cst_158 {dimension_numbers = #tpu.dot_dimension_numbers<[1], [0], [0], [1], [0, 0, 1, 1], [], []>} : vector<64x64xbf16>, vector<64x128xbf16>, vector<64x128xf32> -> vector<64x128xf32>
    %c1_159 = arith.constant 1 : index
    %c0_160 = arith.constant 0 : index
    %c0_161 = arith.constant 0 : index
    %308 = vector.load %arg9[%c1_159, %c0_160, %c0_161] : memref<4x64x1xf32, #tpu.memory_space<vmem>>, vector<1x64x1xf32>
    %309 = vector.shape_cast %308 : vector<1x64x1xf32> to vector<64x1xf32>
    %310 = vector.broadcast %309 : vector<64x1xf32> to vector<64x128xf32>
    %311 = arith.addf %307, %310 : vector<64x128xf32>
    %cst_162 = arith.constant 0.000000e+00 : f32
    %312 = vector.broadcast %cst_162 : f32 to vector<64x128xf32>
    %313 = arith.maximumf %311, %312 : vector<64x128xf32>
    %314 = arith.addf %267, %313 : vector<64x128xf32>
    %c1_163 = arith.constant 1 : index
    %c64_164 = arith.constant 64 : index
    %c0_165 = arith.constant 0 : index
    %315 = vector.load %arg10[%c1_163, %c64_164, %c0_165] : memref<2x256x128xf32, #tpu.memory_space<vmem>>, vector<1x64x128xf32>
    %316 = vector.shape_cast %315 : vector<1x64x128xf32> to vector<64x128xf32>
    %317 = vector.shape_cast %314 : vector<64x128xf32> to vector<1x64x128xf32>
    tpu.vector_store %arg10[%c1_163, %c64_164, %c0_165], %317 {strides = array<i32>} : memref<2x256x128xf32, #tpu.memory_space<vmem>>, vector<1x64x128xf32>,
    %318 = arith.truncf %314 : vector<64x128xf32> to vector<64x128xbf16>
    %c2_166 = arith.constant 2 : index
    %c0_167 = arith.constant 0 : index
    %c0_168 = arith.constant 0 : index
    %319 = vector.load %arg6[%c2_166, %c0_167, %c0_168] : memref<4x80x64xbf16, #tpu.memory_space<vmem>>, vector<1x80x64xbf16>
    %320 = vector.shape_cast %319 : vector<1x80x64xbf16> to vector<80x64xbf16>
    %cst_169 = arith.constant dense<0.000000e+00> : vector<80x128xf32>
    %321 = tpu.matmul %320, %318, %cst_169 {dimension_numbers = #tpu.dot_dimension_numbers<[1], [0], [0], [1], [0, 0, 1, 1], [], []>} : vector<80x64xbf16>, vector<64x128xbf16>, vector<80x128xf32> -> vector<80x128xf32>
    %322 = vector.extract_strided_slice %321 {offsets = [0, 0], sizes = [16, 128], strides = [1, 1]} : vector<80x128xf32> to vector<16x128xf32>
    %323 = vector.extract_strided_slice %321 {offsets = [16, 0], sizes = [64, 128], strides = [1, 1]} : vector<80x128xf32> to vector<64x128xf32>
    %c2_170 = arith.constant 2 : index
    %c0_171 = arith.constant 0 : index
    %c0_172 = arith.constant 0 : index
    %324 = vector.load %arg7[%c2_170, %c0_171, %c0_172] : memref<4x64x1xf32, #tpu.memory_space<vmem>>, vector<1x64x1xf32>
    %325 = vector.shape_cast %324 : vector<1x64x1xf32> to vector<64x1xf32>
    %326 = vector.broadcast %325 : vector<64x1xf32> to vector<64x128xf32>
    %327 = arith.addf %323, %326 : vector<64x128xf32>
    %328 = arith.truncf %322 : vector<16x128xf32> to vector<16x128xbf16>
    %cst_173 = arith.constant dense<0.000000e+00> : vector<128x128xf32>
    %329 = tpu.matmul %328, %328, %cst_173 {dimension_numbers = #tpu.dot_dimension_numbers<[0], [0], [1], [1], [0, 1, 1, 1], [], []>} : vector<16x128xbf16>, vector<16x128xbf16>, vector<128x128xf32> -> vector<128x128xf32>
    %cst_174 = arith.constant dense<0xFF800000> : vector<128xf32>
    %330 = vector.multi_reduction <maximumf>, %329, %cst_174 [1] : vector<128x128xf32> to vector<128xf32>
    %331 = vector.shape_cast %330 : vector<128xf32> to vector<128x1xf32>
    %332 = vector.broadcast %331 : vector<128x1xf32> to vector<128x128xf32>
    %333 = arith.subf %329, %332 : vector<128x128xf32>
    %334 = math.exp %333 : vector<128x128xf32>
    %cst_175 = arith.constant dense<0.000000e+00> : vector<128xf32>
    %335 = vector.multi_reduction <add>, %334, %cst_175 [1] : vector<128x128xf32> to vector<128xf32>
    %336 = vector.shape_cast %335 : vector<128xf32> to vector<128x1xf32>
    %337 = tpu.reciprocal %336 {approx = true} : vector<128x1xf32> -> vector<128x1xf32>
    %338 = vector.broadcast %337 : vector<128x1xf32> to vector<128x128xf32>
    %339 = arith.mulf %334, %338 : vector<128x128xf32>
    %cst_176 = arith.constant dense<0.000000e+00> : vector<128xf32>
    %340 = vector.multi_reduction <add>, %339, %cst_176 [0] : vector<128x128xf32> to vector<128xf32>
    %341 = vector.shape_cast %340 : vector<128xf32> to vector<1x128xf32>
    %cst_177 = arith.constant 9.99999971E-10 : f32
    %342 = vector.broadcast %cst_177 : f32 to vector<1x128xf32>
    %343 = arith.addf %342, %341 : vector<1x128xf32>
    %344 = tpu.reciprocal %343 {approx = true} : vector<1x128xf32> -> vector<1x128xf32>
    %345 = arith.truncf %327 : vector<64x128xf32> to vector<64x128xbf16>
    %346 = arith.truncf %339 : vector<128x128xf32> to vector<128x128xbf16>
    %cst_178 = arith.constant dense<0.000000e+00> : vector<64x128xf32>
    %347 = tpu.matmul %345, %346, %cst_178 {dimension_numbers = #tpu.dot_dimension_numbers<[1], [0], [0], [1], [0, 0, 1, 1], [], []>} : vector<64x128xbf16>, vector<128x128xbf16>, vector<64x128xf32> -> vector<64x128xf32>
    %348 = vector.broadcast %344 : vector<1x128xf32> to vector<64x128xf32>
    %349 = arith.mulf %347, %348 : vector<64x128xf32>
    %350 = arith.subf %314, %349 : vector<64x128xf32>
    %351 = arith.truncf %350 : vector<64x128xf32> to vector<64x128xbf16>
    %c2_179 = arith.constant 2 : index
    %c0_180 = arith.constant 0 : index
    %c0_181 = arith.constant 0 : index
    %352 = vector.load %arg8[%c2_179, %c0_180, %c0_181] : memref<4x64x64xbf16, #tpu.memory_space<vmem>>, vector<1x64x64xbf16>
    %353 = vector.shape_cast %352 : vector<1x64x64xbf16> to vector<64x64xbf16>
    %cst_182 = arith.constant dense<0.000000e+00> : vector<64x128xf32>
    %354 = tpu.matmul %353, %351, %cst_182 {dimension_numbers = #tpu.dot_dimension_numbers<[1], [0], [0], [1], [0, 0, 1, 1], [], []>} : vector<64x64xbf16>, vector<64x128xbf16>, vector<64x128xf32> -> vector<64x128xf32>
    %c2_183 = arith.constant 2 : index
    %c0_184 = arith.constant 0 : index
    %c0_185 = arith.constant 0 : index
    %355 = vector.load %arg9[%c2_183, %c0_184, %c0_185] : memref<4x64x1xf32, #tpu.memory_space<vmem>>, vector<1x64x1xf32>
    %356 = vector.shape_cast %355 : vector<1x64x1xf32> to vector<64x1xf32>
    %357 = vector.broadcast %356 : vector<64x1xf32> to vector<64x128xf32>
    %358 = arith.addf %354, %357 : vector<64x128xf32>
    %cst_186 = arith.constant 0.000000e+00 : f32
    %359 = vector.broadcast %cst_186 : f32 to vector<64x128xf32>
    %360 = arith.maximumf %358, %359 : vector<64x128xf32>
    %361 = arith.addf %314, %360 : vector<64x128xf32>
    %c1_187 = arith.constant 1 : index
    %c128_188 = arith.constant 128 : index
    %c0_189 = arith.constant 0 : index
    %362 = vector.load %arg10[%c1_187, %c128_188, %c0_189] : memref<2x256x128xf32, #tpu.memory_space<vmem>>, vector<1x64x128xf32>
    %363 = vector.shape_cast %362 : vector<1x64x128xf32> to vector<64x128xf32>
    %364 = vector.shape_cast %361 : vector<64x128xf32> to vector<1x64x128xf32>
    tpu.vector_store %arg10[%c1_187, %c128_188, %c0_189], %364 {strides = array<i32>} : memref<2x256x128xf32, #tpu.memory_space<vmem>>, vector<1x64x128xf32>,
    %365 = arith.truncf %361 : vector<64x128xf32> to vector<64x128xbf16>
    %c3_190 = arith.constant 3 : index
    %c0_191 = arith.constant 0 : index
    %c0_192 = arith.constant 0 : index
    %366 = vector.load %arg6[%c3_190, %c0_191, %c0_192] : memref<4x80x64xbf16, #tpu.memory_space<vmem>>, vector<1x80x64xbf16>
    %367 = vector.shape_cast %366 : vector<1x80x64xbf16> to vector<80x64xbf16>
    %cst_193 = arith.constant dense<0.000000e+00> : vector<80x128xf32>
    %368 = tpu.matmul %367, %365, %cst_193 {dimension_numbers = #tpu.dot_dimension_numbers<[1], [0], [0], [1], [0, 0, 1, 1], [], []>} : vector<80x64xbf16>, vector<64x128xbf16>, vector<80x128xf32> -> vector<80x128xf32>
    %369 = vector.extract_strided_slice %368 {offsets = [0, 0], sizes = [16, 128], strides = [1, 1]} : vector<80x128xf32> to vector<16x128xf32>
    %370 = vector.extract_strided_slice %368 {offsets = [16, 0], sizes = [64, 128], strides = [1, 1]} : vector<80x128xf32> to vector<64x128xf32>
    %c3_194 = arith.constant 3 : index
    %c0_195 = arith.constant 0 : index
    %c0_196 = arith.constant 0 : index
    %371 = vector.load %arg7[%c3_194, %c0_195, %c0_196] : memref<4x64x1xf32, #tpu.memory_space<vmem>>, vector<1x64x1xf32>
    %372 = vector.shape_cast %371 : vector<1x64x1xf32> to vector<64x1xf32>
    %373 = vector.broadcast %372 : vector<64x1xf32> to vector<64x128xf32>
    %374 = arith.addf %370, %373 : vector<64x128xf32>
    %375 = arith.truncf %369 : vector<16x128xf32> to vector<16x128xbf16>
    %cst_197 = arith.constant dense<0.000000e+00> : vector<128x128xf32>
    %376 = tpu.matmul %375, %375, %cst_197 {dimension_numbers = #tpu.dot_dimension_numbers<[0], [0], [1], [1], [0, 1, 1, 1], [], []>} : vector<16x128xbf16>, vector<16x128xbf16>, vector<128x128xf32> -> vector<128x128xf32>
    %cst_198 = arith.constant dense<0xFF800000> : vector<128xf32>
    %377 = vector.multi_reduction <maximumf>, %376, %cst_198 [1] : vector<128x128xf32> to vector<128xf32>
    %378 = vector.shape_cast %377 : vector<128xf32> to vector<128x1xf32>
    %379 = vector.broadcast %378 : vector<128x1xf32> to vector<128x128xf32>
    %380 = arith.subf %376, %379 : vector<128x128xf32>
    %381 = math.exp %380 : vector<128x128xf32>
    %cst_199 = arith.constant dense<0.000000e+00> : vector<128xf32>
    %382 = vector.multi_reduction <add>, %381, %cst_199 [1] : vector<128x128xf32> to vector<128xf32>
    %383 = vector.shape_cast %382 : vector<128xf32> to vector<128x1xf32>
    %384 = tpu.reciprocal %383 {approx = true} : vector<128x1xf32> -> vector<128x1xf32>
    %385 = vector.broadcast %384 : vector<128x1xf32> to vector<128x128xf32>
    %386 = arith.mulf %381, %385 : vector<128x128xf32>
    %cst_200 = arith.constant dense<0.000000e+00> : vector<128xf32>
    %387 = vector.multi_reduction <add>, %386, %cst_200 [0] : vector<128x128xf32> to vector<128xf32>
    %388 = vector.shape_cast %387 : vector<128xf32> to vector<1x128xf32>
    %cst_201 = arith.constant 9.99999971E-10 : f32
    %389 = vector.broadcast %cst_201 : f32 to vector<1x128xf32>
    %390 = arith.addf %389, %388 : vector<1x128xf32>
    %391 = tpu.reciprocal %390 {approx = true} : vector<1x128xf32> -> vector<1x128xf32>
    %392 = arith.truncf %374 : vector<64x128xf32> to vector<64x128xbf16>
    %393 = arith.truncf %386 : vector<128x128xf32> to vector<128x128xbf16>
    %cst_202 = arith.constant dense<0.000000e+00> : vector<64x128xf32>
    %394 = tpu.matmul %392, %393, %cst_202 {dimension_numbers = #tpu.dot_dimension_numbers<[1], [0], [0], [1], [0, 0, 1, 1], [], []>} : vector<64x128xbf16>, vector<128x128xbf16>, vector<64x128xf32> -> vector<64x128xf32>
    %395 = vector.broadcast %391 : vector<1x128xf32> to vector<64x128xf32>
    %396 = arith.mulf %394, %395 : vector<64x128xf32>
    %397 = arith.subf %361, %396 : vector<64x128xf32>
    %398 = arith.truncf %397 : vector<64x128xf32> to vector<64x128xbf16>
    %c3_203 = arith.constant 3 : index
    %c0_204 = arith.constant 0 : index
    %c0_205 = arith.constant 0 : index
    %399 = vector.load %arg8[%c3_203, %c0_204, %c0_205] : memref<4x64x64xbf16, #tpu.memory_space<vmem>>, vector<1x64x64xbf16>
    %400 = vector.shape_cast %399 : vector<1x64x64xbf16> to vector<64x64xbf16>
    %cst_206 = arith.constant dense<0.000000e+00> : vector<64x128xf32>
    %401 = tpu.matmul %400, %398, %cst_206 {dimension_numbers = #tpu.dot_dimension_numbers<[1], [0], [0], [1], [0, 0, 1, 1], [], []>} : vector<64x64xbf16>, vector<64x128xbf16>, vector<64x128xf32> -> vector<64x128xf32>
    %c3_207 = arith.constant 3 : index
    %c0_208 = arith.constant 0 : index
    %c0_209 = arith.constant 0 : index
    %402 = vector.load %arg9[%c3_207, %c0_208, %c0_209] : memref<4x64x1xf32, #tpu.memory_space<vmem>>, vector<1x64x1xf32>
    %403 = vector.shape_cast %402 : vector<1x64x1xf32> to vector<64x1xf32>
    %404 = vector.broadcast %403 : vector<64x1xf32> to vector<64x128xf32>
    %405 = arith.addf %401, %404 : vector<64x128xf32>
    %cst_210 = arith.constant 0.000000e+00 : f32
    %406 = vector.broadcast %cst_210 : f32 to vector<64x128xf32>
    %407 = arith.maximumf %405, %406 : vector<64x128xf32>
    %408 = arith.addf %361, %407 : vector<64x128xf32>
    %c1_211 = arith.constant 1 : index
    %c192_212 = arith.constant 192 : index
    %c0_213 = arith.constant 0 : index
    %409 = vector.load %arg10[%c1_211, %c192_212, %c0_213] : memref<2x256x128xf32, #tpu.memory_space<vmem>>, vector<1x64x128xf32>
    %410 = vector.shape_cast %409 : vector<1x64x128xf32> to vector<64x128xf32>
    %411 = vector.shape_cast %408 : vector<64x128xf32> to vector<1x64x128xf32>
    tpu.vector_store %arg10[%c1_211, %c192_212, %c0_213], %411 {strides = array<i32>} : memref<2x256x128xf32, #tpu.memory_space<vmem>>, vector<1x64x128xf32>,
    return
  }
  func.func @transform_0(%arg0: i32) -> (i32, i32, i32) {
    %c0_i32 = arith.constant 0 : i32
    %c0_i32_0 = arith.constant 0 : i32
    %c0_i32_1 = arith.constant 0 : i32
    return %arg0, %c0_i32, %c0_i32_0 : i32, i32, i32
  }
  func.func @transform_1(%arg0: i32) -> (i32, i32) {
    %c0_i32 = arith.constant 0 : i32
    %c0_i32_0 = arith.constant 0 : i32
    %c0_i32_1 = arith.constant 0 : i32
    return %c0_i32, %c0_i32_0 : i32, i32
  }
  func.func @transform_2(%arg0: i32) -> (i32, i32) {
    %c0_i32 = arith.constant 0 : i32
    %c0_i32_0 = arith.constant 0 : i32
    %c0_i32_1 = arith.constant 0 : i32
    return %c0_i32, %c0_i32_0 : i32, i32
  }
  func.func @transform_3(%arg0: i32) -> (i32, i32) {
    %c0_i32 = arith.constant 0 : i32
    %c0_i32_0 = arith.constant 0 : i32
    %c0_i32_1 = arith.constant 0 : i32
    return %c0_i32, %c0_i32_0 : i32, i32
  }
  func.func @transform_4(%arg0: i32) -> (i32, i32) {
    %c0_i32 = arith.constant 0 : i32
    %c0_i32_0 = arith.constant 0 : i32
    %c0_i32_1 = arith.constant 0 : i32
    return %c0_i32, %c0_i32_0 : i32, i32
  }
  func.func @transform_5(%arg0: i32) -> (i32, i32, i32) {
    %c0_i32 = arith.constant 0 : i32
    %c0_i32_0 = arith.constant 0 : i32
    %c0_i32_1 = arith.constant 0 : i32
    %c0_i32_2 = arith.constant 0 : i32
    return %c0_i32, %c0_i32_0, %c0_i32_1 : i32, i32, i32
  }
  func.func @transform_6(%arg0: i32) -> (i32, i32, i32) {
    %c0_i32 = arith.constant 0 : i32
    %c0_i32_0 = arith.constant 0 : i32
    %c0_i32_1 = arith.constant 0 : i32
    %c0_i32_2 = arith.constant 0 : i32
    return %c0_i32, %c0_i32_0, %c0_i32_1 : i32, i32, i32
  }
  func.func @transform_7(%arg0: i32) -> (i32, i32, i32) {
    %c0_i32 = arith.constant 0 : i32
    %c0_i32_0 = arith.constant 0 : i32
    %c0_i32_1 = arith.constant 0 : i32
    %c0_i32_2 = arith.constant 0 : i32
    return %c0_i32, %c0_i32_0, %c0_i32_1 : i32, i32, i32
  }
  func.func @transform_8(%arg0: i32) -> (i32, i32, i32) {
    %c0_i32 = arith.constant 0 : i32
    %c0_i32_0 = arith.constant 0 : i32
    %c0_i32_1 = arith.constant 0 : i32
    %c0_i32_2 = arith.constant 0 : i32
    return %c0_i32, %c0_i32_0, %c0_i32_1 : i32, i32, i32
  }
  func.func @transform_9(%arg0: i32) -> (i32, i32, i32) {
    %c0_i32 = arith.constant 0 : i32
    %c0_i32_0 = arith.constant 0 : i32
    %c0_i32_1 = arith.constant 0 : i32
    return %arg0, %c0_i32, %c0_i32_0 : i32, i32, i32
  }
}

</mosaic_0001>

<llo_original>
// kernel: tpu_custom_call.1
$region0: #{tpu_custom_call.1}
  #allocation0 [shape = 'u32[]', space=smem, size = 0x4, offset = 0x4, fixed_abs, tag = 'smem constant byte address 0x4 - core index']
  #allocation1 [shape = 'u32[144,128]{1,0:T(1,128)}', space=vmem, size = 0x12000, scoped, tag = 'internal scratch']
  %s0 = inlined_call_operand.vmem [shape: f32[4,64,128], index: 0, kind: input, shape index: {}]
  %s1 = inlined_call_operand.vmem [shape: bf16[64,64], index: 1, kind: input, shape index: {}]
  %s2 = inlined_call_operand.vmem [shape: f32[64,1], index: 2, kind: input, shape index: {}]
  %s3 = inlined_call_operand.vmem [shape: bf16[64,64], index: 3, kind: input, shape index: {}]
  %s4 = inlined_call_operand.vmem [shape: f32[64,1], index: 4, kind: input, shape index: {}]
  %s5 = inlined_call_operand.vmem [shape: bf16[4,80,64], index: 5, kind: input, shape index: {}]
  %s6 = inlined_call_operand.vmem [shape: f32[4,64,1], index: 6, kind: input, shape index: {}]
  %s7 = inlined_call_operand.vmem [shape: bf16[4,64,64], index: 7, kind: input, shape index: {}]
  %s8 = inlined_call_operand.vmem [shape: f32[4,64,1], index: 8, kind: input, shape index: {}]
  %s9 = inlined_call_operand.hbm [shape: f32[4,256,128], index: 9, kind: output, shape index: {}]
  %s10 = sld [smem:[#allocation0]]
  $region69: #{tpu_custom_call.1} parent=0
    _
  %s12 = ssub.s32 1, %s10
  %s13 = scalar_select 0, %s12, %s10
  $region1: #{tpu_custom_call.1} parent=0
    #allocation2 [shape = 'u8[524288]{0}', space=vmem, size = 0x80000, scoped, tag = 'output window, operand 0']
    #allocation3 [shape = 's32[2]{0}', space=sflag, size = 0x8, scoped, tag = 'scoped memory for tpu_custom_call.1']
    %14 = vsyncpa [#allocation3], 0
    %s15 = scalar_lea.sflag [#allocation3], 1
    %16 = vsyncpa %s15, 0
    loop: start=0, step=1, limit=4
    $region2: #{tpu_custom_call.1} parent=1 // loop_pre_header
      _
    $region3: #{tpu_custom_call.1} parent=1 // loop_header
      %s18 = sphi 0, %s22
      %p19 = scmp.ge.s32.totalorder %s18, 4
      %s28 = sphi 0, %s30
      %s31 = sphi 0, %s28
      %s32 = sphi 0, %s31
      %s48 = sphi 0, %s32
      %s52 = sphi 0, %s52
      %s54 = sphi 0, %s52
      %s55 = sphi 0, %s54
      %s69 = sphi 0, %s55
      %s73 = sphi 0, %s73
      %s75 = sphi 0, %s73
      %s76 = sphi 0, %s75
      %s90 = sphi 0, %s76
      %s94 = sphi 0, %s94
      %s96 = sphi 0, %s94
      %s97 = sphi 0, %s96
      %s111 = sphi 0, %s97
      %s115 = sphi 0, %s115
      %s117 = sphi 0, %s115
      %s118 = sphi 0, %s117
      %s132 = sphi 0, %s118
      %s136 = sphi 0, %s136
      %s138 = sphi 0, %s136
      %s139 = sphi 0, %s138
      %s153 = sphi 0, %s139
      %s157 = sphi 0, %s157
      %s159 = sphi 0, %s157
      %s160 = sphi 0, %s159
      %s174 = sphi 0, %s160
      %s178 = sphi 0, %s178
      %s180 = sphi 0, %s178
      %s181 = sphi 0, %s180
      %s195 = sphi 0, %s181
      %s199 = sphi 0, %s199
      %s201 = sphi 0, %s199
      %s202 = sphi 0, %s201
      %s216 = sphi 0, %s202
      %s222 = sphi 0, %s224
      %s225 = sphi 0, %s222
      %s226 = sphi 0, %s225
      %s242 = sphi 0, %s226
    $region4: #{tpu_custom_call.1} parent=1 // loop_header_branch
      %21 = sbr.rel (%p19) target = $region8
    $region5: #{tpu_custom_call.1} parent=1 // loop_body
      %s23 = ssub.s32 %s18, 1
      %s24 = ssub.s32 %s18, 2
      %s25 = sadd.s32 %s18, 1
      %s26 = ssub.s32 %s18, %s25
      %p27 = scmp.eq.s32.totalorder %s26, 0
      %s29 = sadd.s32 %s28, 1
      %s30 = scalar_select %p27, %s28, %s29
      %p33 = pneg %p27
      %p34 = scmp.eq.s32.totalorder %s18, 1
      %p35 = por %p33, %p34
      %p36 = scmp.ne.s32.totalorder %s28, %s31
      %p37 = scmp.eq.s32.totalorder %s18, 0
      %p38 = por %p36, %p37
      %p39 = scmp.ne.s32.totalorder %s28, %s31
      %p40 = scmp.eq.s32.totalorder %s23, 1
      %p41 = por %p39, %p40
      %p42 = scmp.ne.s32.totalorder %s31, %s32
      %p43 = scmp.eq.s32.totalorder %s23, 0
      %p44 = por %p42, %p43
      %p45 = scmp.ne.s32.totalorder %s31, %s32
      %p46 = scmp.eq.s32.totalorder %s24, 1
      %p47 = por %p45, %p46
      %p49 = scmp.ne.s32.totalorder %s32, %s48
      %p50 = scmp.eq.s32.totalorder %s24, 0
      %p51 = por %p49, %p50
      %s53 = sadd.s32 %s52, 1
      %p56 = scmp.eq.s32.totalorder %s18, 1
      %p57 = scmp.ne.s32.totalorder %s52, %s54
      %p58 = scmp.eq.s32.totalorder %s18, 0
      %p59 = por %p57, %p58
      %p60 = scmp.ne.s32.totalorder %s52, %s54
      %p61 = scmp.eq.s32.totalorder %s23, 1
      %p62 = por %p60, %p61
      %p63 = scmp.ne.s32.totalorder %s54, %s55
      %p64 = scmp.eq.s32.totalorder %s23, 0
      %p65 = por %p63, %p64
      %p66 = scmp.ne.s32.totalorder %s54, %s55
      %p67 = scmp.eq.s32.totalorder %s24, 1
      %p68 = por %p66, %p67
      %p70 = scmp.ne.s32.totalorder %s55, %s69
      %p71 = scmp.eq.s32.totalorder %s24, 0
      %p72 = por %p70, %p71
      %s74 = sadd.s32 %s73, 1
      %p77 = scmp.eq.s32.totalorder %s18, 1
      %p78 = scmp.ne.s32.totalorder %s73, %s75
      %p79 = scmp.eq.s32.totalorder %s18, 0
      %p80 = por %p78, %p79
      %p81 = scmp.ne.s32.totalorder %s73, %s75
      %p82 = scmp.eq.s32.totalorder %s23, 1
      %p83 = por %p81, %p82
      %p84 = scmp.ne.s32.totalorder %s75, %s76
      %p85 = scmp.eq.s32.totalorder %s23, 0
      %p86 = por %p84, %p85
      %p87 = scmp.ne.s32.totalorder %s75, %s76
      %p88 = scmp.eq.s32.totalorder %s24, 1
      %p89 = por %p87, %p88
      %p91 = scmp.ne.s32.totalorder %s76, %s90
      %p92 = scmp.eq.s32.totalorder %s24, 0
      %p93 = por %p91, %p92
      %s95 = sadd.s32 %s94, 1
      %p98 = scmp.eq.s32.totalorder %s18, 1
      %p99 = scmp.ne.s32.totalorder %s94, %s96
      %p100 = scmp.eq.s32.totalorder %s18, 0
      %p101 = por %p99, %p100
      %p102 = scmp.ne.s32.totalorder %s94, %s96
      %p103 = scmp.eq.s32.totalorder %s23, 1
      %p104 = por %p102, %p103
      %p105 = scmp.ne.s32.totalorder %s96, %s97
      %p106 = scmp.eq.s32.totalorder %s23, 0
      %p107 = por %p105, %p106
      %p108 = scmp.ne.s32.totalorder %s96, %s97
      %p109 = scmp.eq.s32.totalorder %s24, 1
      %p110 = por %p108, %p109
      %p112 = scmp.ne.s32.totalorder %s97, %s111
      %p113 = scmp.eq.s32.totalorder %s24, 0
      %p114 = por %p112, %p113
      %s116 = sadd.s32 %s115, 1
      %p119 = scmp.eq.s32.totalorder %s18, 1
      %p120 = scmp.ne.s32.totalorder %s115, %s117
      %p121 = scmp.eq.s32.totalorder %s18, 0
      %p122 = por %p120, %p121
      %p123 = scmp.ne.s32.totalorder %s115, %s117
      %p124 = scmp.eq.s32.totalorder %s23, 1
      %p125 = por %p123, %p124
      %p126 = scmp.ne.s32.totalorder %s117, %s118
      %p127 = scmp.eq.s32.totalorder %s23, 0
      %p128 = por %p126, %p127
      %p129 = scmp.ne.s32.totalorder %s117, %s118
      %p130 = scmp.eq.s32.totalorder %s24, 1
      %p131 = por %p129, %p130
      %p133 = scmp.ne.s32.totalorder %s118, %s132
      %p134 = scmp.eq.s32.totalorder %s24, 0
      %p135 = por %p133, %p134
      %s137 = sadd.s32 %s136, 1
      %p140 = scmp.eq.s32.totalorder %s18, 1
      %p141 = scmp.ne.s32.totalorder %s136, %s138
      %p142 = scmp.eq.s32.totalorder %s18, 0
      %p143 = por %p141, %p142
      %p144 = scmp.ne.s32.totalorder %s136, %s138
      %p145 = scmp.eq.s32.totalorder %s23, 1
      %p146 = por %p144, %p145
      %p147 = scmp.ne.s32.totalorder %s138, %s139
      %p148 = scmp.eq.s32.totalorder %s23, 0
      %p149 = por %p147, %p148
      %p150 = scmp.ne.s32.totalorder %s138, %s139
      %p151 = scmp.eq.s32.totalorder %s24, 1
      %p152 = por %p150, %p151
      %p154 = scmp.ne.s32.totalorder %s139, %s153
      %p155 = scmp.eq.s32.totalorder %s24, 0
      %p156 = por %p154, %p155
      %s158 = sadd.s32 %s157, 1
      %p161 = scmp.eq.s32.totalorder %s18, 1
      %p162 = scmp.ne.s32.totalorder %s157, %s159
      %p163 = scmp.eq.s32.totalorder %s18, 0
      %p164 = por %p162, %p163
      %p165 = scmp.ne.s32.totalorder %s157, %s159
      %p166 = scmp.eq.s32.totalorder %s23, 1
      %p167 = por %p165, %p166
      %p168 = scmp.ne.s32.totalorder %s159, %s160
      %p169 = scmp.eq.s32.totalorder %s23, 0
      %p170 = por %p168, %p169
      %p171 = scmp.ne.s32.totalorder %s159, %s160
      %p172 = scmp.eq.s32.totalorder %s24, 1
      %p173 = por %p171, %p172
      %p175 = scmp.ne.s32.totalorder %s160, %s174
      %p176 = scmp.eq.s32.totalorder %s24, 0
      %p177 = por %p175, %p176
      %s179 = sadd.s32 %s178, 1
      %p182 = scmp.eq.s32.totalorder %s18, 1
      %p183 = scmp.ne.s32.totalorder %s178, %s180
      %p184 = scmp.eq.s32.totalorder %s18, 0
      %p185 = por %p183, %p184
      %p186 = scmp.ne.s32.totalorder %s178, %s180
      %p187 = scmp.eq.s32.totalorder %s23, 1
      %p188 = por %p186, %p187
      %p189 = scmp.ne.s32.totalorder %s180, %s181
      %p190 = scmp.eq.s32.totalorder %s23, 0
      %p191 = por %p189, %p190
      %p192 = scmp.ne.s32.totalorder %s180, %s181
      %p193 = scmp.eq.s32.totalorder %s24, 1
      %p194 = por %p192, %p193
      %p196 = scmp.ne.s32.totalorder %s181, %s195
      %p197 = scmp.eq.s32.totalorder %s24, 0
      %p198 = por %p196, %p197
      %s200 = sadd.s32 %s199, 1
      %p203 = scmp.eq.s32.totalorder %s18, 1
      %p204 = scmp.ne.s32.totalorder %s199, %s201
      %p205 = scmp.eq.s32.totalorder %s18, 0
      %p206 = por %p204, %p205
      %p207 = scmp.ne.s32.totalorder %s199, %s201
      %p208 = scmp.eq.s32.totalorder %s23, 1
      %p209 = por %p207, %p208
      %p210 = scmp.ne.s32.totalorder %s201, %s202
      %p211 = scmp.eq.s32.totalorder %s23, 0
      %p212 = por %p210, %p211
      %p213 = scmp.ne.s32.totalorder %s201, %s202
      %p214 = scmp.eq.s32.totalorder %s24, 1
      %p215 = por %p213, %p214
      %p217 = scmp.ne.s32.totalorder %s202, %s216
      %p218 = scmp.eq.s32.totalorder %s24, 0
      %p219 = por %p217, %p218
      %s220 = ssub.s32 %s18, %s25
      %p221 = scmp.eq.s32.totalorder %s220, 0
      %s223 = sadd.s32 %s222, 1
      %s224 = scalar_select %p221, %s222, %s223
      %p227 = pneg %p221
      %p228 = scmp.eq.s32.totalorder %s18, 1
      %p229 = por %p227, %p228
      %p230 = scmp.ne.s32.totalorder %s222, %s225
      %p231 = scmp.eq.s32.totalorder %s18, 0
      %p232 = por %p230, %p231
      %p233 = scmp.ne.s32.totalorder %s222, %s225
      %p234 = scmp.eq.s32.totalorder %s23, 1
      %p235 = por %p233, %p234
      %p236 = scmp.ne.s32.totalorder %s225, %s226
      %p237 = scmp.eq.s32.totalorder %s23, 0
      %p238 = por %p236, %p237
      %p239 = scmp.ne.s32.totalorder %s225, %s226
      %p240 = scmp.eq.s32.totalorder %s24, 1
      %p241 = por %p239, %p240
      %p243 = scmp.ne.s32.totalorder %s226, %s242
      %p244 = scmp.eq.s32.totalorder %s24, 0
      %p245 = por %p243, %p244
      %p246 = scmp.le.s32.totalorder 1, %s18
      %p247 = scmp.lt.s32.totalorder %s18, 3
      %p248 = pnand %p246, %p247
      %p249 = pneg %p248
      // Predicated region
      $region9: #{tpu_custom_call.1} parent=5 // pred_check
        _
      $region10: #{tpu_custom_call.1} parent=5 // pred_check_branch
        %251 = sbr.rel (%p248) target = $region12
      $region11: #{tpu_custom_call.1} parent=5 // pred_region
        %s252 = ssub.s32 %s18, 1
        // Predicated region
        $region13: #{tpu_custom_call.1} parent=11 // pred_check
          %p253 = pneg %p65
        $region14: #{tpu_custom_call.1} parent=11 // pred_check_branch
          %255 = sbr.rel (%p253) target = $region16
        $region15: #{tpu_custom_call.1} parent=11 // pred_region
          _
        $region16: #{tpu_custom_call.1} parent=11 // pred_fallthru
          _
        // Predicated region
        $region17: #{tpu_custom_call.1} parent=11 // pred_check
          %p256 = pneg %p86
        $region18: #{tpu_custom_call.1} parent=11 // pred_check_branch
          %258 = sbr.rel (%p256) target = $region20
        $region19: #{tpu_custom_call.1} parent=11 // pred_region
          _
        $region20: #{tpu_custom_call.1} parent=11 // pred_fallthru
          _
        // Predicated region
        $region21: #{tpu_custom_call.1} parent=11 // pred_check
          %p259 = pneg %p107
        $region22: #{tpu_custom_call.1} parent=11 // pred_check_branch
          %261 = sbr.rel (%p259) target = $region24
        $region23: #{tpu_custom_call.1} parent=11 // pred_region
          _
        $region24: #{tpu_custom_call.1} parent=11 // pred_fallthru
          _
        // Predicated region
        $region25: #{tpu_custom_call.1} parent=11 // pred_check
          %p262 = pneg %p128
        $region26: #{tpu_custom_call.1} parent=11 // pred_check_branch
          %264 = sbr.rel (%p262) target = $region28
        $region27: #{tpu_custom_call.1} parent=11 // pred_region
          _
        $region28: #{tpu_custom_call.1} parent=11 // pred_fallthru
          _
        // Predicated region
        $region29: #{tpu_custom_call.1} parent=11 // pred_check
          %p265 = pneg %p149
        $region30: #{tpu_custom_call.1} parent=11 // pred_check_branch
          %267 = sbr.rel (%p265) target = $region32
        $region31: #{tpu_custom_call.1} parent=11 // pred_region
          _
        $region32: #{tpu_custom_call.1} parent=11 // pred_fallthru
          _
        // Predicated region
        $region33: #{tpu_custom_call.1} parent=11 // pred_check
          %p268 = pneg %p170
        $region34: #{tpu_custom_call.1} parent=11 // pred_check_branch
          %270 = sbr.rel (%p268) target = $region36
        $region35: #{tpu_custom_call.1} parent=11 // pred_region
          _
        $region36: #{tpu_custom_call.1} parent=11 // pred_fallthru
          _
        // Predicated region
        $region37: #{tpu_custom_call.1} parent=11 // pred_check
          %p271 = pneg %p191
        $region38: #{tpu_custom_call.1} parent=11 // pred_check_branch
          %273 = sbr.rel (%p271) target = $region40
        $region39: #{tpu_custom_call.1} parent=11 // pred_region
          _
        $region40: #{tpu_custom_call.1} parent=11 // pred_fallthru
          _
        // Predicated region
        $region41: #{tpu_custom_call.1} parent=11 // pred_check
          %p274 = pneg %p212
        $region42: #{tpu_custom_call.1} parent=11 // pred_check_branch
          %276 = sbr.rel (%p274) target = $region44
        $region43: #{tpu_custom_call.1} parent=11 // pred_region
          _
        $region44: #{tpu_custom_call.1} parent=11 // pred_fallthru
          _
      $region12: #{tpu_custom_call.1} parent=5 // pred_fallthru
        _
      %p277 = scmp.lt.s32.totalorder %s18, 2
      // Predicated region
      $region45: #{tpu_custom_call.1} parent=5 // pred_check
        %p278 = pneg %p277
      $region46: #{tpu_custom_call.1} parent=5 // pred_check_branch
        %280 = sbr.rel (%p278) target = $region48
      $region47: #{tpu_custom_call.1} parent=5 // pred_region
        // Predicated region
        $region49: #{tpu_custom_call.1} parent=47 // pred_check
          %p281 = pneg %p38
        $region50: #{tpu_custom_call.1} parent=47 // pred_check_branch
          %283 = sbr.rel (%p281) target = $region52
        $region51: #{tpu_custom_call.1} parent=47 // pred_region
          %s284 = smul.u32 2, %s18
          %p285 = scmp.lt.s32.totalorder %s284, 3
          %s286 = scalar_select %p285, %s284, 3
          %s287 = smul.addr %s286, 8
          %s288 = smul.addr %s287, 8
          %s289 = scalar_lea.vmem %s0, %s288
          %s290 = smul.u32 2, %s18
        $region52: #{tpu_custom_call.1} parent=47 // pred_fallthru
          _
      $region48: #{tpu_custom_call.1} parent=5 // pred_fallthru
        _
      %p291 = scmp.le.s32.totalorder 1, %s18
      %p292 = scmp.lt.s32.totalorder %s18, 3
      %p293 = pnand %p291, %p292
      %p294 = pneg %p293
      // Predicated region
      $region53: #{tpu_custom_call.1} parent=5 // pred_check
        _
      $region54: #{tpu_custom_call.1} parent=5 // pred_check_branch
        %296 = sbr.rel (%p293) target = $region56
      $region55: #{tpu_custom_call.1} parent=5 // pred_region
        %s297 = ssub.s32 %s18, 1
        %s298 = smul.u32 2, %s23
        %p299 = scmp.lt.s32.totalorder %s298, 3
        %s300 = scalar_select %p299, %s298, 3
        %s301 = smul.addr %s300, 8
        %s302 = smul.addr %s301, 8
        %s303 = scalar_lea.vmem %s0, %s302
        %p304 = pneg %p44
        %p305 = pneg %p41
        %p306 = pneg %p65
        %p307 = pneg %p62
        %p308 = pneg %p86
        %p309 = pneg %p83
        %p310 = pneg %p107
        %p311 = pneg %p104
        %p312 = pneg %p128
        %p313 = pneg %p125
        %p314 = pneg %p149
        %p315 = pneg %p146
        %p316 = pneg %p170
        %p317 = pneg %p167
        %p318 = pneg %p191
        %p319 = pneg %p188
        %p320 = pneg %p212
        %p321 = pneg %p209
        %p322 = pneg %p238
        %p323 = pneg %p235
        %s324 = sand.u32 %s225, 1
        %s325 = scalar_lea.sflag [#allocation3], %s324
        %s326 = sand.u32 %s225, 1
        %s327 = smul.addr %s326, 512
        %s328 = scalar_lea.vmem [#allocation2], %s327
        %s329 = smul.u32 2, %s23
        %p330 = scmp.lt.s32.totalorder %s329, 3
        %s331 = scalar_select %p330, %s329, 3
        %s332 = smul.addr %s331, 8
        %s333 = smul.addr %s332, 8
        %s334 = scalar_lea.vmem %s0, %s333
        %s335 = smul.u32 2, %s23
        %s336 = smul.u32 2, %s23
        %v338 = vld [vmem:[%s334] sm:$0xff]
        %v339 = vld [vmem:[%s334 + $0x8] sm:$0xff]
        %v340 = vld [vmem:[%s334 + $0x10] sm:$0xff]
        %v341 = vld [vmem:[%s334 + $0x18] sm:$0xff]
        %v342 = vld [vmem:[%s334 + $0x20] sm:$0xff]
        %v343 = vld [vmem:[%s334 + $0x28] sm:$0xff]
        %v344 = vld [vmem:[%s334 + $0x30] sm:$0xff]
        %v345 = vld [vmem:[%s334 + $0x38] sm:$0xff]
        %v346 = vld [vmem:[%s1] sm:$0xf]
        %v347 = vld [vmem:[%s1 + $0x4] sm:$0xf]
        %v348 = vld [vmem:[%s1 + $0x8] sm:$0xf]
        %v349 = vld [vmem:[%s1 + $0xc] sm:$0xf]
        %v350 = vld [vmem:[%s1 + $0x10] sm:$0xf]
        %v351 = vld [vmem:[%s1 + $0x14] sm:$0xf]
        %v352 = vld [vmem:[%s1 + $0x18] sm:$0xf]
        %v353 = vld [vmem:[%s1 + $0x1c] sm:$0xf]
        %v354 = vpack.c.bf16 %v339, %v338
        %v355 = vpack.c.bf16 %v341, %v340
        %v356 = vpack.c.bf16 %v343, %v342
        %v357 = vpack.c.bf16 %v345, %v344
        %v358 = vld [vmem:[%s2] sm:$0xff]
        %v359 = vld [vmem:[%s2 + $0x8] sm:$0xff]
        %v360 = vld [vmem:[%s2 + $0x10] sm:$0xff]
        %v361 = vld [vmem:[%s2 + $0x18] sm:$0xff]
        %v362 = vld [vmem:[%s2 + $0x20] sm:$0xff]
        %v363 = vld [vmem:[%s2 + $0x28] sm:$0xff]
        %v364 = vld [vmem:[%s2 + $0x30] sm:$0xff]
        %v365 = vld [vmem:[%s2 + $0x38] sm:$0xff]
        %367 = vset.pattern.permute.xlu0 0
        %368 = vperm.xlu0 %367, %v358
        %v369 = vpop.permute.xlu0 %368
        %372 = vset.pattern.permute.xlu0 0
        %373 = vperm.xlu0 %372, %v359
        %v374 = vpop.permute.xlu0 %373
        %377 = vset.pattern.permute.xlu0 0
        %378 = vperm.xlu0 %377, %v360
        %v379 = vpop.permute.xlu0 %378
        %382 = vset.pattern.permute.xlu0 0
        %383 = vperm.xlu0 %382, %v361
        %v384 = vpop.permute.xlu0 %383
        %387 = vset.pattern.permute.xlu0 0
        %388 = vperm.xlu0 %387, %v362
        %v389 = vpop.permute.xlu0 %388
        %392 = vset.pattern.permute.xlu0 0
        %393 = vperm.xlu0 %392, %v363
        %v394 = vpop.permute.xlu0 %393
        %397 = vset.pattern.permute.xlu0 0
        %398 = vperm.xlu0 %397, %v364
        %v399 = vpop.permute.xlu0 %398
        %402 = vset.pattern.permute.xlu0 0
        %403 = vperm.xlu0 %402, %v365
        %v404 = vpop.permute.xlu0 %403
        %v414 = vunpack.c.l.b16 %v346
        %v415 = vunpack.c.l.b16 %v347
        %v416 = vunpack.c.l.b16 %v348
        %v417 = vunpack.c.l.b16 %v349
        %v418 = vunpack.c.l.b16 %v350
        %v419 = vunpack.c.l.b16 %v351
        %v420 = vunpack.c.l.b16 %v352
        %v421 = vunpack.c.l.b16 %v353
        %v422 = vpack.c.b16 %v415, %v414
        %v423 = vpack.c.b16 %v417, %v416
        %v424 = vpack.c.b16 %v419, %v418
        %v425 = vpack.c.b16 %v421, %v420
        %vm426 = vcmask 523264
        %v428 = vsel %vm426, %v422, 0
        %v431 = vsel %vm426, %v423, 0
        %v434 = vsel %vm426, %v424, 0
        %v437 = vsel %vm426, %v425, 0
        %439 = vmatprep.subr.bf16.mxu0 0
        %440 = vmatpush1.bf16.msra.mxu0 %v354
        %441 = vmatprep.subr.bf16.mxu0 0
        %442 = vmatpush1.bf16.msra.mxu0 %v355
        %443 = vmatprep.subr.bf16.mxu0 0
        %444 = vmatpush1.bf16.msra.mxu0 %v356
        %445 = vmatprep.subr.bf16.mxu0 0
        %446 = vmatpush1.bf16.msra.mxu0 %v357
        %447 = vmatprep.subr.bf16.mxu0 0
        %448 = vmatpush1.bf16.msra.mxu0 0
        %449 = vmatprep.subr.bf16.mxu0 0
        %450 = vmatpush1.bf16.msra.mxu0 0
        %451 = vmatprep.subr.bf16.mxu0 0
        %452 = vmatpush1.bf16.msra.mxu0 0
        %453 = vmatprep.subr.bf16.mxu0 0
        %454 = vmatpush1.bf16.msra.mxu0 0
        %455 = vmatprep.subr.bf16.mxu0 0
        %456 = vmatpush1.bf16.msra.mxu0 0
        %457 = vmatprep.subr.bf16.mxu0 0
        %458 = vmatpush1.bf16.msra.mxu0 0
        %459 = vmatprep.subr.bf16.mxu0 0
        %460 = vmatpush1.bf16.msra.mxu0 0
        %461 = vmatprep.subr.bf16.mxu0 0
        %462 = vmatpush1.bf16.msra.mxu0 0
        %463 = vmatprep.subr.bf16.mxu0 0
        %464 = vmatpush1.bf16.msra.mxu0 0
        %465 = vmatprep.subr.bf16.mxu0 0
        %466 = vmatpush1.bf16.msra.mxu0 0
        %467 = vmatprep.subr.bf16.mxu0 0
        %468 = vmatpush1.bf16.msra.mxu0 0
        %469 = vmatprep.subr.bf16.mxu0 0
        %470 = vmatpush1.bf16.msra.mxu0 0
        %471 = vmatprep.mubr.bf16.mxu0 0
        %472 = vmatmul.mubr.bf16.gmra.mrb[0].mxu0 %v428
        %v473 = vpop.f32.mrb[0].mxu0
        %v474 = vadd.f32 %v369, %v473
        %v475 = vpop.f32.mrb[0].mxu0
        %v476 = vpop.f32.mrb[0].mxu0
        %v477 = vadd.f32 %v374, %v476
        %v478 = vpop.f32.mrb[0].mxu0
        %479 = vmatprep.mubr.bf16.mxu0 0
        %480 = vmatmul.mubr.bf16.gmra.mrb[0].mxu0 %v431
        %v481 = vpop.f32.mrb[0].mxu0
        %v482 = vadd.f32 %v379, %v481
        %v483 = vpop.f32.mrb[0].mxu0
        %v484 = vpop.f32.mrb[0].mxu0
        %v485 = vadd.f32 %v384, %v484
        %v486 = vpop.f32.mrb[0].mxu0
        %487 = vmatprep.mubr.bf16.mxu0 0
        %488 = vmatmul.mubr.bf16.gmra.mrb[0].mxu0 %v434
        %v489 = vpop.f32.mrb[0].mxu0
        %v490 = vadd.f32 %v389, %v489
        %v491 = vpop.f32.mrb[0].mxu0
        %v492 = vpop.f32.mrb[0].mxu0
        %v493 = vadd.f32 %v394, %v492
        %v494 = vpop.f32.mrb[0].mxu0
        %495 = vmatprep.mubr.bf16.mxu0 0
        %496 = vmatmul.mubr.bf16.gmra.mrb[0].mxu0 %v437
        %v497 = vpop.f32.mrb[0].mxu0
        %v498 = vadd.f32 %v399, %v497
        %v499 = vpop.f32.mrb[0].mxu0
        %v500 = vpop.f32.mrb[0].mxu0
        %v501 = vadd.f32 %v404, %v500
        %v502 = vpop.f32.mrb[0].mxu0
        %503 = vdwg.mxu0
        %v504 = vmax.f32 %v474, 0.0
        %v505 = vmax.f32 %v477, 0.0
        %v506 = vmax.f32 %v482, 0.0
        %v507 = vmax.f32 %v485, 0.0
        %v508 = vmax.f32 %v490, 0.0
        %v509 = vmax.f32 %v493, 0.0
        %v510 = vmax.f32 %v498, 0.0
        %v511 = vmax.f32 %v501, 0.0
        %v512 = vld [vmem:[%s3] sm:$0xf]
        %v513 = vld [vmem:[%s3 + $0x4] sm:$0xf]
        %v514 = vld [vmem:[%s3 + $0x8] sm:$0xf]
        %v515 = vld [vmem:[%s3 + $0xc] sm:$0xf]
        %v516 = vld [vmem:[%s3 + $0x10] sm:$0xf]
        %v517 = vld [vmem:[%s3 + $0x14] sm:$0xf]
        %v518 = vld [vmem:[%s3 + $0x18] sm:$0xf]
        %v519 = vld [vmem:[%s3 + $0x1c] sm:$0xf]
        %v520 = vpack.c.bf16 %v505, %v504
        %v521 = vpack.c.bf16 %v507, %v506
        %v522 = vpack.c.bf16 %v509, %v508
        %v523 = vpack.c.bf16 %v511, %v510
        %v524 = vld [vmem:[%s4] sm:$0xff]
        %v525 = vld [vmem:[%s4 + $0x8] sm:$0xff]
        %v526 = vld [vmem:[%s4 + $0x10] sm:$0xff]
        %v527 = vld [vmem:[%s4 + $0x18] sm:$0xff]
        %v528 = vld [vmem:[%s4 + $0x20] sm:$0xff]
        %v529 = vld [vmem:[%s4 + $0x28] sm:$0xff]
        %v530 = vld [vmem:[%s4 + $0x30] sm:$0xff]
        %v531 = vld [vmem:[%s4 + $0x38] sm:$0xff]
        %533 = vset.pattern.permute.xlu0 0
        %534 = vperm.xlu0 %533, %v524
        %v535 = vpop.permute.xlu0 %534
        %538 = vset.pattern.permute.xlu0 0
        %539 = vperm.xlu0 %538, %v525
        %v540 = vpop.permute.xlu0 %539
        %543 = vset.pattern.permute.xlu0 0
        %544 = vperm.xlu0 %543, %v526
        %v545 = vpop.permute.xlu0 %544
        %548 = vset.pattern.permute.xlu0 0
        %549 = vperm.xlu0 %548, %v527
        %v550 = vpop.permute.xlu0 %549
        %553 = vset.pattern.permute.xlu0 0
        %554 = vperm.xlu0 %553, %v528
        %v555 = vpop.permute.xlu0 %554
        %558 = vset.pattern.permute.xlu0 0
        %559 = vperm.xlu0 %558, %v529
        %v560 = vpop.permute.xlu0 %559
        %563 = vset.pattern.permute.xlu0 0
        %564 = vperm.xlu0 %563, %v530
        %v565 = vpop.permute.xlu0 %564
        %568 = vset.pattern.permute.xlu0 0
        %569 = vperm.xlu0 %568, %v531
        %v570 = vpop.permute.xlu0 %569
        %v580 = vunpack.c.l.b16 %v512
        %v581 = vunpack.c.l.b16 %v513
        %v582 = vunpack.c.l.b16 %v514
        %v583 = vunpack.c.l.b16 %v515
        %v584 = vunpack.c.l.b16 %v516
        %v585 = vunpack.c.l.b16 %v517
        %v586 = vunpack.c.l.b16 %v518
        %v587 = vunpack.c.l.b16 %v519
        %v588 = vpack.c.b16 %v581, %v580
        %v589 = vpack.c.b16 %v583, %v582
        %v590 = vpack.c.b16 %v585, %v584
        %v591 = vpack.c.b16 %v587, %v586
        %v593 = vsel %vm426, %v588, 0
        %v596 = vsel %vm426, %v589, 0
        %v599 = vsel %vm426, %v590, 0
        %v602 = vsel %vm426, %v591, 0
        %604 = vmatprep.subr.bf16.mxu0 0
        %605 = vmatpush1.bf16.msra.mxu0 %v520
        %606 = vmatprep.subr.bf16.mxu0 0
        %607 = vmatpush1.bf16.msra.mxu0 %v521
        %608 = vmatprep.subr.bf16.mxu0 0
        %609 = vmatpush1.bf16.msra.mxu0 %v522
        %610 = vmatprep.subr.bf16.mxu0 0
        %611 = vmatpush1.bf16.msra.mxu0 %v523
        %612 = vmatprep.subr.bf16.mxu0 0
        %613 = vmatpush1.bf16.msra.mxu0 0
        %614 = vmatprep.subr.bf16.mxu0 0
        %615 = vmatpush1.bf16.msra.mxu0 0
        %616 = vmatprep.subr.bf16.mxu0 0
        %617 = vmatpush1.bf16.msra.mxu0 0
        %618 = vmatprep.subr.bf16.mxu0 0
        %619 = vmatpush1.bf16.msra.mxu0 0
        %620 = vmatprep.subr.bf16.mxu0 0
        %621 = vmatpush1.bf16.msra.mxu0 0
        %622 = vmatprep.subr.bf16.mxu0 0
        %623 = vmatpush1.bf16.msra.mxu0 0
        %624 = vmatprep.subr.bf16.mxu0 0
        %625 = vmatpush1.bf16.msra.mxu0 0
        %626 = vmatprep.subr.bf16.mxu0 0
        %627 = vmatpush1.bf16.msra.mxu0 0
        %628 = vmatprep.subr.bf16.mxu0 0
        %629 = vmatpush1.bf16.msra.mxu0 0
        %630 = vmatprep.subr.bf16.mxu0 0
        %631 = vmatpush1.bf16.msra.mxu0 0
        %632 = vmatprep.subr.bf16.mxu0 0
        %633 = vmatpush1.bf16.msra.mxu0 0
        %634 = vmatprep.subr.bf16.mxu0 0
        %635 = vmatpush1.bf16.msra.mxu0 0
        %636 = vmatprep.mubr.bf16.mxu0 0
        %637 = vmatmul.mubr.bf16.gmra.mrb[0].mxu0 %v593
        %v638 = vpop.f32.mrb[0].mxu0
        %v639 = vadd.f32 %v535, %v638
        %v640 = vpop.f32.mrb[0].mxu0
        %v641 = vpop.f32.mrb[0].mxu0
        %v642 = vadd.f32 %v540, %v641
        %v643 = vpop.f32.mrb[0].mxu0
        %644 = vmatprep.mubr.bf16.mxu0 0
        %645 = vmatmul.mubr.bf16.gmra.mrb[0].mxu0 %v596
        %v646 = vpop.f32.mrb[0].mxu0
        %v647 = vadd.f32 %v545, %v646
        %v648 = vpop.f32.mrb[0].mxu0
        %v649 = vpop.f32.mrb[0].mxu0
        %v650 = vadd.f32 %v550, %v649
        %v651 = vpop.f32.mrb[0].mxu0
        %652 = vmatprep.mubr.bf16.mxu0 0
        %653 = vmatmul.mubr.bf16.gmra.mrb[0].mxu0 %v599
        %v654 = vpop.f32.mrb[0].mxu0
        %v655 = vadd.f32 %v555, %v654
        %v656 = vpop.f32.mrb[0].mxu0
        %v657 = vpop.f32.mrb[0].mxu0
        %v658 = vadd.f32 %v560, %v657
        %v659 = vpop.f32.mrb[0].mxu0
        %660 = vmatprep.mubr.bf16.mxu0 0
        %661 = vmatmul.mubr.bf16.gmra.mrb[0].mxu0 %v602
        %v662 = vpop.f32.mrb[0].mxu0
        %v663 = vadd.f32 %v565, %v662
        %v664 = vpop.f32.mrb[0].mxu0
        %v665 = vpop.f32.mrb[0].mxu0
        %v666 = vadd.f32 %v570, %v665
        %v667 = vpop.f32.mrb[0].mxu0
        %668 = vdwg.mxu0
        %v669 = vmax.f32 %v639, 0.0
        %v670 = vmax.f32 %v642, 0.0
        %v671 = vmax.f32 %v647, 0.0
        %v672 = vmax.f32 %v650, 0.0
        %v673 = vmax.f32 %v655, 0.0
        %v674 = vmax.f32 %v658, 0.0
        %v675 = vmax.f32 %v663, 0.0
        %v676 = vmax.f32 %v666, 0.0
        %v677 = vpack.c.bf16 %v670, %v669
        %v678 = vpack.c.bf16 %v672, %v671
        %v679 = vpack.c.bf16 %v674, %v673
        %v680 = vpack.c.bf16 %v676, %v675
        %v681 = vld [vmem:[%s5] sm:$0xf]
        %v682 = vld [vmem:[%s5 + $0x4] sm:$0xf]
        %v683 = vld [vmem:[%s5 + $0x8] sm:$0xf]
        %v684 = vld [vmem:[%s5 + $0xc] sm:$0xf]
        %v685 = vld [vmem:[%s5 + $0x10] sm:$0xf]
        %v686 = vld [vmem:[%s5 + $0x14] sm:$0xf]
        %v687 = vld [vmem:[%s5 + $0x18] sm:$0xf]
        %v688 = vld [vmem:[%s5 + $0x1c] sm:$0xf]
        %v689 = vld [vmem:[%s5 + $0x20] sm:$0xf]
        %v690 = vld [vmem:[%s5 + $0x24] sm:$0xf]
        %v701 = vunpack.c.l.b16 %v681
        %v702 = vunpack.c.l.b16 %v682
        %v703 = vunpack.c.l.b16 %v683
        %v704 = vunpack.c.l.b16 %v684
        %v705 = vunpack.c.l.b16 %v685
        %v706 = vunpack.c.l.b16 %v686
        %v707 = vunpack.c.l.b16 %v687
        %v708 = vunpack.c.l.b16 %v688
        %v709 = vunpack.c.l.b16 %v689
        %v710 = vunpack.c.l.b16 %v690
        %v711 = vpack.c.b16 %v702, %v701
        %v712 = vpack.c.b16 %v704, %v703
        %v713 = vpack.c.b16 %v706, %v705
        %v714 = vpack.c.b16 %v708, %v707
        %v715 = vpack.c.b16 %v710, %v709
        %v717 = vsel %vm426, %v711, 0
        %v720 = vsel %vm426, %v712, 0
        %v723 = vsel %vm426, %v713, 0
        %v726 = vsel %vm426, %v714, 0
        %v729 = vsel %vm426, %v715, 0
        %731 = vmatprep.subr.bf16.mxu0 0
        %732 = vmatpush1.bf16.msra.mxu0 %v677
        %733 = vmatprep.subr.bf16.mxu0 0
        %734 = vmatpush1.bf16.msra.mxu0 %v678
        %735 = vmatprep.subr.bf16.mxu0 0
        %736 = vmatpush1.bf16.msra.mxu0 %v679
        %737 = vmatprep.subr.bf16.mxu0 0
        %738 = vmatpush1.bf16.msra.mxu0 %v680
        %739 = vmatprep.subr.bf16.mxu0 0
        %740 = vmatpush1.bf16.msra.mxu0 0
        %741 = vmatprep.subr.bf16.mxu0 0
        %742 = vmatpush1.bf16.msra.mxu0 0
        %743 = vmatprep.subr.bf16.mxu0 0
        %744 = vmatpush1.bf16.msra.mxu0 0
        %745 = vmatprep.subr.bf16.mxu0 0
        %746 = vmatpush1.bf16.msra.mxu0 0
        %747 = vmatprep.subr.bf16.mxu0 0
        %748 = vmatpush1.bf16.msra.mxu0 0
        %749 = vmatprep.subr.bf16.mxu0 0
        %750 = vmatpush1.bf16.msra.mxu0 0
        %751 = vmatprep.subr.bf16.mxu0 0
        %752 = vmatpush1.bf16.msra.mxu0 0
        %753 = vmatprep.subr.bf16.mxu0 0
        %754 = vmatpush1.bf16.msra.mxu0 0
        %755 = vmatprep.subr.bf16.mxu0 0
        %756 = vmatpush1.bf16.msra.mxu0 0
        %757 = vmatprep.subr.bf16.mxu0 0
        %758 = vmatpush1.bf16.msra.mxu0 0
        %759 = vmatprep.subr.bf16.mxu0 0
        %760 = vmatpush1.bf16.msra.mxu0 0
        %761 = vmatprep.subr.bf16.mxu0 0
        %762 = vmatpush1.bf16.msra.mxu0 0
        %763 = vmatprep.mubr.bf16.mxu0 0
        %764 = vmatmul.mubr.bf16.gmra.mrb[0].mxu0 %v717
        %v765 = vpop.f32.mrb[0].mxu0
        %v766 = vadd.f32 0.0, %v765
        %v767 = vpop.f32.mrb[0].mxu0
        %v768 = vpop.f32.mrb[0].mxu0
        %v769 = vadd.f32 0.0, %v768
        %v770 = vpop.f32.mrb[0].mxu0
        %771 = vmatprep.mubr.bf16.mxu0 0
        %772 = vmatmul.mubr.bf16.gmra.mrb[0].mxu0 %v720
        %v773 = vpop.f32.mrb[0].mxu0
        %v774 = vadd.f32 0.0, %v773
        %v775 = vpop.f32.mrb[0].mxu0
        %v776 = vpop.f32.mrb[0].mxu0
        %v777 = vadd.f32 0.0, %v776
        %v778 = vpop.f32.mrb[0].mxu0
        %779 = vmatprep.mubr.bf16.mxu0 0
        %780 = vmatmul.mubr.bf16.gmra.mrb[0].mxu0 %v723
        %v781 = vpop.f32.mrb[0].mxu0
        %v782 = vadd.f32 0.0, %v781
        %v783 = vpop.f32.mrb[0].mxu0
        %v784 = vpop.f32.mrb[0].mxu0
        %v785 = vadd.f32 0.0, %v784
        %v786 = vpop.f32.mrb[0].mxu0
        %787 = vmatprep.mubr.bf16.mxu0 0
        %788 = vmatmul.mubr.bf16.gmra.mrb[0].mxu0 %v726
        %v789 = vpop.f32.mrb[0].mxu0
        %v790 = vadd.f32 0.0, %v789
        %v791 = vpop.f32.mrb[0].mxu0
        %v792 = vpop.f32.mrb[0].mxu0
        %v793 = vadd.f32 0.0, %v792
        %v794 = vpop.f32.mrb[0].mxu0
        %795 = vmatprep.mubr.bf16.mxu0 0
        %796 = vmatmul.mubr.bf16.gmra.mrb[0].mxu0 %v729
        %v797 = vpop.f32.mrb[0].mxu0
        %v798 = vadd.f32 0.0, %v797
        %v799 = vpop.f32.mrb[0].mxu0
        %v800 = vpop.f32.mrb[0].mxu0
        %v801 = vadd.f32 0.0, %v800
        %v802 = vpop.f32.mrb[0].mxu0
        %803 = vdwg.mxu0
        %v804 = vld [vmem:[%s6] sm:$0xff]
        %v805 = vld [vmem:[%s6 + $0x8] sm:$0xff]
        %v806 = vld [vmem:[%s6 + $0x10] sm:$0xff]
        %v807 = vld [vmem:[%s6 + $0x18] sm:$0xff]
        %v808 = vld [vmem:[%s6 + $0x20] sm:$0xff]
        %v809 = vld [vmem:[%s6 + $0x28] sm:$0xff]
        %v810 = vld [vmem:[%s6 + $0x30] sm:$0xff]
        %v811 = vld [vmem:[%s6 + $0x38] sm:$0xff]
        %813 = vset.pattern.permute.xlu0 0
        %814 = vperm.xlu0 %813, %v804
        %v815 = vpop.permute.xlu0 %814
        %818 = vset.pattern.permute.xlu0 0
        %819 = vperm.xlu0 %818, %v805
        %v820 = vpop.permute.xlu0 %819
        %823 = vset.pattern.permute.xlu0 0
        %824 = vperm.xlu0 %823, %v806
        %v825 = vpop.permute.xlu0 %824
        %828 = vset.pattern.permute.xlu0 0
        %829 = vperm.xlu0 %828, %v807
        %v830 = vpop.permute.xlu0 %829
        %833 = vset.pattern.permute.xlu0 0
        %834 = vperm.xlu0 %833, %v808
        %v835 = vpop.permute.xlu0 %834
        %838 = vset.pattern.permute.xlu0 0
        %839 = vperm.xlu0 %838, %v809
        %v840 = vpop.permute.xlu0 %839
        %843 = vset.pattern.permute.xlu0 0
        %844 = vperm.xlu0 %843, %v810
        %v845 = vpop.permute.xlu0 %844
        %848 = vset.pattern.permute.xlu0 0
        %849 = vperm.xlu0 %848, %v811
        %v850 = vpop.permute.xlu0 %849
        %v852 = vadd.f32 %v774, %v815
        %v853 = vadd.f32 %v777, %v820
        %v854 = vadd.f32 %v782, %v825
        %v855 = vadd.f32 %v785, %v830
        %v856 = vadd.f32 %v790, %v835
        %v857 = vadd.f32 %v793, %v840
        %v858 = vadd.f32 %v798, %v845
        %v859 = vadd.f32 %v801, %v850
        %v860 = vpack.c.bf16 %v769, %v766
        %861 = vxpose.xlu0.c.b16.start [1/8] %v860, 128
        %862 = vxpose.xlu0.c.b16.cont [2/8] 0, 128
        %863 = vxpose.xlu0.c.b16.cont [3/8] 0, 128
        %864 = vxpose.xlu0.c.b16.cont [4/8] 0, 128
        %865 = vxpose.xlu0.c.b16.cont [5/8] 0, 128
        %866 = vxpose.xlu0.c.b16.cont [6/8] 0, 128
        %867 = vxpose.xlu0.c.b16.cont [7/8] 0, 128
        %868 = vxpose.xlu0.c.b16.end [8/8] 0, 128
        %v869 = vpop.trf.xlu0
        %v870 = vpop.trf.xlu0
        %v871 = vpop.trf.xlu0
        %v872 = vpop.trf.xlu0
        %v873 = vpop.trf.xlu0
        %v874 = vpop.trf.xlu0
        %v875 = vpop.trf.xlu0
        %v876 = vpop.trf.xlu0
        %vm877 = vcmask 130048
        %v879 = vsel %vm877, %v869, 0
        %v882 = vsel %vm877, %v870, 0
        %v885 = vsel %vm877, %v871, 0
        %v888 = vsel %vm877, %v872, 0
        %v891 = vsel %vm877, %v873, 0
        %v894 = vsel %vm877, %v874, 0
        %v897 = vsel %vm877, %v875, 0
        %v900 = vsel %vm877, %v876, 0
        %902 = vmatprep.subr.bf16.mxu0 0
        %903 = vmatpush1.bf16.msra.mxu0 %v860
        %904 = vmatprep.subr.bf16.mxu0 0
        %905 = vmatpush1.bf16.msra.mxu0 0
        %906 = vmatprep.subr.bf16.mxu0 0
        %907 = vmatpush1.bf16.msra.mxu0 0
        %908 = vmatprep.subr.bf16.mxu0 0
        %909 = vmatpush1.bf16.msra.mxu0 0
        %910 = vmatprep.subr.bf16.mxu0 0
        %911 = vmatpush1.bf16.msra.mxu0 0
        %912 = vmatprep.subr.bf16.mxu0 0
        %913 = vmatpush1.bf16.msra.mxu0 0
        %914 = vmatprep.subr.bf16.mxu0 0
        %915 = vmatpush1.bf16.msra.mxu0 0
        %916 = vmatprep.subr.bf16.mxu0 0
        %917 = vmatpush1.bf16.msra.mxu0 0
        %918 = vmatprep.subr.bf16.mxu0 0
        %919 = vmatpush1.bf16.msra.mxu0 0
        %920 = vmatprep.subr.bf16.mxu0 0
        %921 = vmatpush1.bf16.msra.mxu0 0
        %922 = vmatprep.subr.bf16.mxu0 0
        %923 = vmatpush1.bf16.msra.mxu0 0
        %924 = vmatprep.subr.bf16.mxu0 0
        %925 = vmatpush1.bf16.msra.mxu0 0
        %926 = vmatprep.subr.bf16.mxu0 0
        %927 = vmatpush1.bf16.msra.mxu0 0
        %928 = vmatprep.subr.bf16.mxu0 0
        %929 = vmatpush1.bf16.msra.mxu0 0
        %930 = vmatprep.subr.bf16.mxu0 0
        %931 = vmatpush1.bf16.msra.mxu0 0
        %932 = vmatprep.subr.bf16.mxu0 0
        %933 = vmatpush1.bf16.msra.mxu0 0
        %934 = vmatprep.mubr.bf16.mxu0 0
        %935 = vmatmul.mubr.bf16.gmra.mrb[0].mxu0 %v879
        %v936 = vpop.f32.mrb[0].mxu0
        %v937 = vadd.f32 0.0, %v936
        %v938 = vpop.f32.mrb[0].mxu0
        %v939 = vpop.f32.mrb[0].mxu0
        %v940 = vadd.f32 0.0, %v939
        %v941 = vpop.f32.mrb[0].mxu0
        %942 = vmatprep.mubr.bf16.mxu0 0
        %943 = vmatmul.mubr.bf16.gmra.mrb[0].mxu0 %v882
        %v944 = vpop.f32.mrb[0].mxu0
        %v945 = vadd.f32 0.0, %v944
        %v946 = vpop.f32.mrb[0].mxu0
        %v947 = vpop.f32.mrb[0].mxu0
        %v948 = vadd.f32 0.0, %v947
        %v949 = vpop.f32.mrb[0].mxu0
        %950 = vmatprep.mubr.bf16.mxu0 0
        %951 = vmatmul.mubr.bf16.gmra.mrb[0].mxu0 %v885
        %v952 = vpop.f32.mrb[0].mxu0
        %v953 = vadd.f32 0.0, %v952
        %v954 = vpop.f32.mrb[0].mxu0
        %v955 = vpop.f32.mrb[0].mxu0
        %v956 = vadd.f32 0.0, %v955
        %v957 = vpop.f32.mrb[0].mxu0
        %958 = vmatprep.mubr.bf16.mxu0 0
        %959 = vmatmul.mubr.bf16.gmra.mrb[0].mxu0 %v888
        %v960 = vpop.f32.mrb[0].mxu0
        %v961 = vadd.f32 0.0, %v960
        %v962 = vpop.f32.mrb[0].mxu0
        %v963 = vpop.f32.mrb[0].mxu0
        %v964 = vadd.f32 0.0, %v963
        %v965 = vpop.f32.mrb[0].mxu0
        %966 = vmatprep.mubr.bf16.mxu0 0
        %967 = vmatmul.mubr.bf16.gmra.mrb[0].mxu0 %v891
        %v968 = vpop.f32.mrb[0].mxu0
        %v969 = vadd.f32 0.0, %v968
        %v970 = vpop.f32.mrb[0].mxu0
        %v971 = vpop.f32.mrb[0].mxu0
        %v972 = vadd.f32 0.0, %v971
        %v973 = vpop.f32.mrb[0].mxu0
        %974 = vmatprep.mubr.bf16.mxu0 0
        %975 = vmatmul.mubr.bf16.gmra.mrb[0].mxu0 %v894
        %v976 = vpop.f32.mrb[0].mxu0
        %v977 = vadd.f32 0.0, %v976
        %v978 = vpop.f32.mrb[0].mxu0
        %v979 = vpop.f32.mrb[0].mxu0
        %v980 = vadd.f32 0.0, %v979
        %v981 = vpop.f32.mrb[0].mxu0
        %982 = vmatprep.mubr.bf16.mxu0 0
        %983 = vmatmul.mubr.bf16.gmra.mrb[0].mxu0 %v897
        %v984 = vpop.f32.mrb[0].mxu0
        %v985 = vadd.f32 0.0, %v984
        %v986 = vpop.f32.mrb[0].mxu0
        %v987 = vpop.f32.mrb[0].mxu0
        %v988 = vadd.f32 0.0, %v987
        %v989 = vpop.f32.mrb[0].mxu0
        %990 = vmatprep.mubr.bf16.mxu0 0
        %991 = vmatmul.mubr.bf16.gmra.mrb[0].mxu0 %v900
        %v992 = vpop.f32.mrb[0].mxu0
        %v993 = vadd.f32 0.0, %v992
        %v994 = vpop.f32.mrb[0].mxu0
        %v995 = vpop.f32.mrb[0].mxu0
        %v996 = vadd.f32 0.0, %v995
        %v997 = vpop.f32.mrb[0].mxu0
        %998 = vdwg.mxu0
        %999 = vmax.xlane.f32.xlu0 %v937
        %v1000 = vpop.xlane.xlu0 %999
        %1001 = vmax.xlane.f32.xlu0 %v940
        %v1002 = vpop.xlane.xlu0 %1001
        %1003 = vmax.xlane.f32.xlu0 %v945
        %v1004 = vpop.xlane.xlu0 %1003
        %1005 = vmax.xlane.f32.xlu0 %v948
        %v1006 = vpop.xlane.xlu0 %1005
        %1007 = vmax.xlane.f32.xlu0 %v953
        %v1008 = vpop.xlane.xlu0 %1007
        %1009 = vmax.xlane.f32.xlu0 %v956
        %v1010 = vpop.xlane.xlu0 %1009
        %1011 = vmax.xlane.f32.xlu0 %v961
        %v1012 = vpop.xlane.xlu0 %1011
        %1013 = vmax.xlane.f32.xlu0 %v964
        %v1014 = vpop.xlane.xlu0 %1013
        %1015 = vmax.xlane.f32.xlu0 %v969
        %v1016 = vpop.xlane.xlu0 %1015
        %1017 = vmax.xlane.f32.xlu0 %v972
        %v1018 = vpop.xlane.xlu0 %1017
        %1019 = vmax.xlane.f32.xlu0 %v977
        %v1020 = vpop.xlane.xlu0 %1019
        %1021 = vmax.xlane.f32.xlu0 %v980
        %v1022 = vpop.xlane.xlu0 %1021
        %1023 = vmax.xlane.f32.xlu0 %v985
        %v1024 = vpop.xlane.xlu0 %1023
        %1025 = vmax.xlane.f32.xlu0 %v988
        %v1026 = vpop.xlane.xlu0 %1025
        %1027 = vmax.xlane.f32.xlu0 %v993
        %v1028 = vpop.xlane.xlu0 %1027
        %1029 = vmax.xlane.f32.xlu0 %v996
        %v1030 = vpop.xlane.xlu0 %1029
        %v1031 = vsub.f32 %v937, %v1000
        %v1032 = vsub.f32 %v940, %v1002
        %v1033 = vsub.f32 %v945, %v1004
        %v1034 = vsub.f32 %v948, %v1006
        %v1035 = vsub.f32 %v953, %v1008
        %v1036 = vsub.f32 %v956, %v1010
        %v1037 = vsub.f32 %v961, %v1012
        %v1038 = vsub.f32 %v964, %v1014
        %v1039 = vsub.f32 %v969, %v1016
        %v1040 = vsub.f32 %v972, %v1018
        %v1041 = vsub.f32 %v977, %v1020
        %v1042 = vsub.f32 %v980, %v1022
        %v1043 = vsub.f32 %v985, %v1024
        %v1044 = vsub.f32 %v988, %v1026
        %v1045 = vsub.f32 %v993, %v1028
        %v1046 = vsub.f32 %v996, %v1030
        %v1047 = vmul.f32 %v1031, 1.442695
        %v1048 = vpow.pop %v1047
        %v1049 = vmul.f32 %v1032, 1.442695
        %v1050 = vpow.pop %v1049
        %v1051 = vmul.f32 %v1033, 1.442695
        %v1052 = vpow.pop %v1051
        %v1053 = vmul.f32 %v1034, 1.442695
        %v1054 = vpow.pop %v1053
        %v1055 = vmul.f32 %v1035, 1.442695
        %v1056 = vpow.pop %v1055
        %v1057 = vmul.f32 %v1036, 1.442695
        %v1058 = vpow.pop %v1057
        %v1059 = vmul.f32 %v1037, 1.442695
        %v1060 = vpow.pop %v1059
        %v1061 = vmul.f32 %v1038, 1.442695
        %v1062 = vpow.pop %v1061
        %v1063 = vmul.f32 %v1039, 1.442695
        %v1064 = vpow.pop %v1063
        %v1065 = vmul.f32 %v1040, 1.442695
        %v1066 = vpow.pop %v1065
        %v1067 = vmul.f32 %v1041, 1.442695
        %v1068 = vpow.pop %v1067
        %v1069 = vmul.f32 %v1042, 1.442695
        %v1070 = vpow.pop %v1069
        %v1071 = vmul.f32 %v1043, 1.442695
        %v1072 = vpow.pop %v1071
        %v1073 = vmul.f32 %v1044, 1.442695
        %v1074 = vpow.pop %v1073
        %v1075 = vmul.f32 %v1045, 1.442695
        %v1076 = vpow.pop %v1075
        %v1077 = vmul.f32 %v1046, 1.442695
        %v1078 = vpow.pop %v1077
        %1079 = vadd.xlane.f32.xlu0 %v1048
        %v1080 = vpop.xlane.xlu0 %1079
        %1081 = vadd.xlane.f32.xlu0 %v1050
        %v1082 = vpop.xlane.xlu0 %1081
        %1083 = vadd.xlane.f32.xlu0 %v1052
        %v1084 = vpop.xlane.xlu0 %1083
        %1085 = vadd.xlane.f32.xlu0 %v1054
        %v1086 = vpop.xlane.xlu0 %1085
        %1087 = vadd.xlane.f32.xlu0 %v1056
        %v1088 = vpop.xlane.xlu0 %1087
        %1089 = vadd.xlane.f32.xlu0 %v1058
        %v1090 = vpop.xlane.xlu0 %1089
        %1091 = vadd.xlane.f32.xlu0 %v1060
        %v1092 = vpop.xlane.xlu0 %1091
        %1093 = vadd.xlane.f32.xlu0 %v1062
        %v1094 = vpop.xlane.xlu0 %1093
        %1095 = vadd.xlane.f32.xlu0 %v1064
        %v1096 = vpop.xlane.xlu0 %1095
        %1097 = vadd.xlane.f32.xlu0 %v1066
        %v1098 = vpop.xlane.xlu0 %1097
        %1099 = vadd.xlane.f32.xlu0 %v1068
        %v1100 = vpop.xlane.xlu0 %1099
        %1101 = vadd.xlane.f32.xlu0 %v1070
        %v1102 = vpop.xlane.xlu0 %1101
        %1103 = vadd.xlane.f32.xlu0 %v1072
        %v1104 = vpop.xlane.xlu0 %1103
        %1105 = vadd.xlane.f32.xlu0 %v1074
        %v1106 = vpop.xlane.xlu0 %1105
        %1107 = vadd.xlane.f32.xlu0 %v1076
        %v1108 = vpop.xlane.xlu0 %1107
        %1109 = vadd.xlane.f32.xlu0 %v1078
        %v1110 = vpop.xlane.xlu0 %1109
        %v1111 = vrcp.pop %v1080
        %v1112 = vrcp.pop %v1082
        %v1113 = vrcp.pop %v1084
        %v1114 = vrcp.pop %v1086
        %v1115 = vrcp.pop %v1088
        %v1116 = vrcp.pop %v1090
        %v1117 = vrcp.pop %v1092
        %v1118 = vrcp.pop %v1094
        %v1119 = vrcp.pop %v1096
        %v1120 = vrcp.pop %v1098
        %v1121 = vrcp.pop %v1100
        %v1122 = vrcp.pop %v1102
        %v1123 = vrcp.pop %v1104
        %v1124 = vrcp.pop %v1106
        %v1125 = vrcp.pop %v1108
        %v1126 = vrcp.pop %v1110
        %v1127 = vmul.f32 %v1048, %v1111
        %v1128 = vmul.f32 %v1050, %v1112
        %v1129 = vmul.f32 %v1052, %v1113
        %v1130 = vmul.f32 %v1054, %v1114
        %v1131 = vmul.f32 %v1056, %v1115
        %v1132 = vmul.f32 %v1058, %v1116
        %v1133 = vmul.f32 %v1060, %v1117
        %v1134 = vmul.f32 %v1062, %v1118
        %v1135 = vmul.f32 %v1064, %v1119
        %v1136 = vmul.f32 %v1066, %v1120
        %v1137 = vmul.f32 %v1068, %v1121
        %v1138 = vmul.f32 %v1070, %v1122
        %v1139 = vmul.f32 %v1072, %v1123
        %v1140 = vmul.f32 %v1074, %v1124
        %v1141 = vmul.f32 %v1076, %v1125
        %v1142 = vmul.f32 %v1078, %v1126
        %v1143 = vadd.f32 %v1127, %v1128
        %v1144 = vadd.f32 %v1143, %v1129
        %v1145 = vadd.f32 %v1144, %v1130
        %v1146 = vadd.f32 %v1145, %v1131
        %v1147 = vadd.f32 %v1146, %v1132
        %v1148 = vadd.f32 %v1147, %v1133
        %v1149 = vadd.f32 %v1148, %v1134
        %v1150 = vadd.f32 %v1149, %v1135
        %v1151 = vadd.f32 %v1150, %v1136
        %v1152 = vadd.f32 %v1151, %v1137
        %v1153 = vadd.f32 %v1152, %v1138
        %v1154 = vadd.f32 %v1153, %v1139
        %v1155 = vadd.f32 %v1154, %v1140
        %v1156 = vadd.f32 %v1155, %v1141
        %v1157 = vadd.f32 %v1156, %v1142
        %v1158 = vrot.slane %v1157, 4
        %v1159 = vadd.f32 %v1157, %v1158
        %v1160 = vrot.slane %v1159, 2
        %v1161 = vadd.f32 %v1159, %v1160
        %v1162 = vrot.slane %v1161, 1
        %v1163 = vadd.f32 %v1161, %v1162
        %v1164 = vadd.f32 %v1163, 1e-09
        %v1165 = vrcp.pop %v1164
        %v1166 = vpack.c.bf16 %v853, %v852
        %v1167 = vpack.c.bf16 %v855, %v854
        %v1168 = vpack.c.bf16 %v857, %v856
        %v1169 = vpack.c.bf16 %v859, %v858
        %v1170 = vpack.c.bf16 %v1128, %v1127
        %v1171 = vpack.c.bf16 %v1130, %v1129
        %v1172 = vpack.c.bf16 %v1132, %v1131
        %v1173 = vpack.c.bf16 %v1134, %v1133
        %v1174 = vpack.c.bf16 %v1136, %v1135
        %v1175 = vpack.c.bf16 %v1138, %v1137
        %v1176 = vpack.c.bf16 %v1140, %v1139
        %v1177 = vpack.c.bf16 %v1142, %v1141
        %1178 = vmatprep.subr.bf16.mxu0 0
        %1179 = vmatpush1.bf16.msra.mxu0 %v1170
        %1180 = vmatprep.subr.bf16.mxu0 0
        %1181 = vmatpush1.bf16.msra.mxu0 %v1171
        %1182 = vmatprep.subr.bf16.mxu0 0
        %1183 = vmatpush1.bf16.msra.mxu0 %v1172
        %1184 = vmatprep.subr.bf16.mxu0 0
        %1185 = vmatpush1.bf16.msra.mxu0 %v1173
        %1186 = vmatprep.subr.bf16.mxu0 0
        %1187 = vmatpush1.bf16.msra.mxu0 %v1174
        %1188 = vmatprep.subr.bf16.mxu0 0
        %1189 = vmatpush1.bf16.msra.mxu0 %v1175
        %1190 = vmatprep.subr.bf16.mxu0 0
        %1191 = vmatpush1.bf16.msra.mxu0 %v1176
        %1192 = vmatprep.subr.bf16.mxu0 0
        %1193 = vmatpush1.bf16.msra.mxu0 %v1177
        %1194 = vmatprep.subr.bf16.mxu0 0
        %1195 = vmatpush1.bf16.msra.mxu0 0
        %1196 = vmatprep.subr.bf16.mxu0 0
        %1197 = vmatpush1.bf16.msra.mxu0 0
        %1198 = vmatprep.subr.bf16.mxu0 0
        %1199 = vmatpush1.bf16.msra.mxu0 0
        %1200 = vmatprep.subr.bf16.mxu0 0
        %1201 = vmatpush1.bf16.msra.mxu0 0
        %1202 = vmatprep.subr.bf16.mxu0 0
        %1203 = vmatpush1.bf16.msra.mxu0 0
        %1204 = vmatprep.subr.bf16.mxu0 0
        %1205 = vmatpush1.bf16.msra.mxu0 0
        %1206 = vmatprep.subr.bf16.mxu0 0
        %1207 = vmatpush1.bf16.msra.mxu0 0
        %1208 = vmatprep.subr.bf16.mxu0 0
        %1209 = vmatpush1.bf16.msra.mxu0 0
        %1210 = vmatprep.mubr.bf16.mxu0 0
        %1211 = vmatmul.mubr.bf16.gmra.mrb[0].mxu0 %v1166
        %v1212 = vpop.f32.mrb[0].mxu0
        %v1213 = vadd.f32 0.0, %v1212
        %v1214 = vpop.f32.mrb[0].mxu0
        %v1215 = vpop.f32.mrb[0].mxu0
        %v1216 = vadd.f32 0.0, %v1215
        %v1217 = vpop.f32.mrb[0].mxu0
        %1218 = vmatprep.mubr.bf16.mxu0 0
        %1219 = vmatmul.mubr.bf16.gmra.mrb[0].mxu0 %v1167
        %v1220 = vpop.f32.mrb[0].mxu0
        %v1221 = vadd.f32 0.0, %v1220
        %v1222 = vpop.f32.mrb[0].mxu0
        %v1223 = vpop.f32.mrb[0].mxu0
        %v1224 = vadd.f32 0.0, %v1223
        %v1225 = vpop.f32.mrb[0].mxu0
        %1226 = vmatprep.mubr.bf16.mxu0 0
        %1227 = vmatmul.mubr.bf16.gmra.mrb[0].mxu0 %v1168
        %v1228 = vpop.f32.mrb[0].mxu0
        %v1229 = vadd.f32 0.0, %v1228
        %v1230 = vpop.f32.mrb[0].mxu0
        %v1231 = vpop.f32.mrb[0].mxu0
        %v1232 = vadd.f32 0.0, %v1231
        %v1233 = vpop.f32.mrb[0].mxu0
        %1234 = vmatprep.mubr.bf16.mxu0 0
        %1235 = vmatmul.mubr.bf16.gmra.mrb[0].mxu0 %v1169
        %v1236 = vpop.f32.mrb[0].mxu0
        %v1237 = vadd.f32 0.0, %v1236
        %v1238 = vpop.f32.mrb[0].mxu0
        %v1239 = vpop.f32.mrb[0].mxu0
        %v1240 = vadd.f32 0.0, %v1239
        %v1241 = vpop.f32.mrb[0].mxu0
        %1242 = vdwg.mxu0
        %v1243 = vmul.f32 %v1213, %v1165
        %v1244 = vmul.f32 %v1216, %v1165
        %v1245 = vmul.f32 %v1221, %v1165
        %v1246 = vmul.f32 %v1224, %v1165
        %v1247 = vmul.f32 %v1229, %v1165
        %v1248 = vmul.f32 %v1232, %v1165
        %v1249 = vmul.f32 %v1237, %v1165
        %v1250 = vmul.f32 %v1240, %v1165
        %v1251 = vsub.f32 %v669, %v1243
        %v1252 = vsub.f32 %v670, %v1244
        %v1253 = vsub.f32 %v671, %v1245
        %v1254 = vsub.f32 %v672, %v1246
        %v1255 = vsub.f32 %v673, %v1247
        %v1256 = vsub.f32 %v674, %v1248
        %v1257 = vsub.f32 %v675, %v1249
        %v1258 = vsub.f32 %v676, %v1250
        %v1259 = vpack.c.bf16 %v1252, %v1251
        %v1260 = vpack.c.bf16 %v1254, %v1253
        %v1261 = vpack.c.bf16 %v1256, %v1255
        %v1262 = vpack.c.bf16 %v1258, %v1257
        %v1263 = vld [vmem:[%s7] sm:$0xf]
        %v1264 = vld [vmem:[%s7 + $0x4] sm:$0xf]
        %v1265 = vld [vmem:[%s7 + $0x8] sm:$0xf]
        %v1266 = vld [vmem:[%s7 + $0xc] sm:$0xf]
        %v1267 = vld [vmem:[%s7 + $0x10] sm:$0xf]
        %v1268 = vld [vmem:[%s7 + $0x14] sm:$0xf]
        %v1269 = vld [vmem:[%s7 + $0x18] sm:$0xf]
        %v1270 = vld [vmem:[%s7 + $0x1c] sm:$0xf]
        %v1271 = vld [vmem:[%s8] sm:$0xff]
        %v1272 = vld [vmem:[%s8 + $0x8] sm:$0xff]
        %v1273 = vld [vmem:[%s8 + $0x10] sm:$0xff]
        %v1274 = vld [vmem:[%s8 + $0x18] sm:$0xff]
        %v1275 = vld [vmem:[%s8 + $0x20] sm:$0xff]
        %v1276 = vld [vmem:[%s8 + $0x28] sm:$0xff]
        %v1277 = vld [vmem:[%s8 + $0x30] sm:$0xff]
        %v1278 = vld [vmem:[%s8 + $0x38] sm:$0xff]
        %1280 = vset.pattern.permute.xlu0 0
        %1281 = vperm.xlu0 %1280, %v1271
        %v1282 = vpop.permute.xlu0 %1281
        %1285 = vset.pattern.permute.xlu0 0
        %1286 = vperm.xlu0 %1285, %v1272
        %v1287 = vpop.permute.xlu0 %1286
        %1290 = vset.pattern.permute.xlu0 0
        %1291 = vperm.xlu0 %1290, %v1273
        %v1292 = vpop.permute.xlu0 %1291
        %1295 = vset.pattern.permute.xlu0 0
        %1296 = vperm.xlu0 %1295, %v1274
        %v1297 = vpop.permute.xlu0 %1296
        %1300 = vset.pattern.permute.xlu0 0
        %1301 = vperm.xlu0 %1300, %v1275
        %v1302 = vpop.permute.xlu0 %1301
        %1305 = vset.pattern.permute.xlu0 0
        %1306 = vperm.xlu0 %1305, %v1276
        %v1307 = vpop.permute.xlu0 %1306
        %1310 = vset.pattern.permute.xlu0 0
        %1311 = vperm.xlu0 %1310, %v1277
        %v1312 = vpop.permute.xlu0 %1311
        %1315 = vset.pattern.permute.xlu0 0
        %1316 = vperm.xlu0 %1315, %v1278
        %v1317 = vpop.permute.xlu0 %1316
        %v1327 = vunpack.c.l.b16 %v1263
        %v1328 = vunpack.c.l.b16 %v1264
        %v1329 = vunpack.c.l.b16 %v1265
        %v1330 = vunpack.c.l.b16 %v1266
        %v1331 = vunpack.c.l.b16 %v1267
        %v1332 = vunpack.c.l.b16 %v1268
        %v1333 = vunpack.c.l.b16 %v1269
        %v1334 = vunpack.c.l.b16 %v1270
        %v1335 = vpack.c.b16 %v1328, %v1327
        %v1336 = vpack.c.b16 %v1330, %v1329
        %v1337 = vpack.c.b16 %v1332, %v1331
        %v1338 = vpack.c.b16 %v1334, %v1333
        %v1340 = vsel %vm426, %v1335, 0
        %v1343 = vsel %vm426, %v1336, 0
        %v1346 = vsel %vm426, %v1337, 0
        %v1349 = vsel %vm426, %v1338, 0
        %1351 = vmatprep.subr.bf16.mxu0 0
        %1352 = vmatpush1.bf16.msra.mxu0 %v1259
        %1353 = vmatprep.subr.bf16.mxu0 0
        %1354 = vmatpush1.bf16.msra.mxu0 %v1260
        %1355 = vmatprep.subr.bf16.mxu0 0
        %1356 = vmatpush1.bf16.msra.mxu0 %v1261
        %1357 = vmatprep.subr.bf16.mxu0 0
        %1358 = vmatpush1.bf16.msra.mxu0 %v1262
        %1359 = vmatprep.subr.bf16.mxu0 0
        %1360 = vmatpush1.bf16.msra.mxu0 0
        %1361 = vmatprep.subr.bf16.mxu0 0
        %1362 = vmatpush1.bf16.msra.mxu0 0
        %1363 = vmatprep.subr.bf16.mxu0 0
        %1364 = vmatpush1.bf16.msra.mxu0 0
        %1365 = vmatprep.subr.bf16.mxu0 0
        %1366 = vmatpush1.bf16.msra.mxu0 0
        %1367 = vmatprep.subr.bf16.mxu0 0
        %1368 = vmatpush1.bf16.msra.mxu0 0
        %1369 = vmatprep.subr.bf16.mxu0 0
        %1370 = vmatpush1.bf16.msra.mxu0 0
        %1371 = vmatprep.subr.bf16.mxu0 0
        %1372 = vmatpush1.bf16.msra.mxu0 0
        %1373 = vmatprep.subr.bf16.mxu0 0
        %1374 = vmatpush1.bf16.msra.mxu0 0
        %1375 = vmatprep.subr.bf16.mxu0 0
        %1376 = vmatpush1.bf16.msra.mxu0 0
        %1377 = vmatprep.subr.bf16.mxu0 0
        %1378 = vmatpush1.bf16.msra.mxu0 0
        %1379 = vmatprep.subr.bf16.mxu0 0
        %1380 = vmatpush1.bf16.msra.mxu0 0
        %1381 = vmatprep.subr.bf16.mxu0 0
        %1382 = vmatpush1.bf16.msra.mxu0 0
        %1383 = vmatprep.mubr.bf16.mxu0 0
        %1384 = vmatmul.mubr.bf16.gmra.mrb[0].mxu0 %v1340
        %v1385 = vpop.f32.mrb[0].mxu0
        %v1386 = vadd.f32 %v1282, %v1385
        %v1387 = vpop.f32.mrb[0].mxu0
        %v1388 = vpop.f32.mrb[0].mxu0
        %v1389 = vadd.f32 %v1287, %v1388
        %v1390 = vpop.f32.mrb[0].mxu0
        %1391 = vmatprep.mubr.bf16.mxu0 0
        %1392 = vmatmul.mubr.bf16.gmra.mrb[0].mxu0 %v1343
        %v1393 = vpop.f32.mrb[0].mxu0
        %v1394 = vadd.f32 %v1292, %v1393
        %v1395 = vpop.f32.mrb[0].mxu0
        %v1396 = vpop.f32.mrb[0].mxu0
        %v1397 = vadd.f32 %v1297, %v1396
        %v1398 = vpop.f32.mrb[0].mxu0
        %1399 = vmatprep.mubr.bf16.mxu0 0
        %1400 = vmatmul.mubr.bf16.gmra.mrb[0].mxu0 %v1346
        %v1401 = vpop.f32.mrb[0].mxu0
        %v1402 = vadd.f32 %v1302, %v1401
        %v1403 = vpop.f32.mrb[0].mxu0
        %v1404 = vpop.f32.mrb[0].mxu0
        %v1405 = vadd.f32 %v1307, %v1404
        %v1406 = vpop.f32.mrb[0].mxu0
        %1407 = vmatprep.mubr.bf16.mxu0 0
        %1408 = vmatmul.mubr.bf16.gmra.mrb[0].mxu0 %v1349
        %v1409 = vpop.f32.mrb[0].mxu0
        %v1410 = vadd.f32 %v1312, %v1409
        %v1411 = vpop.f32.mrb[0].mxu0
        %v1412 = vpop.f32.mrb[0].mxu0
        %v1413 = vadd.f32 %v1317, %v1412
        %v1414 = vpop.f32.mrb[0].mxu0
        %1415 = vdwg.mxu0
        %v1416 = vmax.f32 %v1386, 0.0
        %v1417 = vmax.f32 %v1389, 0.0
        %v1418 = vmax.f32 %v1394, 0.0
        %v1419 = vmax.f32 %v1397, 0.0
        %v1420 = vmax.f32 %v1402, 0.0
        %v1421 = vmax.f32 %v1405, 0.0
        %v1422 = vmax.f32 %v1410, 0.0
        %v1423 = vmax.f32 %v1413, 0.0
        %v1424 = vadd.f32 %v669, %v1416
        %v1425 = vadd.f32 %v670, %v1417
        %v1426 = vadd.f32 %v671, %v1418
        %v1427 = vadd.f32 %v672, %v1419
        %v1428 = vadd.f32 %v673, %v1420
        %v1429 = vadd.f32 %v674, %v1421
        %v1430 = vadd.f32 %v675, %v1422
        %v1431 = vadd.f32 %v676, %v1423
        %1432 = vst [vmem:[%s328] sm:$0xff] %v1424
        %1433 = vst [vmem:[%s328 + $0x8] sm:$0xff] %v1425
        %1434 = vst [vmem:[%s328 + $0x10] sm:$0xff] %v1426
        %1435 = vst [vmem:[%s328 + $0x18] sm:$0xff] %v1427
        %1436 = vst [vmem:[%s328 + $0x20] sm:$0xff] %v1428
        %1437 = vst [vmem:[%s328 + $0x28] sm:$0xff] %v1429
        %1438 = vst [vmem:[%s328 + $0x30] sm:$0xff] %v1430
        %1439 = vst [vmem:[%s328 + $0x38] sm:$0xff] %v1431
        %v1440 = vpack.c.bf16 %v1425, %v1424
        %v1441 = vpack.c.bf16 %v1427, %v1426
        %v1442 = vpack.c.bf16 %v1429, %v1428
        %v1443 = vpack.c.bf16 %v1431, %v1430
        %s1444 = scalar_lea.vmem %s5, 40
        %v1445 = vld [vmem:[%s1444] sm:$0xf]
        %v1446 = vld [vmem:[%s1444 + $0x4] sm:$0xf]
        %v1447 = vld [vmem:[%s1444 + $0x8] sm:$0xf]
        %v1448 = vld [vmem:[%s1444 + $0xc] sm:$0xf]
        %v1449 = vld [vmem:[%s1444 + $0x10] sm:$0xf]
        %v1450 = vld [vmem:[%s1444 + $0x14] sm:$0xf]
        %v1451 = vld [vmem:[%s1444 + $0x18] sm:$0xf]
        %v1452 = vld [vmem:[%s1444 + $0x1c] sm:$0xf]
        %v1453 = vld [vmem:[%s1444 + $0x20] sm:$0xf]
        %v1454 = vld [vmem:[%s1444 + $0x24] sm:$0xf]
        %v1465 = vunpack.c.l.b16 %v1445
        %v1466 = vunpack.c.l.b16 %v1446
        %v1467 = vunpack.c.l.b16 %v1447
        %v1468 = vunpack.c.l.b16 %v1448
        %v1469 = vunpack.c.l.b16 %v1449
        %v1470 = vunpack.c.l.b16 %v1450
        %v1471 = vunpack.c.l.b16 %v1451
        %v1472 = vunpack.c.l.b16 %v1452
        %v1473 = vunpack.c.l.b16 %v1453
        %v1474 = vunpack.c.l.b16 %v1454
        %v1475 = vpack.c.b16 %v1466, %v1465
        %v1476 = vpack.c.b16 %v1468, %v1467
        %v1477 = vpack.c.b16 %v1470, %v1469
        %v1478 = vpack.c.b16 %v1472, %v1471
        %v1479 = vpack.c.b16 %v1474, %v1473
        %v1481 = vsel %vm426, %v1475, 0
        %v1484 = vsel %vm426, %v1476, 0
        %v1487 = vsel %vm426, %v1477, 0
        %v1490 = vsel %vm426, %v1478, 0
        %v1493 = vsel %vm426, %v1479, 0
        %1495 = vmatprep.subr.bf16.mxu0 0
        %1496 = vmatpush1.bf16.msra.mxu0 %v1440
        %1497 = vmatprep.subr.bf16.mxu0 0
        %1498 = vmatpush1.bf16.msra.mxu0 %v1441
        %1499 = vmatprep.subr.bf16.mxu0 0
        %1500 = vmatpush1.bf16.msra.mxu0 %v1442
        %1501 = vmatprep.subr.bf16.mxu0 0
        %1502 = vmatpush1.bf16.msra.mxu0 %v1443
        %1503 = vmatprep.subr.bf16.mxu0 0
        %1504 = vmatpush1.bf16.msra.mxu0 0
        %1505 = vmatprep.subr.bf16.mxu0 0
        %1506 = vmatpush1.bf16.msra.mxu0 0
        %1507 = vmatprep.subr.bf16.mxu0 0
        %1508 = vmatpush1.bf16.msra.mxu0 0
        %1509 = vmatprep.subr.bf16.mxu0 0
        %1510 = vmatpush1.bf16.msra.mxu0 0
        %1511 = vmatprep.subr.bf16.mxu0 0
        %1512 = vmatpush1.bf16.msra.mxu0 0
        %1513 = vmatprep.subr.bf16.mxu0 0
        %1514 = vmatpush1.bf16.msra.mxu0 0
        %1515 = vmatprep.subr.bf16.mxu0 0
        %1516 = vmatpush1.bf16.msra.mxu0 0
        %1517 = vmatprep.subr.bf16.mxu0 0
        %1518 = vmatpush1.bf16.msra.mxu0 0
        %1519 = vmatprep.subr.bf16.mxu0 0
        %1520 = vmatpush1.bf16.msra.mxu0 0
        %1521 = vmatprep.subr.bf16.mxu0 0
        %1522 = vmatpush1.bf16.msra.mxu0 0
        %1523 = vmatprep.subr.bf16.mxu0 0
        %1524 = vmatpush1.bf16.msra.mxu0 0
        %1525 = vmatprep.subr.bf16.mxu0 0
        %1526 = vmatpush1.bf16.msra.mxu0 0
        %1527 = vmatprep.mubr.bf16.mxu0 0
        %1528 = vmatmul.mubr.bf16.gmra.mrb[0].mxu0 %v1481
        %v1529 = vpop.f32.mrb[0].mxu0
        %v1530 = vadd.f32 0.0, %v1529
        %v1531 = vpop.f32.mrb[0].mxu0
        %v1532 = vpop.f32.mrb[0].mxu0
        %v1533 = vadd.f32 0.0, %v1532
        %v1534 = vpop.f32.mrb[0].mxu0
        %1535 = vmatprep.mubr.bf16.mxu0 0
        %1536 = vmatmul.mubr.bf16.gmra.mrb[0].mxu0 %v1484
        %v1537 = vpop.f32.mrb[0].mxu0
        %v1538 = vadd.f32 0.0, %v1537
        %v1539 = vpop.f32.mrb[0].mxu0
        %v1540 = vpop.f32.mrb[0].mxu0
        %v1541 = vadd.f32 0.0, %v1540
        %v1542 = vpop.f32.mrb[0].mxu0
        %1543 = vmatprep.mubr.bf16.mxu0 0
        %1544 = vmatmul.mubr.bf16.gmra.mrb[0].mxu0 %v1487
        %v1545 = vpop.f32.mrb[0].mxu0
        %v1546 = vadd.f32 0.0, %v1545
        %v1547 = vpop.f32.mrb[0].mxu0
        %v1548 = vpop.f32.mrb[0].mxu0
        %v1549 = vadd.f32 0.0, %v1548
        %v1550 = vpop.f32.mrb[0].mxu0
        %1551 = vmatprep.mubr.bf16.mxu0 0
        %1552 = vmatmul.mubr.bf16.gmra.mrb[0].mxu0 %v1490
        %v1553 = vpop.f32.mrb[0].mxu0
        %v1554 = vadd.f32 0.0, %v1553
        %v1555 = vpop.f32.mrb[0].mxu0
        %v1556 = vpop.f32.mrb[0].mxu0
        %v1557 = vadd.f32 0.0, %v1556
        %v1558 = vpop.f32.mrb[0].mxu0
        %1559 = vmatprep.mubr.bf16.mxu0 0
        %1560 = vmatmul.mubr.bf16.gmra.mrb[0].mxu0 %v1493
        %v1561 = vpop.f32.mrb[0].mxu0
        %v1562 = vadd.f32 0.0, %v1561
        %v1563 = vpop.f32.mrb[0].mxu0
        %v1564 = vpop.f32.mrb[0].mxu0
        %v1565 = vadd.f32 0.0, %v1564
        %v1566 = vpop.f32.mrb[0].mxu0
        %1567 = vdwg.mxu0
        %s1568 = scalar_lea.vmem %s6, 64
        %v1569 = vld [vmem:[%s1568] sm:$0xff]
        %v1570 = vld [vmem:[%s1568 + $0x8] sm:$0xff]
        %v1571 = vld [vmem:[%s1568 + $0x10] sm:$0xff]
        %v1572 = vld [vmem:[%s1568 + $0x18] sm:$0xff]
        %v1573 = vld [vmem:[%s1568 + $0x20] sm:$0xff]
        %v1574 = vld [vmem:[%s1568 + $0x28] sm:$0xff]
        %v1575 = vld [vmem:[%s1568 + $0x30] sm:$0xff]
        %v1576 = vld [vmem:[%s1568 + $0x38] sm:$0xff]
        %1578 = vset.pattern.permute.xlu0 0
        %1579 = vperm.xlu0 %1578, %v1569
        %v1580 = vpop.permute.xlu0 %1579
        %1583 = vset.pattern.permute.xlu0 0
        %1584 = vperm.xlu0 %1583, %v1570
        %v1585 = vpop.permute.xlu0 %1584
        %1588 = vset.pattern.permute.xlu0 0
        %1589 = vperm.xlu0 %1588, %v1571
        %v1590 = vpop.permute.xlu0 %1589
        %1593 = vset.pattern.permute.xlu0 0
        %1594 = vperm.xlu0 %1593, %v1572
        %v1595 = vpop.permute.xlu0 %1594
        %1598 = vset.pattern.permute.xlu0 0
        %1599 = vperm.xlu0 %1598, %v1573
        %v1600 = vpop.permute.xlu0 %1599
        %1603 = vset.pattern.permute.xlu0 0
        %1604 = vperm.xlu0 %1603, %v1574
        %v1605 = vpop.permute.xlu0 %1604
        %1608 = vset.pattern.permute.xlu0 0
        %1609 = vperm.xlu0 %1608, %v1575
        %v1610 = vpop.permute.xlu0 %1609
        %1613 = vset.pattern.permute.xlu0 0
        %1614 = vperm.xlu0 %1613, %v1576
        %v1615 = vpop.permute.xlu0 %1614
        %v1617 = vadd.f32 %v1538, %v1580
        %v1618 = vadd.f32 %v1541, %v1585
        %v1619 = vadd.f32 %v1546, %v1590
        %v1620 = vadd.f32 %v1549, %v1595
        %v1621 = vadd.f32 %v1554, %v1600
        %v1622 = vadd.f32 %v1557, %v1605
        %v1623 = vadd.f32 %v1562, %v1610
        %v1624 = vadd.f32 %v1565, %v1615
        %v1625 = vpack.c.bf16 %v1533, %v1530
        %1626 = vxpose.xlu0.c.b16.start [1/8] %v1625, 128
        %1627 = vxpose.xlu0.c.b16.cont [2/8] 0, 128
        %1628 = vxpose.xlu0.c.b16.cont [3/8] 0, 128
        %1629 = vxpose.xlu0.c.b16.cont [4/8] 0, 128
        %1630 = vxpose.xlu0.c.b16.cont [5/8] 0, 128
        %1631 = vxpose.xlu0.c.b16.cont [6/8] 0, 128
        %1632 = vxpose.xlu0.c.b16.cont [7/8] 0, 128
        %1633 = vxpose.xlu0.c.b16.end [8/8] 0, 128
        %v1634 = vpop.trf.xlu0
        %v1635 = vpop.trf.xlu0
        %v1636 = vpop.trf.xlu0
        %v1637 = vpop.trf.xlu0
        %v1638 = vpop.trf.xlu0
        %v1639 = vpop.trf.xlu0
        %v1640 = vpop.trf.xlu0
        %v1641 = vpop.trf.xlu0
        %v1643 = vsel %vm877, %v1634, 0
        %v1646 = vsel %vm877, %v1635, 0
        %v1649 = vsel %vm877, %v1636, 0
        %v1652 = vsel %vm877, %v1637, 0
        %v1655 = vsel %vm877, %v1638, 0
        %v1658 = vsel %vm877, %v1639, 0
        %v1661 = vsel %vm877, %v1640, 0
        %v1664 = vsel %vm877, %v1641, 0
        %1666 = vmatprep.subr.bf16.mxu0 0
        %1667 = vmatpush1.bf16.msra.mxu0 %v1625
        %1668 = vmatprep.subr.bf16.mxu0 0
        %1669 = vmatpush1.bf16.msra.mxu0 0
        %1670 = vmatprep.subr.bf16.mxu0 0
        %1671 = vmatpush1.bf16.msra.mxu0 0
        %1672 = vmatprep.subr.bf16.mxu0 0
        %1673 = vmatpush1.bf16.msra.mxu0 0
        %1674 = vmatprep.subr.bf16.mxu0 0
        %1675 = vmatpush1.bf16.msra.mxu0 0
        %1676 = vmatprep.subr.bf16.mxu0 0
        %1677 = vmatpush1.bf16.msra.mxu0 0
        %1678 = vmatprep.subr.bf16.mxu0 0
        %1679 = vmatpush1.bf16.msra.mxu0 0
        %1680 = vmatprep.subr.bf16.mxu0 0
        %1681 = vmatpush1.bf16.msra.mxu0 0
        %1682 = vmatprep.subr.bf16.mxu0 0
        %1683 = vmatpush1.bf16.msra.mxu0 0
        %1684 = vmatprep.subr.bf16.mxu0 0
        %1685 = vmatpush1.bf16.msra.mxu0 0
        %1686 = vmatprep.subr.bf16.mxu0 0
        %1687 = vmatpush1.bf16.msra.mxu0 0
        %1688 = vmatprep.subr.bf16.mxu0 0
        %1689 = vmatpush1.bf16.msra.mxu0 0
        %1690 = vmatprep.subr.bf16.mxu0 0
        %1691 = vmatpush1.bf16.msra.mxu0 0
        %1692 = vmatprep.subr.bf16.mxu0 0
        %1693 = vmatpush1.bf16.msra.mxu0 0
        %1694 = vmatprep.subr.bf16.mxu0 0
        %1695 = vmatpush1.bf16.msra.mxu0 0
        %1696 = vmatprep.subr.bf16.mxu0 0
        %1697 = vmatpush1.bf16.msra.mxu0 0
        %1698 = vmatprep.mubr.bf16.mxu0 0
        %1699 = vmatmul.mubr.bf16.gmra.mrb[0].mxu0 %v1643
        %v1700 = vpop.f32.mrb[0].mxu0
        %v1701 = vadd.f32 0.0, %v1700
        %v1702 = vpop.f32.mrb[0].mxu0
        %v1703 = vpop.f32.mrb[0].mxu0
        %v1704 = vadd.f32 0.0, %v1703
        %v1705 = vpop.f32.mrb[0].mxu0
        %1706 = vmatprep.mubr.bf16.mxu0 0
        %1707 = vmatmul.mubr.bf16.gmra.mrb[0].mxu0 %v1646
        %v1708 = vpop.f32.mrb[0].mxu0
        %v1709 = vadd.f32 0.0, %v1708
        %v1710 = vpop.f32.mrb[0].mxu0
        %v1711 = vpop.f32.mrb[0].mxu0
        %v1712 = vadd.f32 0.0, %v1711
        %v1713 = vpop.f32.mrb[0].mxu0
        %1714 = vmatprep.mubr.bf16.mxu0 0
        %1715 = vmatmul.mubr.bf16.gmra.mrb[0].mxu0 %v1649
        %v1716 = vpop.f32.mrb[0].mxu0
        %v1717 = vadd.f32 0.0, %v1716
        %v1718 = vpop.f32.mrb[0].mxu0
        %v1719 = vpop.f32.mrb[0].mxu0
        %v1720 = vadd.f32 0.0, %v1719
        %v1721 = vpop.f32.mrb[0].mxu0
        %1722 = vmatprep.mubr.bf16.mxu0 0
        %1723 = vmatmul.mubr.bf16.gmra.mrb[0].mxu0 %v1652
        %v1724 = vpop.f32.mrb[0].mxu0
        %v1725 = vadd.f32 0.0, %v1724
        %v1726 = vpop.f32.mrb[0].mxu0
        %v1727 = vpop.f32.mrb[0].mxu0
        %v1728 = vadd.f32 0.0, %v1727
        %v1729 = vpop.f32.mrb[0].mxu0
        %1730 = vmatprep.mubr.bf16.mxu0 0
        %1731 = vmatmul.mubr.bf16.gmra.mrb[0].mxu0 %v1655
        %v1732 = vpop.f32.mrb[0].mxu0
        %v1733 = vadd.f32 0.0, %v1732
        %v1734 = vpop.f32.mrb[0].mxu0
        %v1735 = vpop.f32.mrb[0].mxu0
        %v1736 = vadd.f32 0.0, %v1735
        %v1737 = vpop.f32.mrb[0].mxu0
        %1738 = vmatprep.mubr.bf16.mxu0 0
        %1739 = vmatmul.mubr.bf16.gmra.mrb[0].mxu0 %v1658
        %v1740 = vpop.f32.mrb[0].mxu0
        %v1741 = vadd.f32 0.0, %v1740
        %v1742 = vpop.f32.mrb[0].mxu0
        %v1743 = vpop.f32.mrb[0].mxu0
        %v1744 = vadd.f32 0.0, %v1743
        %v1745 = vpop.f32.mrb[0].mxu0
        %1746 = vmatprep.mubr.bf16.mxu0 0
        %1747 = vmatmul.mubr.bf16.gmra.mrb[0].mxu0 %v1661
        %v1748 = vpop.f32.mrb[0].mxu0
        %v1749 = vadd.f32 0.0, %v1748
        %v1750 = vpop.f32.mrb[0].mxu0
        %v1751 = vpop.f32.mrb[0].mxu0
        %v1752 = vadd.f32 0.0, %v1751
        %v1753 = vpop.f32.mrb[0].mxu0
        %1754 = vmatprep.mubr.bf16.mxu0 0
        %1755 = vmatmul.mubr.bf16.gmra.mrb[0].mxu0 %v1664
        %v1756 = vpop.f32.mrb[0].mxu0
        %v1757 = vadd.f32 0.0, %v1756
        %v1758 = vpop.f32.mrb[0].mxu0
        %v1759 = vpop.f32.mrb[0].mxu0
        %v1760 = vadd.f32 0.0, %v1759
        %v1761 = vpop.f32.mrb[0].mxu0
        %1762 = vdwg.mxu0
        %1763 = vmax.xlane.f32.xlu0 %v1701
        %v1764 = vpop.xlane.xlu0 %1763
        %1765 = vmax.xlane.f32.xlu0 %v1704
        %v1766 = vpop.xlane.xlu0 %1765
        %1767 = vmax.xlane.f32.xlu0 %v1709
        %v1768 = vpop.xlane.xlu0 %1767
        %1769 = vmax.xlane.f32.xlu0 %v1712
        %v1770 = vpop.xlane.xlu0 %1769
        %1771 = vmax.xlane.f32.xlu0 %v1717
        %v1772 = vpop.xlane.xlu0 %1771
        %1773 = vmax.xlane.f32.xlu0 %v1720
        %v1774 = vpop.xlane.xlu0 %1773
        %1775 = vmax.xlane.f32.xlu0 %v1725
        %v1776 = vpop.xlane.xlu0 %1775
        %1777 = vmax.xlane.f32.xlu0 %v1728
        %v1778 = vpop.xlane.xlu0 %1777
        %1779 = vmax.xlane.f32.xlu0 %v1733
        %v1780 = vpop.xlane.xlu0 %1779
        %1781 = vmax.xlane.f32.xlu0 %v1736
        %v1782 = vpop.xlane.xlu0 %1781
        %1783 = vmax.xlane.f32.xlu0 %v1741
        %v1784 = vpop.xlane.xlu0 %1783
        %1785 = vmax.xlane.f32.xlu0 %v1744
        %v1786 = vpop.xlane.xlu0 %1785
        %1787 = vmax.xlane.f32.xlu0 %v1749
        %v1788 = vpop.xlane.xlu0 %1787
        %1789 = vmax.xlane.f32.xlu0 %v1752
        %v1790 = vpop.xlane.xlu0 %1789
        %1791 = vmax.xlane.f32.xlu0 %v1757
        %v1792 = vpop.xlane.xlu0 %1791
        %1793 = vmax.xlane.f32.xlu0 %v1760
        %v1794 = vpop.xlane.xlu0 %1793
        %v1795 = vsub.f32 %v1701, %v1764
        %v1796 = vsub.f32 %v1704, %v1766
        %v1797 = vsub.f32 %v1709, %v1768
        %v1798 = vsub.f32 %v1712, %v1770
        %v1799 = vsub.f32 %v1717, %v1772
        %v1800 = vsub.f32 %v1720, %v1774
        %v1801 = vsub.f32 %v1725, %v1776
        %v1802 = vsub.f32 %v1728, %v1778
        %v1803 = vsub.f32 %v1733, %v1780
        %v1804 = vsub.f32 %v1736, %v1782
        %v1805 = vsub.f32 %v1741, %v1784
        %v1806 = vsub.f32 %v1744, %v1786
        %v1807 = vsub.f32 %v1749, %v1788
        %v1808 = vsub.f32 %v1752, %v1790
        %v1809 = vsub.f32 %v1757, %v1792
        %v1810 = vsub.f32 %v1760, %v1794
        %v1811 = vmul.f32 %v1795, 1.442695
        %v1812 = vpow.pop %v1811
        %v1813 = vmul.f32 %v1796, 1.442695
        %v1814 = vpow.pop %v1813
        %v1815 = vmul.f32 %v1797, 1.442695
        %v1816 = vpow.pop %v1815
        %v1817 = vmul.f32 %v1798, 1.442695
        %v1818 = vpow.pop %v1817
        %v1819 = vmul.f32 %v1799, 1.442695
        %v1820 = vpow.pop %v1819
        %v1821 = vmul.f32 %v1800, 1.442695
        %v1822 = vpow.pop %v1821
        %v1823 = vmul.f32 %v1801, 1.442695
        %v1824 = vpow.pop %v1823
        %v1825 = vmul.f32 %v1802, 1.442695
        %v1826 = vpow.pop %v1825
        %v1827 = vmul.f32 %v1803, 1.442695
        %v1828 = vpow.pop %v1827
        %v1829 = vmul.f32 %v1804, 1.442695
        %v1830 = vpow.pop %v1829
        %v1831 = vmul.f32 %v1805, 1.442695
        %v1832 = vpow.pop %v1831
        %v1833 = vmul.f32 %v1806, 1.442695
        %v1834 = vpow.pop %v1833
        %v1835 = vmul.f32 %v1807, 1.442695
        %v1836 = vpow.pop %v1835
        %v1837 = vmul.f32 %v1808, 1.442695
        %v1838 = vpow.pop %v1837
        %v1839 = vmul.f32 %v1809, 1.442695
        %v1840 = vpow.pop %v1839
        %v1841 = vmul.f32 %v1810, 1.442695
        %v1842 = vpow.pop %v1841
        %1843 = vadd.xlane.f32.xlu0 %v1812
        %v1844 = vpop.xlane.xlu0 %1843
        %1845 = vadd.xlane.f32.xlu0 %v1814
        %v1846 = vpop.xlane.xlu0 %1845
        %1847 = vadd.xlane.f32.xlu0 %v1816
        %v1848 = vpop.xlane.xlu0 %1847
        %1849 = vadd.xlane.f32.xlu0 %v1818
        %v1850 = vpop.xlane.xlu0 %1849
        %1851 = vadd.xlane.f32.xlu0 %v1820
        %v1852 = vpop.xlane.xlu0 %1851
        %1853 = vadd.xlane.f32.xlu0 %v1822
        %v1854 = vpop.xlane.xlu0 %1853
        %1855 = vadd.xlane.f32.xlu0 %v1824
        %v1856 = vpop.xlane.xlu0 %1855
        %1857 = vadd.xlane.f32.xlu0 %v1826
        %v1858 = vpop.xlane.xlu0 %1857
        %1859 = vadd.xlane.f32.xlu0 %v1828
        %v1860 = vpop.xlane.xlu0 %1859
        %1861 = vadd.xlane.f32.xlu0 %v1830
        %v1862 = vpop.xlane.xlu0 %1861
        %1863 = vadd.xlane.f32.xlu0 %v1832
        %v1864 = vpop.xlane.xlu0 %1863
        %1865 = vadd.xlane.f32.xlu0 %v1834
        %v1866 = vpop.xlane.xlu0 %1865
        %1867 = vadd.xlane.f32.xlu0 %v1836
        %v1868 = vpop.xlane.xlu0 %1867
        %1869 = vadd.xlane.f32.xlu0 %v1838
        %v1870 = vpop.xlane.xlu0 %1869
        %1871 = vadd.xlane.f32.xlu0 %v1840
        %v1872 = vpop.xlane.xlu0 %1871
        %1873 = vadd.xlane.f32.xlu0 %v1842
        %v1874 = vpop.xlane.xlu0 %1873
        %v1875 = vrcp.pop %v1844
        %v1876 = vrcp.pop %v1846
        %v1877 = vrcp.pop %v1848
        %v1878 = vrcp.pop %v1850
        %v1879 = vrcp.pop %v1852
        %v1880 = vrcp.pop %v1854
        %v1881 = vrcp.pop %v1856
        %v1882 = vrcp.pop %v1858
        %v1883 = vrcp.pop %v1860
        %v1884 = vrcp.pop %v1862
        %v1885 = vrcp.pop %v1864
        %v1886 = vrcp.pop %v1866
        %v1887 = vrcp.pop %v1868
        %v1888 = vrcp.pop %v1870
        %v1889 = vrcp.pop %v1872
        %v1890 = vrcp.pop %v1874
        %v1891 = vmul.f32 %v1812, %v1875
        %v1892 = vmul.f32 %v1814, %v1876
        %v1893 = vmul.f32 %v1816, %v1877
        %v1894 = vmul.f32 %v1818, %v1878
        %v1895 = vmul.f32 %v1820, %v1879
        %v1896 = vmul.f32 %v1822, %v1880
        %v1897 = vmul.f32 %v1824, %v1881
        %v1898 = vmul.f32 %v1826, %v1882
        %v1899 = vmul.f32 %v1828, %v1883
        %v1900 = vmul.f32 %v1830, %v1884
        %v1901 = vmul.f32 %v1832, %v1885
        %v1902 = vmul.f32 %v1834, %v1886
        %v1903 = vmul.f32 %v1836, %v1887
        %v1904 = vmul.f32 %v1838, %v1888
        %v1905 = vmul.f32 %v1840, %v1889
        %v1906 = vmul.f32 %v1842, %v1890
        %v1907 = vadd.f32 %v1891, %v1892
        %v1908 = vadd.f32 %v1907, %v1893
        %v1909 = vadd.f32 %v1908, %v1894
        %v1910 = vadd.f32 %v1909, %v1895
        %v1911 = vadd.f32 %v1910, %v1896
        %v1912 = vadd.f32 %v1911, %v1897
        %v1913 = vadd.f32 %v1912, %v1898
        %v1914 = vadd.f32 %v1913, %v1899
        %v1915 = vadd.f32 %v1914, %v1900
        %v1916 = vadd.f32 %v1915, %v1901
        %v1917 = vadd.f32 %v1916, %v1902
        %v1918 = vadd.f32 %v1917, %v1903
        %v1919 = vadd.f32 %v1918, %v1904
        %v1920 = vadd.f32 %v1919, %v1905
        %v1921 = vadd.f32 %v1920, %v1906
        %v1922 = vrot.slane %v1921, 4
        %v1923 = vadd.f32 %v1921, %v1922
        %v1924 = vrot.slane %v1923, 2
        %v1925 = vadd.f32 %v1923, %v1924
        %v1926 = vrot.slane %v1925, 1
        %v1927 = vadd.f32 %v1925, %v1926
        %v1928 = vadd.f32 %v1927, 1e-09
        %v1929 = vrcp.pop %v1928
        %v1930 = vpack.c.bf16 %v1618, %v1617
        %v1931 = vpack.c.bf16 %v1620, %v1619
        %v1932 = vpack.c.bf16 %v1622, %v1621
        %v1933 = vpack.c.bf16 %v1624, %v1623
        %v1934 = vpack.c.bf16 %v1892, %v1891
        %v1935 = vpack.c.bf16 %v1894, %v1893
        %v1936 = vpack.c.bf16 %v1896, %v1895
        %v1937 = vpack.c.bf16 %v1898, %v1897
        %v1938 = vpack.c.bf16 %v1900, %v1899
        %v1939 = vpack.c.bf16 %v1902, %v1901
        %v1940 = vpack.c.bf16 %v1904, %v1903
        %v1941 = vpack.c.bf16 %v1906, %v1905
        %1942 = vmatprep.subr.bf16.mxu0 0
        %1943 = vmatpush1.bf16.msra.mxu0 %v1934
        %1944 = vmatprep.subr.bf16.mxu0 0
        %1945 = vmatpush1.bf16.msra.mxu0 %v1935
        %1946 = vmatprep.subr.bf16.mxu0 0
        %1947 = vmatpush1.bf16.msra.mxu0 %v1936
        %1948 = vmatprep.subr.bf16.mxu0 0
        %1949 = vmatpush1.bf16.msra.mxu0 %v1937
        %1950 = vmatprep.subr.bf16.mxu0 0
        %1951 = vmatpush1.bf16.msra.mxu0 %v1938
        %1952 = vmatprep.subr.bf16.mxu0 0
        %1953 = vmatpush1.bf16.msra.mxu0 %v1939
        %1954 = vmatprep.subr.bf16.mxu0 0
        %1955 = vmatpush1.bf16.msra.mxu0 %v1940
        %1956 = vmatprep.subr.bf16.mxu0 0
        %1957 = vmatpush1.bf16.msra.mxu0 %v1941
        %1958 = vmatprep.subr.bf16.mxu0 0
        %1959 = vmatpush1.bf16.msra.mxu0 0
        %1960 = vmatprep.subr.bf16.mxu0 0
        %1961 = vmatpush1.bf16.msra.mxu0 0
        %1962 = vmatprep.subr.bf16.mxu0 0
        %1963 = vmatpush1.bf16.msra.mxu0 0
        %1964 = vmatprep.subr.bf16.mxu0 0
        %1965 = vmatpush1.bf16.msra.mxu0 0
        %1966 = vmatprep.subr.bf16.mxu0 0
        %1967 = vmatpush1.bf16.msra.mxu0 0
        %1968 = vmatprep.subr.bf16.mxu0 0
        %1969 = vmatpush1.bf16.msra.mxu0 0
        %1970 = vmatprep.subr.bf16.mxu0 0
        %1971 = vmatpush1.bf16.msra.mxu0 0
        %1972 = vmatprep.subr.bf16.mxu0 0
        %1973 = vmatpush1.bf16.msra.mxu0 0
        %1974 = vmatprep.mubr.bf16.mxu0 0
        %1975 = vmatmul.mubr.bf16.gmra.mrb[0].mxu0 %v1930
        %v1976 = vpop.f32.mrb[0].mxu0
        %v1977 = vadd.f32 0.0, %v1976
        %v1978 = vpop.f32.mrb[0].mxu0
        %v1979 = vpop.f32.mrb[0].mxu0
        %v1980 = vadd.f32 0.0, %v1979
        %v1981 = vpop.f32.mrb[0].mxu0
        %1982 = vmatprep.mubr.bf16.mxu0 0
        %1983 = vmatmul.mubr.bf16.gmra.mrb[0].mxu0 %v1931
        %v1984 = vpop.f32.mrb[0].mxu0
        %v1985 = vadd.f32 0.0, %v1984
        %v1986 = vpop.f32.mrb[0].mxu0
        %v1987 = vpop.f32.mrb[0].mxu0
        %v1988 = vadd.f32 0.0, %v1987
        %v1989 = vpop.f32.mrb[0].mxu0
        %1990 = vmatprep.mubr.bf16.mxu0 0
        %1991 = vmatmul.mubr.bf16.gmra.mrb[0].mxu0 %v1932
        %v1992 = vpop.f32.mrb[0].mxu0
        %v1993 = vadd.f32 0.0, %v1992
        %v1994 = vpop.f32.mrb[0].mxu0
        %v1995 = vpop.f32.mrb[0].mxu0
        %v1996 = vadd.f32 0.0, %v1995
        %v1997 = vpop.f32.mrb[0].mxu0
        %1998 = vmatprep.mubr.bf16.mxu0 0
        %1999 = vmatmul.mubr.bf16.gmra.mrb[0].mxu0 %v1933
        %v2000 = vpop.f32.mrb[0].mxu0
        %v2001 = vadd.f32 0.0, %v2000
        %v2002 = vpop.f32.mrb[0].mxu0
        %v2003 = vpop.f32.mrb[0].mxu0
        %v2004 = vadd.f32 0.0, %v2003
        %v2005 = vpop.f32.mrb[0].mxu0
        %2006 = vdwg.mxu0
        %v2007 = vmul.f32 %v1977, %v1929
        %v2008 = vmul.f32 %v1980, %v1929
        %v2009 = vmul.f32 %v1985, %v1929
        %v2010 = vmul.f32 %v1988, %v1929
        %v2011 = vmul.f32 %v1993, %v1929
        %v2012 = vmul.f32 %v1996, %v1929
        %v2013 = vmul.f32 %v2001, %v1929
        %v2014 = vmul.f32 %v2004, %v1929
        %v2015 = vsub.f32 %v1424, %v2007
        %v2016 = vsub.f32 %v1425, %v2008
        %v2017 = vsub.f32 %v1426, %v2009
        %v2018 = vsub.f32 %v1427, %v2010
        %v2019 = vsub.f32 %v1428, %v2011
        %v2020 = vsub.f32 %v1429, %v2012
        %v2021 = vsub.f32 %v1430, %v2013
        %v2022 = vsub.f32 %v1431, %v2014
        %v2023 = vpack.c.bf16 %v2016, %v2015
        %v2024 = vpack.c.bf16 %v2018, %v2017
        %v2025 = vpack.c.bf16 %v2020, %v2019
        %v2026 = vpack.c.bf16 %v2022, %v2021
        %s2027 = scalar_lea.vmem %s7, 32
        %v2028 = vld [vmem:[%s2027] sm:$0xf]
        %v2029 = vld [vmem:[%s2027 + $0x4] sm:$0xf]
        %v2030 = vld [vmem:[%s2027 + $0x8] sm:$0xf]
        %v2031 = vld [vmem:[%s2027 + $0xc] sm:$0xf]
        %v2032 = vld [vmem:[%s2027 + $0x10] sm:$0xf]
        %v2033 = vld [vmem:[%s2027 + $0x14] sm:$0xf]
        %v2034 = vld [vmem:[%s2027 + $0x18] sm:$0xf]
        %v2035 = vld [vmem:[%s2027 + $0x1c] sm:$0xf]
        %s2036 = scalar_lea.vmem %s8, 64
        %v2037 = vld [vmem:[%s2036] sm:$0xff]
        %v2038 = vld [vmem:[%s2036 + $0x8] sm:$0xff]
        %v2039 = vld [vmem:[%s2036 + $0x10] sm:$0xff]
        %v2040 = vld [vmem:[%s2036 + $0x18] sm:$0xff]
        %v2041 = vld [vmem:[%s2036 + $0x20] sm:$0xff]
        %v2042 = vld [vmem:[%s2036 + $0x28] sm:$0xff]
        %v2043 = vld [vmem:[%s2036 + $0x30] sm:$0xff]
        %v2044 = vld [vmem:[%s2036 + $0x38] sm:$0xff]
        %2046 = vset.pattern.permute.xlu0 0
        %2047 = vperm.xlu0 %2046, %v2037
        %v2048 = vpop.permute.xlu0 %2047
        %2051 = vset.pattern.permute.xlu0 0
        %2052 = vperm.xlu0 %2051, %v2038
        %v2053 = vpop.permute.xlu0 %2052
        %2056 = vset.pattern.permute.xlu0 0
        %2057 = vperm.xlu0 %2056, %v2039
        %v2058 = vpop.permute.xlu0 %2057
        %2061 = vset.pattern.permute.xlu0 0
        %2062 = vperm.xlu0 %2061, %v2040
        %v2063 = vpop.permute.xlu0 %2062
        %2066 = vset.pattern.permute.xlu0 0
        %2067 = vperm.xlu0 %2066, %v2041
        %v2068 = vpop.permute.xlu0 %2067
        %2071 = vset.pattern.permute.xlu0 0
        %2072 = vperm.xlu0 %2071, %v2042
        %v2073 = vpop.permute.xlu0 %2072
        %2076 = vset.pattern.permute.xlu0 0
        %2077 = vperm.xlu0 %2076, %v2043
        %v2078 = vpop.permute.xlu0 %2077
        %2081 = vset.pattern.permute.xlu0 0
        %2082 = vperm.xlu0 %2081, %v2044
        %v2083 = vpop.permute.xlu0 %2082
        %v2093 = vunpack.c.l.b16 %v2028
        %v2094 = vunpack.c.l.b16 %v2029
        %v2095 = vunpack.c.l.b16 %v2030
        %v2096 = vunpack.c.l.b16 %v2031
        %v2097 = vunpack.c.l.b16 %v2032
        %v2098 = vunpack.c.l.b16 %v2033
        %v2099 = vunpack.c.l.b16 %v2034
        %v2100 = vunpack.c.l.b16 %v2035
        %v2101 = vpack.c.b16 %v2094, %v2093
        %v2102 = vpack.c.b16 %v2096, %v2095
        %v2103 = vpack.c.b16 %v2098, %v2097
        %v2104 = vpack.c.b16 %v2100, %v2099
        %v2106 = vsel %vm426, %v2101, 0
        %v2109 = vsel %vm426, %v2102, 0
        %v2112 = vsel %vm426, %v2103, 0
        %v2115 = vsel %vm426, %v2104, 0
        %2117 = vmatprep.subr.bf16.mxu0 0
        %2118 = vmatpush1.bf16.msra.mxu0 %v2023
        %2119 = vmatprep.subr.bf16.mxu0 0
        %2120 = vmatpush1.bf16.msra.mxu0 %v2024
        %2121 = vmatprep.subr.bf16.mxu0 0
        %2122 = vmatpush1.bf16.msra.mxu0 %v2025
        %2123 = vmatprep.subr.bf16.mxu0 0
        %2124 = vmatpush1.bf16.msra.mxu0 %v2026
        %2125 = vmatprep.subr.bf16.mxu0 0
        %2126 = vmatpush1.bf16.msra.mxu0 0
        %2127 = vmatprep.subr.bf16.mxu0 0
        %2128 = vmatpush1.bf16.msra.mxu0 0
        %2129 = vmatprep.subr.bf16.mxu0 0
        %2130 = vmatpush1.bf16.msra.mxu0 0
        %2131 = vmatprep.subr.bf16.mxu0 0
        %2132 = vmatpush1.bf16.msra.mxu0 0
        %2133 = vmatprep.subr.bf16.mxu0 0
        %2134 = vmatpush1.bf16.msra.mxu0 0
        %2135 = vmatprep.subr.bf16.mxu0 0
        %2136 = vmatpush1.bf16.msra.mxu0 0
        %2137 = vmatprep.subr.bf16.mxu0 0
        %2138 = vmatpush1.bf16.msra.mxu0 0
        %2139 = vmatprep.subr.bf16.mxu0 0
        %2140 = vmatpush1.bf16.msra.mxu0 0
        %2141 = vmatprep.subr.bf16.mxu0 0
        %2142 = vmatpush1.bf16.msra.mxu0 0
        %2143 = vmatprep.subr.bf16.mxu0 0
        %2144 = vmatpush1.bf16.msra.mxu0 0
        %2145 = vmatprep.subr.bf16.mxu0 0
        %2146 = vmatpush1.bf16.msra.mxu0 0
        %2147 = vmatprep.subr.bf16.mxu0 0
        %2148 = vmatpush1.bf16.msra.mxu0 0
        %2149 = vmatprep.mubr.bf16.mxu0 0
        %2150 = vmatmul.mubr.bf16.gmra.mrb[0].mxu0 %v2106
        %v2151 = vpop.f32.mrb[0].mxu0
        %v2152 = vadd.f32 %v2048, %v2151
        %v2153 = vpop.f32.mrb[0].mxu0
        %v2154 = vpop.f32.mrb[0].mxu0
        %v2155 = vadd.f32 %v2053, %v2154
        %v2156 = vpop.f32.mrb[0].mxu0
        %2157 = vmatprep.mubr.bf16.mxu0 0
        %2158 = vmatmul.mubr.bf16.gmra.mrb[0].mxu0 %v2109
        %v2159 = vpop.f32.mrb[0].mxu0
        %v2160 = vadd.f32 %v2058, %v2159
        %v2161 = vpop.f32.mrb[0].mxu0
        %v2162 = vpop.f32.mrb[0].mxu0
        %v2163 = vadd.f32 %v2063, %v2162
        %v2164 = vpop.f32.mrb[0].mxu0
        %2165 = vmatprep.mubr.bf16.mxu0 0
        %2166 = vmatmul.mubr.bf16.gmra.mrb[0].mxu0 %v2112
        %v2167 = vpop.f32.mrb[0].mxu0
        %v2168 = vadd.f32 %v2068, %v2167
        %v2169 = vpop.f32.mrb[0].mxu0
        %v2170 = vpop.f32.mrb[0].mxu0
        %v2171 = vadd.f32 %v2073, %v2170
        %v2172 = vpop.f32.mrb[0].mxu0
        %2173 = vmatprep.mubr.bf16.mxu0 0
        %2174 = vmatmul.mubr.bf16.gmra.mrb[0].mxu0 %v2115
        %v2175 = vpop.f32.mrb[0].mxu0
        %v2176 = vadd.f32 %v2078, %v2175
        %v2177 = vpop.f32.mrb[0].mxu0
        %v2178 = vpop.f32.mrb[0].mxu0
        %v2179 = vadd.f32 %v2083, %v2178
        %v2180 = vpop.f32.mrb[0].mxu0
        %2181 = vdwg.mxu0
        %v2182 = vmax.f32 %v2152, 0.0
        %v2183 = vmax.f32 %v2155, 0.0
        %v2184 = vmax.f32 %v2160, 0.0
        %v2185 = vmax.f32 %v2163, 0.0
        %v2186 = vmax.f32 %v2168, 0.0
        %v2187 = vmax.f32 %v2171, 0.0
        %v2188 = vmax.f32 %v2176, 0.0
        %v2189 = vmax.f32 %v2179, 0.0
        %v2190 = vadd.f32 %v1424, %v2182
        %v2191 = vadd.f32 %v1425, %v2183
        %v2192 = vadd.f32 %v1426, %v2184
        %v2193 = vadd.f32 %v1427, %v2185
        %v2194 = vadd.f32 %v1428, %v2186
        %v2195 = vadd.f32 %v1429, %v2187
        %v2196 = vadd.f32 %v1430, %v2188
        %v2197 = vadd.f32 %v1431, %v2189
        %2198 = vst [vmem:[%s328 + $0x40] sm:$0xff] %v2190
        %2199 = vst [vmem:[%s328 + $0x48] sm:$0xff] %v2191
        %2200 = vst [vmem:[%s328 + $0x50] sm:$0xff] %v2192
        %2201 = vst [vmem:[%s328 + $0x58] sm:$0xff] %v2193
        %2202 = vst [vmem:[%s328 + $0x60] sm:$0xff] %v2194
        %2203 = vst [vmem:[%s328 + $0x68] sm:$0xff] %v2195
        %2204 = vst [vmem:[%s328 + $0x70] sm:$0xff] %v2196
        %2205 = vst [vmem:[%s328 + $0x78] sm:$0xff] %v2197
        %v2206 = vpack.c.bf16 %v2191, %v2190
        %v2207 = vpack.c.bf16 %v2193, %v2192
        %v2208 = vpack.c.bf16 %v2195, %v2194
        %v2209 = vpack.c.bf16 %v2197, %v2196
        %s2210 = scalar_lea.vmem %s5, 80
        %v2211 = vld [vmem:[%s2210] sm:$0xf]
        %v2212 = vld [vmem:[%s2210 + $0x4] sm:$0xf]
        %v2213 = vld [vmem:[%s2210 + $0x8] sm:$0xf]
        %v2214 = vld [vmem:[%s2210 + $0xc] sm:$0xf]
        %v2215 = vld [vmem:[%s2210 + $0x10] sm:$0xf]
        %v2216 = vld [vmem:[%s2210 + $0x14] sm:$0xf]
        %v2217 = vld [vmem:[%s2210 + $0x18] sm:$0xf]
        %v2218 = vld [vmem:[%s2210 + $0x1c] sm:$0xf]
        %v2219 = vld [vmem:[%s2210 + $0x20] sm:$0xf]
        %v2220 = vld [vmem:[%s2210 + $0x24] sm:$0xf]
        %v2231 = vunpack.c.l.b16 %v2211
        %v2232 = vunpack.c.l.b16 %v2212
        %v2233 = vunpack.c.l.b16 %v2213
        %v2234 = vunpack.c.l.b16 %v2214
        %v2235 = vunpack.c.l.b16 %v2215
        %v2236 = vunpack.c.l.b16 %v2216
        %v2237 = vunpack.c.l.b16 %v2217
        %v2238 = vunpack.c.l.b16 %v2218
        %v2239 = vunpack.c.l.b16 %v2219
        %v2240 = vunpack.c.l.b16 %v2220
        %v2241 = vpack.c.b16 %v2232, %v2231
        %v2242 = vpack.c.b16 %v2234, %v2233
        %v2243 = vpack.c.b16 %v2236, %v2235
        %v2244 = vpack.c.b16 %v2238, %v2237
        %v2245 = vpack.c.b16 %v2240, %v2239
        %v2247 = vsel %vm426, %v2241, 0
        %v2250 = vsel %vm426, %v2242, 0
        %v2253 = vsel %vm426, %v2243, 0
        %v2256 = vsel %vm426, %v2244, 0
        %v2259 = vsel %vm426, %v2245, 0
        %2261 = vmatprep.subr.bf16.mxu0 0
        %2262 = vmatpush1.bf16.msra.mxu0 %v2206
        %2263 = vmatprep.subr.bf16.mxu0 0
        %2264 = vmatpush1.bf16.msra.mxu0 %v2207
        %2265 = vmatprep.subr.bf16.mxu0 0
        %2266 = vmatpush1.bf16.msra.mxu0 %v2208
        %2267 = vmatprep.subr.bf16.mxu0 0
        %2268 = vmatpush1.bf16.msra.mxu0 %v2209
        %2269 = vmatprep.subr.bf16.mxu0 0
        %2270 = vmatpush1.bf16.msra.mxu0 0
        %2271 = vmatprep.subr.bf16.mxu0 0
        %2272 = vmatpush1.bf16.msra.mxu0 0
        %2273 = vmatprep.subr.bf16.mxu0 0
        %2274 = vmatpush1.bf16.msra.mxu0 0
        %2275 = vmatprep.subr.bf16.mxu0 0
        %2276 = vmatpush1.bf16.msra.mxu0 0
        %2277 = vmatprep.subr.bf16.mxu0 0
        %2278 = vmatpush1.bf16.msra.mxu0 0
        %2279 = vmatprep.subr.bf16.mxu0 0
        %2280 = vmatpush1.bf16.msra.mxu0 0
        %2281 = vmatprep.subr.bf16.mxu0 0
        %2282 = vmatpush1.bf16.msra.mxu0 0
        %2283 = vmatprep.subr.bf16.mxu0 0
        %2284 = vmatpush1.bf16.msra.mxu0 0
        %2285 = vmatprep.subr.bf16.mxu0 0
        %2286 = vmatpush1.bf16.msra.mxu0 0
        %2287 = vmatprep.subr.bf16.mxu0 0
        %2288 = vmatpush1.bf16.msra.mxu0 0
        %2289 = vmatprep.subr.bf16.mxu0 0
        %2290 = vmatpush1.bf16.msra.mxu0 0
        %2291 = vmatprep.subr.bf16.mxu0 0
        %2292 = vmatpush1.bf16.msra.mxu0 0
        %2293 = vmatprep.mubr.bf16.mxu0 0
        %2294 = vmatmul.mubr.bf16.gmra.mrb[0].mxu0 %v2247
        %v2295 = vpop.f32.mrb[0].mxu0
        %v2296 = vadd.f32 0.0, %v2295
        %v2297 = vpop.f32.mrb[0].mxu0
        %v2298 = vpop.f32.mrb[0].mxu0
        %v2299 = vadd.f32 0.0, %v2298
        %v2300 = vpop.f32.mrb[0].mxu0
        %2301 = vmatprep.mubr.bf16.mxu0 0
        %2302 = vmatmul.mubr.bf16.gmra.mrb[0].mxu0 %v2250
        %v2303 = vpop.f32.mrb[0].mxu0
        %v2304 = vadd.f32 0.0, %v2303
        %v2305 = vpop.f32.mrb[0].mxu0
        %v2306 = vpop.f32.mrb[0].mxu0
        %v2307 = vadd.f32 0.0, %v2306
        %v2308 = vpop.f32.mrb[0].mxu0
        %2309 = vmatprep.mubr.bf16.mxu0 0
        %2310 = vmatmul.mubr.bf16.gmra.mrb[0].mxu0 %v2253
        %v2311 = vpop.f32.mrb[0].mxu0
        %v2312 = vadd.f32 0.0, %v2311
        %v2313 = vpop.f32.mrb[0].mxu0
        %v2314 = vpop.f32.mrb[0].mxu0
        %v2315 = vadd.f32 0.0, %v2314
        %v2316 = vpop.f32.mrb[0].mxu0
        %2317 = vmatprep.mubr.bf16.mxu0 0
        %2318 = vmatmul.mubr.bf16.gmra.mrb[0].mxu0 %v2256
        %v2319 = vpop.f32.mrb[0].mxu0
        %v2320 = vadd.f32 0.0, %v2319
        %v2321 = vpop.f32.mrb[0].mxu0
        %v2322 = vpop.f32.mrb[0].mxu0
        %v2323 = vadd.f32 0.0, %v2322
        %v2324 = vpop.f32.mrb[0].mxu0
        %2325 = vmatprep.mubr.bf16.mxu0 0
        %2326 = vmatmul.mubr.bf16.gmra.mrb[0].mxu0 %v2259
        %v2327 = vpop.f32.mrb[0].mxu0
        %v2328 = vadd.f32 0.0, %v2327
        %v2329 = vpop.f32.mrb[0].mxu0
        %v2330 = vpop.f32.mrb[0].mxu0
        %v2331 = vadd.f32 0.0, %v2330
        %v2332 = vpop.f32.mrb[0].mxu0
        %2333 = vdwg.mxu0
        %s2334 = scalar_lea.vmem %s6, 128
        %v2335 = vld [vmem:[%s2334] sm:$0xff]
        %v2336 = vld [vmem:[%s2334 + $0x8] sm:$0xff]
        %v2337 = vld [vmem:[%s2334 + $0x10] sm:$0xff]
        %v2338 = vld [vmem:[%s2334 + $0x18] sm:$0xff]
        %v2339 = vld [vmem:[%s2334 + $0x20] sm:$0xff]
        %v2340 = vld [vmem:[%s2334 + $0x28] sm:$0xff]
        %v2341 = vld [vmem:[%s2334 + $0x30] sm:$0xff]
        %v2342 = vld [vmem:[%s2334 + $0x38] sm:$0xff]
        %2344 = vset.pattern.permute.xlu0 0
        %2345 = vperm.xlu0 %2344, %v2335
        %v2346 = vpop.permute.xlu0 %2345
        %2349 = vset.pattern.permute.xlu0 0
        %2350 = vperm.xlu0 %2349, %v2336
        %v2351 = vpop.permute.xlu0 %2350
        %2354 = vset.pattern.permute.xlu0 0
        %2355 = vperm.xlu0 %2354, %v2337
        %v2356 = vpop.permute.xlu0 %2355
        %2359 = vset.pattern.permute.xlu0 0
        %2360 = vperm.xlu0 %2359, %v2338
        %v2361 = vpop.permute.xlu0 %2360
        %2364 = vset.pattern.permute.xlu0 0
        %2365 = vperm.xlu0 %2364, %v2339
        %v2366 = vpop.permute.xlu0 %2365
        %2369 = vset.pattern.permute.xlu0 0
        %2370 = vperm.xlu0 %2369, %v2340
        %v2371 = vpop.permute.xlu0 %2370
        %2374 = vset.pattern.permute.xlu0 0
        %2375 = vperm.xlu0 %2374, %v2341
        %v2376 = vpop.permute.xlu0 %2375
        %2379 = vset.pattern.permute.xlu0 0
        %2380 = vperm.xlu0 %2379, %v2342
        %v2381 = vpop.permute.xlu0 %2380
        %v2383 = vadd.f32 %v2304, %v2346
        %v2384 = vadd.f32 %v2307, %v2351
        %v2385 = vadd.f32 %v2312, %v2356
        %v2386 = vadd.f32 %v2315, %v2361
        %v2387 = vadd.f32 %v2320, %v2366
        %v2388 = vadd.f32 %v2323, %v2371
        %v2389 = vadd.f32 %v2328, %v2376
        %v2390 = vadd.f32 %v2331, %v2381
        %v2391 = vpack.c.bf16 %v2299, %v2296
        %2392 = vxpose.xlu0.c.b16.start [1/8] %v2391, 128
        %2393 = vxpose.xlu0.c.b16.cont [2/8] 0, 128
        %2394 = vxpose.xlu0.c.b16.cont [3/8] 0, 128
        %2395 = vxpose.xlu0.c.b16.cont [4/8] 0, 128
        %2396 = vxpose.xlu0.c.b16.cont [5/8] 0, 128
        %2397 = vxpose.xlu0.c.b16.cont [6/8] 0, 128
        %2398 = vxpose.xlu0.c.b16.cont [7/8] 0, 128
        %2399 = vxpose.xlu0.c.b16.end [8/8] 0, 128
        %v2400 = vpop.trf.xlu0
        %v2401 = vpop.trf.xlu0
        %v2402 = vpop.trf.xlu0
        %v2403 = vpop.trf.xlu0
        %v2404 = vpop.trf.xlu0
        %v2405 = vpop.trf.xlu0
        %v2406 = vpop.trf.xlu0
        %v2407 = vpop.trf.xlu0
        %v2409 = vsel %vm877, %v2400, 0
        %v2412 = vsel %vm877, %v2401, 0
        %v2415 = vsel %vm877, %v2402, 0
        %v2418 = vsel %vm877, %v2403, 0
        %v2421 = vsel %vm877, %v2404, 0
        %v2424 = vsel %vm877, %v2405, 0
        %v2427 = vsel %vm877, %v2406, 0
        %v2430 = vsel %vm877, %v2407, 0
        %2432 = vmatprep.subr.bf16.mxu0 0
        %2433 = vmatpush1.bf16.msra.mxu0 %v2391
        %2434 = vmatprep.subr.bf16.mxu0 0
        %2435 = vmatpush1.bf16.msra.mxu0 0
        %2436 = vmatprep.subr.bf16.mxu0 0
        %2437 = vmatpush1.bf16.msra.mxu0 0
        %2438 = vmatprep.subr.bf16.mxu0 0
        %2439 = vmatpush1.bf16.msra.mxu0 0
        %2440 = vmatprep.subr.bf16.mxu0 0
        %2441 = vmatpush1.bf16.msra.mxu0 0
        %2442 = vmatprep.subr.bf16.mxu0 0
        %2443 = vmatpush1.bf16.msra.mxu0 0
        %2444 = vmatprep.subr.bf16.mxu0 0
        %2445 = vmatpush1.bf16.msra.mxu0 0
        %2446 = vmatprep.subr.bf16.mxu0 0
        %2447 = vmatpush1.bf16.msra.mxu0 0
        %2448 = vmatprep.subr.bf16.mxu0 0
        %2449 = vmatpush1.bf16.msra.mxu0 0
        %2450 = vmatprep.subr.bf16.mxu0 0
        %2451 = vmatpush1.bf16.msra.mxu0 0
        %2452 = vmatprep.subr.bf16.mxu0 0
        %2453 = vmatpush1.bf16.msra.mxu0 0
        %2454 = vmatprep.subr.bf16.mxu0 0
        %2455 = vmatpush1.bf16.msra.mxu0 0
        %2456 = vmatprep.subr.bf16.mxu0 0
        %2457 = vmatpush1.bf16.msra.mxu0 0
        %2458 = vmatprep.subr.bf16.mxu0 0
        %2459 = vmatpush1.bf16.msra.mxu0 0
        %2460 = vmatprep.subr.bf16.mxu0 0
        %2461 = vmatpush1.bf16.msra.mxu0 0
        %2462 = vmatprep.subr.bf16.mxu0 0
        %2463 = vmatpush1.bf16.msra.mxu0 0
        %2464 = vmatprep.mubr.bf16.mxu0 0
        %2465 = vmatmul.mubr.bf16.gmra.mrb[0].mxu0 %v2409
        %v2466 = vpop.f32.mrb[0].mxu0
        %v2467 = vadd.f32 0.0, %v2466
        %v2468 = vpop.f32.mrb[0].mxu0
        %v2469 = vpop.f32.mrb[0].mxu0
        %v2470 = vadd.f32 0.0, %v2469
        %v2471 = vpop.f32.mrb[0].mxu0
        %2472 = vmatprep.mubr.bf16.mxu0 0
        %2473 = vmatmul.mubr.bf16.gmra.mrb[0].mxu0 %v2412
        %v2474 = vpop.f32.mrb[0].mxu0
        %v2475 = vadd.f32 0.0, %v2474
        %v2476 = vpop.f32.mrb[0].mxu0
        %v2477 = vpop.f32.mrb[0].mxu0
        %v2478 = vadd.f32 0.0, %v2477
        %v2479 = vpop.f32.mrb[0].mxu0
        %2480 = vmatprep.mubr.bf16.mxu0 0
        %2481 = vmatmul.mubr.bf16.gmra.mrb[0].mxu0 %v2415
        %v2482 = vpop.f32.mrb[0].mxu0
        %v2483 = vadd.f32 0.0, %v2482
        %v2484 = vpop.f32.mrb[0].mxu0
        %v2485 = vpop.f32.mrb[0].mxu0
        %v2486 = vadd.f32 0.0, %v2485
        %v2487 = vpop.f32.mrb[0].mxu0
        %2488 = vmatprep.mubr.bf16.mxu0 0
        %2489 = vmatmul.mubr.bf16.gmra.mrb[0].mxu0 %v2418
        %v2490 = vpop.f32.mrb[0].mxu0
        %v2491 = vadd.f32 0.0, %v2490
        %v2492 = vpop.f32.mrb[0].mxu0
        %v2493 = vpop.f32.mrb[0].mxu0
        %v2494 = vadd.f32 0.0, %v2493
        %v2495 = vpop.f32.mrb[0].mxu0
        %2496 = vmatprep.mubr.bf16.mxu0 0
        %2497 = vmatmul.mubr.bf16.gmra.mrb[0].mxu0 %v2421
        %v2498 = vpop.f32.mrb[0].mxu0
        %v2499 = vadd.f32 0.0, %v2498
        %v2500 = vpop.f32.mrb[0].mxu0
        %v2501 = vpop.f32.mrb[0].mxu0
        %v2502 = vadd.f32 0.0, %v2501
        %v2503 = vpop.f32.mrb[0].mxu0
        %2504 = vmatprep.mubr.bf16.mxu0 0
        %2505 = vmatmul.mubr.bf16.gmra.mrb[0].mxu0 %v2424
        %v2506 = vpop.f32.mrb[0].mxu0
        %v2507 = vadd.f32 0.0, %v2506
        %v2508 = vpop.f32.mrb[0].mxu0
        %v2509 = vpop.f32.mrb[0].mxu0
        %v2510 = vadd.f32 0.0, %v2509
        %v2511 = vpop.f32.mrb[0].mxu0
        %2512 = vmatprep.mubr.bf16.mxu0 0
        %2513 = vmatmul.mubr.bf16.gmra.mrb[0].mxu0 %v2427
        %v2514 = vpop.f32.mrb[0].mxu0
        %v2515 = vadd.f32 0.0, %v2514
        %v2516 = vpop.f32.mrb[0].mxu0
        %v2517 = vpop.f32.mrb[0].mxu0
        %v2518 = vadd.f32 0.0, %v2517
        %v2519 = vpop.f32.mrb[0].mxu0
        %2520 = vmatprep.mubr.bf16.mxu0 0
        %2521 = vmatmul.mubr.bf16.gmra.mrb[0].mxu0 %v2430
        %v2522 = vpop.f32.mrb[0].mxu0
        %v2523 = vadd.f32 0.0, %v2522
        %v2524 = vpop.f32.mrb[0].mxu0
        %v2525 = vpop.f32.mrb[0].mxu0
        %v2526 = vadd.f32 0.0, %v2525
        %v2527 = vpop.f32.mrb[0].mxu0
        %2528 = vdwg.mxu0
        %2529 = vmax.xlane.f32.xlu0 %v2467
        %v2530 = vpop.xlane.xlu0 %2529
        %2531 = vmax.xlane.f32.xlu0 %v2470
        %v2532 = vpop.xlane.xlu0 %2531
        %2533 = vmax.xlane.f32.xlu0 %v2475
        %v2534 = vpop.xlane.xlu0 %2533
        %2535 = vmax.xlane.f32.xlu0 %v2478
        %v2536 = vpop.xlane.xlu0 %2535
        %2537 = vmax.xlane.f32.xlu0 %v2483
        %v2538 = vpop.xlane.xlu0 %2537
        %2539 = vmax.xlane.f32.xlu0 %v2486
        %v2540 = vpop.xlane.xlu0 %2539
        %2541 = vmax.xlane.f32.xlu0 %v2491
        %v2542 = vpop.xlane.xlu0 %2541
        %2543 = vmax.xlane.f32.xlu0 %v2494
        %v2544 = vpop.xlane.xlu0 %2543
        %2545 = vmax.xlane.f32.xlu0 %v2499
        %v2546 = vpop.xlane.xlu0 %2545
        %2547 = vmax.xlane.f32.xlu0 %v2502
        %v2548 = vpop.xlane.xlu0 %2547
        %2549 = vmax.xlane.f32.xlu0 %v2507
        %v2550 = vpop.xlane.xlu0 %2549
        %2551 = vmax.xlane.f32.xlu0 %v2510
        %v2552 = vpop.xlane.xlu0 %2551
        %2553 = vmax.xlane.f32.xlu0 %v2515
        %v2554 = vpop.xlane.xlu0 %2553
        %2555 = vmax.xlane.f32.xlu0 %v2518
        %v2556 = vpop.xlane.xlu0 %2555
        %2557 = vmax.xlane.f32.xlu0 %v2523
        %v2558 = vpop.xlane.xlu0 %2557
        %2559 = vmax.xlane.f32.xlu0 %v2526
        %v2560 = vpop.xlane.xlu0 %2559
        %v2561 = vsub.f32 %v2467, %v2530
        %v2562 = vsub.f32 %v2470, %v2532
        %v2563 = vsub.f32 %v2475, %v2534
        %v2564 = vsub.f32 %v2478, %v2536
        %v2565 = vsub.f32 %v2483, %v2538
        %v2566 = vsub.f32 %v2486, %v2540
        %v2567 = vsub.f32 %v2491, %v2542
        %v2568 = vsub.f32 %v2494, %v2544
        %v2569 = vsub.f32 %v2499, %v2546
        %v2570 = vsub.f32 %v2502, %v2548
        %v2571 = vsub.f32 %v2507, %v2550
        %v2572 = vsub.f32 %v2510, %v2552
        %v2573 = vsub.f32 %v2515, %v2554
        %v2574 = vsub.f32 %v2518, %v2556
        %v2575 = vsub.f32 %v2523, %v2558
        %v2576 = vsub.f32 %v2526, %v2560
        %v2577 = vmul.f32 %v2561, 1.442695
        %v2578 = vpow.pop %v2577
        %v2579 = vmul.f32 %v2562, 1.442695
        %v2580 = vpow.pop %v2579
        %v2581 = vmul.f32 %v2563, 1.442695
        %v2582 = vpow.pop %v2581
        %v2583 = vmul.f32 %v2564, 1.442695
        %v2584 = vpow.pop %v2583
        %v2585 = vmul.f32 %v2565, 1.442695
        %v2586 = vpow.pop %v2585
        %v2587 = vmul.f32 %v2566, 1.442695
        %v2588 = vpow.pop %v2587
        %v2589 = vmul.f32 %v2567, 1.442695
        %v2590 = vpow.pop %v2589
        %v2591 = vmul.f32 %v2568, 1.442695
        %v2592 = vpow.pop %v2591
        %v2593 = vmul.f32 %v2569, 1.442695
        %v2594 = vpow.pop %v2593
        %v2595 = vmul.f32 %v2570, 1.442695
        %v2596 = vpow.pop %v2595
        %v2597 = vmul.f32 %v2571, 1.442695
        %v2598 = vpow.pop %v2597
        %v2599 = vmul.f32 %v2572, 1.442695
        %v2600 = vpow.pop %v2599
        %v2601 = vmul.f32 %v2573, 1.442695
        %v2602 = vpow.pop %v2601
        %v2603 = vmul.f32 %v2574, 1.442695
        %v2604 = vpow.pop %v2603
        %v2605 = vmul.f32 %v2575, 1.442695
        %v2606 = vpow.pop %v2605
        %v2607 = vmul.f32 %v2576, 1.442695
        %v2608 = vpow.pop %v2607
        %2609 = vadd.xlane.f32.xlu0 %v2578
        %v2610 = vpop.xlane.xlu0 %2609
        %2611 = vadd.xlane.f32.xlu0 %v2580
        %v2612 = vpop.xlane.xlu0 %2611
        %2613 = vadd.xlane.f32.xlu0 %v2582
        %v2614 = vpop.xlane.xlu0 %2613
        %2615 = vadd.xlane.f32.xlu0 %v2584
        %v2616 = vpop.xlane.xlu0 %2615
        %2617 = vadd.xlane.f32.xlu0 %v2586
        %v2618 = vpop.xlane.xlu0 %2617
        %2619 = vadd.xlane.f32.xlu0 %v2588
        %v2620 = vpop.xlane.xlu0 %2619
        %2621 = vadd.xlane.f32.xlu0 %v2590
        %v2622 = vpop.xlane.xlu0 %2621
        %2623 = vadd.xlane.f32.xlu0 %v2592
        %v2624 = vpop.xlane.xlu0 %2623
        %2625 = vadd.xlane.f32.xlu0 %v2594
        %v2626 = vpop.xlane.xlu0 %2625
        %2627 = vadd.xlane.f32.xlu0 %v2596
        %v2628 = vpop.xlane.xlu0 %2627
        %2629 = vadd.xlane.f32.xlu0 %v2598
        %v2630 = vpop.xlane.xlu0 %2629
        %2631 = vadd.xlane.f32.xlu0 %v2600
        %v2632 = vpop.xlane.xlu0 %2631
        %2633 = vadd.xlane.f32.xlu0 %v2602
        %v2634 = vpop.xlane.xlu0 %2633
        %2635 = vadd.xlane.f32.xlu0 %v2604
        %v2636 = vpop.xlane.xlu0 %2635
        %2637 = vadd.xlane.f32.xlu0 %v2606
        %v2638 = vpop.xlane.xlu0 %2637
        %2639 = vadd.xlane.f32.xlu0 %v2608
        %v2640 = vpop.xlane.xlu0 %2639
        %v2641 = vrcp.pop %v2610
        %v2642 = vrcp.pop %v2612
        %v2643 = vrcp.pop %v2614
        %v2644 = vrcp.pop %v2616
        %v2645 = vrcp.pop %v2618
        %v2646 = vrcp.pop %v2620
        %v2647 = vrcp.pop %v2622
        %v2648 = vrcp.pop %v2624
        %v2649 = vrcp.pop %v2626
        %v2650 = vrcp.pop %v2628
        %v2651 = vrcp.pop %v2630
        %v2652 = vrcp.pop %v2632
        %v2653 = vrcp.pop %v2634
        %v2654 = vrcp.pop %v2636
        %v2655 = vrcp.pop %v2638
        %v2656 = vrcp.pop %v2640
        %v2657 = vmul.f32 %v2578, %v2641
        %v2658 = vmul.f32 %v2580, %v2642
        %v2659 = vmul.f32 %v2582, %v2643
        %v2660 = vmul.f32 %v2584, %v2644
        %v2661 = vmul.f32 %v2586, %v2645
        %v2662 = vmul.f32 %v2588, %v2646
        %v2663 = vmul.f32 %v2590, %v2647
        %v2664 = vmul.f32 %v2592, %v2648
        %v2665 = vmul.f32 %v2594, %v2649
        %v2666 = vmul.f32 %v2596, %v2650
        %v2667 = vmul.f32 %v2598, %v2651
        %v2668 = vmul.f32 %v2600, %v2652
        %v2669 = vmul.f32 %v2602, %v2653
        %v2670 = vmul.f32 %v2604, %v2654
        %v2671 = vmul.f32 %v2606, %v2655
        %v2672 = vmul.f32 %v2608, %v2656
        %v2673 = vadd.f32 %v2657, %v2658
        %v2674 = vadd.f32 %v2673, %v2659
        %v2675 = vadd.f32 %v2674, %v2660
        %v2676 = vadd.f32 %v2675, %v2661
        %v2677 = vadd.f32 %v2676, %v2662
        %v2678 = vadd.f32 %v2677, %v2663
        %v2679 = vadd.f32 %v2678, %v2664
        %v2680 = vadd.f32 %v2679, %v2665
        %v2681 = vadd.f32 %v2680, %v2666
        %v2682 = vadd.f32 %v2681, %v2667
        %v2683 = vadd.f32 %v2682, %v2668
        %v2684 = vadd.f32 %v2683, %v2669
        %v2685 = vadd.f32 %v2684, %v2670
        %v2686 = vadd.f32 %v2685, %v2671
        %v2687 = vadd.f32 %v2686, %v2672
        %v2688 = vrot.slane %v2687, 4
        %v2689 = vadd.f32 %v2687, %v2688
        %v2690 = vrot.slane %v2689, 2
        %v2691 = vadd.f32 %v2689, %v2690
        %v2692 = vrot.slane %v2691, 1
        %v2693 = vadd.f32 %v2691, %v2692
        %v2694 = vadd.f32 %v2693, 1e-09
        %v2695 = vrcp.pop %v2694
        %v2696 = vpack.c.bf16 %v2384, %v2383
        %v2697 = vpack.c.bf16 %v2386, %v2385
        %v2698 = vpack.c.bf16 %v2388, %v2387
        %v2699 = vpack.c.bf16 %v2390, %v2389
        %v2700 = vpack.c.bf16 %v2658, %v2657
        %v2701 = vpack.c.bf16 %v2660, %v2659
        %v2702 = vpack.c.bf16 %v2662, %v2661
        %v2703 = vpack.c.bf16 %v2664, %v2663
        %v2704 = vpack.c.bf16 %v2666, %v2665
        %v2705 = vpack.c.bf16 %v2668, %v2667
        %v2706 = vpack.c.bf16 %v2670, %v2669
        %v2707 = vpack.c.bf16 %v2672, %v2671
        %2708 = vmatprep.subr.bf16.mxu0 0
        %2709 = vmatpush1.bf16.msra.mxu0 %v2700
        %2710 = vmatprep.subr.bf16.mxu0 0
        %2711 = vmatpush1.bf16.msra.mxu0 %v2701
        %2712 = vmatprep.subr.bf16.mxu0 0
        %2713 = vmatpush1.bf16.msra.mxu0 %v2702
        %2714 = vmatprep.subr.bf16.mxu0 0
        %2715 = vmatpush1.bf16.msra.mxu0 %v2703
        %2716 = vmatprep.subr.bf16.mxu0 0
        %2717 = vmatpush1.bf16.msra.mxu0 %v2704
        %2718 = vmatprep.subr.bf16.mxu0 0
        %2719 = vmatpush1.bf16.msra.mxu0 %v2705
        %2720 = vmatprep.subr.bf16.mxu0 0
        %2721 = vmatpush1.bf16.msra.mxu0 %v2706
        %2722 = vmatprep.subr.bf16.mxu0 0
        %2723 = vmatpush1.bf16.msra.mxu0 %v2707
        %2724 = vmatprep.subr.bf16.mxu0 0
        %2725 = vmatpush1.bf16.msra.mxu0 0
        %2726 = vmatprep.subr.bf16.mxu0 0
        %2727 = vmatpush1.bf16.msra.mxu0 0
        %2728 = vmatprep.subr.bf16.mxu0 0
        %2729 = vmatpush1.bf16.msra.mxu0 0
        %2730 = vmatprep.subr.bf16.mxu0 0
        %2731 = vmatpush1.bf16.msra.mxu0 0
        %2732 = vmatprep.subr.bf16.mxu0 0
        %2733 = vmatpush1.bf16.msra.mxu0 0
        %2734 = vmatprep.subr.bf16.mxu0 0
        %2735 = vmatpush1.bf16.msra.mxu0 0
        %2736 = vmatprep.subr.bf16.mxu0 0
        %2737 = vmatpush1.bf16.msra.mxu0 0
        %2738 = vmatprep.subr.bf16.mxu0 0
        %2739 = vmatpush1.bf16.msra.mxu0 0
        %2740 = vmatprep.mubr.bf16.mxu0 0
        %2741 = vmatmul.mubr.bf16.gmra.mrb[0].mxu0 %v2696
        %v2742 = vpop.f32.mrb[0].mxu0
        %v2743 = vadd.f32 0.0, %v2742
        %v2744 = vpop.f32.mrb[0].mxu0
        %v2745 = vpop.f32.mrb[0].mxu0
        %v2746 = vadd.f32 0.0, %v2745
        %v2747 = vpop.f32.mrb[0].mxu0
        %2748 = vmatprep.mubr.bf16.mxu0 0
        %2749 = vmatmul.mubr.bf16.gmra.mrb[0].mxu0 %v2697
        %v2750 = vpop.f32.mrb[0].mxu0
        %v2751 = vadd.f32 0.0, %v2750
        %v2752 = vpop.f32.mrb[0].mxu0
        %v2753 = vpop.f32.mrb[0].mxu0
        %v2754 = vadd.f32 0.0, %v2753
        %v2755 = vpop.f32.mrb[0].mxu0
        %2756 = vmatprep.mubr.bf16.mxu0 0
        %2757 = vmatmul.mubr.bf16.gmra.mrb[0].mxu0 %v2698
        %v2758 = vpop.f32.mrb[0].mxu0
        %v2759 = vadd.f32 0.0, %v2758
        %v2760 = vpop.f32.mrb[0].mxu0
        %v2761 = vpop.f32.mrb[0].mxu0
        %v2762 = vadd.f32 0.0, %v2761
        %v2763 = vpop.f32.mrb[0].mxu0
        %2764 = vmatprep.mubr.bf16.mxu0 0
        %2765 = vmatmul.mubr.bf16.gmra.mrb[0].mxu0 %v2699
        %v2766 = vpop.f32.mrb[0].mxu0
        %v2767 = vadd.f32 0.0, %v2766
        %v2768 = vpop.f32.mrb[0].mxu0
        %v2769 = vpop.f32.mrb[0].mxu0
        %v2770 = vadd.f32 0.0, %v2769
        %v2771 = vpop.f32.mrb[0].mxu0
        %2772 = vdwg.mxu0
        %v2773 = vmul.f32 %v2743, %v2695
        %v2774 = vmul.f32 %v2746, %v2695
        %v2775 = vmul.f32 %v2751, %v2695
        %v2776 = vmul.f32 %v2754, %v2695
        %v2777 = vmul.f32 %v2759, %v2695
        %v2778 = vmul.f32 %v2762, %v2695
        %v2779 = vmul.f32 %v2767, %v2695
        %v2780 = vmul.f32 %v2770, %v2695
        %v2781 = vsub.f32 %v2190, %v2773
        %v2782 = vsub.f32 %v2191, %v2774
        %v2783 = vsub.f32 %v2192, %v2775
        %v2784 = vsub.f32 %v2193, %v2776
        %v2785 = vsub.f32 %v2194, %v2777
        %v2786 = vsub.f32 %v2195, %v2778
        %v2787 = vsub.f32 %v2196, %v2779
        %v2788 = vsub.f32 %v2197, %v2780
        %v2789 = vpack.c.bf16 %v2782, %v2781
        %v2790 = vpack.c.bf16 %v2784, %v2783
        %v2791 = vpack.c.bf16 %v2786, %v2785
        %v2792 = vpack.c.bf16 %v2788, %v2787
        %s2793 = scalar_lea.vmem %s7, 64
        %v2794 = vld [vmem:[%s2793] sm:$0xf]
        %v2795 = vld [vmem:[%s2793 + $0x4] sm:$0xf]
        %v2796 = vld [vmem:[%s2793 + $0x8] sm:$0xf]
        %v2797 = vld [vmem:[%s2793 + $0xc] sm:$0xf]
        %v2798 = vld [vmem:[%s2793 + $0x10] sm:$0xf]
        %v2799 = vld [vmem:[%s2793 + $0x14] sm:$0xf]
        %v2800 = vld [vmem:[%s2793 + $0x18] sm:$0xf]
        %v2801 = vld [vmem:[%s2793 + $0x1c] sm:$0xf]
        %s2802 = scalar_lea.vmem %s8, 128
        %v2803 = vld [vmem:[%s2802] sm:$0xff]
        %v2804 = vld [vmem:[%s2802 + $0x8] sm:$0xff]
        %v2805 = vld [vmem:[%s2802 + $0x10] sm:$0xff]
        %v2806 = vld [vmem:[%s2802 + $0x18] sm:$0xff]
        %v2807 = vld [vmem:[%s2802 + $0x20] sm:$0xff]
        %v2808 = vld [vmem:[%s2802 + $0x28] sm:$0xff]
        %v2809 = vld [vmem:[%s2802 + $0x30] sm:$0xff]
        %v2810 = vld [vmem:[%s2802 + $0x38] sm:$0xff]
        %2812 = vset.pattern.permute.xlu0 0
        %2813 = vperm.xlu0 %2812, %v2803
        %v2814 = vpop.permute.xlu0 %2813
        %2817 = vset.pattern.permute.xlu0 0
        %2818 = vperm.xlu0 %2817, %v2804
        %v2819 = vpop.permute.xlu0 %2818
        %2822 = vset.pattern.permute.xlu0 0
        %2823 = vperm.xlu0 %2822, %v2805
        %v2824 = vpop.permute.xlu0 %2823
        %2827 = vset.pattern.permute.xlu0 0
        %2828 = vperm.xlu0 %2827, %v2806
        %v2829 = vpop.permute.xlu0 %2828
        %2832 = vset.pattern.permute.xlu0 0
        %2833 = vperm.xlu0 %2832, %v2807
        %v2834 = vpop.permute.xlu0 %2833
        %2837 = vset.pattern.permute.xlu0 0
        %2838 = vperm.xlu0 %2837, %v2808
        %v2839 = vpop.permute.xlu0 %2838
        %2842 = vset.pattern.permute.xlu0 0
        %2843 = vperm.xlu0 %2842, %v2809
        %v2844 = vpop.permute.xlu0 %2843
        %2847 = vset.pattern.permute.xlu0 0
        %2848 = vperm.xlu0 %2847, %v2810
        %v2849 = vpop.permute.xlu0 %2848
        %v2859 = vunpack.c.l.b16 %v2794
        %v2860 = vunpack.c.l.b16 %v2795
        %v2861 = vunpack.c.l.b16 %v2796
        %v2862 = vunpack.c.l.b16 %v2797
        %v2863 = vunpack.c.l.b16 %v2798
        %v2864 = vunpack.c.l.b16 %v2799
        %v2865 = vunpack.c.l.b16 %v2800
        %v2866 = vunpack.c.l.b16 %v2801
        %v2867 = vpack.c.b16 %v2860, %v2859
        %v2868 = vpack.c.b16 %v2862, %v2861
        %v2869 = vpack.c.b16 %v2864, %v2863
        %v2870 = vpack.c.b16 %v2866, %v2865
        %v2872 = vsel %vm426, %v2867, 0
        %v2875 = vsel %vm426, %v2868, 0
        %v2878 = vsel %vm426, %v2869, 0
        %v2881 = vsel %vm426, %v2870, 0
        %2883 = vmatprep.subr.bf16.mxu0 0
        %2884 = vmatpush1.bf16.msra.mxu0 %v2789
        %2885 = vmatprep.subr.bf16.mxu0 0
        %2886 = vmatpush1.bf16.msra.mxu0 %v2790
        %2887 = vmatprep.subr.bf16.mxu0 0
        %2888 = vmatpush1.bf16.msra.mxu0 %v2791
        %2889 = vmatprep.subr.bf16.mxu0 0
        %2890 = vmatpush1.bf16.msra.mxu0 %v2792
        %2891 = vmatprep.subr.bf16.mxu0 0
        %2892 = vmatpush1.bf16.msra.mxu0 0
        %2893 = vmatprep.subr.bf16.mxu0 0
        %2894 = vmatpush1.bf16.msra.mxu0 0
        %2895 = vmatprep.subr.bf16.mxu0 0
        %2896 = vmatpush1.bf16.msra.mxu0 0
        %2897 = vmatprep.subr.bf16.mxu0 0
        %2898 = vmatpush1.bf16.msra.mxu0 0
        %2899 = vmatprep.subr.bf16.mxu0 0
        %2900 = vmatpush1.bf16.msra.mxu0 0
        %2901 = vmatprep.subr.bf16.mxu0 0
        %2902 = vmatpush1.bf16.msra.mxu0 0
        %2903 = vmatprep.subr.bf16.mxu0 0
        %2904 = vmatpush1.bf16.msra.mxu0 0
        %2905 = vmatprep.subr.bf16.mxu0 0
        %2906 = vmatpush1.bf16.msra.mxu0 0
        %2907 = vmatprep.subr.bf16.mxu0 0
        %2908 = vmatpush1.bf16.msra.mxu0 0
        %2909 = vmatprep.subr.bf16.mxu0 0
        %2910 = vmatpush1.bf16.msra.mxu0 0
        %2911 = vmatprep.subr.bf16.mxu0 0
        %2912 = vmatpush1.bf16.msra.mxu0 0
        %2913 = vmatprep.subr.bf16.mxu0 0
        %2914 = vmatpush1.bf16.msra.mxu0 0
        %2915 = vmatprep.mubr.bf16.mxu0 0
        %2916 = vmatmul.mubr.bf16.gmra.mrb[0].mxu0 %v2872
        %v2917 = vpop.f32.mrb[0].mxu0
        %v2918 = vadd.f32 %v2814, %v2917
        %v2919 = vpop.f32.mrb[0].mxu0
        %v2920 = vpop.f32.mrb[0].mxu0
        %v2921 = vadd.f32 %v2819, %v2920
        %v2922 = vpop.f32.mrb[0].mxu0
        %2923 = vmatprep.mubr.bf16.mxu0 0
        %2924 = vmatmul.mubr.bf16.gmra.mrb[0].mxu0 %v2875
        %v2925 = vpop.f32.mrb[0].mxu0
        %v2926 = vadd.f32 %v2824, %v2925
        %v2927 = vpop.f32.mrb[0].mxu0
        %v2928 = vpop.f32.mrb[0].mxu0
        %v2929 = vadd.f32 %v2829, %v2928
        %v2930 = vpop.f32.mrb[0].mxu0
        %2931 = vmatprep.mubr.bf16.mxu0 0
        %2932 = vmatmul.mubr.bf16.gmra.mrb[0].mxu0 %v2878
        %v2933 = vpop.f32.mrb[0].mxu0
        %v2934 = vadd.f32 %v2834, %v2933
        %v2935 = vpop.f32.mrb[0].mxu0
        %v2936 = vpop.f32.mrb[0].mxu0
        %v2937 = vadd.f32 %v2839, %v2936
        %v2938 = vpop.f32.mrb[0].mxu0
        %2939 = vmatprep.mubr.bf16.mxu0 0
        %2940 = vmatmul.mubr.bf16.gmra.mrb[0].mxu0 %v2881
        %v2941 = vpop.f32.mrb[0].mxu0
        %v2942 = vadd.f32 %v2844, %v2941
        %v2943 = vpop.f32.mrb[0].mxu0
        %v2944 = vpop.f32.mrb[0].mxu0
        %v2945 = vadd.f32 %v2849, %v2944
        %v2946 = vpop.f32.mrb[0].mxu0
        %2947 = vdwg.mxu0
        %v2948 = vmax.f32 %v2918, 0.0
        %v2949 = vmax.f32 %v2921, 0.0
        %v2950 = vmax.f32 %v2926, 0.0
        %v2951 = vmax.f32 %v2929, 0.0
        %v2952 = vmax.f32 %v2934, 0.0
        %v2953 = vmax.f32 %v2937, 0.0
        %v2954 = vmax.f32 %v2942, 0.0
        %v2955 = vmax.f32 %v2945, 0.0
        %v2956 = vadd.f32 %v2190, %v2948
        %v2957 = vadd.f32 %v2191, %v2949
        %v2958 = vadd.f32 %v2192, %v2950
        %v2959 = vadd.f32 %v2193, %v2951
        %v2960 = vadd.f32 %v2194, %v2952
        %v2961 = vadd.f32 %v2195, %v2953
        %v2962 = vadd.f32 %v2196, %v2954
        %v2963 = vadd.f32 %v2197, %v2955
        %2964 = vst [vmem:[%s328 + $0x80] sm:$0xff] %v2956
        %2965 = vst [vmem:[%s328 + $0x88] sm:$0xff] %v2957
        %2966 = vst [vmem:[%s328 + $0x90] sm:$0xff] %v2958
        %2967 = vst [vmem:[%s328 + $0x98] sm:$0xff] %v2959
        %2968 = vst [vmem:[%s328 + $0xa0] sm:$0xff] %v2960
        %2969 = vst [vmem:[%s328 + $0xa8] sm:$0xff] %v2961
        %2970 = vst [vmem:[%s328 + $0xb0] sm:$0xff] %v2962
        %2971 = vst [vmem:[%s328 + $0xb8] sm:$0xff] %v2963
        %v2972 = vpack.c.bf16 %v2957, %v2956
        %v2973 = vpack.c.bf16 %v2959, %v2958
        %v2974 = vpack.c.bf16 %v2961, %v2960
        %v2975 = vpack.c.bf16 %v2963, %v2962
        %s2976 = scalar_lea.vmem %s5, 120
        %v2977 = vld [vmem:[%s2976] sm:$0xf]
        %v2978 = vld [vmem:[%s2976 + $0x4] sm:$0xf]
        %v2979 = vld [vmem:[%s2976 + $0x8] sm:$0xf]
        %v2980 = vld [vmem:[%s2976 + $0xc] sm:$0xf]
        %v2981 = vld [vmem:[%s2976 + $0x10] sm:$0xf]
        %v2982 = vld [vmem:[%s2976 + $0x14] sm:$0xf]
        %v2983 = vld [vmem:[%s2976 + $0x18] sm:$0xf]
        %v2984 = vld [vmem:[%s2976 + $0x1c] sm:$0xf]
        %v2985 = vld [vmem:[%s2976 + $0x20] sm:$0xf]
        %v2986 = vld [vmem:[%s2976 + $0x24] sm:$0xf]
        %v2997 = vunpack.c.l.b16 %v2977
        %v2998 = vunpack.c.l.b16 %v2978
        %v2999 = vunpack.c.l.b16 %v2979
        %v3000 = vunpack.c.l.b16 %v2980
        %v3001 = vunpack.c.l.b16 %v2981
        %v3002 = vunpack.c.l.b16 %v2982
        %v3003 = vunpack.c.l.b16 %v2983
        %v3004 = vunpack.c.l.b16 %v2984
        %v3005 = vunpack.c.l.b16 %v2985
        %v3006 = vunpack.c.l.b16 %v2986
        %v3007 = vpack.c.b16 %v2998, %v2997
        %v3008 = vpack.c.b16 %v3000, %v2999
        %v3009 = vpack.c.b16 %v3002, %v3001
        %v3010 = vpack.c.b16 %v3004, %v3003
        %v3011 = vpack.c.b16 %v3006, %v3005
        %v3013 = vsel %vm426, %v3007, 0
        %v3016 = vsel %vm426, %v3008, 0
        %v3019 = vsel %vm426, %v3009, 0
        %v3022 = vsel %vm426, %v3010, 0
        %v3025 = vsel %vm426, %v3011, 0
        %3027 = vmatprep.subr.bf16.mxu0 0
        %3028 = vmatpush1.bf16.msra.mxu0 %v2972
        %3029 = vmatprep.subr.bf16.mxu0 0
        %3030 = vmatpush1.bf16.msra.mxu0 %v2973
        %3031 = vmatprep.subr.bf16.mxu0 0
        %3032 = vmatpush1.bf16.msra.mxu0 %v2974
        %3033 = vmatprep.subr.bf16.mxu0 0
        %3034 = vmatpush1.bf16.msra.mxu0 %v2975
        %3035 = vmatprep.subr.bf16.mxu0 0
        %3036 = vmatpush1.bf16.msra.mxu0 0
        %3037 = vmatprep.subr.bf16.mxu0 0
        %3038 = vmatpush1.bf16.msra.mxu0 0
        %3039 = vmatprep.subr.bf16.mxu0 0
        %3040 = vmatpush1.bf16.msra.mxu0 0
        %3041 = vmatprep.subr.bf16.mxu0 0
        %3042 = vmatpush1.bf16.msra.mxu0 0
        %3043 = vmatprep.subr.bf16.mxu0 0
        %3044 = vmatpush1.bf16.msra.mxu0 0
        %3045 = vmatprep.subr.bf16.mxu0 0
        %3046 = vmatpush1.bf16.msra.mxu0 0
        %3047 = vmatprep.subr.bf16.mxu0 0
        %3048 = vmatpush1.bf16.msra.mxu0 0
        %3049 = vmatprep.subr.bf16.mxu0 0
        %3050 = vmatpush1.bf16.msra.mxu0 0
        %3051 = vmatprep.subr.bf16.mxu0 0
        %3052 = vmatpush1.bf16.msra.mxu0 0
        %3053 = vmatprep.subr.bf16.mxu0 0
        %3054 = vmatpush1.bf16.msra.mxu0 0
        %3055 = vmatprep.subr.bf16.mxu0 0
        %3056 = vmatpush1.bf16.msra.mxu0 0
        %3057 = vmatprep.subr.bf16.mxu0 0
        %3058 = vmatpush1.bf16.msra.mxu0 0
        %3059 = vmatprep.mubr.bf16.mxu0 0
        %3060 = vmatmul.mubr.bf16.gmra.mrb[0].mxu0 %v3013
        %v3061 = vpop.f32.mrb[0].mxu0
        %v3062 = vadd.f32 0.0, %v3061
        %v3063 = vpop.f32.mrb[0].mxu0
        %v3064 = vpop.f32.mrb[0].mxu0
        %v3065 = vadd.f32 0.0, %v3064
        %v3066 = vpop.f32.mrb[0].mxu0
        %3067 = vmatprep.mubr.bf16.mxu0 0
        %3068 = vmatmul.mubr.bf16.gmra.mrb[0].mxu0 %v3016
        %v3069 = vpop.f32.mrb[0].mxu0
        %v3070 = vadd.f32 0.0, %v3069
        %v3071 = vpop.f32.mrb[0].mxu0
        %v3072 = vpop.f32.mrb[0].mxu0
        %v3073 = vadd.f32 0.0, %v3072
        %v3074 = vpop.f32.mrb[0].mxu0
        %3075 = vmatprep.mubr.bf16.mxu0 0
        %3076 = vmatmul.mubr.bf16.gmra.mrb[0].mxu0 %v3019
        %v3077 = vpop.f32.mrb[0].mxu0
        %v3078 = vadd.f32 0.0, %v3077
        %v3079 = vpop.f32.mrb[0].mxu0
        %v3080 = vpop.f32.mrb[0].mxu0
        %v3081 = vadd.f32 0.0, %v3080
        %v3082 = vpop.f32.mrb[0].mxu0
        %3083 = vmatprep.mubr.bf16.mxu0 0
        %3084 = vmatmul.mubr.bf16.gmra.mrb[0].mxu0 %v3022
        %v3085 = vpop.f32.mrb[0].mxu0
        %v3086 = vadd.f32 0.0, %v3085
        %v3087 = vpop.f32.mrb[0].mxu0
        %v3088 = vpop.f32.mrb[0].mxu0
        %v3089 = vadd.f32 0.0, %v3088
        %v3090 = vpop.f32.mrb[0].mxu0
        %3091 = vmatprep.mubr.bf16.mxu0 0
        %3092 = vmatmul.mubr.bf16.gmra.mrb[0].mxu0 %v3025
        %v3093 = vpop.f32.mrb[0].mxu0
        %v3094 = vadd.f32 0.0, %v3093
        %v3095 = vpop.f32.mrb[0].mxu0
        %v3096 = vpop.f32.mrb[0].mxu0
        %v3097 = vadd.f32 0.0, %v3096
        %v3098 = vpop.f32.mrb[0].mxu0
        %3099 = vdwg.mxu0
        %s3100 = scalar_lea.vmem %s6, 192
        %v3101 = vld [vmem:[%s3100] sm:$0xff]
        %v3102 = vld [vmem:[%s3100 + $0x8] sm:$0xff]
        %v3103 = vld [vmem:[%s3100 + $0x10] sm:$0xff]
        %v3104 = vld [vmem:[%s3100 + $0x18] sm:$0xff]
        %v3105 = vld [vmem:[%s3100 + $0x20] sm:$0xff]
        %v3106 = vld [vmem:[%s3100 + $0x28] sm:$0xff]
        %v3107 = vld [vmem:[%s3100 + $0x30] sm:$0xff]
        %v3108 = vld [vmem:[%s3100 + $0x38] sm:$0xff]
        %3110 = vset.pattern.permute.xlu0 0
        %3111 = vperm.xlu0 %3110, %v3101
        %v3112 = vpop.permute.xlu0 %3111
        %3115 = vset.pattern.permute.xlu0 0
        %3116 = vperm.xlu0 %3115, %v3102
        %v3117 = vpop.permute.xlu0 %3116
        %3120 = vset.pattern.permute.xlu0 0
        %3121 = vperm.xlu0 %3120, %v3103
        %v3122 = vpop.permute.xlu0 %3121
        %3125 = vset.pattern.permute.xlu0 0
        %3126 = vperm.xlu0 %3125, %v3104
        %v3127 = vpop.permute.xlu0 %3126
        %3130 = vset.pattern.permute.xlu0 0
        %3131 = vperm.xlu0 %3130, %v3105
        %v3132 = vpop.permute.xlu0 %3131
        %3135 = vset.pattern.permute.xlu0 0
        %3136 = vperm.xlu0 %3135, %v3106
        %v3137 = vpop.permute.xlu0 %3136
        %3140 = vset.pattern.permute.xlu0 0
        %3141 = vperm.xlu0 %3140, %v3107
        %v3142 = vpop.permute.xlu0 %3141
        %3145 = vset.pattern.permute.xlu0 0
        %3146 = vperm.xlu0 %3145, %v3108
        %v3147 = vpop.permute.xlu0 %3146
        %v3149 = vadd.f32 %v3070, %v3112
        %v3150 = vadd.f32 %v3073, %v3117
        %v3151 = vadd.f32 %v3078, %v3122
        %v3152 = vadd.f32 %v3081, %v3127
        %v3153 = vadd.f32 %v3086, %v3132
        %v3154 = vadd.f32 %v3089, %v3137
        %v3155 = vadd.f32 %v3094, %v3142
        %v3156 = vadd.f32 %v3097, %v3147
        %v3157 = vpack.c.bf16 %v3065, %v3062
        %3158 = vxpose.xlu0.c.b16.start [1/8] %v3157, 128
        %3159 = vxpose.xlu0.c.b16.cont [2/8] 0, 128
        %3160 = vxpose.xlu0.c.b16.cont [3/8] 0, 128
        %3161 = vxpose.xlu0.c.b16.cont [4/8] 0, 128
        %3162 = vxpose.xlu0.c.b16.cont [5/8] 0, 128
        %3163 = vxpose.xlu0.c.b16.cont [6/8] 0, 128
        %3164 = vxpose.xlu0.c.b16.cont [7/8] 0, 128
        %3165 = vxpose.xlu0.c.b16.end [8/8] 0, 128
        %v3166 = vpop.trf.xlu0
        %v3167 = vpop.trf.xlu0
        %v3168 = vpop.trf.xlu0
        %v3169 = vpop.trf.xlu0
        %v3170 = vpop.trf.xlu0
        %v3171 = vpop.trf.xlu0
        %v3172 = vpop.trf.xlu0
        %v3173 = vpop.trf.xlu0
        %v3175 = vsel %vm877, %v3166, 0
        %v3178 = vsel %vm877, %v3167, 0
        %v3181 = vsel %vm877, %v3168, 0
        %v3184 = vsel %vm877, %v3169, 0
        %v3187 = vsel %vm877, %v3170, 0
        %v3190 = vsel %vm877, %v3171, 0
        %v3193 = vsel %vm877, %v3172, 0
        %v3196 = vsel %vm877, %v3173, 0
        %3198 = vmatprep.subr.bf16.mxu0 0
        %3199 = vmatpush1.bf16.msra.mxu0 %v3157
        %3200 = vmatprep.subr.bf16.mxu0 0
        %3201 = vmatpush1.bf16.msra.mxu0 0
        %3202 = vmatprep.subr.bf16.mxu0 0
        %3203 = vmatpush1.bf16.msra.mxu0 0
        %3204 = vmatprep.subr.bf16.mxu0 0
        %3205 = vmatpush1.bf16.msra.mxu0 0
        %3206 = vmatprep.subr.bf16.mxu0 0
        %3207 = vmatpush1.bf16.msra.mxu0 0
        %3208 = vmatprep.subr.bf16.mxu0 0
        %3209 = vmatpush1.bf16.msra.mxu0 0
        %3210 = vmatprep.subr.bf16.mxu0 0
        %3211 = vmatpush1.bf16.msra.mxu0 0
        %3212 = vmatprep.subr.bf16.mxu0 0
        %3213 = vmatpush1.bf16.msra.mxu0 0
        %3214 = vmatprep.subr.bf16.mxu0 0
        %3215 = vmatpush1.bf16.msra.mxu0 0
        %3216 = vmatprep.subr.bf16.mxu0 0
        %3217 = vmatpush1.bf16.msra.mxu0 0
        %3218 = vmatprep.subr.bf16.mxu0 0
        %3219 = vmatpush1.bf16.msra.mxu0 0
        %3220 = vmatprep.subr.bf16.mxu0 0
        %3221 = vmatpush1.bf16.msra.mxu0 0
        %3222 = vmatprep.subr.bf16.mxu0 0
        %3223 = vmatpush1.bf16.msra.mxu0 0
        %3224 = vmatprep.subr.bf16.mxu0 0
        %3225 = vmatpush1.bf16.msra.mxu0 0
        %3226 = vmatprep.subr.bf16.mxu0 0
        %3227 = vmatpush1.bf16.msra.mxu0 0
        %3228 = vmatprep.subr.bf16.mxu0 0
        %3229 = vmatpush1.bf16.msra.mxu0 0
        %3230 = vmatprep.mubr.bf16.mxu0 0
        %3231 = vmatmul.mubr.bf16.gmra.mrb[0].mxu0 %v3175
        %v3232 = vpop.f32.mrb[0].mxu0
        %v3233 = vadd.f32 0.0, %v3232
        %v3234 = vpop.f32.mrb[0].mxu0
        %v3235 = vpop.f32.mrb[0].mxu0
        %v3236 = vadd.f32 0.0, %v3235
        %v3237 = vpop.f32.mrb[0].mxu0
        %3238 = vmatprep.mubr.bf16.mxu0 0
        %3239 = vmatmul.mubr.bf16.gmra.mrb[0].mxu0 %v3178
        %v3240 = vpop.f32.mrb[0].mxu0
        %v3241 = vadd.f32 0.0, %v3240
        %v3242 = vpop.f32.mrb[0].mxu0
        %v3243 = vpop.f32.mrb[0].mxu0
        %v3244 = vadd.f32 0.0, %v3243
        %v3245 = vpop.f32.mrb[0].mxu0
        %3246 = vmatprep.mubr.bf16.mxu0 0
        %3247 = vmatmul.mubr.bf16.gmra.mrb[0].mxu0 %v3181
        %v3248 = vpop.f32.mrb[0].mxu0
        %v3249 = vadd.f32 0.0, %v3248
        %v3250 = vpop.f32.mrb[0].mxu0
        %v3251 = vpop.f32.mrb[0].mxu0
        %v3252 = vadd.f32 0.0, %v3251
        %v3253 = vpop.f32.mrb[0].mxu0
        %3254 = vmatprep.mubr.bf16.mxu0 0
        %3255 = vmatmul.mubr.bf16.gmra.mrb[0].mxu0 %v3184
        %v3256 = vpop.f32.mrb[0].mxu0
        %v3257 = vadd.f32 0.0, %v3256
        %v3258 = vpop.f32.mrb[0].mxu0
        %v3259 = vpop.f32.mrb[0].mxu0
        %v3260 = vadd.f32 0.0, %v3259
        %v3261 = vpop.f32.mrb[0].mxu0
        %3262 = vmatprep.mubr.bf16.mxu0 0
        %3263 = vmatmul.mubr.bf16.gmra.mrb[0].mxu0 %v3187
        %v3264 = vpop.f32.mrb[0].mxu0
        %v3265 = vadd.f32 0.0, %v3264
        %v3266 = vpop.f32.mrb[0].mxu0
        %v3267 = vpop.f32.mrb[0].mxu0
        %v3268 = vadd.f32 0.0, %v3267
        %v3269 = vpop.f32.mrb[0].mxu0
        %3270 = vmatprep.mubr.bf16.mxu0 0
        %3271 = vmatmul.mubr.bf16.gmra.mrb[0].mxu0 %v3190
        %v3272 = vpop.f32.mrb[0].mxu0
        %v3273 = vadd.f32 0.0, %v3272
        %v3274 = vpop.f32.mrb[0].mxu0
        %v3275 = vpop.f32.mrb[0].mxu0
        %v3276 = vadd.f32 0.0, %v3275
        %v3277 = vpop.f32.mrb[0].mxu0
        %3278 = vmatprep.mubr.bf16.mxu0 0
        %3279 = vmatmul.mubr.bf16.gmra.mrb[0].mxu0 %v3193
        %v3280 = vpop.f32.mrb[0].mxu0
        %v3281 = vadd.f32 0.0, %v3280
        %v3282 = vpop.f32.mrb[0].mxu0
        %v3283 = vpop.f32.mrb[0].mxu0
        %v3284 = vadd.f32 0.0, %v3283
        %v3285 = vpop.f32.mrb[0].mxu0
        %3286 = vmatprep.mubr.bf16.mxu0 0
        %3287 = vmatmul.mubr.bf16.gmra.mrb[0].mxu0 %v3196
        %v3288 = vpop.f32.mrb[0].mxu0
        %v3289 = vadd.f32 0.0, %v3288
        %v3290 = vpop.f32.mrb[0].mxu0
        %v3291 = vpop.f32.mrb[0].mxu0
        %v3292 = vadd.f32 0.0, %v3291
        %v3293 = vpop.f32.mrb[0].mxu0
        %3294 = vdwg.mxu0
        %3295 = vmax.xlane.f32.xlu0 %v3233
        %v3296 = vpop.xlane.xlu0 %3295
        %3297 = vmax.xlane.f32.xlu0 %v3236
        %v3298 = vpop.xlane.xlu0 %3297
        %3299 = vmax.xlane.f32.xlu0 %v3241
        %v3300 = vpop.xlane.xlu0 %3299
        %3301 = vmax.xlane.f32.xlu0 %v3244
        %v3302 = vpop.xlane.xlu0 %3301
        %3303 = vmax.xlane.f32.xlu0 %v3249
        %v3304 = vpop.xlane.xlu0 %3303
        %3305 = vmax.xlane.f32.xlu0 %v3252
        %v3306 = vpop.xlane.xlu0 %3305
        %3307 = vmax.xlane.f32.xlu0 %v3257
        %v3308 = vpop.xlane.xlu0 %3307
        %3309 = vmax.xlane.f32.xlu0 %v3260
        %v3310 = vpop.xlane.xlu0 %3309
        %3311 = vmax.xlane.f32.xlu0 %v3265
        %v3312 = vpop.xlane.xlu0 %3311
        %3313 = vmax.xlane.f32.xlu0 %v3268
        %v3314 = vpop.xlane.xlu0 %3313
        %3315 = vmax.xlane.f32.xlu0 %v3273
        %v3316 = vpop.xlane.xlu0 %3315
        %3317 = vmax.xlane.f32.xlu0 %v3276
        %v3318 = vpop.xlane.xlu0 %3317
        %3319 = vmax.xlane.f32.xlu0 %v3281
        %v3320 = vpop.xlane.xlu0 %3319
        %3321 = vmax.xlane.f32.xlu0 %v3284
        %v3322 = vpop.xlane.xlu0 %3321
        %3323 = vmax.xlane.f32.xlu0 %v3289
        %v3324 = vpop.xlane.xlu0 %3323
        %3325 = vmax.xlane.f32.xlu0 %v3292
        %v3326 = vpop.xlane.xlu0 %3325
        %v3327 = vsub.f32 %v3233, %v3296
        %v3328 = vsub.f32 %v3236, %v3298
        %v3329 = vsub.f32 %v3241, %v3300
        %v3330 = vsub.f32 %v3244, %v3302
        %v3331 = vsub.f32 %v3249, %v3304
        %v3332 = vsub.f32 %v3252, %v3306
        %v3333 = vsub.f32 %v3257, %v3308
        %v3334 = vsub.f32 %v3260, %v3310
        %v3335 = vsub.f32 %v3265, %v3312
        %v3336 = vsub.f32 %v3268, %v3314
        %v3337 = vsub.f32 %v3273, %v3316
        %v3338 = vsub.f32 %v3276, %v3318
        %v3339 = vsub.f32 %v3281, %v3320
        %v3340 = vsub.f32 %v3284, %v3322
        %v3341 = vsub.f32 %v3289, %v3324
        %v3342 = vsub.f32 %v3292, %v3326
        %v3343 = vmul.f32 %v3327, 1.442695
        %v3344 = vpow.pop %v3343
        %v3345 = vmul.f32 %v3328, 1.442695
        %v3346 = vpow.pop %v3345
        %v3347 = vmul.f32 %v3329, 1.442695
        %v3348 = vpow.pop %v3347
        %v3349 = vmul.f32 %v3330, 1.442695
        %v3350 = vpow.pop %v3349
        %v3351 = vmul.f32 %v3331, 1.442695
        %v3352 = vpow.pop %v3351
        %v3353 = vmul.f32 %v3332, 1.442695
        %v3354 = vpow.pop %v3353
        %v3355 = vmul.f32 %v3333, 1.442695
        %v3356 = vpow.pop %v3355
        %v3357 = vmul.f32 %v3334, 1.442695
        %v3358 = vpow.pop %v3357
        %v3359 = vmul.f32 %v3335, 1.442695
        %v3360 = vpow.pop %v3359
        %v3361 = vmul.f32 %v3336, 1.442695
        %v3362 = vpow.pop %v3361
        %v3363 = vmul.f32 %v3337, 1.442695
        %v3364 = vpow.pop %v3363
        %v3365 = vmul.f32 %v3338, 1.442695
        %v3366 = vpow.pop %v3365
        %v3367 = vmul.f32 %v3339, 1.442695
        %v3368 = vpow.pop %v3367
        %v3369 = vmul.f32 %v3340, 1.442695
        %v3370 = vpow.pop %v3369
        %v3371 = vmul.f32 %v3341, 1.442695
        %v3372 = vpow.pop %v3371
        %v3373 = vmul.f32 %v3342, 1.442695
        %v3374 = vpow.pop %v3373
        %3375 = vadd.xlane.f32.xlu0 %v3344
        %v3376 = vpop.xlane.xlu0 %3375
        %3377 = vadd.xlane.f32.xlu0 %v3346
        %v3378 = vpop.xlane.xlu0 %3377
        %3379 = vadd.xlane.f32.xlu0 %v3348
        %v3380 = vpop.xlane.xlu0 %3379
        %3381 = vadd.xlane.f32.xlu0 %v3350
        %v3382 = vpop.xlane.xlu0 %3381
        %3383 = vadd.xlane.f32.xlu0 %v3352
        %v3384 = vpop.xlane.xlu0 %3383
        %3385 = vadd.xlane.f32.xlu0 %v3354
        %v3386 = vpop.xlane.xlu0 %3385
        %3387 = vadd.xlane.f32.xlu0 %v3356
        %v3388 = vpop.xlane.xlu0 %3387
        %3389 = vadd.xlane.f32.xlu0 %v3358
        %v3390 = vpop.xlane.xlu0 %3389
        %3391 = vadd.xlane.f32.xlu0 %v3360
        %v3392 = vpop.xlane.xlu0 %3391
        %3393 = vadd.xlane.f32.xlu0 %v3362
        %v3394 = vpop.xlane.xlu0 %3393
        %3395 = vadd.xlane.f32.xlu0 %v3364
        %v3396 = vpop.xlane.xlu0 %3395
        %3397 = vadd.xlane.f32.xlu0 %v3366
        %v3398 = vpop.xlane.xlu0 %3397
        %3399 = vadd.xlane.f32.xlu0 %v3368
        %v3400 = vpop.xlane.xlu0 %3399
        %3401 = vadd.xlane.f32.xlu0 %v3370
        %v3402 = vpop.xlane.xlu0 %3401
        %3403 = vadd.xlane.f32.xlu0 %v3372
        %v3404 = vpop.xlane.xlu0 %3403
        %3405 = vadd.xlane.f32.xlu0 %v3374
        %v3406 = vpop.xlane.xlu0 %3405
        %v3407 = vrcp.pop %v3376
        %v3408 = vrcp.pop %v3378
        %v3409 = vrcp.pop %v3380
        %v3410 = vrcp.pop %v3382
        %v3411 = vrcp.pop %v3384
        %v3412 = vrcp.pop %v3386
        %v3413 = vrcp.pop %v3388
        %v3414 = vrcp.pop %v3390
        %v3415 = vrcp.pop %v3392
        %v3416 = vrcp.pop %v3394
        %v3417 = vrcp.pop %v3396
        %v3418 = vrcp.pop %v3398
        %v3419 = vrcp.pop %v3400
        %v3420 = vrcp.pop %v3402
        %v3421 = vrcp.pop %v3404
        %v3422 = vrcp.pop %v3406
        %v3423 = vmul.f32 %v3344, %v3407
        %v3424 = vmul.f32 %v3346, %v3408
        %v3425 = vmul.f32 %v3348, %v3409
        %v3426 = vmul.f32 %v3350, %v3410
        %v3427 = vmul.f32 %v3352, %v3411
        %v3428 = vmul.f32 %v3354, %v3412
        %v3429 = vmul.f32 %v3356, %v3413
        %v3430 = vmul.f32 %v3358, %v3414
        %v3431 = vmul.f32 %v3360, %v3415
        %v3432 = vmul.f32 %v3362, %v3416
        %v3433 = vmul.f32 %v3364, %v3417
        %v3434 = vmul.f32 %v3366, %v3418
        %v3435 = vmul.f32 %v3368, %v3419
        %v3436 = vmul.f32 %v3370, %v3420
        %v3437 = vmul.f32 %v3372, %v3421
        %v3438 = vmul.f32 %v3374, %v3422
        %v3439 = vadd.f32 %v3423, %v3424
        %v3440 = vadd.f32 %v3439, %v3425
        %v3441 = vadd.f32 %v3440, %v3426
        %v3442 = vadd.f32 %v3441, %v3427
        %v3443 = vadd.f32 %v3442, %v3428
        %v3444 = vadd.f32 %v3443, %v3429
        %v3445 = vadd.f32 %v3444, %v3430
        %v3446 = vadd.f32 %v3445, %v3431
        %v3447 = vadd.f32 %v3446, %v3432
        %v3448 = vadd.f32 %v3447, %v3433
        %v3449 = vadd.f32 %v3448, %v3434
        %v3450 = vadd.f32 %v3449, %v3435
        %v3451 = vadd.f32 %v3450, %v3436
        %v3452 = vadd.f32 %v3451, %v3437
        %v3453 = vadd.f32 %v3452, %v3438
        %v3454 = vrot.slane %v3453, 4
        %v3455 = vadd.f32 %v3453, %v3454
        %v3456 = vrot.slane %v3455, 2
        %v3457 = vadd.f32 %v3455, %v3456
        %v3458 = vrot.slane %v3457, 1
        %v3459 = vadd.f32 %v3457, %v3458
        %v3460 = vadd.f32 %v3459, 1e-09
        %v3461 = vrcp.pop %v3460
        %v3462 = vpack.c.bf16 %v3150, %v3149
        %v3463 = vpack.c.bf16 %v3152, %v3151
        %v3464 = vpack.c.bf16 %v3154, %v3153
        %v3465 = vpack.c.bf16 %v3156, %v3155
        %v3466 = vpack.c.bf16 %v3424, %v3423
        %v3467 = vpack.c.bf16 %v3426, %v3425
        %v3468 = vpack.c.bf16 %v3428, %v3427
        %v3469 = vpack.c.bf16 %v3430, %v3429
        %v3470 = vpack.c.bf16 %v3432, %v3431
        %v3471 = vpack.c.bf16 %v3434, %v3433
        %v3472 = vpack.c.bf16 %v3436, %v3435
        %v3473 = vpack.c.bf16 %v3438, %v3437
        %3474 = vmatprep.subr.bf16.mxu0 0
        %3475 = vmatpush1.bf16.msra.mxu0 %v3466
        %3476 = vmatprep.subr.bf16.mxu0 0
        %3477 = vmatpush1.bf16.msra.mxu0 %v3467
        %3478 = vmatprep.subr.bf16.mxu0 0
        %3479 = vmatpush1.bf16.msra.mxu0 %v3468
        %3480 = vmatprep.subr.bf16.mxu0 0
        %3481 = vmatpush1.bf16.msra.mxu0 %v3469
        %3482 = vmatprep.subr.bf16.mxu0 0
        %3483 = vmatpush1.bf16.msra.mxu0 %v3470
        %3484 = vmatprep.subr.bf16.mxu0 0
        %3485 = vmatpush1.bf16.msra.mxu0 %v3471
        %3486 = vmatprep.subr.bf16.mxu0 0
        %3487 = vmatpush1.bf16.msra.mxu0 %v3472
        %3488 = vmatprep.subr.bf16.mxu0 0
        %3489 = vmatpush1.bf16.msra.mxu0 %v3473
        %3490 = vmatprep.subr.bf16.mxu0 0
        %3491 = vmatpush1.bf16.msra.mxu0 0
        %3492 = vmatprep.subr.bf16.mxu0 0
        %3493 = vmatpush1.bf16.msra.mxu0 0
        %3494 = vmatprep.subr.bf16.mxu0 0
        %3495 = vmatpush1.bf16.msra.mxu0 0
        %3496 = vmatprep.subr.bf16.mxu0 0
        %3497 = vmatpush1.bf16.msra.mxu0 0
        %3498 = vmatprep.subr.bf16.mxu0 0
        %3499 = vmatpush1.bf16.msra.mxu0 0
        %3500 = vmatprep.subr.bf16.mxu0 0
        %3501 = vmatpush1.bf16.msra.mxu0 0
        %3502 = vmatprep.subr.bf16.mxu0 0
        %3503 = vmatpush1.bf16.msra.mxu0 0
        %3504 = vmatprep.subr.bf16.mxu0 0
        %3505 = vmatpush1.bf16.msra.mxu0 0
        %3506 = vmatprep.mubr.bf16.mxu0 0
        %3507 = vmatmul.mubr.bf16.gmra.mrb[0].mxu0 %v3462
        %v3508 = vpop.f32.mrb[0].mxu0
        %v3509 = vadd.f32 0.0, %v3508
        %v3510 = vpop.f32.mrb[0].mxu0
        %v3511 = vpop.f32.mrb[0].mxu0
        %v3512 = vadd.f32 0.0, %v3511
        %v3513 = vpop.f32.mrb[0].mxu0
        %3514 = vmatprep.mubr.bf16.mxu0 0
        %3515 = vmatmul.mubr.bf16.gmra.mrb[0].mxu0 %v3463
        %v3516 = vpop.f32.mrb[0].mxu0
        %v3517 = vadd.f32 0.0, %v3516
        %v3518 = vpop.f32.mrb[0].mxu0
        %v3519 = vpop.f32.mrb[0].mxu0
        %v3520 = vadd.f32 0.0, %v3519
        %v3521 = vpop.f32.mrb[0].mxu0
        %3522 = vmatprep.mubr.bf16.mxu0 0
        %3523 = vmatmul.mubr.bf16.gmra.mrb[0].mxu0 %v3464
        %v3524 = vpop.f32.mrb[0].mxu0
        %v3525 = vadd.f32 0.0, %v3524
        %v3526 = vpop.f32.mrb[0].mxu0
        %v3527 = vpop.f32.mrb[0].mxu0
        %v3528 = vadd.f32 0.0, %v3527
        %v3529 = vpop.f32.mrb[0].mxu0
        %3530 = vmatprep.mubr.bf16.mxu0 0
        %3531 = vmatmul.mubr.bf16.gmra.mrb[0].mxu0 %v3465
        %v3532 = vpop.f32.mrb[0].mxu0
        %v3533 = vadd.f32 0.0, %v3532
        %v3534 = vpop.f32.mrb[0].mxu0
        %v3535 = vpop.f32.mrb[0].mxu0
        %v3536 = vadd.f32 0.0, %v3535
        %v3537 = vpop.f32.mrb[0].mxu0
        %3538 = vdwg.mxu0
        %v3539 = vmul.f32 %v3509, %v3461
        %v3540 = vmul.f32 %v3512, %v3461
        %v3541 = vmul.f32 %v3517, %v3461
        %v3542 = vmul.f32 %v3520, %v3461
        %v3543 = vmul.f32 %v3525, %v3461
        %v3544 = vmul.f32 %v3528, %v3461
        %v3545 = vmul.f32 %v3533, %v3461
        %v3546 = vmul.f32 %v3536, %v3461
        %v3547 = vsub.f32 %v2956, %v3539
        %v3548 = vsub.f32 %v2957, %v3540
        %v3549 = vsub.f32 %v2958, %v3541
        %v3550 = vsub.f32 %v2959, %v3542
        %v3551 = vsub.f32 %v2960, %v3543
        %v3552 = vsub.f32 %v2961, %v3544
        %v3553 = vsub.f32 %v2962, %v3545
        %v3554 = vsub.f32 %v2963, %v3546
        %v3555 = vpack.c.bf16 %v3548, %v3547
        %v3556 = vpack.c.bf16 %v3550, %v3549
        %v3557 = vpack.c.bf16 %v3552, %v3551
        %v3558 = vpack.c.bf16 %v3554, %v3553
        %s3559 = scalar_lea.vmem %s7, 96
        %v3560 = vld [vmem:[%s3559] sm:$0xf]
        %v3561 = vld [vmem:[%s3559 + $0x4] sm:$0xf]
        %v3562 = vld [vmem:[%s3559 + $0x8] sm:$0xf]
        %v3563 = vld [vmem:[%s3559 + $0xc] sm:$0xf]
        %v3564 = vld [vmem:[%s3559 + $0x10] sm:$0xf]
        %v3565 = vld [vmem:[%s3559 + $0x14] sm:$0xf]
        %v3566 = vld [vmem:[%s3559 + $0x18] sm:$0xf]
        %v3567 = vld [vmem:[%s3559 + $0x1c] sm:$0xf]
        %s3568 = scalar_lea.vmem %s8, 192
        %v3569 = vld [vmem:[%s3568] sm:$0xff]
        %v3570 = vld [vmem:[%s3568 + $0x8] sm:$0xff]
        %v3571 = vld [vmem:[%s3568 + $0x10] sm:$0xff]
        %v3572 = vld [vmem:[%s3568 + $0x18] sm:$0xff]
        %v3573 = vld [vmem:[%s3568 + $0x20] sm:$0xff]
        %v3574 = vld [vmem:[%s3568 + $0x28] sm:$0xff]
        %v3575 = vld [vmem:[%s3568 + $0x30] sm:$0xff]
        %v3576 = vld [vmem:[%s3568 + $0x38] sm:$0xff]
        %3578 = vset.pattern.permute.xlu0 0
        %3579 = vperm.xlu0 %3578, %v3569
        %v3580 = vpop.permute.xlu0 %3579
        %3583 = vset.pattern.permute.xlu0 0
        %3584 = vperm.xlu0 %3583, %v3570
        %v3585 = vpop.permute.xlu0 %3584
        %3588 = vset.pattern.permute.xlu0 0
        %3589 = vperm.xlu0 %3588, %v3571
        %v3590 = vpop.permute.xlu0 %3589
        %3593 = vset.pattern.permute.xlu0 0
        %3594 = vperm.xlu0 %3593, %v3572
        %v3595 = vpop.permute.xlu0 %3594
        %3598 = vset.pattern.permute.xlu0 0
        %3599 = vperm.xlu0 %3598, %v3573
        %v3600 = vpop.permute.xlu0 %3599
        %3603 = vset.pattern.permute.xlu0 0
        %3604 = vperm.xlu0 %3603, %v3574
        %v3605 = vpop.permute.xlu0 %3604
        %3608 = vset.pattern.permute.xlu0 0
        %3609 = vperm.xlu0 %3608, %v3575
        %v3610 = vpop.permute.xlu0 %3609
        %3613 = vset.pattern.permute.xlu0 0
        %3614 = vperm.xlu0 %3613, %v3576
        %v3615 = vpop.permute.xlu0 %3614
        %v3625 = vunpack.c.l.b16 %v3560
        %v3626 = vunpack.c.l.b16 %v3561
        %v3627 = vunpack.c.l.b16 %v3562
        %v3628 = vunpack.c.l.b16 %v3563
        %v3629 = vunpack.c.l.b16 %v3564
        %v3630 = vunpack.c.l.b16 %v3565
        %v3631 = vunpack.c.l.b16 %v3566
        %v3632 = vunpack.c.l.b16 %v3567
        %v3633 = vpack.c.b16 %v3626, %v3625
        %v3634 = vpack.c.b16 %v3628, %v3627
        %v3635 = vpack.c.b16 %v3630, %v3629
        %v3636 = vpack.c.b16 %v3632, %v3631
        %v3638 = vsel %vm426, %v3633, 0
        %v3641 = vsel %vm426, %v3634, 0
        %v3644 = vsel %vm426, %v3635, 0
        %v3647 = vsel %vm426, %v3636, 0
        %3649 = vmatprep.subr.bf16.mxu0 0
        %3650 = vmatpush1.bf16.msra.mxu0 %v3555
        %3651 = vmatprep.subr.bf16.mxu0 0
        %3652 = vmatpush1.bf16.msra.mxu0 %v3556
        %3653 = vmatprep.subr.bf16.mxu0 0
        %3654 = vmatpush1.bf16.msra.mxu0 %v3557
        %3655 = vmatprep.subr.bf16.mxu0 0
        %3656 = vmatpush1.bf16.msra.mxu0 %v3558
        %3657 = vmatprep.subr.bf16.mxu0 0
        %3658 = vmatpush1.bf16.msra.mxu0 0
        %3659 = vmatprep.subr.bf16.mxu0 0
        %3660 = vmatpush1.bf16.msra.mxu0 0
        %3661 = vmatprep.subr.bf16.mxu0 0
        %3662 = vmatpush1.bf16.msra.mxu0 0
        %3663 = vmatprep.subr.bf16.mxu0 0
        %3664 = vmatpush1.bf16.msra.mxu0 0
        %3665 = vmatprep.subr.bf16.mxu0 0
        %3666 = vmatpush1.bf16.msra.mxu0 0
        %3667 = vmatprep.subr.bf16.mxu0 0
        %3668 = vmatpush1.bf16.msra.mxu0 0
        %3669 = vmatprep.subr.bf16.mxu0 0
        %3670 = vmatpush1.bf16.msra.mxu0 0
        %3671 = vmatprep.subr.bf16.mxu0 0
        %3672 = vmatpush1.bf16.msra.mxu0 0
        %3673 = vmatprep.subr.bf16.mxu0 0
        %3674 = vmatpush1.bf16.msra.mxu0 0
        %3675 = vmatprep.subr.bf16.mxu0 0
        %3676 = vmatpush1.bf16.msra.mxu0 0
        %3677 = vmatprep.subr.bf16.mxu0 0
        %3678 = vmatpush1.bf16.msra.mxu0 0
        %3679 = vmatprep.subr.bf16.mxu0 0
        %3680 = vmatpush1.bf16.msra.mxu0 0
        %3681 = vmatprep.mubr.bf16.mxu0 0
        %3682 = vmatmul.mubr.bf16.gmra.mrb[0].mxu0 %v3638
        %v3683 = vpop.f32.mrb[0].mxu0
        %v3684 = vadd.f32 %v3580, %v3683
        %v3685 = vpop.f32.mrb[0].mxu0
        %v3686 = vpop.f32.mrb[0].mxu0
        %v3687 = vadd.f32 %v3585, %v3686
        %v3688 = vpop.f32.mrb[0].mxu0
        %3689 = vmatprep.mubr.bf16.mxu0 0
        %3690 = vmatmul.mubr.bf16.gmra.mrb[0].mxu0 %v3641
        %v3691 = vpop.f32.mrb[0].mxu0
        %v3692 = vadd.f32 %v3590, %v3691
        %v3693 = vpop.f32.mrb[0].mxu0
        %v3694 = vpop.f32.mrb[0].mxu0
        %v3695 = vadd.f32 %v3595, %v3694
        %v3696 = vpop.f32.mrb[0].mxu0
        %3697 = vmatprep.mubr.bf16.mxu0 0
        %3698 = vmatmul.mubr.bf16.gmra.mrb[0].mxu0 %v3644
        %v3699 = vpop.f32.mrb[0].mxu0
        %v3700 = vadd.f32 %v3600, %v3699
        %v3701 = vpop.f32.mrb[0].mxu0
        %v3702 = vpop.f32.mrb[0].mxu0
        %v3703 = vadd.f32 %v3605, %v3702
        %v3704 = vpop.f32.mrb[0].mxu0
        %3705 = vmatprep.mubr.bf16.mxu0 0
        %3706 = vmatmul.mubr.bf16.gmra.mrb[0].mxu0 %v3647
        %v3707 = vpop.f32.mrb[0].mxu0
        %v3708 = vadd.f32 %v3610, %v3707
        %v3709 = vpop.f32.mrb[0].mxu0
        %v3710 = vpop.f32.mrb[0].mxu0
        %v3711 = vadd.f32 %v3615, %v3710
        %v3712 = vpop.f32.mrb[0].mxu0
        %3713 = vdwg.mxu0
        %v3714 = vmax.f32 %v3684, 0.0
        %v3715 = vmax.f32 %v3687, 0.0
        %v3716 = vmax.f32 %v3692, 0.0
        %v3717 = vmax.f32 %v3695, 0.0
        %v3718 = vmax.f32 %v3700, 0.0
        %v3719 = vmax.f32 %v3703, 0.0
        %v3720 = vmax.f32 %v3708, 0.0
        %v3721 = vmax.f32 %v3711, 0.0
        %v3722 = vadd.f32 %v2956, %v3714
        %v3723 = vadd.f32 %v2957, %v3715
        %v3724 = vadd.f32 %v2958, %v3716
        %v3725 = vadd.f32 %v2959, %v3717
        %v3726 = vadd.f32 %v2960, %v3718
        %v3727 = vadd.f32 %v2961, %v3719
        %v3728 = vadd.f32 %v2962, %v3720
        %v3729 = vadd.f32 %v2963, %v3721
        %3730 = vst [vmem:[%s328 + $0xc0] sm:$0xff] %v3722
        %3731 = vst [vmem:[%s328 + $0xc8] sm:$0xff] %v3723
        %3732 = vst [vmem:[%s328 + $0xd0] sm:$0xff] %v3724
        %3733 = vst [vmem:[%s328 + $0xd8] sm:$0xff] %v3725
        %3734 = vst [vmem:[%s328 + $0xe0] sm:$0xff] %v3726
        %3735 = vst [vmem:[%s328 + $0xe8] sm:$0xff] %v3727
        %3736 = vst [vmem:[%s328 + $0xf0] sm:$0xff] %v3728
        %3737 = vst [vmem:[%s328 + $0xf8] sm:$0xff] %v3729
        %s3738 = scalar_lea.vmem %s334, 64
        %v3739 = vld [vmem:[%s3738] sm:$0xff]
        %v3740 = vld [vmem:[%s3738 + $0x8] sm:$0xff]
        %v3741 = vld [vmem:[%s3738 + $0x10] sm:$0xff]
        %v3742 = vld [vmem:[%s3738 + $0x18] sm:$0xff]
        %v3743 = vld [vmem:[%s3738 + $0x20] sm:$0xff]
        %v3744 = vld [vmem:[%s3738 + $0x28] sm:$0xff]
        %v3745 = vld [vmem:[%s3738 + $0x30] sm:$0xff]
        %v3746 = vld [vmem:[%s3738 + $0x38] sm:$0xff]
        %v3747 = vld [vmem:[%s1] sm:$0xf]
        %v3748 = vld [vmem:[%s1 + $0x4] sm:$0xf]
        %v3749 = vld [vmem:[%s1 + $0x8] sm:$0xf]
        %v3750 = vld [vmem:[%s1 + $0xc] sm:$0xf]
        %v3751 = vld [vmem:[%s1 + $0x10] sm:$0xf]
        %v3752 = vld [vmem:[%s1 + $0x14] sm:$0xf]
        %v3753 = vld [vmem:[%s1 + $0x18] sm:$0xf]
        %v3754 = vld [vmem:[%s1 + $0x1c] sm:$0xf]
        %v3755 = vpack.c.bf16 %v3740, %v3739
        %v3756 = vpack.c.bf16 %v3742, %v3741
        %v3757 = vpack.c.bf16 %v3744, %v3743
        %v3758 = vpack.c.bf16 %v3746, %v3745
        %v3759 = vld [vmem:[%s2] sm:$0xff]
        %v3760 = vld [vmem:[%s2 + $0x8] sm:$0xff]
        %v3761 = vld [vmem:[%s2 + $0x10] sm:$0xff]
        %v3762 = vld [vmem:[%s2 + $0x18] sm:$0xff]
        %v3763 = vld [vmem:[%s2 + $0x20] sm:$0xff]
        %v3764 = vld [vmem:[%s2 + $0x28] sm:$0xff]
        %v3765 = vld [vmem:[%s2 + $0x30] sm:$0xff]
        %v3766 = vld [vmem:[%s2 + $0x38] sm:$0xff]
        %3768 = vset.pattern.permute.xlu0 0
        %3769 = vperm.xlu0 %3768, %v3759
        %v3770 = vpop.permute.xlu0 %3769
        %3773 = vset.pattern.permute.xlu0 0
        %3774 = vperm.xlu0 %3773, %v3760
        %v3775 = vpop.permute.xlu0 %3774
        %3778 = vset.pattern.permute.xlu0 0
        %3779 = vperm.xlu0 %3778, %v3761
        %v3780 = vpop.permute.xlu0 %3779
        %3783 = vset.pattern.permute.xlu0 0
        %3784 = vperm.xlu0 %3783, %v3762
        %v3785 = vpop.permute.xlu0 %3784
        %3788 = vset.pattern.permute.xlu0 0
        %3789 = vperm.xlu0 %3788, %v3763
        %v3790 = vpop.permute.xlu0 %3789
        %3793 = vset.pattern.permute.xlu0 0
        %3794 = vperm.xlu0 %3793, %v3764
        %v3795 = vpop.permute.xlu0 %3794
        %3798 = vset.pattern.permute.xlu0 0
        %3799 = vperm.xlu0 %3798, %v3765
        %v3800 = vpop.permute.xlu0 %3799
        %3803 = vset.pattern.permute.xlu0 0
        %3804 = vperm.xlu0 %3803, %v3766
        %v3805 = vpop.permute.xlu0 %3804
        %v3815 = vunpack.c.l.b16 %v3747
        %v3816 = vunpack.c.l.b16 %v3748
        %v3817 = vunpack.c.l.b16 %v3749
        %v3818 = vunpack.c.l.b16 %v3750
        %v3819 = vunpack.c.l.b16 %v3751
        %v3820 = vunpack.c.l.b16 %v3752
        %v3821 = vunpack.c.l.b16 %v3753
        %v3822 = vunpack.c.l.b16 %v3754
        %v3823 = vpack.c.b16 %v3816, %v3815
        %v3824 = vpack.c.b16 %v3818, %v3817
        %v3825 = vpack.c.b16 %v3820, %v3819
        %v3826 = vpack.c.b16 %v3822, %v3821
        %v3828 = vsel %vm426, %v3823, 0
        %v3831 = vsel %vm426, %v3824, 0
        %v3834 = vsel %vm426, %v3825, 0
        %v3837 = vsel %vm426, %v3826, 0
        %3839 = vmatprep.subr.bf16.mxu0 0
        %3840 = vmatpush1.bf16.msra.mxu0 %v3755
        %3841 = vmatprep.subr.bf16.mxu0 0
        %3842 = vmatpush1.bf16.msra.mxu0 %v3756
        %3843 = vmatprep.subr.bf16.mxu0 0
        %3844 = vmatpush1.bf16.msra.mxu0 %v3757
        %3845 = vmatprep.subr.bf16.mxu0 0
        %3846 = vmatpush1.bf16.msra.mxu0 %v3758
        %3847 = vmatprep.subr.bf16.mxu0 0
        %3848 = vmatpush1.bf16.msra.mxu0 0
        %3849 = vmatprep.subr.bf16.mxu0 0
        %3850 = vmatpush1.bf16.msra.mxu0 0
        %3851 = vmatprep.subr.bf16.mxu0 0
        %3852 = vmatpush1.bf16.msra.mxu0 0
        %3853 = vmatprep.subr.bf16.mxu0 0
        %3854 = vmatpush1.bf16.msra.mxu0 0
        %3855 = vmatprep.subr.bf16.mxu0 0
        %3856 = vmatpush1.bf16.msra.mxu0 0
        %3857 = vmatprep.subr.bf16.mxu0 0
        %3858 = vmatpush1.bf16.msra.mxu0 0
        %3859 = vmatprep.subr.bf16.mxu0 0
        %3860 = vmatpush1.bf16.msra.mxu0 0
        %3861 = vmatprep.subr.bf16.mxu0 0
        %3862 = vmatpush1.bf16.msra.mxu0 0
        %3863 = vmatprep.subr.bf16.mxu0 0
        %3864 = vmatpush1.bf16.msra.mxu0 0
        %3865 = vmatprep.subr.bf16.mxu0 0
        %3866 = vmatpush1.bf16.msra.mxu0 0
        %3867 = vmatprep.subr.bf16.mxu0 0
        %3868 = vmatpush1.bf16.msra.mxu0 0
        %3869 = vmatprep.subr.bf16.mxu0 0
        %3870 = vmatpush1.bf16.msra.mxu0 0
        %3871 = vmatprep.mubr.bf16.mxu0 0
        %3872 = vmatmul.mubr.bf16.gmra.mrb[0].mxu0 %v3828
        %v3873 = vpop.f32.mrb[0].mxu0
        %v3874 = vadd.f32 %v3770, %v3873
        %v3875 = vpop.f32.mrb[0].mxu0
        %v3876 = vpop.f32.mrb[0].mxu0
        %v3877 = vadd.f32 %v3775, %v3876
        %v3878 = vpop.f32.mrb[0].mxu0
        %3879 = vmatprep.mubr.bf16.mxu0 0
        %3880 = vmatmul.mubr.bf16.gmra.mrb[0].mxu0 %v3831
        %v3881 = vpop.f32.mrb[0].mxu0
        %v3882 = vadd.f32 %v3780, %v3881
        %v3883 = vpop.f32.mrb[0].mxu0
        %v3884 = vpop.f32.mrb[0].mxu0
        %v3885 = vadd.f32 %v3785, %v3884
        %v3886 = vpop.f32.mrb[0].mxu0
        %3887 = vmatprep.mubr.bf16.mxu0 0
        %3888 = vmatmul.mubr.bf16.gmra.mrb[0].mxu0 %v3834
        %v3889 = vpop.f32.mrb[0].mxu0
        %v3890 = vadd.f32 %v3790, %v3889
        %v3891 = vpop.f32.mrb[0].mxu0
        %v3892 = vpop.f32.mrb[0].mxu0
        %v3893 = vadd.f32 %v3795, %v3892
        %v3894 = vpop.f32.mrb[0].mxu0
        %3895 = vmatprep.mubr.bf16.mxu0 0
        %3896 = vmatmul.mubr.bf16.gmra.mrb[0].mxu0 %v3837
        %v3897 = vpop.f32.mrb[0].mxu0
        %v3898 = vadd.f32 %v3800, %v3897
        %v3899 = vpop.f32.mrb[0].mxu0
        %v3900 = vpop.f32.mrb[0].mxu0
        %v3901 = vadd.f32 %v3805, %v3900
        %v3902 = vpop.f32.mrb[0].mxu0
        %3903 = vdwg.mxu0
        %v3904 = vmax.f32 %v3874, 0.0
        %v3905 = vmax.f32 %v3877, 0.0
        %v3906 = vmax.f32 %v3882, 0.0
        %v3907 = vmax.f32 %v3885, 0.0
        %v3908 = vmax.f32 %v3890, 0.0
        %v3909 = vmax.f32 %v3893, 0.0
        %v3910 = vmax.f32 %v3898, 0.0
        %v3911 = vmax.f32 %v3901, 0.0
        %v3912 = vld [vmem:[%s3] sm:$0xf]
        %v3913 = vld [vmem:[%s3 + $0x4] sm:$0xf]
        %v3914 = vld [vmem:[%s3 + $0x8] sm:$0xf]
        %v3915 = vld [vmem:[%s3 + $0xc] sm:$0xf]
        %v3916 = vld [vmem:[%s3 + $0x10] sm:$0xf]
        %v3917 = vld [vmem:[%s3 + $0x14] sm:$0xf]
        %v3918 = vld [vmem:[%s3 + $0x18] sm:$0xf]
        %v3919 = vld [vmem:[%s3 + $0x1c] sm:$0xf]
        %v3920 = vpack.c.bf16 %v3905, %v3904
        %v3921 = vpack.c.bf16 %v3907, %v3906
        %v3922 = vpack.c.bf16 %v3909, %v3908
        %v3923 = vpack.c.bf16 %v3911, %v3910
        %v3924 = vld [vmem:[%s4] sm:$0xff]
        %v3925 = vld [vmem:[%s4 + $0x8] sm:$0xff]
        %v3926 = vld [vmem:[%s4 + $0x10] sm:$0xff]
        %v3927 = vld [vmem:[%s4 + $0x18] sm:$0xff]
        %v3928 = vld [vmem:[%s4 + $0x20] sm:$0xff]
        %v3929 = vld [vmem:[%s4 + $0x28] sm:$0xff]
        %v3930 = vld [vmem:[%s4 + $0x30] sm:$0xff]
        %v3931 = vld [vmem:[%s4 + $0x38] sm:$0xff]
        %3933 = vset.pattern.permute.xlu0 0
        %3934 = vperm.xlu0 %3933, %v3924
        %v3935 = vpop.permute.xlu0 %3934
        %3938 = vset.pattern.permute.xlu0 0
        %3939 = vperm.xlu0 %3938, %v3925
        %v3940 = vpop.permute.xlu0 %3939
        %3943 = vset.pattern.permute.xlu0 0
        %3944 = vperm.xlu0 %3943, %v3926
        %v3945 = vpop.permute.xlu0 %3944
        %3948 = vset.pattern.permute.xlu0 0
        %3949 = vperm.xlu0 %3948, %v3927
        %v3950 = vpop.permute.xlu0 %3949
        %3953 = vset.pattern.permute.xlu0 0
        %3954 = vperm.xlu0 %3953, %v3928
        %v3955 = vpop.permute.xlu0 %3954
        %3958 = vset.pattern.permute.xlu0 0
        %3959 = vperm.xlu0 %3958, %v3929
        %v3960 = vpop.permute.xlu0 %3959
        %3963 = vset.pattern.permute.xlu0 0
        %3964 = vperm.xlu0 %3963, %v3930
        %v3965 = vpop.permute.xlu0 %3964
        %3968 = vset.pattern.permute.xlu0 0
        %3969 = vperm.xlu0 %3968, %v3931
        %v3970 = vpop.permute.xlu0 %3969
        %v3980 = vunpack.c.l.b16 %v3912
        %v3981 = vunpack.c.l.b16 %v3913
        %v3982 = vunpack.c.l.b16 %v3914
        %v3983 = vunpack.c.l.b16 %v3915
        %v3984 = vunpack.c.l.b16 %v3916
        %v3985 = vunpack.c.l.b16 %v3917
        %v3986 = vunpack.c.l.b16 %v3918
        %v3987 = vunpack.c.l.b16 %v3919
        %v3988 = vpack.c.b16 %v3981, %v3980
        %v3989 = vpack.c.b16 %v3983, %v3982
        %v3990 = vpack.c.b16 %v3985, %v3984
        %v3991 = vpack.c.b16 %v3987, %v3986
        %v3993 = vsel %vm426, %v3988, 0
        %v3996 = vsel %vm426, %v3989, 0
        %v3999 = vsel %vm426, %v3990, 0
        %v4002 = vsel %vm426, %v3991, 0
        %4004 = vmatprep.subr.bf16.mxu0 0
        %4005 = vmatpush1.bf16.msra.mxu0 %v3920
        %4006 = vmatprep.subr.bf16.mxu0 0
        %4007 = vmatpush1.bf16.msra.mxu0 %v3921
        %4008 = vmatprep.subr.bf16.mxu0 0
        %4009 = vmatpush1.bf16.msra.mxu0 %v3922
        %4010 = vmatprep.subr.bf16.mxu0 0
        %4011 = vmatpush1.bf16.msra.mxu0 %v3923
        %4012 = vmatprep.subr.bf16.mxu0 0
        %4013 = vmatpush1.bf16.msra.mxu0 0
        %4014 = vmatprep.subr.bf16.mxu0 0
        %4015 = vmatpush1.bf16.msra.mxu0 0
        %4016 = vmatprep.subr.bf16.mxu0 0
        %4017 = vmatpush1.bf16.msra.mxu0 0
        %4018 = vmatprep.subr.bf16.mxu0 0
        %4019 = vmatpush1.bf16.msra.mxu0 0
        %4020 = vmatprep.subr.bf16.mxu0 0
        %4021 = vmatpush1.bf16.msra.mxu0 0
        %4022 = vmatprep.subr.bf16.mxu0 0
        %4023 = vmatpush1.bf16.msra.mxu0 0
        %4024 = vmatprep.subr.bf16.mxu0 0
        %4025 = vmatpush1.bf16.msra.mxu0 0
        %4026 = vmatprep.subr.bf16.mxu0 0
        %4027 = vmatpush1.bf16.msra.mxu0 0
        %4028 = vmatprep.subr.bf16.mxu0 0
        %4029 = vmatpush1.bf16.msra.mxu0 0
        %4030 = vmatprep.subr.bf16.mxu0 0
        %4031 = vmatpush1.bf16.msra.mxu0 0
        %4032 = vmatprep.subr.bf16.mxu0 0
        %4033 = vmatpush1.bf16.msra.mxu0 0
        %4034 = vmatprep.subr.bf16.mxu0 0
        %4035 = vmatpush1.bf16.msra.mxu0 0
        %4036 = vmatprep.mubr.bf16.mxu0 0
        %4037 = vmatmul.mubr.bf16.gmra.mrb[0].mxu0 %v3993
        %v4038 = vpop.f32.mrb[0].mxu0
        %v4039 = vadd.f32 %v3935, %v4038
        %v4040 = vpop.f32.mrb[0].mxu0
        %v4041 = vpop.f32.mrb[0].mxu0
        %v4042 = vadd.f32 %v3940, %v4041
        %v4043 = vpop.f32.mrb[0].mxu0
        %4044 = vmatprep.mubr.bf16.mxu0 0
        %4045 = vmatmul.mubr.bf16.gmra.mrb[0].mxu0 %v3996
        %v4046 = vpop.f32.mrb[0].mxu0
        %v4047 = vadd.f32 %v3945, %v4046
        %v4048 = vpop.f32.mrb[0].mxu0
        %v4049 = vpop.f32.mrb[0].mxu0
        %v4050 = vadd.f32 %v3950, %v4049
        %v4051 = vpop.f32.mrb[0].mxu0
        %4052 = vmatprep.mubr.bf16.mxu0 0
        %4053 = vmatmul.mubr.bf16.gmra.mrb[0].mxu0 %v3999
        %v4054 = vpop.f32.mrb[0].mxu0
        %v4055 = vadd.f32 %v3955, %v4054
        %v4056 = vpop.f32.mrb[0].mxu0
        %v4057 = vpop.f32.mrb[0].mxu0
        %v4058 = vadd.f32 %v3960, %v4057
        %v4059 = vpop.f32.mrb[0].mxu0
        %4060 = vmatprep.mubr.bf16.mxu0 0
        %4061 = vmatmul.mubr.bf16.gmra.mrb[0].mxu0 %v4002
        %v4062 = vpop.f32.mrb[0].mxu0
        %v4063 = vadd.f32 %v3965, %v4062
        %v4064 = vpop.f32.mrb[0].mxu0
        %v4065 = vpop.f32.mrb[0].mxu0
        %v4066 = vadd.f32 %v3970, %v4065
        %v4067 = vpop.f32.mrb[0].mxu0
        %4068 = vdwg.mxu0
        %v4069 = vmax.f32 %v4039, 0.0
        %v4070 = vmax.f32 %v4042, 0.0
        %v4071 = vmax.f32 %v4047, 0.0
        %v4072 = vmax.f32 %v4050, 0.0
        %v4073 = vmax.f32 %v4055, 0.0
        %v4074 = vmax.f32 %v4058, 0.0
        %v4075 = vmax.f32 %v4063, 0.0
        %v4076 = vmax.f32 %v4066, 0.0
        %v4077 = vpack.c.bf16 %v4070, %v4069
        %v4078 = vpack.c.bf16 %v4072, %v4071
        %v4079 = vpack.c.bf16 %v4074, %v4073
        %v4080 = vpack.c.bf16 %v4076, %v4075
        %v4081 = vld [vmem:[%s5] sm:$0xf]
        %v4082 = vld [vmem:[%s5 + $0x4] sm:$0xf]
        %v4083 = vld [vmem:[%s5 + $0x8] sm:$0xf]
        %v4084 = vld [vmem:[%s5 + $0xc] sm:$0xf]
        %v4085 = vld [vmem:[%s5 + $0x10] sm:$0xf]
        %v4086 = vld [vmem:[%s5 + $0x14] sm:$0xf]
        %v4087 = vld [vmem:[%s5 + $0x18] sm:$0xf]
        %v4088 = vld [vmem:[%s5 + $0x1c] sm:$0xf]
        %v4089 = vld [vmem:[%s5 + $0x20] sm:$0xf]
        %v4090 = vld [vmem:[%s5 + $0x24] sm:$0xf]
        %v4101 = vunpack.c.l.b16 %v4081
        %v4102 = vunpack.c.l.b16 %v4082
        %v4103 = vunpack.c.l.b16 %v4083
        %v4104 = vunpack.c.l.b16 %v4084
        %v4105 = vunpack.c.l.b16 %v4085
        %v4106 = vunpack.c.l.b16 %v4086
        %v4107 = vunpack.c.l.b16 %v4087
        %v4108 = vunpack.c.l.b16 %v4088
        %v4109 = vunpack.c.l.b16 %v4089
        %v4110 = vunpack.c.l.b16 %v4090
        %v4111 = vpack.c.b16 %v4102, %v4101
        %v4112 = vpack.c.b16 %v4104, %v4103
        %v4113 = vpack.c.b16 %v4106, %v4105
        %v4114 = vpack.c.b16 %v4108, %v4107
        %v4115 = vpack.c.b16 %v4110, %v4109
        %v4117 = vsel %vm426, %v4111, 0
        %v4120 = vsel %vm426, %v4112, 0
        %v4123 = vsel %vm426, %v4113, 0
        %v4126 = vsel %vm426, %v4114, 0
        %v4129 = vsel %vm426, %v4115, 0
        %4131 = vmatprep.subr.bf16.mxu0 0
        %4132 = vmatpush1.bf16.msra.mxu0 %v4077
        %4133 = vmatprep.subr.bf16.mxu0 0
        %4134 = vmatpush1.bf16.msra.mxu0 %v4078
        %4135 = vmatprep.subr.bf16.mxu0 0
        %4136 = vmatpush1.bf16.msra.mxu0 %v4079
        %4137 = vmatprep.subr.bf16.mxu0 0
        %4138 = vmatpush1.bf16.msra.mxu0 %v4080
        %4139 = vmatprep.subr.bf16.mxu0 0
        %4140 = vmatpush1.bf16.msra.mxu0 0
        %4141 = vmatprep.subr.bf16.mxu0 0
        %4142 = vmatpush1.bf16.msra.mxu0 0
        %4143 = vmatprep.subr.bf16.mxu0 0
        %4144 = vmatpush1.bf16.msra.mxu0 0
        %4145 = vmatprep.subr.bf16.mxu0 0
        %4146 = vmatpush1.bf16.msra.mxu0 0
        %4147 = vmatprep.subr.bf16.mxu0 0
        %4148 = vmatpush1.bf16.msra.mxu0 0
        %4149 = vmatprep.subr.bf16.mxu0 0
        %4150 = vmatpush1.bf16.msra.mxu0 0
        %4151 = vmatprep.subr.bf16.mxu0 0
        %4152 = vmatpush1.bf16.msra.mxu0 0
        %4153 = vmatprep.subr.bf16.mxu0 0
        %4154 = vmatpush1.bf16.msra.mxu0 0
        %4155 = vmatprep.subr.bf16.mxu0 0
        %4156 = vmatpush1.bf16.msra.mxu0 0
        %4157 = vmatprep.subr.bf16.mxu0 0
        %4158 = vmatpush1.bf16.msra.mxu0 0
        %4159 = vmatprep.subr.bf16.mxu0 0
        %4160 = vmatpush1.bf16.msra.mxu0 0
        %4161 = vmatprep.subr.bf16.mxu0 0
        %4162 = vmatpush1.bf16.msra.mxu0 0
        %4163 = vmatprep.mubr.bf16.mxu0 0
        %4164 = vmatmul.mubr.bf16.gmra.mrb[0].mxu0 %v4117
        %v4165 = vpop.f32.mrb[0].mxu0
        %v4166 = vadd.f32 0.0, %v4165
        %v4167 = vpop.f32.mrb[0].mxu0
        %v4168 = vpop.f32.mrb[0].mxu0
        %v4169 = vadd.f32 0.0, %v4168
        %v4170 = vpop.f32.mrb[0].mxu0
        %4171 = vmatprep.mubr.bf16.mxu0 0
        %4172 = vmatmul.mubr.bf16.gmra.mrb[0].mxu0 %v4120
        %v4173 = vpop.f32.mrb[0].mxu0
        %v4174 = vadd.f32 0.0, %v4173
        %v4175 = vpop.f32.mrb[0].mxu0
        %v4176 = vpop.f32.mrb[0].mxu0
        %v4177 = vadd.f32 0.0, %v4176
        %v4178 = vpop.f32.mrb[0].mxu0
        %4179 = vmatprep.mubr.bf16.mxu0 0
        %4180 = vmatmul.mubr.bf16.gmra.mrb[0].mxu0 %v4123
        %v4181 = vpop.f32.mrb[0].mxu0
        %v4182 = vadd.f32 0.0, %v4181
        %v4183 = vpop.f32.mrb[0].mxu0
        %v4184 = vpop.f32.mrb[0].mxu0
        %v4185 = vadd.f32 0.0, %v4184
        %v4186 = vpop.f32.mrb[0].mxu0
        %4187 = vmatprep.mubr.bf16.mxu0 0
        %4188 = vmatmul.mubr.bf16.gmra.mrb[0].mxu0 %v4126
        %v4189 = vpop.f32.mrb[0].mxu0
        %v4190 = vadd.f32 0.0, %v4189
        %v4191 = vpop.f32.mrb[0].mxu0
        %v4192 = vpop.f32.mrb[0].mxu0
        %v4193 = vadd.f32 0.0, %v4192
        %v4194 = vpop.f32.mrb[0].mxu0
        %4195 = vmatprep.mubr.bf16.mxu0 0
        %4196 = vmatmul.mubr.bf16.gmra.mrb[0].mxu0 %v4129
        %v4197 = vpop.f32.mrb[0].mxu0
        %v4198 = vadd.f32 0.0, %v4197
        %v4199 = vpop.f32.mrb[0].mxu0
        %v4200 = vpop.f32.mrb[0].mxu0
        %v4201 = vadd.f32 0.0, %v4200
        %v4202 = vpop.f32.mrb[0].mxu0
        %4203 = vdwg.mxu0
        %v4204 = vld [vmem:[%s6] sm:$0xff]
        %v4205 = vld [vmem:[%s6 + $0x8] sm:$0xff]
        %v4206 = vld [vmem:[%s6 + $0x10] sm:$0xff]
        %v4207 = vld [vmem:[%s6 + $0x18] sm:$0xff]
        %v4208 = vld [vmem:[%s6 + $0x20] sm:$0xff]
        %v4209 = vld [vmem:[%s6 + $0x28] sm:$0xff]
        %v4210 = vld [vmem:[%s6 + $0x30] sm:$0xff]
        %v4211 = vld [vmem:[%s6 + $0x38] sm:$0xff]
        %4213 = vset.pattern.permute.xlu0 0
        %4214 = vperm.xlu0 %4213, %v4204
        %v4215 = vpop.permute.xlu0 %4214
        %4218 = vset.pattern.permute.xlu0 0
        %4219 = vperm.xlu0 %4218, %v4205
        %v4220 = vpop.permute.xlu0 %4219
        %4223 = vset.pattern.permute.xlu0 0
        %4224 = vperm.xlu0 %4223, %v4206
        %v4225 = vpop.permute.xlu0 %4224
        %4228 = vset.pattern.permute.xlu0 0
        %4229 = vperm.xlu0 %4228, %v4207
        %v4230 = vpop.permute.xlu0 %4229
        %4233 = vset.pattern.permute.xlu0 0
        %4234 = vperm.xlu0 %4233, %v4208
        %v4235 = vpop.permute.xlu0 %4234
        %4238 = vset.pattern.permute.xlu0 0
        %4239 = vperm.xlu0 %4238, %v4209
        %v4240 = vpop.permute.xlu0 %4239
        %4243 = vset.pattern.permute.xlu0 0
        %4244 = vperm.xlu0 %4243, %v4210
        %v4245 = vpop.permute.xlu0 %4244
        %4248 = vset.pattern.permute.xlu0 0
        %4249 = vperm.xlu0 %4248, %v4211
        %v4250 = vpop.permute.xlu0 %4249
        %v4252 = vadd.f32 %v4174, %v4215
        %v4253 = vadd.f32 %v4177, %v4220
        %v4254 = vadd.f32 %v4182, %v4225
        %v4255 = vadd.f32 %v4185, %v4230
        %v4256 = vadd.f32 %v4190, %v4235
        %v4257 = vadd.f32 %v4193, %v4240
        %v4258 = vadd.f32 %v4198, %v4245
        %v4259 = vadd.f32 %v4201, %v4250
        %v4260 = vpack.c.bf16 %v4169, %v4166
        %4261 = vxpose.xlu0.c.b16.start [1/8] %v4260, 128
        %4262 = vxpose.xlu0.c.b16.cont [2/8] 0, 128
        %4263 = vxpose.xlu0.c.b16.cont [3/8] 0, 128
        %4264 = vxpose.xlu0.c.b16.cont [4/8] 0, 128
        %4265 = vxpose.xlu0.c.b16.cont [5/8] 0, 128
        %4266 = vxpose.xlu0.c.b16.cont [6/8] 0, 128
        %4267 = vxpose.xlu0.c.b16.cont [7/8] 0, 128
        %4268 = vxpose.xlu0.c.b16.end [8/8] 0, 128
        %v4269 = vpop.trf.xlu0
        %v4270 = vpop.trf.xlu0
        %v4271 = vpop.trf.xlu0
        %v4272 = vpop.trf.xlu0
        %v4273 = vpop.trf.xlu0
        %v4274 = vpop.trf.xlu0
        %v4275 = vpop.trf.xlu0
        %v4276 = vpop.trf.xlu0
        %v4278 = vsel %vm877, %v4269, 0
        %v4281 = vsel %vm877, %v4270, 0
        %v4284 = vsel %vm877, %v4271, 0
        %v4287 = vsel %vm877, %v4272, 0
        %v4290 = vsel %vm877, %v4273, 0
        %v4293 = vsel %vm877, %v4274, 0
        %v4296 = vsel %vm877, %v4275, 0
        %v4299 = vsel %vm877, %v4276, 0
        %4301 = vmatprep.subr.bf16.mxu0 0
        %4302 = vmatpush1.bf16.msra.mxu0 %v4260
        %4303 = vmatprep.subr.bf16.mxu0 0
        %4304 = vmatpush1.bf16.msra.mxu0 0
        %4305 = vmatprep.subr.bf16.mxu0 0
        %4306 = vmatpush1.bf16.msra.mxu0 0
        %4307 = vmatprep.subr.bf16.mxu0 0
        %4308 = vmatpush1.bf16.msra.mxu0 0
        %4309 = vmatprep.subr.bf16.mxu0 0
        %4310 = vmatpush1.bf16.msra.mxu0 0
        %4311 = vmatprep.subr.bf16.mxu0 0
        %4312 = vmatpush1.bf16.msra.mxu0 0
        %4313 = vmatprep.subr.bf16.mxu0 0
        %4314 = vmatpush1.bf16.msra.mxu0 0
        %4315 = vmatprep.subr.bf16.mxu0 0
        %4316 = vmatpush1.bf16.msra.mxu0 0
        %4317 = vmatprep.subr.bf16.mxu0 0
        %4318 = vmatpush1.bf16.msra.mxu0 0
        %4319 = vmatprep.subr.bf16.mxu0 0
        %4320 = vmatpush1.bf16.msra.mxu0 0
        %4321 = vmatprep.subr.bf16.mxu0 0
        %4322 = vmatpush1.bf16.msra.mxu0 0
        %4323 = vmatprep.subr.bf16.mxu0 0
        %4324 = vmatpush1.bf16.msra.mxu0 0
        %4325 = vmatprep.subr.bf16.mxu0 0
        %4326 = vmatpush1.bf16.msra.mxu0 0
        %4327 = vmatprep.subr.bf16.mxu0 0
        %4328 = vmatpush1.bf16.msra.mxu0 0
        %4329 = vmatprep.subr.bf16.mxu0 0
        %4330 = vmatpush1.bf16.msra.mxu0 0
        %4331 = vmatprep.subr.bf16.mxu0 0
        %4332 = vmatpush1.bf16.msra.mxu0 0
        %4333 = vmatprep.mubr.bf16.mxu0 0
        %4334 = vmatmul.mubr.bf16.gmra.mrb[0].mxu0 %v4278
        %v4335 = vpop.f32.mrb[0].mxu0
        %v4336 = vadd.f32 0.0, %v4335
        %v4337 = vpop.f32.mrb[0].mxu0
        %v4338 = vpop.f32.mrb[0].mxu0
        %v4339 = vadd.f32 0.0, %v4338
        %v4340 = vpop.f32.mrb[0].mxu0
        %4341 = vmatprep.mubr.bf16.mxu0 0
        %4342 = vmatmul.mubr.bf16.gmra.mrb[0].mxu0 %v4281
        %v4343 = vpop.f32.mrb[0].mxu0
        %v4344 = vadd.f32 0.0, %v4343
        %v4345 = vpop.f32.mrb[0].mxu0
        %v4346 = vpop.f32.mrb[0].mxu0
        %v4347 = vadd.f32 0.0, %v4346
        %v4348 = vpop.f32.mrb[0].mxu0
        %4349 = vmatprep.mubr.bf16.mxu0 0
        %4350 = vmatmul.mubr.bf16.gmra.mrb[0].mxu0 %v4284
        %v4351 = vpop.f32.mrb[0].mxu0
        %v4352 = vadd.f32 0.0, %v4351
        %v4353 = vpop.f32.mrb[0].mxu0
        %v4354 = vpop.f32.mrb[0].mxu0
        %v4355 = vadd.f32 0.0, %v4354
        %v4356 = vpop.f32.mrb[0].mxu0
        %4357 = vmatprep.mubr.bf16.mxu0 0
        %4358 = vmatmul.mubr.bf16.gmra.mrb[0].mxu0 %v4287
        %v4359 = vpop.f32.mrb[0].mxu0
        %v4360 = vadd.f32 0.0, %v4359
        %v4361 = vpop.f32.mrb[0].mxu0
        %v4362 = vpop.f32.mrb[0].mxu0
        %v4363 = vadd.f32 0.0, %v4362
        %v4364 = vpop.f32.mrb[0].mxu0
        %4365 = vmatprep.mubr.bf16.mxu0 0
        %4366 = vmatmul.mubr.bf16.gmra.mrb[0].mxu0 %v4290
        %v4367 = vpop.f32.mrb[0].mxu0
        %v4368 = vadd.f32 0.0, %v4367
        %v4369 = vpop.f32.mrb[0].mxu0
        %v4370 = vpop.f32.mrb[0].mxu0
        %v4371 = vadd.f32 0.0, %v4370
        %v4372 = vpop.f32.mrb[0].mxu0
        %4373 = vmatprep.mubr.bf16.mxu0 0
        %4374 = vmatmul.mubr.bf16.gmra.mrb[0].mxu0 %v4293
        %v4375 = vpop.f32.mrb[0].mxu0
        %v4376 = vadd.f32 0.0, %v4375
        %v4377 = vpop.f32.mrb[0].mxu0
        %v4378 = vpop.f32.mrb[0].mxu0
        %v4379 = vadd.f32 0.0, %v4378
        %v4380 = vpop.f32.mrb[0].mxu0
        %4381 = vmatprep.mubr.bf16.mxu0 0
        %4382 = vmatmul.mubr.bf16.gmra.mrb[0].mxu0 %v4296
        %v4383 = vpop.f32.mrb[0].mxu0
        %v4384 = vadd.f32 0.0, %v4383
        %v4385 = vpop.f32.mrb[0].mxu0
        %v4386 = vpop.f32.mrb[0].mxu0
        %v4387 = vadd.f32 0.0, %v4386
        %v4388 = vpop.f32.mrb[0].mxu0
        %4389 = vmatprep.mubr.bf16.mxu0 0
        %4390 = vmatmul.mubr.bf16.gmra.mrb[0].mxu0 %v4299
        %v4391 = vpop.f32.mrb[0].mxu0
        %v4392 = vadd.f32 0.0, %v4391
        %v4393 = vpop.f32.mrb[0].mxu0
        %v4394 = vpop.f32.mrb[0].mxu0
        %v4395 = vadd.f32 0.0, %v4394
        %v4396 = vpop.f32.mrb[0].mxu0
        %4397 = vdwg.mxu0
        %4398 = vmax.xlane.f32.xlu0 %v4336
        %v4399 = vpop.xlane.xlu0 %4398
        %4400 = vmax.xlane.f32.xlu0 %v4339
        %v4401 = vpop.xlane.xlu0 %4400
        %4402 = vmax.xlane.f32.xlu0 %v4344
        %v4403 = vpop.xlane.xlu0 %4402
        %4404 = vmax.xlane.f32.xlu0 %v4347
        %v4405 = vpop.xlane.xlu0 %4404
        %4406 = vmax.xlane.f32.xlu0 %v4352
        %v4407 = vpop.xlane.xlu0 %4406
        %4408 = vmax.xlane.f32.xlu0 %v4355
        %v4409 = vpop.xlane.xlu0 %4408
        %4410 = vmax.xlane.f32.xlu0 %v4360
        %v4411 = vpop.xlane.xlu0 %4410
        %4412 = vmax.xlane.f32.xlu0 %v4363
        %v4413 = vpop.xlane.xlu0 %4412
        %4414 = vmax.xlane.f32.xlu0 %v4368
        %v4415 = vpop.xlane.xlu0 %4414
        %4416 = vmax.xlane.f32.xlu0 %v4371
        %v4417 = vpop.xlane.xlu0 %4416
        %4418 = vmax.xlane.f32.xlu0 %v4376
        %v4419 = vpop.xlane.xlu0 %4418
        %4420 = vmax.xlane.f32.xlu0 %v4379
        %v4421 = vpop.xlane.xlu0 %4420
        %4422 = vmax.xlane.f32.xlu0 %v4384
        %v4423 = vpop.xlane.xlu0 %4422
        %4424 = vmax.xlane.f32.xlu0 %v4387
        %v4425 = vpop.xlane.xlu0 %4424
        %4426 = vmax.xlane.f32.xlu0 %v4392
        %v4427 = vpop.xlane.xlu0 %4426
        %4428 = vmax.xlane.f32.xlu0 %v4395
        %v4429 = vpop.xlane.xlu0 %4428
        %v4430 = vsub.f32 %v4336, %v4399
        %v4431 = vsub.f32 %v4339, %v4401
        %v4432 = vsub.f32 %v4344, %v4403
        %v4433 = vsub.f32 %v4347, %v4405
        %v4434 = vsub.f32 %v4352, %v4407
        %v4435 = vsub.f32 %v4355, %v4409
        %v4436 = vsub.f32 %v4360, %v4411
        %v4437 = vsub.f32 %v4363, %v4413
        %v4438 = vsub.f32 %v4368, %v4415
        %v4439 = vsub.f32 %v4371, %v4417
        %v4440 = vsub.f32 %v4376, %v4419
        %v4441 = vsub.f32 %v4379, %v4421
        %v4442 = vsub.f32 %v4384, %v4423
        %v4443 = vsub.f32 %v4387, %v4425
        %v4444 = vsub.f32 %v4392, %v4427
        %v4445 = vsub.f32 %v4395, %v4429
        %v4446 = vmul.f32 %v4430, 1.442695
        %v4447 = vpow.pop %v4446
        %v4448 = vmul.f32 %v4431, 1.442695
        %v4449 = vpow.pop %v4448
        %v4450 = vmul.f32 %v4432, 1.442695
        %v4451 = vpow.pop %v4450
        %v4452 = vmul.f32 %v4433, 1.442695
        %v4453 = vpow.pop %v4452
        %v4454 = vmul.f32 %v4434, 1.442695
        %v4455 = vpow.pop %v4454
        %v4456 = vmul.f32 %v4435, 1.442695
        %v4457 = vpow.pop %v4456
        %v4458 = vmul.f32 %v4436, 1.442695
        %v4459 = vpow.pop %v4458
        %v4460 = vmul.f32 %v4437, 1.442695
        %v4461 = vpow.pop %v4460
        %v4462 = vmul.f32 %v4438, 1.442695
        %v4463 = vpow.pop %v4462
        %v4464 = vmul.f32 %v4439, 1.442695
        %v4465 = vpow.pop %v4464
        %v4466 = vmul.f32 %v4440, 1.442695
        %v4467 = vpow.pop %v4466
        %v4468 = vmul.f32 %v4441, 1.442695
        %v4469 = vpow.pop %v4468
        %v4470 = vmul.f32 %v4442, 1.442695
        %v4471 = vpow.pop %v4470
        %v4472 = vmul.f32 %v4443, 1.442695
        %v4473 = vpow.pop %v4472
        %v4474 = vmul.f32 %v4444, 1.442695
        %v4475 = vpow.pop %v4474
        %v4476 = vmul.f32 %v4445, 1.442695
        %v4477 = vpow.pop %v4476
        %4478 = vadd.xlane.f32.xlu0 %v4447
        %v4479 = vpop.xlane.xlu0 %4478
        %4480 = vadd.xlane.f32.xlu0 %v4449
        %v4481 = vpop.xlane.xlu0 %4480
        %4482 = vadd.xlane.f32.xlu0 %v4451
        %v4483 = vpop.xlane.xlu0 %4482
        %4484 = vadd.xlane.f32.xlu0 %v4453
        %v4485 = vpop.xlane.xlu0 %4484
        %4486 = vadd.xlane.f32.xlu0 %v4455
        %v4487 = vpop.xlane.xlu0 %4486
        %4488 = vadd.xlane.f32.xlu0 %v4457
        %v4489 = vpop.xlane.xlu0 %4488
        %4490 = vadd.xlane.f32.xlu0 %v4459
        %v4491 = vpop.xlane.xlu0 %4490
        %4492 = vadd.xlane.f32.xlu0 %v4461
        %v4493 = vpop.xlane.xlu0 %4492
        %4494 = vadd.xlane.f32.xlu0 %v4463
        %v4495 = vpop.xlane.xlu0 %4494
        %4496 = vadd.xlane.f32.xlu0 %v4465
        %v4497 = vpop.xlane.xlu0 %4496
        %4498 = vadd.xlane.f32.xlu0 %v4467
        %v4499 = vpop.xlane.xlu0 %4498
        %4500 = vadd.xlane.f32.xlu0 %v4469
        %v4501 = vpop.xlane.xlu0 %4500
        %4502 = vadd.xlane.f32.xlu0 %v4471
        %v4503 = vpop.xlane.xlu0 %4502
        %4504 = vadd.xlane.f32.xlu0 %v4473
        %v4505 = vpop.xlane.xlu0 %4504
        %4506 = vadd.xlane.f32.xlu0 %v4475
        %v4507 = vpop.xlane.xlu0 %4506
        %4508 = vadd.xlane.f32.xlu0 %v4477
        %v4509 = vpop.xlane.xlu0 %4508
        %v4510 = vrcp.pop %v4479
        %v4511 = vrcp.pop %v4481
        %v4512 = vrcp.pop %v4483
        %v4513 = vrcp.pop %v4485
        %v4514 = vrcp.pop %v4487
        %v4515 = vrcp.pop %v4489
        %v4516 = vrcp.pop %v4491
        %v4517 = vrcp.pop %v4493
        %v4518 = vrcp.pop %v4495
        %v4519 = vrcp.pop %v4497
        %v4520 = vrcp.pop %v4499
        %v4521 = vrcp.pop %v4501
        %v4522 = vrcp.pop %v4503
        %v4523 = vrcp.pop %v4505
        %v4524 = vrcp.pop %v4507
        %v4525 = vrcp.pop %v4509
        %v4526 = vmul.f32 %v4447, %v4510
        %v4527 = vmul.f32 %v4449, %v4511
        %v4528 = vmul.f32 %v4451, %v4512
        %v4529 = vmul.f32 %v4453, %v4513
        %v4530 = vmul.f32 %v4455, %v4514
        %v4531 = vmul.f32 %v4457, %v4515
        %v4532 = vmul.f32 %v4459, %v4516
        %v4533 = vmul.f32 %v4461, %v4517
        %v4534 = vmul.f32 %v4463, %v4518
        %v4535 = vmul.f32 %v4465, %v4519
        %v4536 = vmul.f32 %v4467, %v4520
        %v4537 = vmul.f32 %v4469, %v4521
        %v4538 = vmul.f32 %v4471, %v4522
        %v4539 = vmul.f32 %v4473, %v4523
        %v4540 = vmul.f32 %v4475, %v4524
        %v4541 = vmul.f32 %v4477, %v4525
        %v4542 = vadd.f32 %v4526, %v4527
        %v4543 = vadd.f32 %v4542, %v4528
        %v4544 = vadd.f32 %v4543, %v4529
        %v4545 = vadd.f32 %v4544, %v4530
        %v4546 = vadd.f32 %v4545, %v4531
        %v4547 = vadd.f32 %v4546, %v4532
        %v4548 = vadd.f32 %v4547, %v4533
        %v4549 = vadd.f32 %v4548, %v4534
        %v4550 = vadd.f32 %v4549, %v4535
        %v4551 = vadd.f32 %v4550, %v4536
        %v4552 = vadd.f32 %v4551, %v4537
        %v4553 = vadd.f32 %v4552, %v4538
        %v4554 = vadd.f32 %v4553, %v4539
        %v4555 = vadd.f32 %v4554, %v4540
        %v4556 = vadd.f32 %v4555, %v4541
        %v4557 = vrot.slane %v4556, 4
        %v4558 = vadd.f32 %v4556, %v4557
        %v4559 = vrot.slane %v4558, 2
        %v4560 = vadd.f32 %v4558, %v4559
        %v4561 = vrot.slane %v4560, 1
        %v4562 = vadd.f32 %v4560, %v4561
        %v4563 = vadd.f32 %v4562, 1e-09
        %v4564 = vrcp.pop %v4563
        %v4565 = vpack.c.bf16 %v4253, %v4252
        %v4566 = vpack.c.bf16 %v4255, %v4254
        %v4567 = vpack.c.bf16 %v4257, %v4256
        %v4568 = vpack.c.bf16 %v4259, %v4258
        %v4569 = vpack.c.bf16 %v4527, %v4526
        %v4570 = vpack.c.bf16 %v4529, %v4528
        %v4571 = vpack.c.bf16 %v4531, %v4530
        %v4572 = vpack.c.bf16 %v4533, %v4532
        %v4573 = vpack.c.bf16 %v4535, %v4534
        %v4574 = vpack.c.bf16 %v4537, %v4536
        %v4575 = vpack.c.bf16 %v4539, %v4538
        %v4576 = vpack.c.bf16 %v4541, %v4540
        %4577 = vmatprep.subr.bf16.mxu0 0
        %4578 = vmatpush1.bf16.msra.mxu0 %v4569
        %4579 = vmatprep.subr.bf16.mxu0 0
        %4580 = vmatpush1.bf16.msra.mxu0 %v4570
        %4581 = vmatprep.subr.bf16.mxu0 0
        %4582 = vmatpush1.bf16.msra.mxu0 %v4571
        %4583 = vmatprep.subr.bf16.mxu0 0
        %4584 = vmatpush1.bf16.msra.mxu0 %v4572
        %4585 = vmatprep.subr.bf16.mxu0 0
        %4586 = vmatpush1.bf16.msra.mxu0 %v4573
        %4587 = vmatprep.subr.bf16.mxu0 0
        %4588 = vmatpush1.bf16.msra.mxu0 %v4574
        %4589 = vmatprep.subr.bf16.mxu0 0
        %4590 = vmatpush1.bf16.msra.mxu0 %v4575
        %4591 = vmatprep.subr.bf16.mxu0 0
        %4592 = vmatpush1.bf16.msra.mxu0 %v4576
        %4593 = vmatprep.subr.bf16.mxu0 0
        %4594 = vmatpush1.bf16.msra.mxu0 0
        %4595 = vmatprep.subr.bf16.mxu0 0
        %4596 = vmatpush1.bf16.msra.mxu0 0
        %4597 = vmatprep.subr.bf16.mxu0 0
        %4598 = vmatpush1.bf16.msra.mxu0 0
        %4599 = vmatprep.subr.bf16.mxu0 0
        %4600 = vmatpush1.bf16.msra.mxu0 0
        %4601 = vmatprep.subr.bf16.mxu0 0
        %4602 = vmatpush1.bf16.msra.mxu0 0
        %4603 = vmatprep.subr.bf16.mxu0 0
        %4604 = vmatpush1.bf16.msra.mxu0 0
        %4605 = vmatprep.subr.bf16.mxu0 0
        %4606 = vmatpush1.bf16.msra.mxu0 0
        %4607 = vmatprep.subr.bf16.mxu0 0
        %4608 = vmatpush1.bf16.msra.mxu0 0
        %4609 = vmatprep.mubr.bf16.mxu0 0
        %4610 = vmatmul.mubr.bf16.gmra.mrb[0].mxu0 %v4565
        %v4611 = vpop.f32.mrb[0].mxu0
        %v4612 = vadd.f32 0.0, %v4611
        %v4613 = vpop.f32.mrb[0].mxu0
        %v4614 = vpop.f32.mrb[0].mxu0
        %v4615 = vadd.f32 0.0, %v4614
        %v4616 = vpop.f32.mrb[0].mxu0
        %4617 = vmatprep.mubr.bf16.mxu0 0
        %4618 = vmatmul.mubr.bf16.gmra.mrb[0].mxu0 %v4566
        %v4619 = vpop.f32.mrb[0].mxu0
        %v4620 = vadd.f32 0.0, %v4619
        %v4621 = vpop.f32.mrb[0].mxu0
        %v4622 = vpop.f32.mrb[0].mxu0
        %v4623 = vadd.f32 0.0, %v4622
        %v4624 = vpop.f32.mrb[0].mxu0
        %4625 = vmatprep.mubr.bf16.mxu0 0
        %4626 = vmatmul.mubr.bf16.gmra.mrb[0].mxu0 %v4567
        %v4627 = vpop.f32.mrb[0].mxu0
        %v4628 = vadd.f32 0.0, %v4627
        %v4629 = vpop.f32.mrb[0].mxu0
        %v4630 = vpop.f32.mrb[0].mxu0
        %v4631 = vadd.f32 0.0, %v4630
        %v4632 = vpop.f32.mrb[0].mxu0
        %4633 = vmatprep.mubr.bf16.mxu0 0
        %4634 = vmatmul.mubr.bf16.gmra.mrb[0].mxu0 %v4568
        %v4635 = vpop.f32.mrb[0].mxu0
        %v4636 = vadd.f32 0.0, %v4635
        %v4637 = vpop.f32.mrb[0].mxu0
        %v4638 = vpop.f32.mrb[0].mxu0
        %v4639 = vadd.f32 0.0, %v4638
        %v4640 = vpop.f32.mrb[0].mxu0
        %4641 = vdwg.mxu0
        %v4642 = vmul.f32 %v4612, %v4564
        %v4643 = vmul.f32 %v4615, %v4564
        %v4644 = vmul.f32 %v4620, %v4564
        %v4645 = vmul.f32 %v4623, %v4564
        %v4646 = vmul.f32 %v4628, %v4564
        %v4647 = vmul.f32 %v4631, %v4564
        %v4648 = vmul.f32 %v4636, %v4564
        %v4649 = vmul.f32 %v4639, %v4564
        %v4650 = vsub.f32 %v4069, %v4642
        %v4651 = vsub.f32 %v4070, %v4643
        %v4652 = vsub.f32 %v4071, %v4644
        %v4653 = vsub.f32 %v4072, %v4645
        %v4654 = vsub.f32 %v4073, %v4646
        %v4655 = vsub.f32 %v4074, %v4647
        %v4656 = vsub.f32 %v4075, %v4648
        %v4657 = vsub.f32 %v4076, %v4649
        %v4658 = vpack.c.bf16 %v4651, %v4650
        %v4659 = vpack.c.bf16 %v4653, %v4652
        %v4660 = vpack.c.bf16 %v4655, %v4654
        %v4661 = vpack.c.bf16 %v4657, %v4656
        %v4662 = vld [vmem:[%s7] sm:$0xf]
        %v4663 = vld [vmem:[%s7 + $0x4] sm:$0xf]
        %v4664 = vld [vmem:[%s7 + $0x8] sm:$0xf]
        %v4665 = vld [vmem:[%s7 + $0xc] sm:$0xf]
        %v4666 = vld [vmem:[%s7 + $0x10] sm:$0xf]
        %v4667 = vld [vmem:[%s7 + $0x14] sm:$0xf]
        %v4668 = vld [vmem:[%s7 + $0x18] sm:$0xf]
        %v4669 = vld [vmem:[%s7 + $0x1c] sm:$0xf]
        %v4670 = vld [vmem:[%s8] sm:$0xff]
        %v4671 = vld [vmem:[%s8 + $0x8] sm:$0xff]
        %v4672 = vld [vmem:[%s8 + $0x10] sm:$0xff]
        %v4673 = vld [vmem:[%s8 + $0x18] sm:$0xff]
        %v4674 = vld [vmem:[%s8 + $0x20] sm:$0xff]
        %v4675 = vld [vmem:[%s8 + $0x28] sm:$0xff]
        %v4676 = vld [vmem:[%s8 + $0x30] sm:$0xff]
        %v4677 = vld [vmem:[%s8 + $0x38] sm:$0xff]
        %4679 = vset.pattern.permute.xlu0 0
        %4680 = vperm.xlu0 %4679, %v4670
        %v4681 = vpop.permute.xlu0 %4680
        %4684 = vset.pattern.permute.xlu0 0
        %4685 = vperm.xlu0 %4684, %v4671
        %v4686 = vpop.permute.xlu0 %4685
        %4689 = vset.pattern.permute.xlu0 0
        %4690 = vperm.xlu0 %4689, %v4672
        %v4691 = vpop.permute.xlu0 %4690
        %4694 = vset.pattern.permute.xlu0 0
        %4695 = vperm.xlu0 %4694, %v4673
        %v4696 = vpop.permute.xlu0 %4695
        %4699 = vset.pattern.permute.xlu0 0
        %4700 = vperm.xlu0 %4699, %v4674
        %v4701 = vpop.permute.xlu0 %4700
        %4704 = vset.pattern.permute.xlu0 0
        %4705 = vperm.xlu0 %4704, %v4675
        %v4706 = vpop.permute.xlu0 %4705
        %4709 = vset.pattern.permute.xlu0 0
        %4710 = vperm.xlu0 %4709, %v4676
        %v4711 = vpop.permute.xlu0 %4710
        %4714 = vset.pattern.permute.xlu0 0
        %4715 = vperm.xlu0 %4714, %v4677
        %v4716 = vpop.permute.xlu0 %4715
        %v4726 = vunpack.c.l.b16 %v4662
        %v4727 = vunpack.c.l.b16 %v4663
        %v4728 = vunpack.c.l.b16 %v4664
        %v4729 = vunpack.c.l.b16 %v4665
        %v4730 = vunpack.c.l.b16 %v4666
        %v4731 = vunpack.c.l.b16 %v4667
        %v4732 = vunpack.c.l.b16 %v4668
        %v4733 = vunpack.c.l.b16 %v4669
        %v4734 = vpack.c.b16 %v4727, %v4726
        %v4735 = vpack.c.b16 %v4729, %v4728
        %v4736 = vpack.c.b16 %v4731, %v4730
        %v4737 = vpack.c.b16 %v4733, %v4732
        %v4739 = vsel %vm426, %v4734, 0
        %v4742 = vsel %vm426, %v4735, 0
        %v4745 = vsel %vm426, %v4736, 0
        %v4748 = vsel %vm426, %v4737, 0
        %4750 = vmatprep.subr.bf16.mxu0 0
        %4751 = vmatpush1.bf16.msra.mxu0 %v4658
        %4752 = vmatprep.subr.bf16.mxu0 0
        %4753 = vmatpush1.bf16.msra.mxu0 %v4659
        %4754 = vmatprep.subr.bf16.mxu0 0
        %4755 = vmatpush1.bf16.msra.mxu0 %v4660
        %4756 = vmatprep.subr.bf16.mxu0 0
        %4757 = vmatpush1.bf16.msra.mxu0 %v4661
        %4758 = vmatprep.subr.bf16.mxu0 0
        %4759 = vmatpush1.bf16.msra.mxu0 0
        %4760 = vmatprep.subr.bf16.mxu0 0
        %4761 = vmatpush1.bf16.msra.mxu0 0
        %4762 = vmatprep.subr.bf16.mxu0 0
        %4763 = vmatpush1.bf16.msra.mxu0 0
        %4764 = vmatprep.subr.bf16.mxu0 0
        %4765 = vmatpush1.bf16.msra.mxu0 0
        %4766 = vmatprep.subr.bf16.mxu0 0
        %4767 = vmatpush1.bf16.msra.mxu0 0
        %4768 = vmatprep.subr.bf16.mxu0 0
        %4769 = vmatpush1.bf16.msra.mxu0 0
        %4770 = vmatprep.subr.bf16.mxu0 0
        %4771 = vmatpush1.bf16.msra.mxu0 0
        %4772 = vmatprep.subr.bf16.mxu0 0
        %4773 = vmatpush1.bf16.msra.mxu0 0
        %4774 = vmatprep.subr.bf16.mxu0 0
        %4775 = vmatpush1.bf16.msra.mxu0 0
        %4776 = vmatprep.subr.bf16.mxu0 0
        %4777 = vmatpush1.bf16.msra.mxu0 0
        %4778 = vmatprep.subr.bf16.mxu0 0
        %4779 = vmatpush1.bf16.msra.mxu0 0
        %4780 = vmatprep.subr.bf16.mxu0 0
        %4781 = vmatpush1.bf16.msra.mxu0 0
        %4782 = vmatprep.mubr.bf16.mxu0 0
        %4783 = vmatmul.mubr.bf16.gmra.mrb[0].mxu0 %v4739
        %v4784 = vpop.f32.mrb[0].mxu0
        %v4785 = vadd.f32 %v4681, %v4784
        %v4786 = vpop.f32.mrb[0].mxu0
        %v4787 = vpop.f32.mrb[0].mxu0
        %v4788 = vadd.f32 %v4686, %v4787
        %v4789 = vpop.f32.mrb[0].mxu0
        %4790 = vmatprep.mubr.bf16.mxu0 0
        %4791 = vmatmul.mubr.bf16.gmra.mrb[0].mxu0 %v4742
        %v4792 = vpop.f32.mrb[0].mxu0
        %v4793 = vadd.f32 %v4691, %v4792
        %v4794 = vpop.f32.mrb[0].mxu0
        %v4795 = vpop.f32.mrb[0].mxu0
        %v4796 = vadd.f32 %v4696, %v4795
        %v4797 = vpop.f32.mrb[0].mxu0
        %4798 = vmatprep.mubr.bf16.mxu0 0
        %4799 = vmatmul.mubr.bf16.gmra.mrb[0].mxu0 %v4745
        %v4800 = vpop.f32.mrb[0].mxu0
        %v4801 = vadd.f32 %v4701, %v4800
        %v4802 = vpop.f32.mrb[0].mxu0
        %v4803 = vpop.f32.mrb[0].mxu0
        %v4804 = vadd.f32 %v4706, %v4803
        %v4805 = vpop.f32.mrb[0].mxu0
        %4806 = vmatprep.mubr.bf16.mxu0 0
        %4807 = vmatmul.mubr.bf16.gmra.mrb[0].mxu0 %v4748
        %v4808 = vpop.f32.mrb[0].mxu0
        %v4809 = vadd.f32 %v4711, %v4808
        %v4810 = vpop.f32.mrb[0].mxu0
        %v4811 = vpop.f32.mrb[0].mxu0
        %v4812 = vadd.f32 %v4716, %v4811
        %v4813 = vpop.f32.mrb[0].mxu0
        %4814 = vdwg.mxu0
        %v4815 = vmax.f32 %v4785, 0.0
        %v4816 = vmax.f32 %v4788, 0.0
        %v4817 = vmax.f32 %v4793, 0.0
        %v4818 = vmax.f32 %v4796, 0.0
        %v4819 = vmax.f32 %v4801, 0.0
        %v4820 = vmax.f32 %v4804, 0.0
        %v4821 = vmax.f32 %v4809, 0.0
        %v4822 = vmax.f32 %v4812, 0.0
        %v4823 = vadd.f32 %v4069, %v4815
        %v4824 = vadd.f32 %v4070, %v4816
        %v4825 = vadd.f32 %v4071, %v4817
        %v4826 = vadd.f32 %v4072, %v4818
        %v4827 = vadd.f32 %v4073, %v4819
        %v4828 = vadd.f32 %v4074, %v4820
        %v4829 = vadd.f32 %v4075, %v4821
        %v4830 = vadd.f32 %v4076, %v4822
        %s4831 = scalar_lea.vmem %s328, 256 [#allocation2]
        %4832 = vst [vmem:[%s4831] sm:$0xff] %v4823
        %4833 = vst [vmem:[%s4831 + $0x8] sm:$0xff] %v4824
        %4834 = vst [vmem:[%s4831 + $0x10] sm:$0xff] %v4825
        %4835 = vst [vmem:[%s4831 + $0x18] sm:$0xff] %v4826
        %4836 = vst [vmem:[%s4831 + $0x20] sm:$0xff] %v4827
        %4837 = vst [vmem:[%s4831 + $0x28] sm:$0xff] %v4828
        %4838 = vst [vmem:[%s4831 + $0x30] sm:$0xff] %v4829
        %4839 = vst [vmem:[%s4831 + $0x38] sm:$0xff] %v4830
        %v4840 = vpack.c.bf16 %v4824, %v4823
        %v4841 = vpack.c.bf16 %v4826, %v4825
        %v4842 = vpack.c.bf16 %v4828, %v4827
        %v4843 = vpack.c.bf16 %v4830, %v4829
        %v4844 = vld [vmem:[%s1444] sm:$0xf]
        %v4845 = vld [vmem:[%s1444 + $0x4] sm:$0xf]
        %v4846 = vld [vmem:[%s1444 + $0x8] sm:$0xf]
        %v4847 = vld [vmem:[%s1444 + $0xc] sm:$0xf]
        %v4848 = vld [vmem:[%s1444 + $0x10] sm:$0xf]
        %v4849 = vld [vmem:[%s1444 + $0x14] sm:$0xf]
        %v4850 = vld [vmem:[%s1444 + $0x18] sm:$0xf]
        %v4851 = vld [vmem:[%s1444 + $0x1c] sm:$0xf]
        %v4852 = vld [vmem:[%s1444 + $0x20] sm:$0xf]
        %v4853 = vld [vmem:[%s1444 + $0x24] sm:$0xf]
        %v4864 = vunpack.c.l.b16 %v4844
        %v4865 = vunpack.c.l.b16 %v4845
        %v4866 = vunpack.c.l.b16 %v4846
        %v4867 = vunpack.c.l.b16 %v4847
        %v4868 = vunpack.c.l.b16 %v4848
        %v4869 = vunpack.c.l.b16 %v4849
        %v4870 = vunpack.c.l.b16 %v4850
        %v4871 = vunpack.c.l.b16 %v4851
        %v4872 = vunpack.c.l.b16 %v4852
        %v4873 = vunpack.c.l.b16 %v4853
        %v4874 = vpack.c.b16 %v4865, %v4864
        %v4875 = vpack.c.b16 %v4867, %v4866
        %v4876 = vpack.c.b16 %v4869, %v4868
        %v4877 = vpack.c.b16 %v4871, %v4870
        %v4878 = vpack.c.b16 %v4873, %v4872
        %v4880 = vsel %vm426, %v4874, 0
        %v4883 = vsel %vm426, %v4875, 0
        %v4886 = vsel %vm426, %v4876, 0
        %v4889 = vsel %vm426, %v4877, 0
        %v4892 = vsel %vm426, %v4878, 0
        %4894 = vmatprep.subr.bf16.mxu0 0
        %4895 = vmatpush1.bf16.msra.mxu0 %v4840
        %4896 = vmatprep.subr.bf16.mxu0 0
        %4897 = vmatpush1.bf16.msra.mxu0 %v4841
        %4898 = vmatprep.subr.bf16.mxu0 0
        %4899 = vmatpush1.bf16.msra.mxu0 %v4842
        %4900 = vmatprep.subr.bf16.mxu0 0
        %4901 = vmatpush1.bf16.msra.mxu0 %v4843
        %4902 = vmatprep.subr.bf16.mxu0 0
        %4903 = vmatpush1.bf16.msra.mxu0 0
        %4904 = vmatprep.subr.bf16.mxu0 0
        %4905 = vmatpush1.bf16.msra.mxu0 0
        %4906 = vmatprep.subr.bf16.mxu0 0
        %4907 = vmatpush1.bf16.msra.mxu0 0
        %4908 = vmatprep.subr.bf16.mxu0 0
        %4909 = vmatpush1.bf16.msra.mxu0 0
        %4910 = vmatprep.subr.bf16.mxu0 0
        %4911 = vmatpush1.bf16.msra.mxu0 0
        %4912 = vmatprep.subr.bf16.mxu0 0
        %4913 = vmatpush1.bf16.msra.mxu0 0
        %4914 = vmatprep.subr.bf16.mxu0 0
        %4915 = vmatpush1.bf16.msra.mxu0 0
        %4916 = vmatprep.subr.bf16.mxu0 0
        %4917 = vmatpush1.bf16.msra.mxu0 0
        %4918 = vmatprep.subr.bf16.mxu0 0
        %4919 = vmatpush1.bf16.msra.mxu0 0
        %4920 = vmatprep.subr.bf16.mxu0 0
        %4921 = vmatpush1.bf16.msra.mxu0 0
        %4922 = vmatprep.subr.bf16.mxu0 0
        %4923 = vmatpush1.bf16.msra.mxu0 0
        %4924 = vmatprep.subr.bf16.mxu0 0
        %4925 = vmatpush1.bf16.msra.mxu0 0
        %4926 = vmatprep.mubr.bf16.mxu0 0
        %4927 = vmatmul.mubr.bf16.gmra.mrb[0].mxu0 %v4880
        %v4928 = vpop.f32.mrb[0].mxu0
        %v4929 = vadd.f32 0.0, %v4928
        %v4930 = vpop.f32.mrb[0].mxu0
        %v4931 = vpop.f32.mrb[0].mxu0
        %v4932 = vadd.f32 0.0, %v4931
        %v4933 = vpop.f32.mrb[0].mxu0
        %4934 = vmatprep.mubr.bf16.mxu0 0
        %4935 = vmatmul.mubr.bf16.gmra.mrb[0].mxu0 %v4883
        %v4936 = vpop.f32.mrb[0].mxu0
        %v4937 = vadd.f32 0.0, %v4936
        %v4938 = vpop.f32.mrb[0].mxu0
        %v4939 = vpop.f32.mrb[0].mxu0
        %v4940 = vadd.f32 0.0, %v4939
        %v4941 = vpop.f32.mrb[0].mxu0
        %4942 = vmatprep.mubr.bf16.mxu0 0
        %4943 = vmatmul.mubr.bf16.gmra.mrb[0].mxu0 %v4886
        %v4944 = vpop.f32.mrb[0].mxu0
        %v4945 = vadd.f32 0.0, %v4944
        %v4946 = vpop.f32.mrb[0].mxu0
        %v4947 = vpop.f32.mrb[0].mxu0
        %v4948 = vadd.f32 0.0, %v4947
        %v4949 = vpop.f32.mrb[0].mxu0
        %4950 = vmatprep.mubr.bf16.mxu0 0
        %4951 = vmatmul.mubr.bf16.gmra.mrb[0].mxu0 %v4889
        %v4952 = vpop.f32.mrb[0].mxu0
        %v4953 = vadd.f32 0.0, %v4952
        %v4954 = vpop.f32.mrb[0].mxu0
        %v4955 = vpop.f32.mrb[0].mxu0
        %v4956 = vadd.f32 0.0, %v4955
        %v4957 = vpop.f32.mrb[0].mxu0
        %4958 = vmatprep.mubr.bf16.mxu0 0
        %4959 = vmatmul.mubr.bf16.gmra.mrb[0].mxu0 %v4892
        %v4960 = vpop.f32.mrb[0].mxu0
        %v4961 = vadd.f32 0.0, %v4960
        %v4962 = vpop.f32.mrb[0].mxu0
        %v4963 = vpop.f32.mrb[0].mxu0
        %v4964 = vadd.f32 0.0, %v4963
        %v4965 = vpop.f32.mrb[0].mxu0
        %4966 = vdwg.mxu0
        %v4967 = vld [vmem:[%s1568] sm:$0xff]
        %v4968 = vld [vmem:[%s1568 + $0x8] sm:$0xff]
        %v4969 = vld [vmem:[%s1568 + $0x10] sm:$0xff]
        %v4970 = vld [vmem:[%s1568 + $0x18] sm:$0xff]
        %v4971 = vld [vmem:[%s1568 + $0x20] sm:$0xff]
        %v4972 = vld [vmem:[%s1568 + $0x28] sm:$0xff]
        %v4973 = vld [vmem:[%s1568 + $0x30] sm:$0xff]
        %v4974 = vld [vmem:[%s1568 + $0x38] sm:$0xff]
        %4976 = vset.pattern.permute.xlu0 0
        %4977 = vperm.xlu0 %4976, %v4967
        %v4978 = vpop.permute.xlu0 %4977
        %4981 = vset.pattern.permute.xlu0 0
        %4982 = vperm.xlu0 %4981, %v4968
        %v4983 = vpop.permute.xlu0 %4982
        %4986 = vset.pattern.permute.xlu0 0
        %4987 = vperm.xlu0 %4986, %v4969
        %v4988 = vpop.permute.xlu0 %4987
        %4991 = vset.pattern.permute.xlu0 0
        %4992 = vperm.xlu0 %4991, %v4970
        %v4993 = vpop.permute.xlu0 %4992
        %4996 = vset.pattern.permute.xlu0 0
        %4997 = vperm.xlu0 %4996, %v4971
        %v4998 = vpop.permute.xlu0 %4997
        %5001 = vset.pattern.permute.xlu0 0
        %5002 = vperm.xlu0 %5001, %v4972
        %v5003 = vpop.permute.xlu0 %5002
        %5006 = vset.pattern.permute.xlu0 0
        %5007 = vperm.xlu0 %5006, %v4973
        %v5008 = vpop.permute.xlu0 %5007
        %5011 = vset.pattern.permute.xlu0 0
        %5012 = vperm.xlu0 %5011, %v4974
        %v5013 = vpop.permute.xlu0 %5012
        %v5015 = vadd.f32 %v4937, %v4978
        %v5016 = vadd.f32 %v4940, %v4983
        %v5017 = vadd.f32 %v4945, %v4988
        %v5018 = vadd.f32 %v4948, %v4993
        %v5019 = vadd.f32 %v4953, %v4998
        %v5020 = vadd.f32 %v4956, %v5003
        %v5021 = vadd.f32 %v4961, %v5008
        %v5022 = vadd.f32 %v4964, %v5013
        %v5023 = vpack.c.bf16 %v4932, %v4929
        %5024 = vxpose.xlu0.c.b16.start [1/8] %v5023, 128
        %5025 = vxpose.xlu0.c.b16.cont [2/8] 0, 128
        %5026 = vxpose.xlu0.c.b16.cont [3/8] 0, 128
        %5027 = vxpose.xlu0.c.b16.cont [4/8] 0, 128
        %5028 = vxpose.xlu0.c.b16.cont [5/8] 0, 128
        %5029 = vxpose.xlu0.c.b16.cont [6/8] 0, 128
        %5030 = vxpose.xlu0.c.b16.cont [7/8] 0, 128
        %5031 = vxpose.xlu0.c.b16.end [8/8] 0, 128
        %v5032 = vpop.trf.xlu0
        %v5033 = vpop.trf.xlu0
        %v5034 = vpop.trf.xlu0
        %v5035 = vpop.trf.xlu0
        %v5036 = vpop.trf.xlu0
        %v5037 = vpop.trf.xlu0
        %v5038 = vpop.trf.xlu0
        %v5039 = vpop.trf.xlu0
        %v5041 = vsel %vm877, %v5032, 0
        %v5044 = vsel %vm877, %v5033, 0
        %v5047 = vsel %vm877, %v5034, 0
        %v5050 = vsel %vm877, %v5035, 0
        %v5053 = vsel %vm877, %v5036, 0
        %v5056 = vsel %vm877, %v5037, 0
        %v5059 = vsel %vm877, %v5038, 0
        %v5062 = vsel %vm877, %v5039, 0
        %5064 = vmatprep.subr.bf16.mxu0 0
        %5065 = vmatpush1.bf16.msra.mxu0 %v5023
        %5066 = vmatprep.subr.bf16.mxu0 0
        %5067 = vmatpush1.bf16.msra.mxu0 0
        %5068 = vmatprep.subr.bf16.mxu0 0
        %5069 = vmatpush1.bf16.msra.mxu0 0
        %5070 = vmatprep.subr.bf16.mxu0 0
        %5071 = vmatpush1.bf16.msra.mxu0 0
        %5072 = vmatprep.subr.bf16.mxu0 0
        %5073 = vmatpush1.bf16.msra.mxu0 0
        %5074 = vmatprep.subr.bf16.mxu0 0
        %5075 = vmatpush1.bf16.msra.mxu0 0
        %5076 = vmatprep.subr.bf16.mxu0 0
        %5077 = vmatpush1.bf16.msra.mxu0 0
        %5078 = vmatprep.subr.bf16.mxu0 0
        %5079 = vmatpush1.bf16.msra.mxu0 0
        %5080 = vmatprep.subr.bf16.mxu0 0
        %5081 = vmatpush1.bf16.msra.mxu0 0
        %5082 = vmatprep.subr.bf16.mxu0 0
        %5083 = vmatpush1.bf16.msra.mxu0 0
        %5084 = vmatprep.subr.bf16.mxu0 0
        %5085 = vmatpush1.bf16.msra.mxu0 0
        %5086 = vmatprep.subr.bf16.mxu0 0
        %5087 = vmatpush1.bf16.msra.mxu0 0
        %5088 = vmatprep.subr.bf16.mxu0 0
        %5089 = vmatpush1.bf16.msra.mxu0 0
        %5090 = vmatprep.subr.bf16.mxu0 0
        %5091 = vmatpush1.bf16.msra.mxu0 0
        %5092 = vmatprep.subr.bf16.mxu0 0
        %5093 = vmatpush1.bf16.msra.mxu0 0
        %5094 = vmatprep.subr.bf16.mxu0 0
        %5095 = vmatpush1.bf16.msra.mxu0 0
        %5096 = vmatprep.mubr.bf16.mxu0 0
        %5097 = vmatmul.mubr.bf16.gmra.mrb[0].mxu0 %v5041
        %v5098 = vpop.f32.mrb[0].mxu0
        %v5099 = vadd.f32 0.0, %v5098
        %v5100 = vpop.f32.mrb[0].mxu0
        %v5101 = vpop.f32.mrb[0].mxu0
        %v5102 = vadd.f32 0.0, %v5101
        %v5103 = vpop.f32.mrb[0].mxu0
        %5104 = vmatprep.mubr.bf16.mxu0 0
        %5105 = vmatmul.mubr.bf16.gmra.mrb[0].mxu0 %v5044
        %v5106 = vpop.f32.mrb[0].mxu0
        %v5107 = vadd.f32 0.0, %v5106
        %v5108 = vpop.f32.mrb[0].mxu0
        %v5109 = vpop.f32.mrb[0].mxu0
        %v5110 = vadd.f32 0.0, %v5109
        %v5111 = vpop.f32.mrb[0].mxu0
        %5112 = vmatprep.mubr.bf16.mxu0 0
        %5113 = vmatmul.mubr.bf16.gmra.mrb[0].mxu0 %v5047
        %v5114 = vpop.f32.mrb[0].mxu0
        %v5115 = vadd.f32 0.0, %v5114
        %v5116 = vpop.f32.mrb[0].mxu0
        %v5117 = vpop.f32.mrb[0].mxu0
        %v5118 = vadd.f32 0.0, %v5117
        %v5119 = vpop.f32.mrb[0].mxu0
        %5120 = vmatprep.mubr.bf16.mxu0 0
        %5121 = vmatmul.mubr.bf16.gmra.mrb[0].mxu0 %v5050
        %v5122 = vpop.f32.mrb[0].mxu0
        %v5123 = vadd.f32 0.0, %v5122
        %v5124 = vpop.f32.mrb[0].mxu0
        %v5125 = vpop.f32.mrb[0].mxu0
        %v5126 = vadd.f32 0.0, %v5125
        %v5127 = vpop.f32.mrb[0].mxu0
        %5128 = vmatprep.mubr.bf16.mxu0 0
        %5129 = vmatmul.mubr.bf16.gmra.mrb[0].mxu0 %v5053
        %v5130 = vpop.f32.mrb[0].mxu0
        %v5131 = vadd.f32 0.0, %v5130
        %v5132 = vpop.f32.mrb[0].mxu0
        %v5133 = vpop.f32.mrb[0].mxu0
        %v5134 = vadd.f32 0.0, %v5133
        %v5135 = vpop.f32.mrb[0].mxu0
        %5136 = vmatprep.mubr.bf16.mxu0 0
        %5137 = vmatmul.mubr.bf16.gmra.mrb[0].mxu0 %v5056
        %v5138 = vpop.f32.mrb[0].mxu0
        %v5139 = vadd.f32 0.0, %v5138
        %v5140 = vpop.f32.mrb[0].mxu0
        %v5141 = vpop.f32.mrb[0].mxu0
        %v5142 = vadd.f32 0.0, %v5141
        %v5143 = vpop.f32.mrb[0].mxu0
        %5144 = vmatprep.mubr.bf16.mxu0 0
        %5145 = vmatmul.mubr.bf16.gmra.mrb[0].mxu0 %v5059
        %v5146 = vpop.f32.mrb[0].mxu0
        %v5147 = vadd.f32 0.0, %v5146
        %v5148 = vpop.f32.mrb[0].mxu0
        %v5149 = vpop.f32.mrb[0].mxu0
        %v5150 = vadd.f32 0.0, %v5149
        %v5151 = vpop.f32.mrb[0].mxu0
        %5152 = vmatprep.mubr.bf16.mxu0 0
        %5153 = vmatmul.mubr.bf16.gmra.mrb[0].mxu0 %v5062
        %v5154 = vpop.f32.mrb[0].mxu0
        %v5155 = vadd.f32 0.0, %v5154
        %v5156 = vpop.f32.mrb[0].mxu0
        %v5157 = vpop.f32.mrb[0].mxu0
        %v5158 = vadd.f32 0.0, %v5157
        %v5159 = vpop.f32.mrb[0].mxu0
        %5160 = vdwg.mxu0
        %5161 = vmax.xlane.f32.xlu0 %v5099
        %v5162 = vpop.xlane.xlu0 %5161
        %5163 = vmax.xlane.f32.xlu0 %v5102
        %v5164 = vpop.xlane.xlu0 %5163
        %5165 = vmax.xlane.f32.xlu0 %v5107
        %v5166 = vpop.xlane.xlu0 %5165
        %5167 = vmax.xlane.f32.xlu0 %v5110
        %v5168 = vpop.xlane.xlu0 %5167
        %5169 = vmax.xlane.f32.xlu0 %v5115
        %v5170 = vpop.xlane.xlu0 %5169
        %5171 = vmax.xlane.f32.xlu0 %v5118
        %v5172 = vpop.xlane.xlu0 %5171
        %5173 = vmax.xlane.f32.xlu0 %v5123
        %v5174 = vpop.xlane.xlu0 %5173
        %5175 = vmax.xlane.f32.xlu0 %v5126
        %v5176 = vpop.xlane.xlu0 %5175
        %5177 = vmax.xlane.f32.xlu0 %v5131
        %v5178 = vpop.xlane.xlu0 %5177
        %5179 = vmax.xlane.f32.xlu0 %v5134
        %v5180 = vpop.xlane.xlu0 %5179
        %5181 = vmax.xlane.f32.xlu0 %v5139
        %v5182 = vpop.xlane.xlu0 %5181
        %5183 = vmax.xlane.f32.xlu0 %v5142
        %v5184 = vpop.xlane.xlu0 %5183
        %5185 = vmax.xlane.f32.xlu0 %v5147
        %v5186 = vpop.xlane.xlu0 %5185
        %5187 = vmax.xlane.f32.xlu0 %v5150
        %v5188 = vpop.xlane.xlu0 %5187
        %5189 = vmax.xlane.f32.xlu0 %v5155
        %v5190 = vpop.xlane.xlu0 %5189
        %5191 = vmax.xlane.f32.xlu0 %v5158
        %v5192 = vpop.xlane.xlu0 %5191
        %v5193 = vsub.f32 %v5099, %v5162
        %v5194 = vsub.f32 %v5102, %v5164
        %v5195 = vsub.f32 %v5107, %v5166
        %v5196 = vsub.f32 %v5110, %v5168
        %v5197 = vsub.f32 %v5115, %v5170
        %v5198 = vsub.f32 %v5118, %v5172
        %v5199 = vsub.f32 %v5123, %v5174
        %v5200 = vsub.f32 %v5126, %v5176
        %v5201 = vsub.f32 %v5131, %v5178
        %v5202 = vsub.f32 %v5134, %v5180
        %v5203 = vsub.f32 %v5139, %v5182
        %v5204 = vsub.f32 %v5142, %v5184
        %v5205 = vsub.f32 %v5147, %v5186
        %v5206 = vsub.f32 %v5150, %v5188
        %v5207 = vsub.f32 %v5155, %v5190
        %v5208 = vsub.f32 %v5158, %v5192
        %v5209 = vmul.f32 %v5193, 1.442695
        %v5210 = vpow.pop %v5209
        %v5211 = vmul.f32 %v5194, 1.442695
        %v5212 = vpow.pop %v5211
        %v5213 = vmul.f32 %v5195, 1.442695
        %v5214 = vpow.pop %v5213
        %v5215 = vmul.f32 %v5196, 1.442695
        %v5216 = vpow.pop %v5215
        %v5217 = vmul.f32 %v5197, 1.442695
        %v5218 = vpow.pop %v5217
        %v5219 = vmul.f32 %v5198, 1.442695
        %v5220 = vpow.pop %v5219
        %v5221 = vmul.f32 %v5199, 1.442695
        %v5222 = vpow.pop %v5221
        %v5223 = vmul.f32 %v5200, 1.442695
        %v5224 = vpow.pop %v5223
        %v5225 = vmul.f32 %v5201, 1.442695
        %v5226 = vpow.pop %v5225
        %v5227 = vmul.f32 %v5202, 1.442695
        %v5228 = vpow.pop %v5227
        %v5229 = vmul.f32 %v5203, 1.442695
        %v5230 = vpow.pop %v5229
        %v5231 = vmul.f32 %v5204, 1.442695
        %v5232 = vpow.pop %v5231
        %v5233 = vmul.f32 %v5205, 1.442695
        %v5234 = vpow.pop %v5233
        %v5235 = vmul.f32 %v5206, 1.442695
        %v5236 = vpow.pop %v5235
        %v5237 = vmul.f32 %v5207, 1.442695
        %v5238 = vpow.pop %v5237
        %v5239 = vmul.f32 %v5208, 1.442695
        %v5240 = vpow.pop %v5239
        %5241 = vadd.xlane.f32.xlu0 %v5210
        %v5242 = vpop.xlane.xlu0 %5241
        %5243 = vadd.xlane.f32.xlu0 %v5212
        %v5244 = vpop.xlane.xlu0 %5243
        %5245 = vadd.xlane.f32.xlu0 %v5214
        %v5246 = vpop.xlane.xlu0 %5245
        %5247 = vadd.xlane.f32.xlu0 %v5216
        %v5248 = vpop.xlane.xlu0 %5247
        %5249 = vadd.xlane.f32.xlu0 %v5218
        %v5250 = vpop.xlane.xlu0 %5249
        %5251 = vadd.xlane.f32.xlu0 %v5220
        %v5252 = vpop.xlane.xlu0 %5251
        %5253 = vadd.xlane.f32.xlu0 %v5222
        %v5254 = vpop.xlane.xlu0 %5253
        %5255 = vadd.xlane.f32.xlu0 %v5224
        %v5256 = vpop.xlane.xlu0 %5255
        %5257 = vadd.xlane.f32.xlu0 %v5226
        %v5258 = vpop.xlane.xlu0 %5257
        %5259 = vadd.xlane.f32.xlu0 %v5228
        %v5260 = vpop.xlane.xlu0 %5259
        %5261 = vadd.xlane.f32.xlu0 %v5230
        %v5262 = vpop.xlane.xlu0 %5261
        %5263 = vadd.xlane.f32.xlu0 %v5232
        %v5264 = vpop.xlane.xlu0 %5263
        %5265 = vadd.xlane.f32.xlu0 %v5234
        %v5266 = vpop.xlane.xlu0 %5265
        %5267 = vadd.xlane.f32.xlu0 %v5236
        %v5268 = vpop.xlane.xlu0 %5267
        %5269 = vadd.xlane.f32.xlu0 %v5238
        %v5270 = vpop.xlane.xlu0 %5269
        %5271 = vadd.xlane.f32.xlu0 %v5240
        %v5272 = vpop.xlane.xlu0 %5271
        %v5273 = vrcp.pop %v5242
        %v5274 = vrcp.pop %v5244
        %v5275 = vrcp.pop %v5246
        %v5276 = vrcp.pop %v5248
        %v5277 = vrcp.pop %v5250
        %v5278 = vrcp.pop %v5252
        %v5279 = vrcp.pop %v5254
        %v5280 = vrcp.pop %v5256
        %v5281 = vrcp.pop %v5258
        %v5282 = vrcp.pop %v5260
        %v5283 = vrcp.pop %v5262
        %v5284 = vrcp.pop %v5264
        %v5285 = vrcp.pop %v5266
        %v5286 = vrcp.pop %v5268
        %v5287 = vrcp.pop %v5270
        %v5288 = vrcp.pop %v5272
        %v5289 = vmul.f32 %v5210, %v5273
        %v5290 = vmul.f32 %v5212, %v5274
        %v5291 = vmul.f32 %v5214, %v5275
        %v5292 = vmul.f32 %v5216, %v5276
        %v5293 = vmul.f32 %v5218, %v5277
        %v5294 = vmul.f32 %v5220, %v5278
        %v5295 = vmul.f32 %v5222, %v5279
        %v5296 = vmul.f32 %v5224, %v5280
        %v5297 = vmul.f32 %v5226, %v5281
        %v5298 = vmul.f32 %v5228, %v5282
        %v5299 = vmul.f32 %v5230, %v5283
        %v5300 = vmul.f32 %v5232, %v5284
        %v5301 = vmul.f32 %v5234, %v5285
        %v5302 = vmul.f32 %v5236, %v5286
        %v5303 = vmul.f32 %v5238, %v5287
        %v5304 = vmul.f32 %v5240, %v5288
        %v5305 = vadd.f32 %v5289, %v5290
        %v5306 = vadd.f32 %v5305, %v5291
        %v5307 = vadd.f32 %v5306, %v5292
        %v5308 = vadd.f32 %v5307, %v5293
        %v5309 = vadd.f32 %v5308, %v5294
        %v5310 = vadd.f32 %v5309, %v5295
        %v5311 = vadd.f32 %v5310, %v5296
        %v5312 = vadd.f32 %v5311, %v5297
        %v5313 = vadd.f32 %v5312, %v5298
        %v5314 = vadd.f32 %v5313, %v5299
        %v5315 = vadd.f32 %v5314, %v5300
        %v5316 = vadd.f32 %v5315, %v5301
        %v5317 = vadd.f32 %v5316, %v5302
        %v5318 = vadd.f32 %v5317, %v5303
        %v5319 = vadd.f32 %v5318, %v5304
        %v5320 = vrot.slane %v5319, 4
        %v5321 = vadd.f32 %v5319, %v5320
        %v5322 = vrot.slane %v5321, 2
        %v5323 = vadd.f32 %v5321, %v5322
        %v5324 = vrot.slane %v5323, 1
        %v5325 = vadd.f32 %v5323, %v5324
        %v5326 = vadd.f32 %v5325, 1e-09
        %v5327 = vrcp.pop %v5326
        %v5328 = vpack.c.bf16 %v5016, %v5015
        %v5329 = vpack.c.bf16 %v5018, %v5017
        %v5330 = vpack.c.bf16 %v5020, %v5019
        %v5331 = vpack.c.bf16 %v5022, %v5021
        %v5332 = vpack.c.bf16 %v5290, %v5289
        %v5333 = vpack.c.bf16 %v5292, %v5291
        %v5334 = vpack.c.bf16 %v5294, %v5293
        %v5335 = vpack.c.bf16 %v5296, %v5295
        %v5336 = vpack.c.bf16 %v5298, %v5297
        %v5337 = vpack.c.bf16 %v5300, %v5299
        %v5338 = vpack.c.bf16 %v5302, %v5301
        %v5339 = vpack.c.bf16 %v5304, %v5303
        %5340 = vmatprep.subr.bf16.mxu0 0
        %5341 = vmatpush1.bf16.msra.mxu0 %v5332
        %5342 = vmatprep.subr.bf16.mxu0 0
        %5343 = vmatpush1.bf16.msra.mxu0 %v5333
        %5344 = vmatprep.subr.bf16.mxu0 0
        %5345 = vmatpush1.bf16.msra.mxu0 %v5334
        %5346 = vmatprep.subr.bf16.mxu0 0
        %5347 = vmatpush1.bf16.msra.mxu0 %v5335
        %5348 = vmatprep.subr.bf16.mxu0 0
        %5349 = vmatpush1.bf16.msra.mxu0 %v5336
        %5350 = vmatprep.subr.bf16.mxu0 0
        %5351 = vmatpush1.bf16.msra.mxu0 %v5337
        %5352 = vmatprep.subr.bf16.mxu0 0
        %5353 = vmatpush1.bf16.msra.mxu0 %v5338
        %5354 = vmatprep.subr.bf16.mxu0 0
        %5355 = vmatpush1.bf16.msra.mxu0 %v5339
        %5356 = vmatprep.subr.bf16.mxu0 0
        %5357 = vmatpush1.bf16.msra.mxu0 0
        %5358 = vmatprep.subr.bf16.mxu0 0
        %5359 = vmatpush1.bf16.msra.mxu0 0
        %5360 = vmatprep.subr.bf16.mxu0 0
        %5361 = vmatpush1.bf16.msra.mxu0 0
        %5362 = vmatprep.subr.bf16.mxu0 0
        %5363 = vmatpush1.bf16.msra.mxu0 0
        %5364 = vmatprep.subr.bf16.mxu0 0
        %5365 = vmatpush1.bf16.msra.mxu0 0
        %5366 = vmatprep.subr.bf16.mxu0 0
        %5367 = vmatpush1.bf16.msra.mxu0 0
        %5368 = vmatprep.subr.bf16.mxu0 0
        %5369 = vmatpush1.bf16.msra.mxu0 0
        %5370 = vmatprep.subr.bf16.mxu0 0
        %5371 = vmatpush1.bf16.msra.mxu0 0
        %5372 = vmatprep.mubr.bf16.mxu0 0
        %5373 = vmatmul.mubr.bf16.gmra.mrb[0].mxu0 %v5328
        %v5374 = vpop.f32.mrb[0].mxu0
        %v5375 = vadd.f32 0.0, %v5374
        %v5376 = vpop.f32.mrb[0].mxu0
        %v5377 = vpop.f32.mrb[0].mxu0
        %v5378 = vadd.f32 0.0, %v5377
        %v5379 = vpop.f32.mrb[0].mxu0
        %5380 = vmatprep.mubr.bf16.mxu0 0
        %5381 = vmatmul.mubr.bf16.gmra.mrb[0].mxu0 %v5329
        %v5382 = vpop.f32.mrb[0].mxu0
        %v5383 = vadd.f32 0.0, %v5382
        %v5384 = vpop.f32.mrb[0].mxu0
        %v5385 = vpop.f32.mrb[0].mxu0
        %v5386 = vadd.f32 0.0, %v5385
        %v5387 = vpop.f32.mrb[0].mxu0
        %5388 = vmatprep.mubr.bf16.mxu0 0
        %5389 = vmatmul.mubr.bf16.gmra.mrb[0].mxu0 %v5330
        %v5390 = vpop.f32.mrb[0].mxu0
        %v5391 = vadd.f32 0.0, %v5390
        %v5392 = vpop.f32.mrb[0].mxu0
        %v5393 = vpop.f32.mrb[0].mxu0
        %v5394 = vadd.f32 0.0, %v5393
        %v5395 = vpop.f32.mrb[0].mxu0
        %5396 = vmatprep.mubr.bf16.mxu0 0
        %5397 = vmatmul.mubr.bf16.gmra.mrb[0].mxu0 %v5331
        %v5398 = vpop.f32.mrb[0].mxu0
        %v5399 = vadd.f32 0.0, %v5398
        %v5400 = vpop.f32.mrb[0].mxu0
        %v5401 = vpop.f32.mrb[0].mxu0
        %v5402 = vadd.f32 0.0, %v5401
        %v5403 = vpop.f32.mrb[0].mxu0
        %5404 = vdwg.mxu0
        %v5405 = vmul.f32 %v5375, %v5327
        %v5406 = vmul.f32 %v5378, %v5327
        %v5407 = vmul.f32 %v5383, %v5327
        %v5408 = vmul.f32 %v5386, %v5327
        %v5409 = vmul.f32 %v5391, %v5327
        %v5410 = vmul.f32 %v5394, %v5327
        %v5411 = vmul.f32 %v5399, %v5327
        %v5412 = vmul.f32 %v5402, %v5327
        %v5413 = vsub.f32 %v4823, %v5405
        %v5414 = vsub.f32 %v4824, %v5406
        %v5415 = vsub.f32 %v4825, %v5407
        %v5416 = vsub.f32 %v4826, %v5408
        %v5417 = vsub.f32 %v4827, %v5409
        %v5418 = vsub.f32 %v4828, %v5410
        %v5419 = vsub.f32 %v4829, %v5411
        %v5420 = vsub.f32 %v4830, %v5412
        %v5421 = vpack.c.bf16 %v5414, %v5413
        %v5422 = vpack.c.bf16 %v5416, %v5415
        %v5423 = vpack.c.bf16 %v5418, %v5417
        %v5424 = vpack.c.bf16 %v5420, %v5419
        %v5425 = vld [vmem:[%s2027] sm:$0xf]
        %v5426 = vld [vmem:[%s2027 + $0x4] sm:$0xf]
        %v5427 = vld [vmem:[%s2027 + $0x8] sm:$0xf]
        %v5428 = vld [vmem:[%s2027 + $0xc] sm:$0xf]
        %v5429 = vld [vmem:[%s2027 + $0x10] sm:$0xf]
        %v5430 = vld [vmem:[%s2027 + $0x14] sm:$0xf]
        %v5431 = vld [vmem:[%s2027 + $0x18] sm:$0xf]
        %v5432 = vld [vmem:[%s2027 + $0x1c] sm:$0xf]
        %v5433 = vld [vmem:[%s2036] sm:$0xff]
        %v5434 = vld [vmem:[%s2036 + $0x8] sm:$0xff]
        %v5435 = vld [vmem:[%s2036 + $0x10] sm:$0xff]
        %v5436 = vld [vmem:[%s2036 + $0x18] sm:$0xff]
        %v5437 = vld [vmem:[%s2036 + $0x20] sm:$0xff]
        %v5438 = vld [vmem:[%s2036 + $0x28] sm:$0xff]
        %v5439 = vld [vmem:[%s2036 + $0x30] sm:$0xff]
        %v5440 = vld [vmem:[%s2036 + $0x38] sm:$0xff]
        %5442 = vset.pattern.permute.xlu0 0
        %5443 = vperm.xlu0 %5442, %v5433
        %v5444 = vpop.permute.xlu0 %5443
        %5447 = vset.pattern.permute.xlu0 0
        %5448 = vperm.xlu0 %5447, %v5434
        %v5449 = vpop.permute.xlu0 %5448
        %5452 = vset.pattern.permute.xlu0 0
        %5453 = vperm.xlu0 %5452, %v5435
        %v5454 = vpop.permute.xlu0 %5453
        %5457 = vset.pattern.permute.xlu0 0
        %5458 = vperm.xlu0 %5457, %v5436
        %v5459 = vpop.permute.xlu0 %5458
        %5462 = vset.pattern.permute.xlu0 0
        %5463 = vperm.xlu0 %5462, %v5437
        %v5464 = vpop.permute.xlu0 %5463
        %5467 = vset.pattern.permute.xlu0 0
        %5468 = vperm.xlu0 %5467, %v5438
        %v5469 = vpop.permute.xlu0 %5468
        %5472 = vset.pattern.permute.xlu0 0
        %5473 = vperm.xlu0 %5472, %v5439
        %v5474 = vpop.permute.xlu0 %5473
        %5477 = vset.pattern.permute.xlu0 0
        %5478 = vperm.xlu0 %5477, %v5440
        %v5479 = vpop.permute.xlu0 %5478
        %v5489 = vunpack.c.l.b16 %v5425
        %v5490 = vunpack.c.l.b16 %v5426
        %v5491 = vunpack.c.l.b16 %v5427
        %v5492 = vunpack.c.l.b16 %v5428
        %v5493 = vunpack.c.l.b16 %v5429
        %v5494 = vunpack.c.l.b16 %v5430
        %v5495 = vunpack.c.l.b16 %v5431
        %v5496 = vunpack.c.l.b16 %v5432
        %v5497 = vpack.c.b16 %v5490, %v5489
        %v5498 = vpack.c.b16 %v5492, %v5491
        %v5499 = vpack.c.b16 %v5494, %v5493
        %v5500 = vpack.c.b16 %v5496, %v5495
        %v5502 = vsel %vm426, %v5497, 0
        %v5505 = vsel %vm426, %v5498, 0
        %v5508 = vsel %vm426, %v5499, 0
        %v5511 = vsel %vm426, %v5500, 0
        %5513 = vmatprep.subr.bf16.mxu0 0
        %5514 = vmatpush1.bf16.msra.mxu0 %v5421
        %5515 = vmatprep.subr.bf16.mxu0 0
        %5516 = vmatpush1.bf16.msra.mxu0 %v5422
        %5517 = vmatprep.subr.bf16.mxu0 0
        %5518 = vmatpush1.bf16.msra.mxu0 %v5423
        %5519 = vmatprep.subr.bf16.mxu0 0
        %5520 = vmatpush1.bf16.msra.mxu0 %v5424
        %5521 = vmatprep.subr.bf16.mxu0 0
        %5522 = vmatpush1.bf16.msra.mxu0 0
        %5523 = vmatprep.subr.bf16.mxu0 0
        %5524 = vmatpush1.bf16.msra.mxu0 0
        %5525 = vmatprep.subr.bf16.mxu0 0
        %5526 = vmatpush1.bf16.msra.mxu0 0
        %5527 = vmatprep.subr.bf16.mxu0 0
        %5528 = vmatpush1.bf16.msra.mxu0 0
        %5529 = vmatprep.subr.bf16.mxu0 0
        %5530 = vmatpush1.bf16.msra.mxu0 0
        %5531 = vmatprep.subr.bf16.mxu0 0
        %5532 = vmatpush1.bf16.msra.mxu0 0
        %5533 = vmatprep.subr.bf16.mxu0 0
        %5534 = vmatpush1.bf16.msra.mxu0 0
        %5535 = vmatprep.subr.bf16.mxu0 0
        %5536 = vmatpush1.bf16.msra.mxu0 0
        %5537 = vmatprep.subr.bf16.mxu0 0
        %5538 = vmatpush1.bf16.msra.mxu0 0
        %5539 = vmatprep.subr.bf16.mxu0 0
        %5540 = vmatpush1.bf16.msra.mxu0 0
        %5541 = vmatprep.subr.bf16.mxu0 0
        %5542 = vmatpush1.bf16.msra.mxu0 0
        %5543 = vmatprep.subr.bf16.mxu0 0
        %5544 = vmatpush1.bf16.msra.mxu0 0
        %5545 = vmatprep.mubr.bf16.mxu0 0
        %5546 = vmatmul.mubr.bf16.gmra.mrb[0].mxu0 %v5502
        %v5547 = vpop.f32.mrb[0].mxu0
        %v5548 = vadd.f32 %v5444, %v5547
        %v5549 = vpop.f32.mrb[0].mxu0
        %v5550 = vpop.f32.mrb[0].mxu0
        %v5551 = vadd.f32 %v5449, %v5550
        %v5552 = vpop.f32.mrb[0].mxu0
        %5553 = vmatprep.mubr.bf16.mxu0 0
        %5554 = vmatmul.mubr.bf16.gmra.mrb[0].mxu0 %v5505
        %v5555 = vpop.f32.mrb[0].mxu0
        %v5556 = vadd.f32 %v5454, %v5555
        %v5557 = vpop.f32.mrb[0].mxu0
        %v5558 = vpop.f32.mrb[0].mxu0
        %v5559 = vadd.f32 %v5459, %v5558
        %v5560 = vpop.f32.mrb[0].mxu0
        %5561 = vmatprep.mubr.bf16.mxu0 0
        %5562 = vmatmul.mubr.bf16.gmra.mrb[0].mxu0 %v5508
        %v5563 = vpop.f32.mrb[0].mxu0
        %v5564 = vadd.f32 %v5464, %v5563
        %v5565 = vpop.f32.mrb[0].mxu0
        %v5566 = vpop.f32.mrb[0].mxu0
        %v5567 = vadd.f32 %v5469, %v5566
        %v5568 = vpop.f32.mrb[0].mxu0
        %5569 = vmatprep.mubr.bf16.mxu0 0
        %5570 = vmatmul.mubr.bf16.gmra.mrb[0].mxu0 %v5511
        %v5571 = vpop.f32.mrb[0].mxu0
        %v5572 = vadd.f32 %v5474, %v5571
        %v5573 = vpop.f32.mrb[0].mxu0
        %v5574 = vpop.f32.mrb[0].mxu0
        %v5575 = vadd.f32 %v5479, %v5574
        %v5576 = vpop.f32.mrb[0].mxu0
        %5577 = vdwg.mxu0
        %v5578 = vmax.f32 %v5548, 0.0
        %v5579 = vmax.f32 %v5551, 0.0
        %v5580 = vmax.f32 %v5556, 0.0
        %v5581 = vmax.f32 %v5559, 0.0
        %v5582 = vmax.f32 %v5564, 0.0
        %v5583 = vmax.f32 %v5567, 0.0
        %v5584 = vmax.f32 %v5572, 0.0
        %v5585 = vmax.f32 %v5575, 0.0
        %v5586 = vadd.f32 %v4823, %v5578
        %v5587 = vadd.f32 %v4824, %v5579
        %v5588 = vadd.f32 %v4825, %v5580
        %v5589 = vadd.f32 %v4826, %v5581
        %v5590 = vadd.f32 %v4827, %v5582
        %v5591 = vadd.f32 %v4828, %v5583
        %v5592 = vadd.f32 %v4829, %v5584
        %v5593 = vadd.f32 %v4830, %v5585
        %5594 = vst [vmem:[%s4831 + $0x40] sm:$0xff] %v5586
        %5595 = vst [vmem:[%s4831 + $0x48] sm:$0xff] %v5587
        %5596 = vst [vmem:[%s4831 + $0x50] sm:$0xff] %v5588
        %5597 = vst [vmem:[%s4831 + $0x58] sm:$0xff] %v5589
        %5598 = vst [vmem:[%s4831 + $0x60] sm:$0xff] %v5590
        %5599 = vst [vmem:[%s4831 + $0x68] sm:$0xff] %v5591
        %5600 = vst [vmem:[%s4831 + $0x70] sm:$0xff] %v5592
        %5601 = vst [vmem:[%s4831 + $0x78] sm:$0xff] %v5593
        %v5602 = vpack.c.bf16 %v5587, %v5586
        %v5603 = vpack.c.bf16 %v5589, %v5588
        %v5604 = vpack.c.bf16 %v5591, %v5590
        %v5605 = vpack.c.bf16 %v5593, %v5592
        %v5606 = vld [vmem:[%s2210] sm:$0xf]
        %v5607 = vld [vmem:[%s2210 + $0x4] sm:$0xf]
        %v5608 = vld [vmem:[%s2210 + $0x8] sm:$0xf]
        %v5609 = vld [vmem:[%s2210 + $0xc] sm:$0xf]
        %v5610 = vld [vmem:[%s2210 + $0x10] sm:$0xf]
        %v5611 = vld [vmem:[%s2210 + $0x14] sm:$0xf]
        %v5612 = vld [vmem:[%s2210 + $0x18] sm:$0xf]
        %v5613 = vld [vmem:[%s2210 + $0x1c] sm:$0xf]
        %v5614 = vld [vmem:[%s2210 + $0x20] sm:$0xf]
        %v5615 = vld [vmem:[%s2210 + $0x24] sm:$0xf]
        %v5626 = vunpack.c.l.b16 %v5606
        %v5627 = vunpack.c.l.b16 %v5607
        %v5628 = vunpack.c.l.b16 %v5608
        %v5629 = vunpack.c.l.b16 %v5609
        %v5630 = vunpack.c.l.b16 %v5610
        %v5631 = vunpack.c.l.b16 %v5611
        %v5632 = vunpack.c.l.b16 %v5612
        %v5633 = vunpack.c.l.b16 %v5613
        %v5634 = vunpack.c.l.b16 %v5614
        %v5635 = vunpack.c.l.b16 %v5615
        %v5636 = vpack.c.b16 %v5627, %v5626
        %v5637 = vpack.c.b16 %v5629, %v5628
        %v5638 = vpack.c.b16 %v5631, %v5630
        %v5639 = vpack.c.b16 %v5633, %v5632
        %v5640 = vpack.c.b16 %v5635, %v5634
        %v5642 = vsel %vm426, %v5636, 0
        %v5645 = vsel %vm426, %v5637, 0
        %v5648 = vsel %vm426, %v5638, 0
        %v5651 = vsel %vm426, %v5639, 0
        %v5654 = vsel %vm426, %v5640, 0
        %5656 = vmatprep.subr.bf16.mxu0 0
        %5657 = vmatpush1.bf16.msra.mxu0 %v5602
        %5658 = vmatprep.subr.bf16.mxu0 0
        %5659 = vmatpush1.bf16.msra.mxu0 %v5603
        %5660 = vmatprep.subr.bf16.mxu0 0
        %5661 = vmatpush1.bf16.msra.mxu0 %v5604
        %5662 = vmatprep.subr.bf16.mxu0 0
        %5663 = vmatpush1.bf16.msra.mxu0 %v5605
        %5664 = vmatprep.subr.bf16.mxu0 0
        %5665 = vmatpush1.bf16.msra.mxu0 0
        %5666 = vmatprep.subr.bf16.mxu0 0
        %5667 = vmatpush1.bf16.msra.mxu0 0
        %5668 = vmatprep.subr.bf16.mxu0 0
        %5669 = vmatpush1.bf16.msra.mxu0 0
        %5670 = vmatprep.subr.bf16.mxu0 0
        %5671 = vmatpush1.bf16.msra.mxu0 0
        %5672 = vmatprep.subr.bf16.mxu0 0
        %5673 = vmatpush1.bf16.msra.mxu0 0
        %5674 = vmatprep.subr.bf16.mxu0 0
        %5675 = vmatpush1.bf16.msra.mxu0 0
        %5676 = vmatprep.subr.bf16.mxu0 0
        %5677 = vmatpush1.bf16.msra.mxu0 0
        %5678 = vmatprep.subr.bf16.mxu0 0
        %5679 = vmatpush1.bf16.msra.mxu0 0
        %5680 = vmatprep.subr.bf16.mxu0 0
        %5681 = vmatpush1.bf16.msra.mxu0 0
        %5682 = vmatprep.subr.bf16.mxu0 0
        %5683 = vmatpush1.bf16.msra.mxu0 0
        %5684 = vmatprep.subr.bf16.mxu0 0
        %5685 = vmatpush1.bf16.msra.mxu0 0
        %5686 = vmatprep.subr.bf16.mxu0 0
        %5687 = vmatpush1.bf16.msra.mxu0 0
        %5688 = vmatprep.mubr.bf16.mxu0 0
        %5689 = vmatmul.mubr.bf16.gmra.mrb[0].mxu0 %v5642
        %v5690 = vpop.f32.mrb[0].mxu0
        %v5691 = vadd.f32 0.0, %v5690
        %v5692 = vpop.f32.mrb[0].mxu0
        %v5693 = vpop.f32.mrb[0].mxu0
        %v5694 = vadd.f32 0.0, %v5693
        %v5695 = vpop.f32.mrb[0].mxu0
        %5696 = vmatprep.mubr.bf16.mxu0 0
        %5697 = vmatmul.mubr.bf16.gmra.mrb[0].mxu0 %v5645
        %v5698 = vpop.f32.mrb[0].mxu0
        %v5699 = vadd.f32 0.0, %v5698
        %v5700 = vpop.f32.mrb[0].mxu0
        %v5701 = vpop.f32.mrb[0].mxu0
        %v5702 = vadd.f32 0.0, %v5701
        %v5703 = vpop.f32.mrb[0].mxu0
        %5704 = vmatprep.mubr.bf16.mxu0 0
        %5705 = vmatmul.mubr.bf16.gmra.mrb[0].mxu0 %v5648
        %v5706 = vpop.f32.mrb[0].mxu0
        %v5707 = vadd.f32 0.0, %v5706
        %v5708 = vpop.f32.mrb[0].mxu0
        %v5709 = vpop.f32.mrb[0].mxu0
        %v5710 = vadd.f32 0.0, %v5709
        %v5711 = vpop.f32.mrb[0].mxu0
        %5712 = vmatprep.mubr.bf16.mxu0 0
        %5713 = vmatmul.mubr.bf16.gmra.mrb[0].mxu0 %v5651
        %v5714 = vpop.f32.mrb[0].mxu0
        %v5715 = vadd.f32 0.0, %v5714
        %v5716 = vpop.f32.mrb[0].mxu0
        %v5717 = vpop.f32.mrb[0].mxu0
        %v5718 = vadd.f32 0.0, %v5717
        %v5719 = vpop.f32.mrb[0].mxu0
        %5720 = vmatprep.mubr.bf16.mxu0 0
        %5721 = vmatmul.mubr.bf16.gmra.mrb[0].mxu0 %v5654
        %v5722 = vpop.f32.mrb[0].mxu0
        %v5723 = vadd.f32 0.0, %v5722
        %v5724 = vpop.f32.mrb[0].mxu0
        %v5725 = vpop.f32.mrb[0].mxu0
        %v5726 = vadd.f32 0.0, %v5725
        %v5727 = vpop.f32.mrb[0].mxu0
        %5728 = vdwg.mxu0
        %v5729 = vld [vmem:[%s2334] sm:$0xff]
        %v5730 = vld [vmem:[%s2334 + $0x8] sm:$0xff]
        %v5731 = vld [vmem:[%s2334 + $0x10] sm:$0xff]
        %v5732 = vld [vmem:[%s2334 + $0x18] sm:$0xff]
        %v5733 = vld [vmem:[%s2334 + $0x20] sm:$0xff]
        %v5734 = vld [vmem:[%s2334 + $0x28] sm:$0xff]
        %v5735 = vld [vmem:[%s2334 + $0x30] sm:$0xff]
        %v5736 = vld [vmem:[%s2334 + $0x38] sm:$0xff]
        %5738 = vset.pattern.permute.xlu0 0
        %5739 = vperm.xlu0 %5738, %v5729
        %v5740 = vpop.permute.xlu0 %5739
        %5743 = vset.pattern.permute.xlu0 0
        %5744 = vperm.xlu0 %5743, %v5730
        %v5745 = vpop.permute.xlu0 %5744
        %5748 = vset.pattern.permute.xlu0 0
        %5749 = vperm.xlu0 %5748, %v5731
        %v5750 = vpop.permute.xlu0 %5749
        %5753 = vset.pattern.permute.xlu0 0
        %5754 = vperm.xlu0 %5753, %v5732
        %v5755 = vpop.permute.xlu0 %5754
        %5758 = vset.pattern.permute.xlu0 0
        %5759 = vperm.xlu0 %5758, %v5733
        %v5760 = vpop.permute.xlu0 %5759
        %5763 = vset.pattern.permute.xlu0 0
        %5764 = vperm.xlu0 %5763, %v5734
        %v5765 = vpop.permute.xlu0 %5764
        %5768 = vset.pattern.permute.xlu0 0
        %5769 = vperm.xlu0 %5768, %v5735
        %v5770 = vpop.permute.xlu0 %5769
        %5773 = vset.pattern.permute.xlu0 0
        %5774 = vperm.xlu0 %5773, %v5736
        %v5775 = vpop.permute.xlu0 %5774
        %v5777 = vadd.f32 %v5699, %v5740
        %v5778 = vadd.f32 %v5702, %v5745
        %v5779 = vadd.f32 %v5707, %v5750
        %v5780 = vadd.f32 %v5710, %v5755
        %v5781 = vadd.f32 %v5715, %v5760
        %v5782 = vadd.f32 %v5718, %v5765
        %v5783 = vadd.f32 %v5723, %v5770
        %v5784 = vadd.f32 %v5726, %v5775
        %v5785 = vpack.c.bf16 %v5694, %v5691
        %5786 = vxpose.xlu0.c.b16.start [1/8] %v5785, 128
        %5787 = vxpose.xlu0.c.b16.cont [2/8] 0, 128
        %5788 = vxpose.xlu0.c.b16.cont [3/8] 0, 128
        %5789 = vxpose.xlu0.c.b16.cont [4/8] 0, 128
        %5790 = vxpose.xlu0.c.b16.cont [5/8] 0, 128
        %5791 = vxpose.xlu0.c.b16.cont [6/8] 0, 128
        %5792 = vxpose.xlu0.c.b16.cont [7/8] 0, 128
        %5793 = vxpose.xlu0.c.b16.end [8/8] 0, 128
        %v5794 = vpop.trf.xlu0
        %v5795 = vpop.trf.xlu0
        %v5796 = vpop.trf.xlu0
        %v5797 = vpop.trf.xlu0
        %v5798 = vpop.trf.xlu0
        %v5799 = vpop.trf.xlu0
        %v5800 = vpop.trf.xlu0
        %v5801 = vpop.trf.xlu0
        %v5803 = vsel %vm877, %v5794, 0
        %v5806 = vsel %vm877, %v5795, 0
        %v5809 = vsel %vm877, %v5796, 0
        %v5812 = vsel %vm877, %v5797, 0
        %v5815 = vsel %vm877, %v5798, 0
        %v5818 = vsel %vm877, %v5799, 0
        %v5821 = vsel %vm877, %v5800, 0
        %v5824 = vsel %vm877, %v5801, 0
        %5826 = vmatprep.subr.bf16.mxu0 0
        %5827 = vmatpush1.bf16.msra.mxu0 %v5785
        %5828 = vmatprep.subr.bf16.mxu0 0
        %5829 = vmatpush1.bf16.msra.mxu0 0
        %5830 = vmatprep.subr.bf16.mxu0 0
        %5831 = vmatpush1.bf16.msra.mxu0 0
        %5832 = vmatprep.subr.bf16.mxu0 0
        %5833 = vmatpush1.bf16.msra.mxu0 0
        %5834 = vmatprep.subr.bf16.mxu0 0
        %5835 = vmatpush1.bf16.msra.mxu0 0
        %5836 = vmatprep.subr.bf16.mxu0 0
        %5837 = vmatpush1.bf16.msra.mxu0 0
        %5838 = vmatprep.subr.bf16.mxu0 0
        %5839 = vmatpush1.bf16.msra.mxu0 0
        %5840 = vmatprep.subr.bf16.mxu0 0
        %5841 = vmatpush1.bf16.msra.mxu0 0
        %5842 = vmatprep.subr.bf16.mxu0 0
        %5843 = vmatpush1.bf16.msra.mxu0 0
        %5844 = vmatprep.subr.bf16.mxu0 0
        %5845 = vmatpush1.bf16.msra.mxu0 0
        %5846 = vmatprep.subr.bf16.mxu0 0
        %5847 = vmatpush1.bf16.msra.mxu0 0
        %5848 = vmatprep.subr.bf16.mxu0 0
        %5849 = vmatpush1.bf16.msra.mxu0 0
        %5850 = vmatprep.subr.bf16.mxu0 0
        %5851 = vmatpush1.bf16.msra.mxu0 0
        %5852 = vmatprep.subr.bf16.mxu0 0
        %5853 = vmatpush1.bf16.msra.mxu0 0
        %5854 = vmatprep.subr.bf16.mxu0 0
        %5855 = vmatpush1.bf16.msra.mxu0 0
        %5856 = vmatprep.subr.bf16.mxu0 0
        %5857 = vmatpush1.bf16.msra.mxu0 0
        %5858 = vmatprep.mubr.bf16.mxu0 0
        %5859 = vmatmul.mubr.bf16.gmra.mrb[0].mxu0 %v5803
        %v5860 = vpop.f32.mrb[0].mxu0
        %v5861 = vadd.f32 0.0, %v5860
        %v5862 = vpop.f32.mrb[0].mxu0
        %v5863 = vpop.f32.mrb[0].mxu0
        %v5864 = vadd.f32 0.0, %v5863
        %v5865 = vpop.f32.mrb[0].mxu0
        %5866 = vmatprep.mubr.bf16.mxu0 0
        %5867 = vmatmul.mubr.bf16.gmra.mrb[0].mxu0 %v5806
        %v5868 = vpop.f32.mrb[0].mxu0
        %v5869 = vadd.f32 0.0, %v5868
        %v5870 = vpop.f32.mrb[0].mxu0
        %v5871 = vpop.f32.mrb[0].mxu0
        %v5872 = vadd.f32 0.0, %v5871
        %v5873 = vpop.f32.mrb[0].mxu0
        %5874 = vmatprep.mubr.bf16.mxu0 0
        %5875 = vmatmul.mubr.bf16.gmra.mrb[0].mxu0 %v5809
        %v5876 = vpop.f32.mrb[0].mxu0
        %v5877 = vadd.f32 0.0, %v5876
        %v5878 = vpop.f32.mrb[0].mxu0
        %v5879 = vpop.f32.mrb[0].mxu0
        %v5880 = vadd.f32 0.0, %v5879
        %v5881 = vpop.f32.mrb[0].mxu0
        %5882 = vmatprep.mubr.bf16.mxu0 0
        %5883 = vmatmul.mubr.bf16.gmra.mrb[0].mxu0 %v5812
        %v5884 = vpop.f32.mrb[0].mxu0
        %v5885 = vadd.f32 0.0, %v5884
        %v5886 = vpop.f32.mrb[0].mxu0
        %v5887 = vpop.f32.mrb[0].mxu0
        %v5888 = vadd.f32 0.0, %v5887
        %v5889 = vpop.f32.mrb[0].mxu0
        %5890 = vmatprep.mubr.bf16.mxu0 0
        %5891 = vmatmul.mubr.bf16.gmra.mrb[0].mxu0 %v5815
        %v5892 = vpop.f32.mrb[0].mxu0
        %v5893 = vadd.f32 0.0, %v5892
        %v5894 = vpop.f32.mrb[0].mxu0
        %v5895 = vpop.f32.mrb[0].mxu0
        %v5896 = vadd.f32 0.0, %v5895
        %v5897 = vpop.f32.mrb[0].mxu0
        %5898 = vmatprep.mubr.bf16.mxu0 0
        %5899 = vmatmul.mubr.bf16.gmra.mrb[0].mxu0 %v5818
        %v5900 = vpop.f32.mrb[0].mxu0
        %v5901 = vadd.f32 0.0, %v5900
        %v5902 = vpop.f32.mrb[0].mxu0
        %v5903 = vpop.f32.mrb[0].mxu0
        %v5904 = vadd.f32 0.0, %v5903
        %v5905 = vpop.f32.mrb[0].mxu0
        %5906 = vmatprep.mubr.bf16.mxu0 0
        %5907 = vmatmul.mubr.bf16.gmra.mrb[0].mxu0 %v5821
        %v5908 = vpop.f32.mrb[0].mxu0
        %v5909 = vadd.f32 0.0, %v5908
        %v5910 = vpop.f32.mrb[0].mxu0
        %v5911 = vpop.f32.mrb[0].mxu0
        %v5912 = vadd.f32 0.0, %v5911
        %v5913 = vpop.f32.mrb[0].mxu0
        %5914 = vmatprep.mubr.bf16.mxu0 0
        %5915 = vmatmul.mubr.bf16.gmra.mrb[0].mxu0 %v5824
        %v5916 = vpop.f32.mrb[0].mxu0
        %v5917 = vadd.f32 0.0, %v5916
        %v5918 = vpop.f32.mrb[0].mxu0
        %v5919 = vpop.f32.mrb[0].mxu0
        %v5920 = vadd.f32 0.0, %v5919
        %v5921 = vpop.f32.mrb[0].mxu0
        %5922 = vdwg.mxu0
        %5923 = vmax.xlane.f32.xlu0 %v5861
        %v5924 = vpop.xlane.xlu0 %5923
        %5925 = vmax.xlane.f32.xlu0 %v5864
        %v5926 = vpop.xlane.xlu0 %5925
        %5927 = vmax.xlane.f32.xlu0 %v5869
        %v5928 = vpop.xlane.xlu0 %5927
        %5929 = vmax.xlane.f32.xlu0 %v5872
        %v5930 = vpop.xlane.xlu0 %5929
        %5931 = vmax.xlane.f32.xlu0 %v5877
        %v5932 = vpop.xlane.xlu0 %5931
        %5933 = vmax.xlane.f32.xlu0 %v5880
        %v5934 = vpop.xlane.xlu0 %5933
        %5935 = vmax.xlane.f32.xlu0 %v5885
        %v5936 = vpop.xlane.xlu0 %5935
        %5937 = vmax.xlane.f32.xlu0 %v5888
        %v5938 = vpop.xlane.xlu0 %5937
        %5939 = vmax.xlane.f32.xlu0 %v5893
        %v5940 = vpop.xlane.xlu0 %5939
        %5941 = vmax.xlane.f32.xlu0 %v5896
        %v5942 = vpop.xlane.xlu0 %5941
        %5943 = vmax.xlane.f32.xlu0 %v5901
        %v5944 = vpop.xlane.xlu0 %5943
        %5945 = vmax.xlane.f32.xlu0 %v5904
        %v5946 = vpop.xlane.xlu0 %5945
        %5947 = vmax.xlane.f32.xlu0 %v5909
        %v5948 = vpop.xlane.xlu0 %5947
        %5949 = vmax.xlane.f32.xlu0 %v5912
        %v5950 = vpop.xlane.xlu0 %5949
        %5951 = vmax.xlane.f32.xlu0 %v5917
        %v5952 = vpop.xlane.xlu0 %5951
        %5953 = vmax.xlane.f32.xlu0 %v5920
        %v5954 = vpop.xlane.xlu0 %5953
        %v5955 = vsub.f32 %v5861, %v5924
        %v5956 = vsub.f32 %v5864, %v5926
        %v5957 = vsub.f32 %v5869, %v5928
        %v5958 = vsub.f32 %v5872, %v5930
        %v5959 = vsub.f32 %v5877, %v5932
        %v5960 = vsub.f32 %v5880, %v5934
        %v5961 = vsub.f32 %v5885, %v5936
        %v5962 = vsub.f32 %v5888, %v5938
        %v5963 = vsub.f32 %v5893, %v5940
        %v5964 = vsub.f32 %v5896, %v5942
        %v5965 = vsub.f32 %v5901, %v5944
        %v5966 = vsub.f32 %v5904, %v5946
        %v5967 = vsub.f32 %v5909, %v5948
        %v5968 = vsub.f32 %v5912, %v5950
        %v5969 = vsub.f32 %v5917, %v5952
        %v5970 = vsub.f32 %v5920, %v5954
        %v5971 = vmul.f32 %v5955, 1.442695
        %v5972 = vpow.pop %v5971
        %v5973 = vmul.f32 %v5956, 1.442695
        %v5974 = vpow.pop %v5973
        %v5975 = vmul.f32 %v5957, 1.442695
        %v5976 = vpow.pop %v5975
        %v5977 = vmul.f32 %v5958, 1.442695
        %v5978 = vpow.pop %v5977
        %v5979 = vmul.f32 %v5959, 1.442695
        %v5980 = vpow.pop %v5979
        %v5981 = vmul.f32 %v5960, 1.442695
        %v5982 = vpow.pop %v5981
        %v5983 = vmul.f32 %v5961, 1.442695
        %v5984 = vpow.pop %v5983
        %v5985 = vmul.f32 %v5962, 1.442695
        %v5986 = vpow.pop %v5985
        %v5987 = vmul.f32 %v5963, 1.442695
        %v5988 = vpow.pop %v5987
        %v5989 = vmul.f32 %v5964, 1.442695
        %v5990 = vpow.pop %v5989
        %v5991 = vmul.f32 %v5965, 1.442695
        %v5992 = vpow.pop %v5991
        %v5993 = vmul.f32 %v5966, 1.442695
        %v5994 = vpow.pop %v5993
        %v5995 = vmul.f32 %v5967, 1.442695
        %v5996 = vpow.pop %v5995
        %v5997 = vmul.f32 %v5968, 1.442695
        %v5998 = vpow.pop %v5997
        %v5999 = vmul.f32 %v5969, 1.442695
        %v6000 = vpow.pop %v5999
        %v6001 = vmul.f32 %v5970, 1.442695
        %v6002 = vpow.pop %v6001
        %6003 = vadd.xlane.f32.xlu0 %v5972
        %v6004 = vpop.xlane.xlu0 %6003
        %6005 = vadd.xlane.f32.xlu0 %v5974
        %v6006 = vpop.xlane.xlu0 %6005
        %6007 = vadd.xlane.f32.xlu0 %v5976
        %v6008 = vpop.xlane.xlu0 %6007
        %6009 = vadd.xlane.f32.xlu0 %v5978
        %v6010 = vpop.xlane.xlu0 %6009
        %6011 = vadd.xlane.f32.xlu0 %v5980
        %v6012 = vpop.xlane.xlu0 %6011
        %6013 = vadd.xlane.f32.xlu0 %v5982
        %v6014 = vpop.xlane.xlu0 %6013
        %6015 = vadd.xlane.f32.xlu0 %v5984
        %v6016 = vpop.xlane.xlu0 %6015
        %6017 = vadd.xlane.f32.xlu0 %v5986
        %v6018 = vpop.xlane.xlu0 %6017
        %6019 = vadd.xlane.f32.xlu0 %v5988
        %v6020 = vpop.xlane.xlu0 %6019
        %6021 = vadd.xlane.f32.xlu0 %v5990
        %v6022 = vpop.xlane.xlu0 %6021
        %6023 = vadd.xlane.f32.xlu0 %v5992
        %v6024 = vpop.xlane.xlu0 %6023
        %6025 = vadd.xlane.f32.xlu0 %v5994
        %v6026 = vpop.xlane.xlu0 %6025
        %6027 = vadd.xlane.f32.xlu0 %v5996
        %v6028 = vpop.xlane.xlu0 %6027
        %6029 = vadd.xlane.f32.xlu0 %v5998
        %v6030 = vpop.xlane.xlu0 %6029
        %6031 = vadd.xlane.f32.xlu0 %v6000
        %v6032 = vpop.xlane.xlu0 %6031
        %6033 = vadd.xlane.f32.xlu0 %v6002
        %v6034 = vpop.xlane.xlu0 %6033
        %v6035 = vrcp.pop %v6004
        %v6036 = vrcp.pop %v6006
        %v6037 = vrcp.pop %v6008
        %v6038 = vrcp.pop %v6010
        %v6039 = vrcp.pop %v6012
        %v6040 = vrcp.pop %v6014
        %v6041 = vrcp.pop %v6016
        %v6042 = vrcp.pop %v6018
        %v6043 = vrcp.pop %v6020
        %v6044 = vrcp.pop %v6022
        %v6045 = vrcp.pop %v6024
        %v6046 = vrcp.pop %v6026
        %v6047 = vrcp.pop %v6028
        %v6048 = vrcp.pop %v6030
        %v6049 = vrcp.pop %v6032
        %v6050 = vrcp.pop %v6034
        %v6051 = vmul.f32 %v5972, %v6035
        %v6052 = vmul.f32 %v5974, %v6036
        %v6053 = vmul.f32 %v5976, %v6037
        %v6054 = vmul.f32 %v5978, %v6038
        %v6055 = vmul.f32 %v5980, %v6039
        %v6056 = vmul.f32 %v5982, %v6040
        %v6057 = vmul.f32 %v5984, %v6041
        %v6058 = vmul.f32 %v5986, %v6042
        %v6059 = vmul.f32 %v5988, %v6043
        %v6060 = vmul.f32 %v5990, %v6044
        %v6061 = vmul.f32 %v5992, %v6045
        %v6062 = vmul.f32 %v5994, %v6046
        %v6063 = vmul.f32 %v5996, %v6047
        %v6064 = vmul.f32 %v5998, %v6048
        %v6065 = vmul.f32 %v6000, %v6049
        %v6066 = vmul.f32 %v6002, %v6050
        %v6067 = vadd.f32 %v6051, %v6052
        %v6068 = vadd.f32 %v6067, %v6053
        %v6069 = vadd.f32 %v6068, %v6054
        %v6070 = vadd.f32 %v6069, %v6055
        %v6071 = vadd.f32 %v6070, %v6056
        %v6072 = vadd.f32 %v6071, %v6057
        %v6073 = vadd.f32 %v6072, %v6058
        %v6074 = vadd.f32 %v6073, %v6059
        %v6075 = vadd.f32 %v6074, %v6060
        %v6076 = vadd.f32 %v6075, %v6061
        %v6077 = vadd.f32 %v6076, %v6062
        %v6078 = vadd.f32 %v6077, %v6063
        %v6079 = vadd.f32 %v6078, %v6064
        %v6080 = vadd.f32 %v6079, %v6065
        %v6081 = vadd.f32 %v6080, %v6066
        %v6082 = vrot.slane %v6081, 4
        %v6083 = vadd.f32 %v6081, %v6082
        %v6084 = vrot.slane %v6083, 2
        %v6085 = vadd.f32 %v6083, %v6084
        %v6086 = vrot.slane %v6085, 1
        %v6087 = vadd.f32 %v6085, %v6086
        %v6088 = vadd.f32 %v6087, 1e-09
        %v6089 = vrcp.pop %v6088
        %v6090 = vpack.c.bf16 %v5778, %v5777
        %v6091 = vpack.c.bf16 %v5780, %v5779
        %v6092 = vpack.c.bf16 %v5782, %v5781
        %v6093 = vpack.c.bf16 %v5784, %v5783
        %v6094 = vpack.c.bf16 %v6052, %v6051
        %v6095 = vpack.c.bf16 %v6054, %v6053
        %v6096 = vpack.c.bf16 %v6056, %v6055
        %v6097 = vpack.c.bf16 %v6058, %v6057
        %v6098 = vpack.c.bf16 %v6060, %v6059
        %v6099 = vpack.c.bf16 %v6062, %v6061
        %v6100 = vpack.c.bf16 %v6064, %v6063
        %v6101 = vpack.c.bf16 %v6066, %v6065
        %6102 = vmatprep.subr.bf16.mxu0 0
        %6103 = vmatpush1.bf16.msra.mxu0 %v6094
        %6104 = vmatprep.subr.bf16.mxu0 0
        %6105 = vmatpush1.bf16.msra.mxu0 %v6095
        %6106 = vmatprep.subr.bf16.mxu0 0
        %6107 = vmatpush1.bf16.msra.mxu0 %v6096
        %6108 = vmatprep.subr.bf16.mxu0 0
        %6109 = vmatpush1.bf16.msra.mxu0 %v6097
        %6110 = vmatprep.subr.bf16.mxu0 0
        %6111 = vmatpush1.bf16.msra.mxu0 %v6098
        %6112 = vmatprep.subr.bf16.mxu0 0
        %6113 = vmatpush1.bf16.msra.mxu0 %v6099
        %6114 = vmatprep.subr.bf16.mxu0 0
        %6115 = vmatpush1.bf16.msra.mxu0 %v6100
        %6116 = vmatprep.subr.bf16.mxu0 0
        %6117 = vmatpush1.bf16.msra.mxu0 %v6101
        %6118 = vmatprep.subr.bf16.mxu0 0
        %6119 = vmatpush1.bf16.msra.mxu0 0
        %6120 = vmatprep.subr.bf16.mxu0 0
        %6121 = vmatpush1.bf16.msra.mxu0 0
        %6122 = vmatprep.subr.bf16.mxu0 0
        %6123 = vmatpush1.bf16.msra.mxu0 0
        %6124 = vmatprep.subr.bf16.mxu0 0
        %6125 = vmatpush1.bf16.msra.mxu0 0
        %6126 = vmatprep.subr.bf16.mxu0 0
        %6127 = vmatpush1.bf16.msra.mxu0 0
        %6128 = vmatprep.subr.bf16.mxu0 0
        %6129 = vmatpush1.bf16.msra.mxu0 0
        %6130 = vmatprep.subr.bf16.mxu0 0
        %6131 = vmatpush1.bf16.msra.mxu0 0
        %6132 = vmatprep.subr.bf16.mxu0 0
        %6133 = vmatpush1.bf16.msra.mxu0 0
        %6134 = vmatprep.mubr.bf16.mxu0 0
        %6135 = vmatmul.mubr.bf16.gmra.mrb[0].mxu0 %v6090
        %v6136 = vpop.f32.mrb[0].mxu0
        %v6137 = vadd.f32 0.0, %v6136
        %v6138 = vpop.f32.mrb[0].mxu0
        %v6139 = vpop.f32.mrb[0].mxu0
        %v6140 = vadd.f32 0.0, %v6139
        %v6141 = vpop.f32.mrb[0].mxu0
        %6142 = vmatprep.mubr.bf16.mxu0 0
        %6143 = vmatmul.mubr.bf16.gmra.mrb[0].mxu0 %v6091
        %v6144 = vpop.f32.mrb[0].mxu0
        %v6145 = vadd.f32 0.0, %v6144
        %v6146 = vpop.f32.mrb[0].mxu0
        %v6147 = vpop.f32.mrb[0].mxu0
        %v6148 = vadd.f32 0.0, %v6147
        %v6149 = vpop.f32.mrb[0].mxu0
        %6150 = vmatprep.mubr.bf16.mxu0 0
        %6151 = vmatmul.mubr.bf16.gmra.mrb[0].mxu0 %v6092
        %v6152 = vpop.f32.mrb[0].mxu0
        %v6153 = vadd.f32 0.0, %v6152
        %v6154 = vpop.f32.mrb[0].mxu0
        %v6155 = vpop.f32.mrb[0].mxu0
        %v6156 = vadd.f32 0.0, %v6155
        %v6157 = vpop.f32.mrb[0].mxu0
        %6158 = vmatprep.mubr.bf16.mxu0 0
        %6159 = vmatmul.mubr.bf16.gmra.mrb[0].mxu0 %v6093
        %v6160 = vpop.f32.mrb[0].mxu0
        %v6161 = vadd.f32 0.0, %v6160
        %v6162 = vpop.f32.mrb[0].mxu0
        %v6163 = vpop.f32.mrb[0].mxu0
        %v6164 = vadd.f32 0.0, %v6163
        %v6165 = vpop.f32.mrb[0].mxu0
        %6166 = vdwg.mxu0
        %v6167 = vmul.f32 %v6137, %v6089
        %v6168 = vmul.f32 %v6140, %v6089
        %v6169 = vmul.f32 %v6145, %v6089
        %v6170 = vmul.f32 %v6148, %v6089
        %v6171 = vmul.f32 %v6153, %v6089
        %v6172 = vmul.f32 %v6156, %v6089
        %v6173 = vmul.f32 %v6161, %v6089
        %v6174 = vmul.f32 %v6164, %v6089
        %v6175 = vsub.f32 %v5586, %v6167
        %v6176 = vsub.f32 %v5587, %v6168
        %v6177 = vsub.f32 %v5588, %v6169
        %v6178 = vsub.f32 %v5589, %v6170
        %v6179 = vsub.f32 %v5590, %v6171
        %v6180 = vsub.f32 %v5591, %v6172
        %v6181 = vsub.f32 %v5592, %v6173
        %v6182 = vsub.f32 %v5593, %v6174
        %v6183 = vpack.c.bf16 %v6176, %v6175
        %v6184 = vpack.c.bf16 %v6178, %v6177
        %v6185 = vpack.c.bf16 %v6180, %v6179
        %v6186 = vpack.c.bf16 %v6182, %v6181
        %v6187 = vld [vmem:[%s2793] sm:$0xf]
        %v6188 = vld [vmem:[%s2793 + $0x4] sm:$0xf]
        %v6189 = vld [vmem:[%s2793 + $0x8] sm:$0xf]
        %v6190 = vld [vmem:[%s2793 + $0xc] sm:$0xf]
        %v6191 = vld [vmem:[%s2793 + $0x10] sm:$0xf]
        %v6192 = vld [vmem:[%s2793 + $0x14] sm:$0xf]
        %v6193 = vld [vmem:[%s2793 + $0x18] sm:$0xf]
        %v6194 = vld [vmem:[%s2793 + $0x1c] sm:$0xf]
        %v6195 = vld [vmem:[%s2802] sm:$0xff]
        %v6196 = vld [vmem:[%s2802 + $0x8] sm:$0xff]
        %v6197 = vld [vmem:[%s2802 + $0x10] sm:$0xff]
        %v6198 = vld [vmem:[%s2802 + $0x18] sm:$0xff]
        %v6199 = vld [vmem:[%s2802 + $0x20] sm:$0xff]
        %v6200 = vld [vmem:[%s2802 + $0x28] sm:$0xff]
        %v6201 = vld [vmem:[%s2802 + $0x30] sm:$0xff]
        %v6202 = vld [vmem:[%s2802 + $0x38] sm:$0xff]
        %6204 = vset.pattern.permute.xlu0 0
        %6205 = vperm.xlu0 %6204, %v6195
        %v6206 = vpop.permute.xlu0 %6205
        %6209 = vset.pattern.permute.xlu0 0
        %6210 = vperm.xlu0 %6209, %v6196
        %v6211 = vpop.permute.xlu0 %6210
        %6214 = vset.pattern.permute.xlu0 0
        %6215 = vperm.xlu0 %6214, %v6197
        %v6216 = vpop.permute.xlu0 %6215
        %6219 = vset.pattern.permute.xlu0 0
        %6220 = vperm.xlu0 %6219, %v6198
        %v6221 = vpop.permute.xlu0 %6220
        %6224 = vset.pattern.permute.xlu0 0
        %6225 = vperm.xlu0 %6224, %v6199
        %v6226 = vpop.permute.xlu0 %6225
        %6229 = vset.pattern.permute.xlu0 0
        %6230 = vperm.xlu0 %6229, %v6200
        %v6231 = vpop.permute.xlu0 %6230
        %6234 = vset.pattern.permute.xlu0 0
        %6235 = vperm.xlu0 %6234, %v6201
        %v6236 = vpop.permute.xlu0 %6235
        %6239 = vset.pattern.permute.xlu0 0
        %6240 = vperm.xlu0 %6239, %v6202
        %v6241 = vpop.permute.xlu0 %6240
        %v6251 = vunpack.c.l.b16 %v6187
        %v6252 = vunpack.c.l.b16 %v6188
        %v6253 = vunpack.c.l.b16 %v6189
        %v6254 = vunpack.c.l.b16 %v6190
        %v6255 = vunpack.c.l.b16 %v6191
        %v6256 = vunpack.c.l.b16 %v6192
        %v6257 = vunpack.c.l.b16 %v6193
        %v6258 = vunpack.c.l.b16 %v6194
        %v6259 = vpack.c.b16 %v6252, %v6251
        %v6260 = vpack.c.b16 %v6254, %v6253
        %v6261 = vpack.c.b16 %v6256, %v6255
        %v6262 = vpack.c.b16 %v6258, %v6257
        %v6264 = vsel %vm426, %v6259, 0
        %v6267 = vsel %vm426, %v6260, 0
        %v6270 = vsel %vm426, %v6261, 0
        %v6273 = vsel %vm426, %v6262, 0
        %6275 = vmatprep.subr.bf16.mxu0 0
        %6276 = vmatpush1.bf16.msra.mxu0 %v6183
        %6277 = vmatprep.subr.bf16.mxu0 0
        %6278 = vmatpush1.bf16.msra.mxu0 %v6184
        %6279 = vmatprep.subr.bf16.mxu0 0
        %6280 = vmatpush1.bf16.msra.mxu0 %v6185
        %6281 = vmatprep.subr.bf16.mxu0 0
        %6282 = vmatpush1.bf16.msra.mxu0 %v6186
        %6283 = vmatprep.subr.bf16.mxu0 0
        %6284 = vmatpush1.bf16.msra.mxu0 0
        %6285 = vmatprep.subr.bf16.mxu0 0
        %6286 = vmatpush1.bf16.msra.mxu0 0
        %6287 = vmatprep.subr.bf16.mxu0 0
        %6288 = vmatpush1.bf16.msra.mxu0 0
        %6289 = vmatprep.subr.bf16.mxu0 0
        %6290 = vmatpush1.bf16.msra.mxu0 0
        %6291 = vmatprep.subr.bf16.mxu0 0
        %6292 = vmatpush1.bf16.msra.mxu0 0
        %6293 = vmatprep.subr.bf16.mxu0 0
        %6294 = vmatpush1.bf16.msra.mxu0 0
        %6295 = vmatprep.subr.bf16.mxu0 0
        %6296 = vmatpush1.bf16.msra.mxu0 0
        %6297 = vmatprep.subr.bf16.mxu0 0
        %6298 = vmatpush1.bf16.msra.mxu0 0
        %6299 = vmatprep.subr.bf16.mxu0 0
        %6300 = vmatpush1.bf16.msra.mxu0 0
        %6301 = vmatprep.subr.bf16.mxu0 0
        %6302 = vmatpush1.bf16.msra.mxu0 0
        %6303 = vmatprep.subr.bf16.mxu0 0
        %6304 = vmatpush1.bf16.msra.mxu0 0
        %6305 = vmatprep.subr.bf16.mxu0 0
        %6306 = vmatpush1.bf16.msra.mxu0 0
        %6307 = vmatprep.mubr.bf16.mxu0 0
        %6308 = vmatmul.mubr.bf16.gmra.mrb[0].mxu0 %v6264
        %v6309 = vpop.f32.mrb[0].mxu0
        %v6310 = vadd.f32 %v6206, %v6309
        %v6311 = vpop.f32.mrb[0].mxu0
        %v6312 = vpop.f32.mrb[0].mxu0
        %v6313 = vadd.f32 %v6211, %v6312
        %v6314 = vpop.f32.mrb[0].mxu0
        %6315 = vmatprep.mubr.bf16.mxu0 0
        %6316 = vmatmul.mubr.bf16.gmra.mrb[0].mxu0 %v6267
        %v6317 = vpop.f32.mrb[0].mxu0
        %v6318 = vadd.f32 %v6216, %v6317
        %v6319 = vpop.f32.mrb[0].mxu0
        %v6320 = vpop.f32.mrb[0].mxu0
        %v6321 = vadd.f32 %v6221, %v6320
        %v6322 = vpop.f32.mrb[0].mxu0
        %6323 = vmatprep.mubr.bf16.mxu0 0
        %6324 = vmatmul.mubr.bf16.gmra.mrb[0].mxu0 %v6270
        %v6325 = vpop.f32.mrb[0].mxu0
        %v6326 = vadd.f32 %v6226, %v6325
        %v6327 = vpop.f32.mrb[0].mxu0
        %v6328 = vpop.f32.mrb[0].mxu0
        %v6329 = vadd.f32 %v6231, %v6328
        %v6330 = vpop.f32.mrb[0].mxu0
        %6331 = vmatprep.mubr.bf16.mxu0 0
        %6332 = vmatmul.mubr.bf16.gmra.mrb[0].mxu0 %v6273
        %v6333 = vpop.f32.mrb[0].mxu0
        %v6334 = vadd.f32 %v6236, %v6333
        %v6335 = vpop.f32.mrb[0].mxu0
        %v6336 = vpop.f32.mrb[0].mxu0
        %v6337 = vadd.f32 %v6241, %v6336
        %v6338 = vpop.f32.mrb[0].mxu0
        %6339 = vdwg.mxu0
        %v6340 = vmax.f32 %v6310, 0.0
        %v6341 = vmax.f32 %v6313, 0.0
        %v6342 = vmax.f32 %v6318, 0.0
        %v6343 = vmax.f32 %v6321, 0.0
        %v6344 = vmax.f32 %v6326, 0.0
        %v6345 = vmax.f32 %v6329, 0.0
        %v6346 = vmax.f32 %v6334, 0.0
        %v6347 = vmax.f32 %v6337, 0.0
        %v6348 = vadd.f32 %v5586, %v6340
        %v6349 = vadd.f32 %v5587, %v6341
        %v6350 = vadd.f32 %v5588, %v6342
        %v6351 = vadd.f32 %v5589, %v6343
        %v6352 = vadd.f32 %v5590, %v6344
        %v6353 = vadd.f32 %v5591, %v6345
        %v6354 = vadd.f32 %v5592, %v6346
        %v6355 = vadd.f32 %v5593, %v6347
        %6356 = vst [vmem:[%s4831 + $0x80] sm:$0xff] %v6348
        %6357 = vst [vmem:[%s4831 + $0x88] sm:$0xff] %v6349
        %6358 = vst [vmem:[%s4831 + $0x90] sm:$0xff] %v6350
        %6359 = vst [vmem:[%s4831 + $0x98] sm:$0xff] %v6351
        %6360 = vst [vmem:[%s4831 + $0xa0] sm:$0xff] %v6352
        %6361 = vst [vmem:[%s4831 + $0xa8] sm:$0xff] %v6353
        %6362 = vst [vmem:[%s4831 + $0xb0] sm:$0xff] %v6354
        %6363 = vst [vmem:[%s4831 + $0xb8] sm:$0xff] %v6355
        %v6364 = vpack.c.bf16 %v6349, %v6348
        %v6365 = vpack.c.bf16 %v6351, %v6350
        %v6366 = vpack.c.bf16 %v6353, %v6352
        %v6367 = vpack.c.bf16 %v6355, %v6354
        %v6368 = vld [vmem:[%s2976] sm:$0xf]
        %v6369 = vld [vmem:[%s2976 + $0x4] sm:$0xf]
        %v6370 = vld [vmem:[%s2976 + $0x8] sm:$0xf]
        %v6371 = vld [vmem:[%s2976 + $0xc] sm:$0xf]
        %v6372 = vld [vmem:[%s2976 + $0x10] sm:$0xf]
        %v6373 = vld [vmem:[%s2976 + $0x14] sm:$0xf]
        %v6374 = vld [vmem:[%s2976 + $0x18] sm:$0xf]
        %v6375 = vld [vmem:[%s2976 + $0x1c] sm:$0xf]
        %v6376 = vld [vmem:[%s2976 + $0x20] sm:$0xf]
        %v6377 = vld [vmem:[%s2976 + $0x24] sm:$0xf]
        %v6388 = vunpack.c.l.b16 %v6368
        %v6389 = vunpack.c.l.b16 %v6369
        %v6390 = vunpack.c.l.b16 %v6370
        %v6391 = vunpack.c.l.b16 %v6371
        %v6392 = vunpack.c.l.b16 %v6372
        %v6393 = vunpack.c.l.b16 %v6373
        %v6394 = vunpack.c.l.b16 %v6374
        %v6395 = vunpack.c.l.b16 %v6375
        %v6396 = vunpack.c.l.b16 %v6376
        %v6397 = vunpack.c.l.b16 %v6377
        %v6398 = vpack.c.b16 %v6389, %v6388
        %v6399 = vpack.c.b16 %v6391, %v6390
        %v6400 = vpack.c.b16 %v6393, %v6392
        %v6401 = vpack.c.b16 %v6395, %v6394
        %v6402 = vpack.c.b16 %v6397, %v6396
        %v6404 = vsel %vm426, %v6398, 0
        %v6407 = vsel %vm426, %v6399, 0
        %v6410 = vsel %vm426, %v6400, 0
        %v6413 = vsel %vm426, %v6401, 0
        %v6416 = vsel %vm426, %v6402, 0
        %6418 = vmatprep.subr.bf16.mxu0 0
        %6419 = vmatpush1.bf16.msra.mxu0 %v6364
        %6420 = vmatprep.subr.bf16.mxu0 0
        %6421 = vmatpush1.bf16.msra.mxu0 %v6365
        %6422 = vmatprep.subr.bf16.mxu0 0
        %6423 = vmatpush1.bf16.msra.mxu0 %v6366
        %6424 = vmatprep.subr.bf16.mxu0 0
        %6425 = vmatpush1.bf16.msra.mxu0 %v6367
        %6426 = vmatprep.subr.bf16.mxu0 0
        %6427 = vmatpush1.bf16.msra.mxu0 0
        %6428 = vmatprep.subr.bf16.mxu0 0
        %6429 = vmatpush1.bf16.msra.mxu0 0
        %6430 = vmatprep.subr.bf16.mxu0 0
        %6431 = vmatpush1.bf16.msra.mxu0 0
        %6432 = vmatprep.subr.bf16.mxu0 0
        %6433 = vmatpush1.bf16.msra.mxu0 0
        %6434 = vmatprep.subr.bf16.mxu0 0
        %6435 = vmatpush1.bf16.msra.mxu0 0
        %6436 = vmatprep.subr.bf16.mxu0 0
        %6437 = vmatpush1.bf16.msra.mxu0 0
        %6438 = vmatprep.subr.bf16.mxu0 0
        %6439 = vmatpush1.bf16.msra.mxu0 0
        %6440 = vmatprep.subr.bf16.mxu0 0
        %6441 = vmatpush1.bf16.msra.mxu0 0
        %6442 = vmatprep.subr.bf16.mxu0 0
        %6443 = vmatpush1.bf16.msra.mxu0 0
        %6444 = vmatprep.subr.bf16.mxu0 0
        %6445 = vmatpush1.bf16.msra.mxu0 0
        %6446 = vmatprep.subr.bf16.mxu0 0
        %6447 = vmatpush1.bf16.msra.mxu0 0
        %6448 = vmatprep.subr.bf16.mxu0 0
        %6449 = vmatpush1.bf16.msra.mxu0 0
        %6450 = vmatprep.mubr.bf16.mxu0 0
        %6451 = vmatmul.mubr.bf16.gmra.mrb[0].mxu0 %v6404
        %v6452 = vpop.f32.mrb[0].mxu0
        %v6453 = vadd.f32 0.0, %v6452
        %v6454 = vpop.f32.mrb[0].mxu0
        %v6455 = vpop.f32.mrb[0].mxu0
        %v6456 = vadd.f32 0.0, %v6455
        %v6457 = vpop.f32.mrb[0].mxu0
        %6458 = vmatprep.mubr.bf16.mxu0 0
        %6459 = vmatmul.mubr.bf16.gmra.mrb[0].mxu0 %v6407
        %v6460 = vpop.f32.mrb[0].mxu0
        %v6461 = vadd.f32 0.0, %v6460
        %v6462 = vpop.f32.mrb[0].mxu0
        %v6463 = vpop.f32.mrb[0].mxu0
        %v6464 = vadd.f32 0.0, %v6463
        %v6465 = vpop.f32.mrb[0].mxu0
        %6466 = vmatprep.mubr.bf16.mxu0 0
        %6467 = vmatmul.mubr.bf16.gmra.mrb[0].mxu0 %v6410
        %v6468 = vpop.f32.mrb[0].mxu0
        %v6469 = vadd.f32 0.0, %v6468
        %v6470 = vpop.f32.mrb[0].mxu0
        %v6471 = vpop.f32.mrb[0].mxu0
        %v6472 = vadd.f32 0.0, %v6471
        %v6473 = vpop.f32.mrb[0].mxu0
        %6474 = vmatprep.mubr.bf16.mxu0 0
        %6475 = vmatmul.mubr.bf16.gmra.mrb[0].mxu0 %v6413
        %v6476 = vpop.f32.mrb[0].mxu0
        %v6477 = vadd.f32 0.0, %v6476
        %v6478 = vpop.f32.mrb[0].mxu0
        %v6479 = vpop.f32.mrb[0].mxu0
        %v6480 = vadd.f32 0.0, %v6479
        %v6481 = vpop.f32.mrb[0].mxu0
        %6482 = vmatprep.mubr.bf16.mxu0 0
        %6483 = vmatmul.mubr.bf16.gmra.mrb[0].mxu0 %v6416
        %v6484 = vpop.f32.mrb[0].mxu0
        %v6485 = vadd.f32 0.0, %v6484
        %v6486 = vpop.f32.mrb[0].mxu0
        %v6487 = vpop.f32.mrb[0].mxu0
        %v6488 = vadd.f32 0.0, %v6487
        %v6489 = vpop.f32.mrb[0].mxu0
        %6490 = vdwg.mxu0
        %v6491 = vld [vmem:[%s3100] sm:$0xff]
        %v6492 = vld [vmem:[%s3100 + $0x8] sm:$0xff]
        %v6493 = vld [vmem:[%s3100 + $0x10] sm:$0xff]
        %v6494 = vld [vmem:[%s3100 + $0x18] sm:$0xff]
        %v6495 = vld [vmem:[%s3100 + $0x20] sm:$0xff]
        %v6496 = vld [vmem:[%s3100 + $0x28] sm:$0xff]
        %v6497 = vld [vmem:[%s3100 + $0x30] sm:$0xff]
        %v6498 = vld [vmem:[%s3100 + $0x38] sm:$0xff]
        %6500 = vset.pattern.permute.xlu0 0
        %6501 = vperm.xlu0 %6500, %v6491
        %v6502 = vpop.permute.xlu0 %6501
        %6505 = vset.pattern.permute.xlu0 0
        %6506 = vperm.xlu0 %6505, %v6492
        %v6507 = vpop.permute.xlu0 %6506
        %6510 = vset.pattern.permute.xlu0 0
        %6511 = vperm.xlu0 %6510, %v6493
        %v6512 = vpop.permute.xlu0 %6511
        %6515 = vset.pattern.permute.xlu0 0
        %6516 = vperm.xlu0 %6515, %v6494
        %v6517 = vpop.permute.xlu0 %6516
        %6520 = vset.pattern.permute.xlu0 0
        %6521 = vperm.xlu0 %6520, %v6495
        %v6522 = vpop.permute.xlu0 %6521
        %6525 = vset.pattern.permute.xlu0 0
        %6526 = vperm.xlu0 %6525, %v6496
        %v6527 = vpop.permute.xlu0 %6526
        %6530 = vset.pattern.permute.xlu0 0
        %6531 = vperm.xlu0 %6530, %v6497
        %v6532 = vpop.permute.xlu0 %6531
        %6535 = vset.pattern.permute.xlu0 0
        %6536 = vperm.xlu0 %6535, %v6498
        %v6537 = vpop.permute.xlu0 %6536
        %v6539 = vadd.f32 %v6461, %v6502
        %v6540 = vadd.f32 %v6464, %v6507
        %v6541 = vadd.f32 %v6469, %v6512
        %v6542 = vadd.f32 %v6472, %v6517
        %v6543 = vadd.f32 %v6477, %v6522
        %v6544 = vadd.f32 %v6480, %v6527
        %v6545 = vadd.f32 %v6485, %v6532
        %v6546 = vadd.f32 %v6488, %v6537
        %v6547 = vpack.c.bf16 %v6456, %v6453
        %6548 = vxpose.xlu0.c.b16.start [1/8] %v6547, 128
        %6549 = vxpose.xlu0.c.b16.cont [2/8] 0, 128
        %6550 = vxpose.xlu0.c.b16.cont [3/8] 0, 128
        %6551 = vxpose.xlu0.c.b16.cont [4/8] 0, 128
        %6552 = vxpose.xlu0.c.b16.cont [5/8] 0, 128
        %6553 = vxpose.xlu0.c.b16.cont [6/8] 0, 128
        %6554 = vxpose.xlu0.c.b16.cont [7/8] 0, 128
        %6555 = vxpose.xlu0.c.b16.end [8/8] 0, 128
        %v6556 = vpop.trf.xlu0
        %v6557 = vpop.trf.xlu0
        %v6558 = vpop.trf.xlu0
        %v6559 = vpop.trf.xlu0
        %v6560 = vpop.trf.xlu0
        %v6561 = vpop.trf.xlu0
        %v6562 = vpop.trf.xlu0
        %v6563 = vpop.trf.xlu0
        %v6565 = vsel %vm877, %v6556, 0
        %v6568 = vsel %vm877, %v6557, 0
        %v6571 = vsel %vm877, %v6558, 0
        %v6574 = vsel %vm877, %v6559, 0
        %v6577 = vsel %vm877, %v6560, 0
        %v6580 = vsel %vm877, %v6561, 0
        %v6583 = vsel %vm877, %v6562, 0
        %v6586 = vsel %vm877, %v6563, 0
        %6588 = vmatprep.subr.bf16.mxu0 0
        %6589 = vmatpush1.bf16.msra.mxu0 %v6547
        %6590 = vmatprep.subr.bf16.mxu0 0
        %6591 = vmatpush1.bf16.msra.mxu0 0
        %6592 = vmatprep.subr.bf16.mxu0 0
        %6593 = vmatpush1.bf16.msra.mxu0 0
        %6594 = vmatprep.subr.bf16.mxu0 0
        %6595 = vmatpush1.bf16.msra.mxu0 0
        %6596 = vmatprep.subr.bf16.mxu0 0
        %6597 = vmatpush1.bf16.msra.mxu0 0
        %6598 = vmatprep.subr.bf16.mxu0 0
        %6599 = vmatpush1.bf16.msra.mxu0 0
        %6600 = vmatprep.subr.bf16.mxu0 0
        %6601 = vmatpush1.bf16.msra.mxu0 0
        %6602 = vmatprep.subr.bf16.mxu0 0
        %6603 = vmatpush1.bf16.msra.mxu0 0
        %6604 = vmatprep.subr.bf16.mxu0 0
        %6605 = vmatpush1.bf16.msra.mxu0 0
        %6606 = vmatprep.subr.bf16.mxu0 0
        %6607 = vmatpush1.bf16.msra.mxu0 0
        %6608 = vmatprep.subr.bf16.mxu0 0
        %6609 = vmatpush1.bf16.msra.mxu0 0
        %6610 = vmatprep.subr.bf16.mxu0 0
        %6611 = vmatpush1.bf16.msra.mxu0 0
        %6612 = vmatprep.subr.bf16.mxu0 0
        %6613 = vmatpush1.bf16.msra.mxu0 0
        %6614 = vmatprep.subr.bf16.mxu0 0
        %6615 = vmatpush1.bf16.msra.mxu0 0
        %6616 = vmatprep.subr.bf16.mxu0 0
        %6617 = vmatpush1.bf16.msra.mxu0 0
        %6618 = vmatprep.subr.bf16.mxu0 0
        %6619 = vmatpush1.bf16.msra.mxu0 0
        %6620 = vmatprep.mubr.bf16.mxu0 0
        %6621 = vmatmul.mubr.bf16.gmra.mrb[0].mxu0 %v6565
        %v6622 = vpop.f32.mrb[0].mxu0
        %v6623 = vadd.f32 0.0, %v6622
        %v6624 = vpop.f32.mrb[0].mxu0
        %v6625 = vpop.f32.mrb[0].mxu0
        %v6626 = vadd.f32 0.0, %v6625
        %v6627 = vpop.f32.mrb[0].mxu0
        %6628 = vmatprep.mubr.bf16.mxu0 0
        %6629 = vmatmul.mubr.bf16.gmra.mrb[0].mxu0 %v6568
        %v6630 = vpop.f32.mrb[0].mxu0
        %v6631 = vadd.f32 0.0, %v6630
        %v6632 = vpop.f32.mrb[0].mxu0
        %v6633 = vpop.f32.mrb[0].mxu0
        %v6634 = vadd.f32 0.0, %v6633
        %v6635 = vpop.f32.mrb[0].mxu0
        %6636 = vmatprep.mubr.bf16.mxu0 0
        %6637 = vmatmul.mubr.bf16.gmra.mrb[0].mxu0 %v6571
        %v6638 = vpop.f32.mrb[0].mxu0
        %v6639 = vadd.f32 0.0, %v6638
        %v6640 = vpop.f32.mrb[0].mxu0
        %v6641 = vpop.f32.mrb[0].mxu0
        %v6642 = vadd.f32 0.0, %v6641
        %v6643 = vpop.f32.mrb[0].mxu0
        %6644 = vmatprep.mubr.bf16.mxu0 0
        %6645 = vmatmul.mubr.bf16.gmra.mrb[0].mxu0 %v6574
        %v6646 = vpop.f32.mrb[0].mxu0
        %v6647 = vadd.f32 0.0, %v6646
        %v6648 = vpop.f32.mrb[0].mxu0
        %v6649 = vpop.f32.mrb[0].mxu0
        %v6650 = vadd.f32 0.0, %v6649
        %v6651 = vpop.f32.mrb[0].mxu0
        %6652 = vmatprep.mubr.bf16.mxu0 0
        %6653 = vmatmul.mubr.bf16.gmra.mrb[0].mxu0 %v6577
        %v6654 = vpop.f32.mrb[0].mxu0
        %v6655 = vadd.f32 0.0, %v6654
        %v6656 = vpop.f32.mrb[0].mxu0
        %v6657 = vpop.f32.mrb[0].mxu0
        %v6658 = vadd.f32 0.0, %v6657
        %v6659 = vpop.f32.mrb[0].mxu0
        %6660 = vmatprep.mubr.bf16.mxu0 0
        %6661 = vmatmul.mubr.bf16.gmra.mrb[0].mxu0 %v6580
        %v6662 = vpop.f32.mrb[0].mxu0
        %v6663 = vadd.f32 0.0, %v6662
        %v6664 = vpop.f32.mrb[0].mxu0
        %v6665 = vpop.f32.mrb[0].mxu0
        %v6666 = vadd.f32 0.0, %v6665
        %v6667 = vpop.f32.mrb[0].mxu0
        %6668 = vmatprep.mubr.bf16.mxu0 0
        %6669 = vmatmul.mubr.bf16.gmra.mrb[0].mxu0 %v6583
        %v6670 = vpop.f32.mrb[0].mxu0
        %v6671 = vadd.f32 0.0, %v6670
        %v6672 = vpop.f32.mrb[0].mxu0
        %v6673 = vpop.f32.mrb[0].mxu0
        %v6674 = vadd.f32 0.0, %v6673
        %v6675 = vpop.f32.mrb[0].mxu0
        %6676 = vmatprep.mubr.bf16.mxu0 0
        %6677 = vmatmul.mubr.bf16.gmra.mrb[0].mxu0 %v6586
        %v6678 = vpop.f32.mrb[0].mxu0
        %v6679 = vadd.f32 0.0, %v6678
        %v6680 = vpop.f32.mrb[0].mxu0
        %v6681 = vpop.f32.mrb[0].mxu0
        %v6682 = vadd.f32 0.0, %v6681
        %v6683 = vpop.f32.mrb[0].mxu0
        %6684 = vdwg.mxu0
        %6685 = vmax.xlane.f32.xlu0 %v6623
        %v6686 = vpop.xlane.xlu0 %6685
        %6687 = vmax.xlane.f32.xlu0 %v6626
        %v6688 = vpop.xlane.xlu0 %6687
        %6689 = vmax.xlane.f32.xlu0 %v6631
        %v6690 = vpop.xlane.xlu0 %6689
        %6691 = vmax.xlane.f32.xlu0 %v6634
        %v6692 = vpop.xlane.xlu0 %6691
        %6693 = vmax.xlane.f32.xlu0 %v6639
        %v6694 = vpop.xlane.xlu0 %6693
        %6695 = vmax.xlane.f32.xlu0 %v6642
        %v6696 = vpop.xlane.xlu0 %6695
        %6697 = vmax.xlane.f32.xlu0 %v6647
        %v6698 = vpop.xlane.xlu0 %6697
        %6699 = vmax.xlane.f32.xlu0 %v6650
        %v6700 = vpop.xlane.xlu0 %6699
        %6701 = vmax.xlane.f32.xlu0 %v6655
        %v6702 = vpop.xlane.xlu0 %6701
        %6703 = vmax.xlane.f32.xlu0 %v6658
        %v6704 = vpop.xlane.xlu0 %6703
        %6705 = vmax.xlane.f32.xlu0 %v6663
        %v6706 = vpop.xlane.xlu0 %6705
        %6707 = vmax.xlane.f32.xlu0 %v6666
        %v6708 = vpop.xlane.xlu0 %6707
        %6709 = vmax.xlane.f32.xlu0 %v6671
        %v6710 = vpop.xlane.xlu0 %6709
        %6711 = vmax.xlane.f32.xlu0 %v6674
        %v6712 = vpop.xlane.xlu0 %6711
        %6713 = vmax.xlane.f32.xlu0 %v6679
        %v6714 = vpop.xlane.xlu0 %6713
        %6715 = vmax.xlane.f32.xlu0 %v6682
        %v6716 = vpop.xlane.xlu0 %6715
        %v6717 = vsub.f32 %v6623, %v6686
        %v6718 = vsub.f32 %v6626, %v6688
        %v6719 = vsub.f32 %v6631, %v6690
        %v6720 = vsub.f32 %v6634, %v6692
        %v6721 = vsub.f32 %v6639, %v6694
        %v6722 = vsub.f32 %v6642, %v6696
        %v6723 = vsub.f32 %v6647, %v6698
        %v6724 = vsub.f32 %v6650, %v6700
        %v6725 = vsub.f32 %v6655, %v6702
        %v6726 = vsub.f32 %v6658, %v6704
        %v6727 = vsub.f32 %v6663, %v6706
        %v6728 = vsub.f32 %v6666, %v6708
        %v6729 = vsub.f32 %v6671, %v6710
        %v6730 = vsub.f32 %v6674, %v6712
        %v6731 = vsub.f32 %v6679, %v6714
        %v6732 = vsub.f32 %v6682, %v6716
        %v6733 = vmul.f32 %v6717, 1.442695
        %v6734 = vpow.pop %v6733
        %v6735 = vmul.f32 %v6718, 1.442695
        %v6736 = vpow.pop %v6735
        %v6737 = vmul.f32 %v6719, 1.442695
        %v6738 = vpow.pop %v6737
        %v6739 = vmul.f32 %v6720, 1.442695
        %v6740 = vpow.pop %v6739
        %v6741 = vmul.f32 %v6721, 1.442695
        %v6742 = vpow.pop %v6741
        %v6743 = vmul.f32 %v6722, 1.442695
        %v6744 = vpow.pop %v6743
        %v6745 = vmul.f32 %v6723, 1.442695
        %v6746 = vpow.pop %v6745
        %v6747 = vmul.f32 %v6724, 1.442695
        %v6748 = vpow.pop %v6747
        %v6749 = vmul.f32 %v6725, 1.442695
        %v6750 = vpow.pop %v6749
        %v6751 = vmul.f32 %v6726, 1.442695
        %v6752 = vpow.pop %v6751
        %v6753 = vmul.f32 %v6727, 1.442695
        %v6754 = vpow.pop %v6753
        %v6755 = vmul.f32 %v6728, 1.442695
        %v6756 = vpow.pop %v6755
        %v6757 = vmul.f32 %v6729, 1.442695
        %v6758 = vpow.pop %v6757
        %v6759 = vmul.f32 %v6730, 1.442695
        %v6760 = vpow.pop %v6759
        %v6761 = vmul.f32 %v6731, 1.442695
        %v6762 = vpow.pop %v6761
        %v6763 = vmul.f32 %v6732, 1.442695
        %v6764 = vpow.pop %v6763
        %6765 = vadd.xlane.f32.xlu0 %v6734
        %v6766 = vpop.xlane.xlu0 %6765
        %6767 = vadd.xlane.f32.xlu0 %v6736
        %v6768 = vpop.xlane.xlu0 %6767
        %6769 = vadd.xlane.f32.xlu0 %v6738
        %v6770 = vpop.xlane.xlu0 %6769
        %6771 = vadd.xlane.f32.xlu0 %v6740
        %v6772 = vpop.xlane.xlu0 %6771
        %6773 = vadd.xlane.f32.xlu0 %v6742
        %v6774 = vpop.xlane.xlu0 %6773
        %6775 = vadd.xlane.f32.xlu0 %v6744
        %v6776 = vpop.xlane.xlu0 %6775
        %6777 = vadd.xlane.f32.xlu0 %v6746
        %v6778 = vpop.xlane.xlu0 %6777
        %6779 = vadd.xlane.f32.xlu0 %v6748
        %v6780 = vpop.xlane.xlu0 %6779
        %6781 = vadd.xlane.f32.xlu0 %v6750
        %v6782 = vpop.xlane.xlu0 %6781
        %6783 = vadd.xlane.f32.xlu0 %v6752
        %v6784 = vpop.xlane.xlu0 %6783
        %6785 = vadd.xlane.f32.xlu0 %v6754
        %v6786 = vpop.xlane.xlu0 %6785
        %6787 = vadd.xlane.f32.xlu0 %v6756
        %v6788 = vpop.xlane.xlu0 %6787
        %6789 = vadd.xlane.f32.xlu0 %v6758
        %v6790 = vpop.xlane.xlu0 %6789
        %6791 = vadd.xlane.f32.xlu0 %v6760
        %v6792 = vpop.xlane.xlu0 %6791
        %6793 = vadd.xlane.f32.xlu0 %v6762
        %v6794 = vpop.xlane.xlu0 %6793
        %6795 = vadd.xlane.f32.xlu0 %v6764
        %v6796 = vpop.xlane.xlu0 %6795
        %v6797 = vrcp.pop %v6766
        %v6798 = vrcp.pop %v6768
        %v6799 = vrcp.pop %v6770
        %v6800 = vrcp.pop %v6772
        %v6801 = vrcp.pop %v6774
        %v6802 = vrcp.pop %v6776
        %v6803 = vrcp.pop %v6778
        %v6804 = vrcp.pop %v6780
        %v6805 = vrcp.pop %v6782
        %v6806 = vrcp.pop %v6784
        %v6807 = vrcp.pop %v6786
        %v6808 = vrcp.pop %v6788
        %v6809 = vrcp.pop %v6790
        %v6810 = vrcp.pop %v6792
        %v6811 = vrcp.pop %v6794
        %v6812 = vrcp.pop %v6796
        %v6813 = vmul.f32 %v6734, %v6797
        %v6814 = vmul.f32 %v6736, %v6798
        %v6815 = vmul.f32 %v6738, %v6799
        %v6816 = vmul.f32 %v6740, %v6800
        %v6817 = vmul.f32 %v6742, %v6801
        %v6818 = vmul.f32 %v6744, %v6802
        %v6819 = vmul.f32 %v6746, %v6803
        %v6820 = vmul.f32 %v6748, %v6804
        %v6821 = vmul.f32 %v6750, %v6805
        %v6822 = vmul.f32 %v6752, %v6806
        %v6823 = vmul.f32 %v6754, %v6807
        %v6824 = vmul.f32 %v6756, %v6808
        %v6825 = vmul.f32 %v6758, %v6809
        %v6826 = vmul.f32 %v6760, %v6810
        %v6827 = vmul.f32 %v6762, %v6811
        %v6828 = vmul.f32 %v6764, %v6812
        %v6829 = vadd.f32 %v6813, %v6814
        %v6830 = vadd.f32 %v6829, %v6815
        %v6831 = vadd.f32 %v6830, %v6816
        %v6832 = vadd.f32 %v6831, %v6817
        %v6833 = vadd.f32 %v6832, %v6818
        %v6834 = vadd.f32 %v6833, %v6819
        %v6835 = vadd.f32 %v6834, %v6820
        %v6836 = vadd.f32 %v6835, %v6821
        %v6837 = vadd.f32 %v6836, %v6822
        %v6838 = vadd.f32 %v6837, %v6823
        %v6839 = vadd.f32 %v6838, %v6824
        %v6840 = vadd.f32 %v6839, %v6825
        %v6841 = vadd.f32 %v6840, %v6826
        %v6842 = vadd.f32 %v6841, %v6827
        %v6843 = vadd.f32 %v6842, %v6828
        %v6844 = vrot.slane %v6843, 4
        %v6845 = vadd.f32 %v6843, %v6844
        %v6846 = vrot.slane %v6845, 2
        %v6847 = vadd.f32 %v6845, %v6846
        %v6848 = vrot.slane %v6847, 1
        %v6849 = vadd.f32 %v6847, %v6848
        %v6850 = vadd.f32 %v6849, 1e-09
        %v6851 = vrcp.pop %v6850
        %v6852 = vpack.c.bf16 %v6540, %v6539
        %v6853 = vpack.c.bf16 %v6542, %v6541
        %v6854 = vpack.c.bf16 %v6544, %v6543
        %v6855 = vpack.c.bf16 %v6546, %v6545
        %v6856 = vpack.c.bf16 %v6814, %v6813
        %v6857 = vpack.c.bf16 %v6816, %v6815
        %v6858 = vpack.c.bf16 %v6818, %v6817
        %v6859 = vpack.c.bf16 %v6820, %v6819
        %v6860 = vpack.c.bf16 %v6822, %v6821
        %v6861 = vpack.c.bf16 %v6824, %v6823
        %v6862 = vpack.c.bf16 %v6826, %v6825
        %v6863 = vpack.c.bf16 %v6828, %v6827
        %6864 = vmatprep.subr.bf16.mxu0 0
        %6865 = vmatpush1.bf16.msra.mxu0 %v6856
        %6866 = vmatprep.subr.bf16.mxu0 0
        %6867 = vmatpush1.bf16.msra.mxu0 %v6857
        %6868 = vmatprep.subr.bf16.mxu0 0
        %6869 = vmatpush1.bf16.msra.mxu0 %v6858
        %6870 = vmatprep.subr.bf16.mxu0 0
        %6871 = vmatpush1.bf16.msra.mxu0 %v6859
        %6872 = vmatprep.subr.bf16.mxu0 0
        %6873 = vmatpush1.bf16.msra.mxu0 %v6860
        %6874 = vmatprep.subr.bf16.mxu0 0
        %6875 = vmatpush1.bf16.msra.mxu0 %v6861
        %6876 = vmatprep.subr.bf16.mxu0 0
        %6877 = vmatpush1.bf16.msra.mxu0 %v6862
        %6878 = vmatprep.subr.bf16.mxu0 0
        %6879 = vmatpush1.bf16.msra.mxu0 %v6863
        %6880 = vmatprep.subr.bf16.mxu0 0
        %6881 = vmatpush1.bf16.msra.mxu0 0
        %6882 = vmatprep.subr.bf16.mxu0 0
        %6883 = vmatpush1.bf16.msra.mxu0 0
        %6884 = vmatprep.subr.bf16.mxu0 0
        %6885 = vmatpush1.bf16.msra.mxu0 0
        %6886 = vmatprep.subr.bf16.mxu0 0
        %6887 = vmatpush1.bf16.msra.mxu0 0
        %6888 = vmatprep.subr.bf16.mxu0 0
        %6889 = vmatpush1.bf16.msra.mxu0 0
        %6890 = vmatprep.subr.bf16.mxu0 0
        %6891 = vmatpush1.bf16.msra.mxu0 0
        %6892 = vmatprep.subr.bf16.mxu0 0
        %6893 = vmatpush1.bf16.msra.mxu0 0
        %6894 = vmatprep.subr.bf16.mxu0 0
        %6895 = vmatpush1.bf16.msra.mxu0 0
        %6896 = vmatprep.mubr.bf16.mxu0 0
        %6897 = vmatmul.mubr.bf16.gmra.mrb[0].mxu0 %v6852
        %v6898 = vpop.f32.mrb[0].mxu0
        %v6899 = vadd.f32 0.0, %v6898
        %v6900 = vpop.f32.mrb[0].mxu0
        %v6901 = vpop.f32.mrb[0].mxu0
        %v6902 = vadd.f32 0.0, %v6901
        %v6903 = vpop.f32.mrb[0].mxu0
        %6904 = vmatprep.mubr.bf16.mxu0 0
        %6905 = vmatmul.mubr.bf16.gmra.mrb[0].mxu0 %v6853
        %v6906 = vpop.f32.mrb[0].mxu0
        %v6907 = vadd.f32 0.0, %v6906
        %v6908 = vpop.f32.mrb[0].mxu0
        %v6909 = vpop.f32.mrb[0].mxu0
        %v6910 = vadd.f32 0.0, %v6909
        %v6911 = vpop.f32.mrb[0].mxu0
        %6912 = vmatprep.mubr.bf16.mxu0 0
        %6913 = vmatmul.mubr.bf16.gmra.mrb[0].mxu0 %v6854
        %v6914 = vpop.f32.mrb[0].mxu0
        %v6915 = vadd.f32 0.0, %v6914
        %v6916 = vpop.f32.mrb[0].mxu0
        %v6917 = vpop.f32.mrb[0].mxu0
        %v6918 = vadd.f32 0.0, %v6917
        %v6919 = vpop.f32.mrb[0].mxu0
        %6920 = vmatprep.mubr.bf16.mxu0 0
        %6921 = vmatmul.mubr.bf16.gmra.mrb[0].mxu0 %v6855
        %v6922 = vpop.f32.mrb[0].mxu0
        %v6923 = vadd.f32 0.0, %v6922
        %v6924 = vpop.f32.mrb[0].mxu0
        %v6925 = vpop.f32.mrb[0].mxu0
        %v6926 = vadd.f32 0.0, %v6925
        %v6927 = vpop.f32.mrb[0].mxu0
        %6928 = vdwg.mxu0
        %v6929 = vmul.f32 %v6899, %v6851
        %v6930 = vmul.f32 %v6902, %v6851
        %v6931 = vmul.f32 %v6907, %v6851
        %v6932 = vmul.f32 %v6910, %v6851
        %v6933 = vmul.f32 %v6915, %v6851
        %v6934 = vmul.f32 %v6918, %v6851
        %v6935 = vmul.f32 %v6923, %v6851
        %v6936 = vmul.f32 %v6926, %v6851
        %v6937 = vsub.f32 %v6348, %v6929
        %v6938 = vsub.f32 %v6349, %v6930
        %v6939 = vsub.f32 %v6350, %v6931
        %v6940 = vsub.f32 %v6351, %v6932
        %v6941 = vsub.f32 %v6352, %v6933
        %v6942 = vsub.f32 %v6353, %v6934
        %v6943 = vsub.f32 %v6354, %v6935
        %v6944 = vsub.f32 %v6355, %v6936
        %v6945 = vpack.c.bf16 %v6938, %v6937
        %v6946 = vpack.c.bf16 %v6940, %v6939
        %v6947 = vpack.c.bf16 %v6942, %v6941
        %v6948 = vpack.c.bf16 %v6944, %v6943
        %v6949 = vld [vmem:[%s3559] sm:$0xf]
        %v6950 = vld [vmem:[%s3559 + $0x4] sm:$0xf]
        %v6951 = vld [vmem:[%s3559 + $0x8] sm:$0xf]
        %v6952 = vld [vmem:[%s3559 + $0xc] sm:$0xf]
        %v6953 = vld [vmem:[%s3559 + $0x10] sm:$0xf]
        %v6954 = vld [vmem:[%s3559 + $0x14] sm:$0xf]
        %v6955 = vld [vmem:[%s3559 + $0x18] sm:$0xf]
        %v6956 = vld [vmem:[%s3559 + $0x1c] sm:$0xf]
        %v6957 = vld [vmem:[%s3568] sm:$0xff]
        %v6958 = vld [vmem:[%s3568 + $0x8] sm:$0xff]
        %v6959 = vld [vmem:[%s3568 + $0x10] sm:$0xff]
        %v6960 = vld [vmem:[%s3568 + $0x18] sm:$0xff]
        %v6961 = vld [vmem:[%s3568 + $0x20] sm:$0xff]
        %v6962 = vld [vmem:[%s3568 + $0x28] sm:$0xff]
        %v6963 = vld [vmem:[%s3568 + $0x30] sm:$0xff]
        %v6964 = vld [vmem:[%s3568 + $0x38] sm:$0xff]
        %6966 = vset.pattern.permute.xlu0 0
        %6967 = vperm.xlu0 %6966, %v6957
        %v6968 = vpop.permute.xlu0 %6967
        %6971 = vset.pattern.permute.xlu0 0
        %6972 = vperm.xlu0 %6971, %v6958
        %v6973 = vpop.permute.xlu0 %6972
        %6976 = vset.pattern.permute.xlu0 0
        %6977 = vperm.xlu0 %6976, %v6959
        %v6978 = vpop.permute.xlu0 %6977
        %6981 = vset.pattern.permute.xlu0 0
        %6982 = vperm.xlu0 %6981, %v6960
        %v6983 = vpop.permute.xlu0 %6982
        %6986 = vset.pattern.permute.xlu0 0
        %6987 = vperm.xlu0 %6986, %v6961
        %v6988 = vpop.permute.xlu0 %6987
        %6991 = vset.pattern.permute.xlu0 0
        %6992 = vperm.xlu0 %6991, %v6962
        %v6993 = vpop.permute.xlu0 %6992
        %6996 = vset.pattern.permute.xlu0 0
        %6997 = vperm.xlu0 %6996, %v6963
        %v6998 = vpop.permute.xlu0 %6997
        %7001 = vset.pattern.permute.xlu0 0
        %7002 = vperm.xlu0 %7001, %v6964
        %v7003 = vpop.permute.xlu0 %7002
        %v7013 = vunpack.c.l.b16 %v6949
        %v7014 = vunpack.c.l.b16 %v6950
        %v7015 = vunpack.c.l.b16 %v6951
        %v7016 = vunpack.c.l.b16 %v6952
        %v7017 = vunpack.c.l.b16 %v6953
        %v7018 = vunpack.c.l.b16 %v6954
        %v7019 = vunpack.c.l.b16 %v6955
        %v7020 = vunpack.c.l.b16 %v6956
        %v7021 = vpack.c.b16 %v7014, %v7013
        %v7022 = vpack.c.b16 %v7016, %v7015
        %v7023 = vpack.c.b16 %v7018, %v7017
        %v7024 = vpack.c.b16 %v7020, %v7019
        %v7026 = vsel %vm426, %v7021, 0
        %v7029 = vsel %vm426, %v7022, 0
        %v7032 = vsel %vm426, %v7023, 0
        %v7035 = vsel %vm426, %v7024, 0
        %7037 = vmatprep.subr.bf16.mxu0 0
        %7038 = vmatpush1.bf16.msra.mxu0 %v6945
        %7039 = vmatprep.subr.bf16.mxu0 0
        %7040 = vmatpush1.bf16.msra.mxu0 %v6946
        %7041 = vmatprep.subr.bf16.mxu0 0
        %7042 = vmatpush1.bf16.msra.mxu0 %v6947
        %7043 = vmatprep.subr.bf16.mxu0 0
        %7044 = vmatpush1.bf16.msra.mxu0 %v6948
        %7045 = vmatprep.subr.bf16.mxu0 0
        %7046 = vmatpush1.bf16.msra.mxu0 0
        %7047 = vmatprep.subr.bf16.mxu0 0
        %7048 = vmatpush1.bf16.msra.mxu0 0
        %7049 = vmatprep.subr.bf16.mxu0 0
        %7050 = vmatpush1.bf16.msra.mxu0 0
        %7051 = vmatprep.subr.bf16.mxu0 0
        %7052 = vmatpush1.bf16.msra.mxu0 0
        %7053 = vmatprep.subr.bf16.mxu0 0
        %7054 = vmatpush1.bf16.msra.mxu0 0
        %7055 = vmatprep.subr.bf16.mxu0 0
        %7056 = vmatpush1.bf16.msra.mxu0 0
        %7057 = vmatprep.subr.bf16.mxu0 0
        %7058 = vmatpush1.bf16.msra.mxu0 0
        %7059 = vmatprep.subr.bf16.mxu0 0
        %7060 = vmatpush1.bf16.msra.mxu0 0
        %7061 = vmatprep.subr.bf16.mxu0 0
        %7062 = vmatpush1.bf16.msra.mxu0 0
        %7063 = vmatprep.subr.bf16.mxu0 0
        %7064 = vmatpush1.bf16.msra.mxu0 0
        %7065 = vmatprep.subr.bf16.mxu0 0
        %7066 = vmatpush1.bf16.msra.mxu0 0
        %7067 = vmatprep.subr.bf16.mxu0 0
        %7068 = vmatpush1.bf16.msra.mxu0 0
        %7069 = vmatprep.mubr.bf16.mxu0 0
        %7070 = vmatmul.mubr.bf16.gmra.mrb[0].mxu0 %v7026
        %v7071 = vpop.f32.mrb[0].mxu0
        %v7072 = vadd.f32 %v6968, %v7071
        %v7073 = vpop.f32.mrb[0].mxu0
        %v7074 = vpop.f32.mrb[0].mxu0
        %v7075 = vadd.f32 %v6973, %v7074
        %v7076 = vpop.f32.mrb[0].mxu0
        %7077 = vmatprep.mubr.bf16.mxu0 0
        %7078 = vmatmul.mubr.bf16.gmra.mrb[0].mxu0 %v7029
        %v7079 = vpop.f32.mrb[0].mxu0
        %v7080 = vadd.f32 %v6978, %v7079
        %v7081 = vpop.f32.mrb[0].mxu0
        %v7082 = vpop.f32.mrb[0].mxu0
        %v7083 = vadd.f32 %v6983, %v7082
        %v7084 = vpop.f32.mrb[0].mxu0
        %7085 = vmatprep.mubr.bf16.mxu0 0
        %7086 = vmatmul.mubr.bf16.gmra.mrb[0].mxu0 %v7032
        %v7087 = vpop.f32.mrb[0].mxu0
        %v7088 = vadd.f32 %v6988, %v7087
        %v7089 = vpop.f32.mrb[0].mxu0
        %v7090 = vpop.f32.mrb[0].mxu0
        %v7091 = vadd.f32 %v6993, %v7090
        %v7092 = vpop.f32.mrb[0].mxu0
        %7093 = vmatprep.mubr.bf16.mxu0 0
        %7094 = vmatmul.mubr.bf16.gmra.mrb[0].mxu0 %v7035
        %v7095 = vpop.f32.mrb[0].mxu0
        %v7096 = vadd.f32 %v6998, %v7095
        %v7097 = vpop.f32.mrb[0].mxu0
        %v7098 = vpop.f32.mrb[0].mxu0
        %v7099 = vadd.f32 %v7003, %v7098
        %v7100 = vpop.f32.mrb[0].mxu0
        %7101 = vdwg.mxu0
        %v7102 = vmax.f32 %v7072, 0.0
        %v7103 = vmax.f32 %v7075, 0.0
        %v7104 = vmax.f32 %v7080, 0.0
        %v7105 = vmax.f32 %v7083, 0.0
        %v7106 = vmax.f32 %v7088, 0.0
        %v7107 = vmax.f32 %v7091, 0.0
        %v7108 = vmax.f32 %v7096, 0.0
        %v7109 = vmax.f32 %v7099, 0.0
        %v7110 = vadd.f32 %v6348, %v7102
        %v7111 = vadd.f32 %v6349, %v7103
        %v7112 = vadd.f32 %v6350, %v7104
        %v7113 = vadd.f32 %v6351, %v7105
        %v7114 = vadd.f32 %v6352, %v7106
        %v7115 = vadd.f32 %v6353, %v7107
        %v7116 = vadd.f32 %v6354, %v7108
        %v7117 = vadd.f32 %v6355, %v7109
        %7118 = vst [vmem:[%s4831 + $0xc0] sm:$0xff] %v7110
        %7119 = vst [vmem:[%s4831 + $0xc8] sm:$0xff] %v7111
        %7120 = vst [vmem:[%s4831 + $0xd0] sm:$0xff] %v7112
        %7121 = vst [vmem:[%s4831 + $0xd8] sm:$0xff] %v7113
        %7122 = vst [vmem:[%s4831 + $0xe0] sm:$0xff] %v7114
        %7123 = vst [vmem:[%s4831 + $0xe8] sm:$0xff] %v7115
        %7124 = vst [vmem:[%s4831 + $0xf0] sm:$0xff] %v7116
        %7125 = vst [vmem:[%s4831 + $0xf8] sm:$0xff] %v7117
        %s7126 = sand.u32 %s225, 1
        %s7127 = scalar_lea.sflag [#allocation3], %s7126
        %s7128 = sand.u32 %s225, 1
        %s7129 = smul.addr %s7128, 512
        %s7130 = scalar_lea.vmem [#allocation2], %s7129
        // Predicated region
        $region57: #{tpu_custom_call.1} parent=55 // pred_check
          %p7131 = pneg %p235
        $region58: #{tpu_custom_call.1} parent=55 // pred_check_branch
          %7133 = sbr.rel (%p7131) target = $region60
        $region59: #{tpu_custom_call.1} parent=55 // pred_region
          %s7134 = smul.u32 2, %s23
          %s7136 = ssub.s32 8192, 8192
          %7137 = vsyncadd %s7127, %s7136
          %s7138 = smul.addr %s7134, 32
          %s7139 = smul.addr %s7138, 128
          %s7140 = scalar_lea.hbm %s9, %s7139
          %s7141 = sshll.u32 %s7130, 4
          %s7142 = int_to_ptr.vmem [resolvable:$true] %s7141
          %7147 = dma.vmem_to_hbm [thread:$0]  %s7142, 8192, %s7140, %s7127, 128, 128, 8
        $region60: #{tpu_custom_call.1} parent=55 // pred_fallthru
          _
      $region56: #{tpu_custom_call.1} parent=5 // pred_fallthru
        _
      %p7148 = scmp.le.s32.totalorder 2, %s18
      // Predicated region
      $region61: #{tpu_custom_call.1} parent=5 // pred_check
        %p7149 = pneg %p7148
      $region62: #{tpu_custom_call.1} parent=5 // pred_check_branch
        %7151 = sbr.rel (%p7149) target = $region64
      $region63: #{tpu_custom_call.1} parent=5 // pred_region
        %s7152 = ssub.s32 %s18, 2
        // Predicated region
        $region65: #{tpu_custom_call.1} parent=63 // pred_check
          %p7153 = pneg %p241
        $region66: #{tpu_custom_call.1} parent=63 // pred_check_branch
          %7155 = sbr.rel (%p7153) target = $region68
        $region67: #{tpu_custom_call.1} parent=63 // pred_region
          %s7156 = sand.u32 %s226, 1
          %s7157 = scalar_lea.sflag [#allocation3], %s7156
          %s7158 = sand.u32 %s226, 1
          %s7159 = smul.addr %s7158, 512
          %s7160 = scalar_lea.vmem [#allocation2], %s7159
          %7161 = dma.done %s7157, 8192
        $region68: #{tpu_custom_call.1} parent=63 // pred_fallthru
          _
      $region64: #{tpu_custom_call.1} parent=5 // pred_fallthru
        _
    $region6: #{tpu_custom_call.1} parent=1 // loop_footer
      %s22 = sadd.s32 1, %s18
    $region7: #{tpu_custom_call.1} parent=1 // loop_footer_branch
      %17 = sbr.rel target = $region3
    $region8: #{tpu_custom_call.1} parent=1 // loop_exit
      _
    %7162 = vsyncpa [#allocation3], 1
    %s7163 = scalar_lea.sflag [#allocation3], 1
    %7164 = vsyncpa %s7163, 1

</llo_original>
